<compile_context>
chip_gen: v7x
topology: tpu7x:2x2x1
jax: 0.10.0
libtpu: 0.0.40
codegen_flags: <defaults>
</compile_context>

<pallas_src>
import jax
import jax.numpy as jnp
import numpy as np
from jax.experimental import pallas as pl
from jax.experimental.pallas import tpu as pltpu

NUM_FEATURES = 49          # F  (== module.num_features) == LSTM hidden size H
SEQ_LEN = 10               # T  (module.D = 10 * 49 = 490 forces T = 10)
H = NUM_FEATURES
HP = 64                    # H / F zero-padded to a lane-friendly 64
L = 64                     # module.L
D1, D1P = 6 * H, 384       # 294 -> padded to 384 lanes
D2, D2P = 4 * H, 256       # 196 -> padded to 256 lanes
NUM_PACKED = 12            # number of packed parameter buffers


# ----------------------------------------------------------------------------
# Fused / padded forward math (shared by the Pallas kernel and the JAX check).
# ----------------------------------------------------------------------------
def _forward_fused(x2, p, n, *, use_pl_recip=False):
    """x2: (T*N, HP) f32, time-major stacked & zero-padded features.
    p : 12 packed parameter buffers (weights bf16 or f32, biases f32)."""
    (wih0, wih1, whh, blstm, w1p, w2p, w3p, bmlp, wag, bag, wheads, bheads) = p
    wdt = wih0.dtype
    T = SEQ_LEN

    def dot(a, w):
        return jnp.dot(a.astype(wdt), w, preferred_element_type=jnp.float32)

    def run_dir(xp_all, whh_d, reverse):
        # One LSTM direction. The input projection (+ b_ih + b_hh) is already in
        # xp_all, so each step is a single (n, HP) x (HP, 4*HP) recurrent dot.
        h = jnp.zeros((n, HP), jnp.float32)
        c = jnp.zeros((n, HP), jnp.float32)
        outs = [None] * T
        for t in (range(T - 1, -1, -1) if reverse else range(T)):
            z = xp_all[t * n:(t + 1) * n] + dot(h, whh_d)          # (n, 4*HP)
            i = jax.nn.sigmoid(z[:, 0:HP])
            f = jax.nn.sigmoid(z[:, HP:2 * HP])
            g = jnp.tanh(z[:, 2 * HP:3 * HP])
            o = jax.nn.sigmoid(z[:, 3 * HP:4 * HP])
            c = f * c + i * g
            h = o * jnp.tanh(c)
            outs[t] = h                # padded lanes stay exactly 0
        return outs

    # Layer 0: hoisted, batched input projections for both directions.
    xp0f = dot(x2, wih0[0]) + blstm[0:1]
    xp0b = dot(x2, wih0[1]) + blstm[1:2]
    h0f = run_dir(xp0f, whh[0], reverse=False)
    h0b = run_dir(xp0b, whh[1], reverse=True)

    # Layer 1: lane-concat fwd|bwd once, then one hoisted (2*HP, 4*HP) projection
    # per direction (the torch split W_ih halves are fused in the packed weight).
    h1in = jnp.concatenate(
        [jnp.concatenate([h0f[t], h0b[t]], axis=1) for t in range(T)], axis=0)
    xp1f = dot(h1in, wih1[0]) + blstm[2:3]
    xp1b = dot(h1in, wih1[1]) + blstm[3:4]
    h1f = run_dir(xp1f, whh[2], reverse=False)
    h1b = run_dir(xp1b, whh[3], reverse=True)

    # temp = relu(fwd + bwd); the torch flatten-to-(N, 490) + Linear(490, 294)
    # becomes a single dot against the re-packed (T*HP, D1P) W1.
    temp_flat = jnp.concatenate(
        [jax.nn.relu(h1f[t] + h1b[t]) for t in range(T)], axis=1)   # (n, T*HP)

    z1 = jax.nn.relu(dot(temp_flat, w1p) + bmlp[0:1, :])            # (n, 384)
    z2 = jax.nn.relu(dot(z1, w2p) + bmlp[1:2, :D2P])                # (n, 256)
    feat = jax.nn.relu(dot(z2, w3p) + bmlp[2:3, :HP])               # (n, 64)

    # Fused attention + gate heads: one (64, 128) dot, split for tanh/sigmoid.
    ag = dot(feat, wag) + bag                                       # (n, 128)
    gated = jnp.tanh(ag[:, :L]) * jax.nn.sigmoid(ag[:, L:])         # (n, 64)
    a = dot(gated, wheads[:, 0:1]) + bheads[:, 0:1]                 # (n, 1)

    # softmax over instances (== torch transpose(-1,-2) then softmax(dim=-1))
    e = jnp.exp(a - jnp.max(a, axis=0, keepdims=True))
    denom = jnp.sum(e, axis=0, keepdims=True)
    inv = pl.reciprocal(denom, approx=True) if use_pl_recip else 1.0 / denom
    w = e * inv                                                     # (n, 1)

    M = jnp.sum(w * feat, axis=0, keepdims=True)                    # (1, 64)
    y = jax.nn.sigmoid(dot(M, wheads[:, 1:2]) + bheads[:, 1:2])     # (1, 1)
    y_hat = (y >= 0.5).astype(jnp.float32)
    return y, y_hat, w


# ----------------------------------------------------------------------------
# Pallas kernel + wrapper
# ----------------------------------------------------------------------------
def _attention_kernel(*refs):
    x_ref = refs[0]
    params = tuple(r[...] for r in refs[1:1 + NUM_PACKED])
    y_ref, yhat_ref, aw_ref = refs[1 + NUM_PACKED:]
    n = x_ref.shape[0] // SEQ_LEN
    y, y_hat, w = _forward_fused(x_ref[...], params, n, use_pl_recip=True)
    y_ref[...] = y
    yhat_ref[...] = y_hat
    aw_ref[...] = w


def attention_forward(x, packed):
    """x: (1, N, T, F) float32 — same layout the torch module receives."""
    x = jnp.squeeze(x, axis=0)                                   # (N, T, F)
    x_tnf = jnp.transpose(x, (1, 0, 2)).astype(jnp.float32)      # (T, N, F)
    T, N, F = x_tnf.shape
    assert T == SEQ_LEN and F == NUM_FEATURES
    x2 = jnp.pad(x_tnf, ((0, 0), (0, 0), (0, HP - F))).reshape(T * N, HP)

    vspec = pl.BlockSpec(memory_space=pltpu.MemorySpace.VMEM)    # whole array in VMEM
    out_shape = (jax.ShapeDtypeStruct((1, 1), jnp.float32),
                 jax.ShapeDtypeStruct((1, 1), jnp.float32),
                 jax.ShapeDtypeStruct((N, 1), jnp.float32))
    # TODO(synk): for large bags, grid over N-blocks with
    # dimension_semantics=("parallel",) + a two-pass softmax so both v7x
    # TensorCores are used; irrelevant at N=8 (working set < 2 MiB in VMEM).
    y, yhat, aw = pl.pallas_call(
        _attention_kernel,
        out_shape=out_shape,
        in_specs=[vspec] * (1 + NUM_PACKED),
        out_specs=(vspec, vspec, vspec),
    )(x2, *packed)
    # match torch: Y_prob (1,), Y_hat (1,), A (1, N)
    return y.reshape(1), yhat.reshape(1), aw.reshape(1, N)


# ----------------------------------------------------------------------------
# Parameter construction: raw torch-layout tensors + host-side fuse/pad/pack.
# ----------------------------------------------------------------------------
def init_raw_params(key):
    keys = iter(jax.random.split(key, 32))

    def uni(shape, fan_in):
        s = 1.0 / np.sqrt(fan_in)
        return jax.random.uniform(next(keys), shape, jnp.float32, -s, s)

    lstm = []
    for in_dim in (H, H, 2 * H, 2 * H):      # l0 fwd, l0 bwd, l1 fwd, l1 bwd
        lstm.append(dict(Wih=uni((4 * H, in_dim), H), Whh=uni((4 * H, H), H),
                         bih=uni((4 * H,), H), bhh=uni((4 * H,), H)))
    D = H * SEQ_LEN
    return dict(
        lstm=lstm,
        W1=uni((D1, D), D), b1=uni((D1,), D),
        W2=uni((D2, D1), D1), b2=uni((D2,), D1),
        W3=uni((L, D2), D2), b3=uni((L,), D2),
        Wa=uni((L, L), L), ba=uni((L,), L),
        Wg=uni((L, L), L), bg=uni((L,), L),
        Wap=uni((1, L), L), bap=uni((1,), L),
        Wc=uni((1, L), L), bc=uni((1,), L))


def pack_params(raw, wdtype=jnp.bfloat16):
    """Fuse / pad / transpose the 28 torch tensors into 12 MXU-friendly buffers.
    Gate order stays (i, f, g, o); gate g occupies lanes [g*HP, g*HP+H) of the
    fused 4*HP output; padded rows/cols are zero so the math is unchanged."""

    def pack_gates_cols(W, in_splits):
        # W: (4H, in_dim) torch gate-stacked -> (len(in_splits)*HP, 4*HP).
        W = np.asarray(W, np.float32)
        out = np.zeros((len(in_splits) * HP, 4 * HP), np.float32)
        for g in range(4):
            blk = W[g * H:(g + 1) * H, :]                       # (H, in_dim)
            for b, (c0, c1) in enumerate(in_splits):
                out[b * HP:b * HP + (c1 - c0), g * HP:g * HP + H] = blk[:, c0:c1].T
        return out

    def pack_gate_bias(bih, bhh):
        b = np.asarray(bih, np.float32) + np.asarray(bhh, np.float32)
        out = np.zeros((4 * HP,), np.float32)
        for g in range(4):
            out[g * HP:g * HP + H] = b[g * H:(g + 1) * H]
        return out

    ls = raw['lstm']
    wih0 = np.stack([pack_gates_cols(ls[0]['Wih'], [(0, H)]),
                     pack_gates_cols(ls[1]['Wih'], [(0, H)])])                 # (2, 64, 256)
    wih1 = np.stack([pack_gates_cols(ls[2]['Wih'], [(0, H), (H, 2 * H)]),
                     pack_gates_cols(ls[3]['Wih'], [(0, H), (H, 2 * H)])])     # (2, 128, 256)
    whh = np.stack([pack_gates_cols(ls[i]['Whh'], [(0, H)]) for i in range(4)])  # (4, 64, 256)
    blstm = np.stack([pack_gate_bias(ls[i]['bih'], ls[i]['bhh'])
                      for i in range(4)])                                      # (4, 256)

    # W1 folded over the (t, h) flatten: torch column t*H+h -> packed row t*HP+h.
    w1p = np.zeros((SEQ_LEN * HP, D1P), np.float32)
    W1t = np.asarray(raw['W1'], np.float32).T                                  # (490, 294)
    for t in range(SEQ_LEN):
        w1p[t * HP:t * HP + H, :D1] = W1t[t * H:(t + 1) * H, :]
    w2p = np.zeros((D1P, D2P), np.float32)
    w2p[:D1, :D2] = np.asarray(raw['W2'], np.float32).T
    w3p = np.zeros((D2P, L), np.float32)
    w3p[:D2, :] = np.asarray(raw['W3'], np.float32).T
    bmlp = np.zeros((3, D1P), np.float32)
    bmlp[0, :D1] = np.asarray(raw['b1'])
    bmlp[1, :D2] = np.asarray(raw['b2'])
    bmlp[2, :L] = np.asarray(raw['b3'])

    wag = np.concatenate([np.asarray(raw['Wa'], np.float32).T,
                          np.asarray(raw['Wg'], np.float32).T], axis=1)        # (64, 128)
    bag = np.concatenate([np.asarray(raw['ba'], np.float32),
                          np.asarray(raw['bg'], np.float32)]).reshape(1, 2 * L)
    wheads = np.concatenate([np.asarray(raw['Wap'], np.float32).T,
                             np.asarray(raw['Wc'], np.float32).T], axis=1)     # (64, 2)
    bheads = np.array([[float(np.asarray(raw['bap'])[0]),
                        float(np.asarray(raw['bc'])[0])]], np.float32)         # (1, 2)

    wcast = lambda a: jnp.asarray(a, dtype=wdtype)
    fcast = lambda a: jnp.asarray(a, dtype=jnp.float32)
    return (wcast(wih0), wcast(wih1), wcast(whh), fcast(blstm),
            wcast(w1p), wcast(w2p), wcast(w3p), fcast(bmlp),
            wcast(wag), fcast(bag), wcast(wheads), fcast(bheads))


# ----------------------------------------------------------------------------
# Direct (unfused, unpadded, f32) port of the torch forward — reference only.
# ----------------------------------------------------------------------------
def _forward_ref(x_tnf, raw):
    T, N, _ = x_tnf.shape

    def lstm_dir(xs, p, reverse):
        h = jnp.zeros((N, H), jnp.float32)
        c = jnp.zeros((N, H), jnp.float32)
        outs = [None] * T
        for t in (range(T - 1, -1, -1) if reverse else range(T)):
            z = xs[t] @ p['Wih'].T + h @ p['Whh'].T + p['bih'] + p['bhh']
            i = jax.nn.sigmoid(z[:, 0:H]); f = jax.nn.sigmoid(z[:, H:2 * H])
            g = jnp.tanh(z[:, 2 * H:3 * H]); o = jax.nn.sigmoid(z[:, 3 * H:4 * H])
            c = f * c + i * g
            h = o * jnp.tanh(c)
            outs[t] = h
        return outs

    xs = [x_tnf[t] for t in range(T)]
    ls = raw['lstm']
    h0f = lstm_dir(xs, ls[0], False)
    h0b = lstm_dir(xs, ls[1], True)
    x1 = [jnp.concatenate([h0f[t], h0b[t]], axis=1) for t in range(T)]
    h1f = lstm_dir(x1, ls[2], False)
    h1b = lstm_dir(x1, ls[3], True)

    temp = jnp.stack([jax.nn.relu(h1f[t] + h1b[t]) for t in range(T)], axis=1)
    flat = temp.reshape(N, T * H)
    z1 = jax.nn.relu(flat @ raw['W1'].T + raw['b1'])
    z2 = jax.nn.relu(z1 @ raw['W2'].T + raw['b2'])
    feat = jax.nn.relu(z2 @ raw['W3'].T + raw['b3'])
    A = jnp.tanh(feat @ raw['Wa'].T + raw['ba'])
    G = jax.nn.sigmoid(feat @ raw['Wg'].T + raw['bg'])
    a = ((A * G) @ raw['Wap'].T + raw['bap']).T                 # (1, N)
    w = jax.nn.softmax(a, axis=-1)
    M = w @ feat                                                # (1, 64)
    y = jax.nn.sigmoid(M @ raw['Wc'].T + raw['bc'])
    return y.reshape(1), (y >= 0.5).astype(jnp.float32).reshape(1), w


if __name__ == "__main__":
    key = jax.random.PRNGKey(0)
    k_x, k_p = jax.random.split(key)
    N = 8  # number of instances in the bag
    x = jax.random.normal(k_x, (1, N, SEQ_LEN, NUM_FEATURES), jnp.float32)
    raw = init_raw_params(k_p)
    packed = pack_params(raw, jnp.bfloat16)

    y_prob, y_hat, A = attention_forward(x, packed)
    jax.block_until_ready((y_prob, y_hat, A))

    # Check 1: Pallas kernel vs the same fused bf16 math in plain JAX.
    x_tnf = jnp.transpose(jnp.squeeze(x, 0), (1, 0, 2))
    x2 = jnp.pad(x_tnf, ((0, 0), (0, 0), (0, HP - NUM_FEATURES))).reshape(SEQ_LEN * N, HP)
    y1, _, a1 = _forward_fused(x2, packed, N)
    np.testing.assert_allclose(np.asarray(y_prob), np.asarray(y1).reshape(1),
                               rtol=1e-2, atol=1e-2)
    np.testing.assert_allclose(np.asarray(A), np.asarray(a1).reshape(1, N),
                               rtol=1e-2, atol=1e-2)

    # Check 2: fused/padded packing (run in f32) vs the direct torch-style math.
    packed_f32 = pack_params(raw, jnp.float32)
    y2, _, a2 = _forward_fused(x2, packed_f32, N)
    y_r, _, a_r = _forward_ref(x_tnf, raw)
    np.testing.assert_allclose(np.asarray(y2).reshape(1), np.asarray(y_r),
                               rtol=2e-3, atol=2e-3)
    np.testing.assert_allclose(np.asarray(a2).reshape(1, N), np.asarray(a_r),
                               rtol=2e-3, atol=2e-3)

    print("KERNEL_OK")
</pallas_src>

<mosaic_0001>
module attributes {stable_mosaic.version = 11 : i64} {
  func.func @_attention_kernel(%arg0: memref<80x64xf32, #tpu.memory_space<vmem>>, %arg1: memref<2x64x256xbf16, #tpu.memory_space<vmem>>, %arg2: memref<2x128x256xbf16, #tpu.memory_space<vmem>>, %arg3: memref<4x64x256xbf16, #tpu.memory_space<vmem>>, %arg4: memref<4x256xf32, #tpu.memory_space<vmem>>, %arg5: memref<640x384xbf16, #tpu.memory_space<vmem>>, %arg6: memref<384x256xbf16, #tpu.memory_space<vmem>>, %arg7: memref<256x64xbf16, #tpu.memory_space<vmem>>, %arg8: memref<3x384xf32, #tpu.memory_space<vmem>>, %arg9: memref<64x128xbf16, #tpu.memory_space<vmem>>, %arg10: memref<1x128xf32, #tpu.memory_space<vmem>>, %arg11: memref<64x2xbf16, #tpu.memory_space<vmem>>, %arg12: memref<1x2xf32, #tpu.memory_space<vmem>>, %arg13: memref<1x1xf32, #tpu.memory_space<vmem>>, %arg14: memref<1x1xf32, #tpu.memory_space<vmem>>, %arg15: memref<8x1xf32, #tpu.memory_space<vmem>>) attributes {dimension_semantics = [], scalar_prefetch = 0 : i64, scratch_operands = 0 : i64, tpu.core_type = #tpu.core_type<tc>} {
    %c0 = arith.constant 0 : index
    %c0_0 = arith.constant 0 : index
    %c0_1 = arith.constant 0 : index
    %0 = vector.load %arg1[%c0, %c0_0, %c0_1] : memref<2x64x256xbf16, #tpu.memory_space<vmem>>, vector<2x64x256xbf16>
    %c0_2 = arith.constant 0 : index
    %c0_3 = arith.constant 0 : index
    %c0_4 = arith.constant 0 : index
    %1 = vector.load %arg2[%c0_2, %c0_3, %c0_4] : memref<2x128x256xbf16, #tpu.memory_space<vmem>>, vector<2x128x256xbf16>
    %c0_5 = arith.constant 0 : index
    %c0_6 = arith.constant 0 : index
    %c0_7 = arith.constant 0 : index
    %2 = vector.load %arg3[%c0_5, %c0_6, %c0_7] : memref<4x64x256xbf16, #tpu.memory_space<vmem>>, vector<4x64x256xbf16>
    %c0_8 = arith.constant 0 : index
    %c0_9 = arith.constant 0 : index
    %3 = vector.load %arg4[%c0_8, %c0_9] : memref<4x256xf32, #tpu.memory_space<vmem>>, vector<4x256xf32>
    %c0_10 = arith.constant 0 : index
    %c0_11 = arith.constant 0 : index
    %4 = vector.load %arg5[%c0_10, %c0_11] : memref<640x384xbf16, #tpu.memory_space<vmem>>, vector<640x384xbf16>
    %c0_12 = arith.constant 0 : index
    %c0_13 = arith.constant 0 : index
    %5 = vector.load %arg6[%c0_12, %c0_13] : memref<384x256xbf16, #tpu.memory_space<vmem>>, vector<384x256xbf16>
    %c0_14 = arith.constant 0 : index
    %c0_15 = arith.constant 0 : index
    %6 = vector.load %arg7[%c0_14, %c0_15] : memref<256x64xbf16, #tpu.memory_space<vmem>>, vector<256x64xbf16>
    %c0_16 = arith.constant 0 : index
    %c0_17 = arith.constant 0 : index
    %7 = vector.load %arg8[%c0_16, %c0_17] : memref<3x384xf32, #tpu.memory_space<vmem>>, vector<3x384xf32>
    %c0_18 = arith.constant 0 : index
    %c0_19 = arith.constant 0 : index
    %8 = vector.load %arg9[%c0_18, %c0_19] : memref<64x128xbf16, #tpu.memory_space<vmem>>, vector<64x128xbf16>
    %c0_20 = arith.constant 0 : index
    %c0_21 = arith.constant 0 : index
    %9 = vector.load %arg10[%c0_20, %c0_21] : memref<1x128xf32, #tpu.memory_space<vmem>>, vector<1x128xf32>
    %c0_22 = arith.constant 0 : index
    %c0_23 = arith.constant 0 : index
    %10 = vector.load %arg11[%c0_22, %c0_23] : memref<64x2xbf16, #tpu.memory_space<vmem>>, vector<64x2xbf16>
    %c0_24 = arith.constant 0 : index
    %c0_25 = arith.constant 0 : index
    %11 = vector.load %arg12[%c0_24, %c0_25] : memref<1x2xf32, #tpu.memory_space<vmem>>, vector<1x2xf32>
    %c0_26 = arith.constant 0 : index
    %c0_27 = arith.constant 0 : index
    %12 = vector.load %arg0[%c0_26, %c0_27] : memref<80x64xf32, #tpu.memory_space<vmem>>, vector<80x64xf32>
    %13 = vector.extract_strided_slice %0 {offsets = [0, 0, 0], sizes = [1, 64, 256], strides = [1, 1, 1]} : vector<2x64x256xbf16> to vector<1x64x256xbf16>
    %14 = vector.shape_cast %13 : vector<1x64x256xbf16> to vector<64x256xbf16>
    %15 = arith.truncf %12 : vector<80x64xf32> to vector<80x64xbf16>
    %cst = arith.constant dense<0.000000e+00> : vector<80x256xf32>
    %16 = tpu.matmul %15, %14, %cst {dimension_numbers = #tpu.dot_dimension_numbers<[1], [0], [0], [1], [0, 0, 1, 1], [], []>} : vector<80x64xbf16>, vector<64x256xbf16>, vector<80x256xf32> -> vector<80x256xf32>
    %17 = vector.extract_strided_slice %3 {offsets = [0, 0], sizes = [1, 256], strides = [1, 1]} : vector<4x256xf32> to vector<1x256xf32>
    %18 = vector.broadcast %17 : vector<1x256xf32> to vector<80x256xf32>
    %19 = arith.addf %16, %18 : vector<80x256xf32>
    %20 = vector.extract_strided_slice %0 {offsets = [1, 0, 0], sizes = [1, 64, 256], strides = [1, 1, 1]} : vector<2x64x256xbf16> to vector<1x64x256xbf16>
    %21 = vector.shape_cast %20 : vector<1x64x256xbf16> to vector<64x256xbf16>
    %22 = arith.truncf %12 : vector<80x64xf32> to vector<80x64xbf16>
    %cst_28 = arith.constant dense<0.000000e+00> : vector<80x256xf32>
    %23 = tpu.matmul %22, %21, %cst_28 {dimension_numbers = #tpu.dot_dimension_numbers<[1], [0], [0], [1], [0, 0, 1, 1], [], []>} : vector<80x64xbf16>, vector<64x256xbf16>, vector<80x256xf32> -> vector<80x256xf32>
    %24 = vector.extract_strided_slice %3 {offsets = [1, 0], sizes = [1, 256], strides = [1, 1]} : vector<4x256xf32> to vector<1x256xf32>
    %25 = vector.broadcast %24 : vector<1x256xf32> to vector<80x256xf32>
    %26 = arith.addf %23, %25 : vector<80x256xf32>
    %27 = vector.extract_strided_slice %2 {offsets = [0, 0, 0], sizes = [1, 64, 256], strides = [1, 1, 1]} : vector<4x64x256xbf16> to vector<1x64x256xbf16>
    %28 = vector.shape_cast %27 : vector<1x64x256xbf16> to vector<64x256xbf16>
    %cst_29 = arith.constant 0.000000e+00 : f32
    %29 = vector.broadcast %cst_29 : f32 to vector<8x64xf32>
    %cst_30 = arith.constant 0.000000e+00 : f32
    %30 = vector.broadcast %cst_30 : f32 to vector<8x64xf32>
    %31 = vector.extract_strided_slice %19 {offsets = [0, 0], sizes = [8, 256], strides = [1, 1]} : vector<80x256xf32> to vector<8x256xf32>
    %32 = arith.truncf %29 : vector<8x64xf32> to vector<8x64xbf16>
    %cst_31 = arith.constant dense<0.000000e+00> : vector<8x256xf32>
    %33 = tpu.matmul %32, %28, %cst_31 {dimension_numbers = #tpu.dot_dimension_numbers<[1], [0], [0], [1], [0, 0, 1, 1], [], []>} : vector<8x64xbf16>, vector<64x256xbf16>, vector<8x256xf32> -> vector<8x256xf32>
    %34 = arith.addf %31, %33 : vector<8x256xf32>
    %35 = vector.extract_strided_slice %34 {offsets = [0, 0], sizes = [8, 64], strides = [1, 1]} : vector<8x256xf32> to vector<8x64xf32>
    %36 = arith.negf %35 : vector<8x64xf32>
    %37 = math.exp %36 : vector<8x64xf32>
    %cst_32 = arith.constant 1.000000e+00 : f32
    %38 = vector.broadcast %cst_32 : f32 to vector<8x64xf32>
    %39 = arith.addf %38, %37 : vector<8x64xf32>
    %40 = arith.divf %38, %39 : vector<8x64xf32>
    %41 = vector.extract_strided_slice %34 {offsets = [0, 64], sizes = [8, 64], strides = [1, 1]} : vector<8x256xf32> to vector<8x64xf32>
    %42 = arith.negf %41 : vector<8x64xf32>
    %43 = math.exp %42 : vector<8x64xf32>
    %cst_33 = arith.constant 1.000000e+00 : f32
    %44 = vector.broadcast %cst_33 : f32 to vector<8x64xf32>
    %45 = arith.addf %44, %43 : vector<8x64xf32>
    %46 = arith.divf %44, %45 : vector<8x64xf32>
    %47 = vector.extract_strided_slice %34 {offsets = [0, 128], sizes = [8, 64], strides = [1, 1]} : vector<8x256xf32> to vector<8x64xf32>
    %48 = math.tanh %47 : vector<8x64xf32>
    %49 = vector.extract_strided_slice %34 {offsets = [0, 192], sizes = [8, 64], strides = [1, 1]} : vector<8x256xf32> to vector<8x64xf32>
    %50 = arith.negf %49 : vector<8x64xf32>
    %51 = math.exp %50 : vector<8x64xf32>
    %cst_34 = arith.constant 1.000000e+00 : f32
    %52 = vector.broadcast %cst_34 : f32 to vector<8x64xf32>
    %53 = arith.addf %52, %51 : vector<8x64xf32>
    %54 = arith.divf %52, %53 : vector<8x64xf32>
    %55 = arith.mulf %46, %30 : vector<8x64xf32>
    %56 = arith.mulf %40, %48 : vector<8x64xf32>
    %57 = arith.addf %55, %56 : vector<8x64xf32>
    %58 = math.tanh %57 : vector<8x64xf32>
    %59 = arith.mulf %54, %58 : vector<8x64xf32>
    %60 = vector.extract_strided_slice %19 {offsets = [8, 0], sizes = [8, 256], strides = [1, 1]} : vector<80x256xf32> to vector<8x256xf32>
    %61 = arith.truncf %59 : vector<8x64xf32> to vector<8x64xbf16>
    %cst_35 = arith.constant dense<0.000000e+00> : vector<8x256xf32>
    %62 = tpu.matmul %61, %28, %cst_35 {dimension_numbers = #tpu.dot_dimension_numbers<[1], [0], [0], [1], [0, 0, 1, 1], [], []>} : vector<8x64xbf16>, vector<64x256xbf16>, vector<8x256xf32> -> vector<8x256xf32>
    %63 = arith.addf %60, %62 : vector<8x256xf32>
    %64 = vector.extract_strided_slice %63 {offsets = [0, 0], sizes = [8, 64], strides = [1, 1]} : vector<8x256xf32> to vector<8x64xf32>
    %65 = arith.negf %64 : vector<8x64xf32>
    %66 = math.exp %65 : vector<8x64xf32>
    %cst_36 = arith.constant 1.000000e+00 : f32
    %67 = vector.broadcast %cst_36 : f32 to vector<8x64xf32>
    %68 = arith.addf %67, %66 : vector<8x64xf32>
    %69 = arith.divf %67, %68 : vector<8x64xf32>
    %70 = vector.extract_strided_slice %63 {offsets = [0, 64], sizes = [8, 64], strides = [1, 1]} : vector<8x256xf32> to vector<8x64xf32>
    %71 = arith.negf %70 : vector<8x64xf32>
    %72 = math.exp %71 : vector<8x64xf32>
    %cst_37 = arith.constant 1.000000e+00 : f32
    %73 = vector.broadcast %cst_37 : f32 to vector<8x64xf32>
    %74 = arith.addf %73, %72 : vector<8x64xf32>
    %75 = arith.divf %73, %74 : vector<8x64xf32>
    %76 = vector.extract_strided_slice %63 {offsets = [0, 128], sizes = [8, 64], strides = [1, 1]} : vector<8x256xf32> to vector<8x64xf32>
    %77 = math.tanh %76 : vector<8x64xf32>
    %78 = vector.extract_strided_slice %63 {offsets = [0, 192], sizes = [8, 64], strides = [1, 1]} : vector<8x256xf32> to vector<8x64xf32>
    %79 = arith.negf %78 : vector<8x64xf32>
    %80 = math.exp %79 : vector<8x64xf32>
    %cst_38 = arith.constant 1.000000e+00 : f32
    %81 = vector.broadcast %cst_38 : f32 to vector<8x64xf32>
    %82 = arith.addf %81, %80 : vector<8x64xf32>
    %83 = arith.divf %81, %82 : vector<8x64xf32>
    %84 = arith.mulf %75, %57 : vector<8x64xf32>
    %85 = arith.mulf %69, %77 : vector<8x64xf32>
    %86 = arith.addf %84, %85 : vector<8x64xf32>
    %87 = math.tanh %86 : vector<8x64xf32>
    %88 = arith.mulf %83, %87 : vector<8x64xf32>
    %89 = vector.extract_strided_slice %19 {offsets = [16, 0], sizes = [8, 256], strides = [1, 1]} : vector<80x256xf32> to vector<8x256xf32>
    %90 = arith.truncf %88 : vector<8x64xf32> to vector<8x64xbf16>
    %cst_39 = arith.constant dense<0.000000e+00> : vector<8x256xf32>
    %91 = tpu.matmul %90, %28, %cst_39 {dimension_numbers = #tpu.dot_dimension_numbers<[1], [0], [0], [1], [0, 0, 1, 1], [], []>} : vector<8x64xbf16>, vector<64x256xbf16>, vector<8x256xf32> -> vector<8x256xf32>
    %92 = arith.addf %89, %91 : vector<8x256xf32>
    %93 = vector.extract_strided_slice %92 {offsets = [0, 0], sizes = [8, 64], strides = [1, 1]} : vector<8x256xf32> to vector<8x64xf32>
    %94 = arith.negf %93 : vector<8x64xf32>
    %95 = math.exp %94 : vector<8x64xf32>
    %cst_40 = arith.constant 1.000000e+00 : f32
    %96 = vector.broadcast %cst_40 : f32 to vector<8x64xf32>
    %97 = arith.addf %96, %95 : vector<8x64xf32>
    %98 = arith.divf %96, %97 : vector<8x64xf32>
    %99 = vector.extract_strided_slice %92 {offsets = [0, 64], sizes = [8, 64], strides = [1, 1]} : vector<8x256xf32> to vector<8x64xf32>
    %100 = arith.negf %99 : vector<8x64xf32>
    %101 = math.exp %100 : vector<8x64xf32>
    %cst_41 = arith.constant 1.000000e+00 : f32
    %102 = vector.broadcast %cst_41 : f32 to vector<8x64xf32>
    %103 = arith.addf %102, %101 : vector<8x64xf32>
    %104 = arith.divf %102, %103 : vector<8x64xf32>
    %105 = vector.extract_strided_slice %92 {offsets = [0, 128], sizes = [8, 64], strides = [1, 1]} : vector<8x256xf32> to vector<8x64xf32>
    %106 = math.tanh %105 : vector<8x64xf32>
    %107 = vector.extract_strided_slice %92 {offsets = [0, 192], sizes = [8, 64], strides = [1, 1]} : vector<8x256xf32> to vector<8x64xf32>
    %108 = arith.negf %107 : vector<8x64xf32>
    %109 = math.exp %108 : vector<8x64xf32>
    %cst_42 = arith.constant 1.000000e+00 : f32
    %110 = vector.broadcast %cst_42 : f32 to vector<8x64xf32>
    %111 = arith.addf %110, %109 : vector<8x64xf32>
    %112 = arith.divf %110, %111 : vector<8x64xf32>
    %113 = arith.mulf %104, %86 : vector<8x64xf32>
    %114 = arith.mulf %98, %106 : vector<8x64xf32>
    %115 = arith.addf %113, %114 : vector<8x64xf32>
    %116 = math.tanh %115 : vector<8x64xf32>
    %117 = arith.mulf %112, %116 : vector<8x64xf32>
    %118 = vector.extract_strided_slice %19 {offsets = [24, 0], sizes = [8, 256], strides = [1, 1]} : vector<80x256xf32> to vector<8x256xf32>
    %119 = arith.truncf %117 : vector<8x64xf32> to vector<8x64xbf16>
    %cst_43 = arith.constant dense<0.000000e+00> : vector<8x256xf32>
    %120 = tpu.matmul %119, %28, %cst_43 {dimension_numbers = #tpu.dot_dimension_numbers<[1], [0], [0], [1], [0, 0, 1, 1], [], []>} : vector<8x64xbf16>, vector<64x256xbf16>, vector<8x256xf32> -> vector<8x256xf32>
    %121 = arith.addf %118, %120 : vector<8x256xf32>
    %122 = vector.extract_strided_slice %121 {offsets = [0, 0], sizes = [8, 64], strides = [1, 1]} : vector<8x256xf32> to vector<8x64xf32>
    %123 = arith.negf %122 : vector<8x64xf32>
    %124 = math.exp %123 : vector<8x64xf32>
    %cst_44 = arith.constant 1.000000e+00 : f32
    %125 = vector.broadcast %cst_44 : f32 to vector<8x64xf32>
    %126 = arith.addf %125, %124 : vector<8x64xf32>
    %127 = arith.divf %125, %126 : vector<8x64xf32>
    %128 = vector.extract_strided_slice %121 {offsets = [0, 64], sizes = [8, 64], strides = [1, 1]} : vector<8x256xf32> to vector<8x64xf32>
    %129 = arith.negf %128 : vector<8x64xf32>
    %130 = math.exp %129 : vector<8x64xf32>
    %cst_45 = arith.constant 1.000000e+00 : f32
    %131 = vector.broadcast %cst_45 : f32 to vector<8x64xf32>
    %132 = arith.addf %131, %130 : vector<8x64xf32>
    %133 = arith.divf %131, %132 : vector<8x64xf32>
    %134 = vector.extract_strided_slice %121 {offsets = [0, 128], sizes = [8, 64], strides = [1, 1]} : vector<8x256xf32> to vector<8x64xf32>
    %135 = math.tanh %134 : vector<8x64xf32>
    %136 = vector.extract_strided_slice %121 {offsets = [0, 192], sizes = [8, 64], strides = [1, 1]} : vector<8x256xf32> to vector<8x64xf32>
    %137 = arith.negf %136 : vector<8x64xf32>
    %138 = math.exp %137 : vector<8x64xf32>
    %cst_46 = arith.constant 1.000000e+00 : f32
    %139 = vector.broadcast %cst_46 : f32 to vector<8x64xf32>
    %140 = arith.addf %139, %138 : vector<8x64xf32>
    %141 = arith.divf %139, %140 : vector<8x64xf32>
    %142 = arith.mulf %133, %115 : vector<8x64xf32>
    %143 = arith.mulf %127, %135 : vector<8x64xf32>
    %144 = arith.addf %142, %143 : vector<8x64xf32>
    %145 = math.tanh %144 : vector<8x64xf32>
    %146 = arith.mulf %141, %145 : vector<8x64xf32>
    %147 = vector.extract_strided_slice %19 {offsets = [32, 0], sizes = [8, 256], strides = [1, 1]} : vector<80x256xf32> to vector<8x256xf32>
    %148 = arith.truncf %146 : vector<8x64xf32> to vector<8x64xbf16>
    %cst_47 = arith.constant dense<0.000000e+00> : vector<8x256xf32>
    %149 = tpu.matmul %148, %28, %cst_47 {dimension_numbers = #tpu.dot_dimension_numbers<[1], [0], [0], [1], [0, 0, 1, 1], [], []>} : vector<8x64xbf16>, vector<64x256xbf16>, vector<8x256xf32> -> vector<8x256xf32>
    %150 = arith.addf %147, %149 : vector<8x256xf32>
    %151 = vector.extract_strided_slice %150 {offsets = [0, 0], sizes = [8, 64], strides = [1, 1]} : vector<8x256xf32> to vector<8x64xf32>
    %152 = arith.negf %151 : vector<8x64xf32>
    %153 = math.exp %152 : vector<8x64xf32>
    %cst_48 = arith.constant 1.000000e+00 : f32
    %154 = vector.broadcast %cst_48 : f32 to vector<8x64xf32>
    %155 = arith.addf %154, %153 : vector<8x64xf32>
    %156 = arith.divf %154, %155 : vector<8x64xf32>
    %157 = vector.extract_strided_slice %150 {offsets = [0, 64], sizes = [8, 64], strides = [1, 1]} : vector<8x256xf32> to vector<8x64xf32>
    %158 = arith.negf %157 : vector<8x64xf32>
    %159 = math.exp %158 : vector<8x64xf32>
    %cst_49 = arith.constant 1.000000e+00 : f32
    %160 = vector.broadcast %cst_49 : f32 to vector<8x64xf32>
    %161 = arith.addf %160, %159 : vector<8x64xf32>
    %162 = arith.divf %160, %161 : vector<8x64xf32>
    %163 = vector.extract_strided_slice %150 {offsets = [0, 128], sizes = [8, 64], strides = [1, 1]} : vector<8x256xf32> to vector<8x64xf32>
    %164 = math.tanh %163 : vector<8x64xf32>
    %165 = vector.extract_strided_slice %150 {offsets = [0, 192], sizes = [8, 64], strides = [1, 1]} : vector<8x256xf32> to vector<8x64xf32>
    %166 = arith.negf %165 : vector<8x64xf32>
    %167 = math.exp %166 : vector<8x64xf32>
    %cst_50 = arith.constant 1.000000e+00 : f32
    %168 = vector.broadcast %cst_50 : f32 to vector<8x64xf32>
    %169 = arith.addf %168, %167 : vector<8x64xf32>
    %170 = arith.divf %168, %169 : vector<8x64xf32>
    %171 = arith.mulf %162, %144 : vector<8x64xf32>
    %172 = arith.mulf %156, %164 : vector<8x64xf32>
    %173 = arith.addf %171, %172 : vector<8x64xf32>
    %174 = math.tanh %173 : vector<8x64xf32>
    %175 = arith.mulf %170, %174 : vector<8x64xf32>
    %176 = vector.extract_strided_slice %19 {offsets = [40, 0], sizes = [8, 256], strides = [1, 1]} : vector<80x256xf32> to vector<8x256xf32>
    %177 = arith.truncf %175 : vector<8x64xf32> to vector<8x64xbf16>
    %cst_51 = arith.constant dense<0.000000e+00> : vector<8x256xf32>
    %178 = tpu.matmul %177, %28, %cst_51 {dimension_numbers = #tpu.dot_dimension_numbers<[1], [0], [0], [1], [0, 0, 1, 1], [], []>} : vector<8x64xbf16>, vector<64x256xbf16>, vector<8x256xf32> -> vector<8x256xf32>
    %179 = arith.addf %176, %178 : vector<8x256xf32>
    %180 = vector.extract_strided_slice %179 {offsets = [0, 0], sizes = [8, 64], strides = [1, 1]} : vector<8x256xf32> to vector<8x64xf32>
    %181 = arith.negf %180 : vector<8x64xf32>
    %182 = math.exp %181 : vector<8x64xf32>
    %cst_52 = arith.constant 1.000000e+00 : f32
    %183 = vector.broadcast %cst_52 : f32 to vector<8x64xf32>
    %184 = arith.addf %183, %182 : vector<8x64xf32>
    %185 = arith.divf %183, %184 : vector<8x64xf32>
    %186 = vector.extract_strided_slice %179 {offsets = [0, 64], sizes = [8, 64], strides = [1, 1]} : vector<8x256xf32> to vector<8x64xf32>
    %187 = arith.negf %186 : vector<8x64xf32>
    %188 = math.exp %187 : vector<8x64xf32>
    %cst_53 = arith.constant 1.000000e+00 : f32
    %189 = vector.broadcast %cst_53 : f32 to vector<8x64xf32>
    %190 = arith.addf %189, %188 : vector<8x64xf32>
    %191 = arith.divf %189, %190 : vector<8x64xf32>
    %192 = vector.extract_strided_slice %179 {offsets = [0, 128], sizes = [8, 64], strides = [1, 1]} : vector<8x256xf32> to vector<8x64xf32>
    %193 = math.tanh %192 : vector<8x64xf32>
    %194 = vector.extract_strided_slice %179 {offsets = [0, 192], sizes = [8, 64], strides = [1, 1]} : vector<8x256xf32> to vector<8x64xf32>
    %195 = arith.negf %194 : vector<8x64xf32>
    %196 = math.exp %195 : vector<8x64xf32>
    %cst_54 = arith.constant 1.000000e+00 : f32
    %197 = vector.broadcast %cst_54 : f32 to vector<8x64xf32>
    %198 = arith.addf %197, %196 : vector<8x64xf32>
    %199 = arith.divf %197, %198 : vector<8x64xf32>
    %200 = arith.mulf %191, %173 : vector<8x64xf32>
    %201 = arith.mulf %185, %193 : vector<8x64xf32>
    %202 = arith.addf %200, %201 : vector<8x64xf32>
    %203 = math.tanh %202 : vector<8x64xf32>
    %204 = arith.mulf %199, %203 : vector<8x64xf32>
    %205 = vector.extract_strided_slice %19 {offsets = [48, 0], sizes = [8, 256], strides = [1, 1]} : vector<80x256xf32> to vector<8x256xf32>
    %206 = arith.truncf %204 : vector<8x64xf32> to vector<8x64xbf16>
    %cst_55 = arith.constant dense<0.000000e+00> : vector<8x256xf32>
    %207 = tpu.matmul %206, %28, %cst_55 {dimension_numbers = #tpu.dot_dimension_numbers<[1], [0], [0], [1], [0, 0, 1, 1], [], []>} : vector<8x64xbf16>, vector<64x256xbf16>, vector<8x256xf32> -> vector<8x256xf32>
    %208 = arith.addf %205, %207 : vector<8x256xf32>
    %209 = vector.extract_strided_slice %208 {offsets = [0, 0], sizes = [8, 64], strides = [1, 1]} : vector<8x256xf32> to vector<8x64xf32>
    %210 = arith.negf %209 : vector<8x64xf32>
    %211 = math.exp %210 : vector<8x64xf32>
    %cst_56 = arith.constant 1.000000e+00 : f32
    %212 = vector.broadcast %cst_56 : f32 to vector<8x64xf32>
    %213 = arith.addf %212, %211 : vector<8x64xf32>
    %214 = arith.divf %212, %213 : vector<8x64xf32>
    %215 = vector.extract_strided_slice %208 {offsets = [0, 64], sizes = [8, 64], strides = [1, 1]} : vector<8x256xf32> to vector<8x64xf32>
    %216 = arith.negf %215 : vector<8x64xf32>
    %217 = math.exp %216 : vector<8x64xf32>
    %cst_57 = arith.constant 1.000000e+00 : f32
    %218 = vector.broadcast %cst_57 : f32 to vector<8x64xf32>
    %219 = arith.addf %218, %217 : vector<8x64xf32>
    %220 = arith.divf %218, %219 : vector<8x64xf32>
    %221 = vector.extract_strided_slice %208 {offsets = [0, 128], sizes = [8, 64], strides = [1, 1]} : vector<8x256xf32> to vector<8x64xf32>
    %222 = math.tanh %221 : vector<8x64xf32>
    %223 = vector.extract_strided_slice %208 {offsets = [0, 192], sizes = [8, 64], strides = [1, 1]} : vector<8x256xf32> to vector<8x64xf32>
    %224 = arith.negf %223 : vector<8x64xf32>
    %225 = math.exp %224 : vector<8x64xf32>
    %cst_58 = arith.constant 1.000000e+00 : f32
    %226 = vector.broadcast %cst_58 : f32 to vector<8x64xf32>
    %227 = arith.addf %226, %225 : vector<8x64xf32>
    %228 = arith.divf %226, %227 : vector<8x64xf32>
    %229 = arith.mulf %220, %202 : vector<8x64xf32>
    %230 = arith.mulf %214, %222 : vector<8x64xf32>
    %231 = arith.addf %229, %230 : vector<8x64xf32>
    %232 = math.tanh %231 : vector<8x64xf32>
    %233 = arith.mulf %228, %232 : vector<8x64xf32>
    %234 = vector.extract_strided_slice %19 {offsets = [56, 0], sizes = [8, 256], strides = [1, 1]} : vector<80x256xf32> to vector<8x256xf32>
    %235 = arith.truncf %233 : vector<8x64xf32> to vector<8x64xbf16>
    %cst_59 = arith.constant dense<0.000000e+00> : vector<8x256xf32>
    %236 = tpu.matmul %235, %28, %cst_59 {dimension_numbers = #tpu.dot_dimension_numbers<[1], [0], [0], [1], [0, 0, 1, 1], [], []>} : vector<8x64xbf16>, vector<64x256xbf16>, vector<8x256xf32> -> vector<8x256xf32>
    %237 = arith.addf %234, %236 : vector<8x256xf32>
    %238 = vector.extract_strided_slice %237 {offsets = [0, 0], sizes = [8, 64], strides = [1, 1]} : vector<8x256xf32> to vector<8x64xf32>
    %239 = arith.negf %238 : vector<8x64xf32>
    %240 = math.exp %239 : vector<8x64xf32>
    %cst_60 = arith.constant 1.000000e+00 : f32
    %241 = vector.broadcast %cst_60 : f32 to vector<8x64xf32>
    %242 = arith.addf %241, %240 : vector<8x64xf32>
    %243 = arith.divf %241, %242 : vector<8x64xf32>
    %244 = vector.extract_strided_slice %237 {offsets = [0, 64], sizes = [8, 64], strides = [1, 1]} : vector<8x256xf32> to vector<8x64xf32>
    %245 = arith.negf %244 : vector<8x64xf32>
    %246 = math.exp %245 : vector<8x64xf32>
    %cst_61 = arith.constant 1.000000e+00 : f32
    %247 = vector.broadcast %cst_61 : f32 to vector<8x64xf32>
    %248 = arith.addf %247, %246 : vector<8x64xf32>
    %249 = arith.divf %247, %248 : vector<8x64xf32>
    %250 = vector.extract_strided_slice %237 {offsets = [0, 128], sizes = [8, 64], strides = [1, 1]} : vector<8x256xf32> to vector<8x64xf32>
    %251 = math.tanh %250 : vector<8x64xf32>
    %252 = vector.extract_strided_slice %237 {offsets = [0, 192], sizes = [8, 64], strides = [1, 1]} : vector<8x256xf32> to vector<8x64xf32>
    %253 = arith.negf %252 : vector<8x64xf32>
    %254 = math.exp %253 : vector<8x64xf32>
    %cst_62 = arith.constant 1.000000e+00 : f32
    %255 = vector.broadcast %cst_62 : f32 to vector<8x64xf32>
    %256 = arith.addf %255, %254 : vector<8x64xf32>
    %257 = arith.divf %255, %256 : vector<8x64xf32>
    %258 = arith.mulf %249, %231 : vector<8x64xf32>
    %259 = arith.mulf %243, %251 : vector<8x64xf32>
    %260 = arith.addf %258, %259 : vector<8x64xf32>
    %261 = math.tanh %260 : vector<8x64xf32>
    %262 = arith.mulf %257, %261 : vector<8x64xf32>
    %263 = vector.extract_strided_slice %19 {offsets = [64, 0], sizes = [8, 256], strides = [1, 1]} : vector<80x256xf32> to vector<8x256xf32>
    %264 = arith.truncf %262 : vector<8x64xf32> to vector<8x64xbf16>
    %cst_63 = arith.constant dense<0.000000e+00> : vector<8x256xf32>
    %265 = tpu.matmul %264, %28, %cst_63 {dimension_numbers = #tpu.dot_dimension_numbers<[1], [0], [0], [1], [0, 0, 1, 1], [], []>} : vector<8x64xbf16>, vector<64x256xbf16>, vector<8x256xf32> -> vector<8x256xf32>
    %266 = arith.addf %263, %265 : vector<8x256xf32>
    %267 = vector.extract_strided_slice %266 {offsets = [0, 0], sizes = [8, 64], strides = [1, 1]} : vector<8x256xf32> to vector<8x64xf32>
    %268 = arith.negf %267 : vector<8x64xf32>
    %269 = math.exp %268 : vector<8x64xf32>
    %cst_64 = arith.constant 1.000000e+00 : f32
    %270 = vector.broadcast %cst_64 : f32 to vector<8x64xf32>
    %271 = arith.addf %270, %269 : vector<8x64xf32>
    %272 = arith.divf %270, %271 : vector<8x64xf32>
    %273 = vector.extract_strided_slice %266 {offsets = [0, 64], sizes = [8, 64], strides = [1, 1]} : vector<8x256xf32> to vector<8x64xf32>
    %274 = arith.negf %273 : vector<8x64xf32>
    %275 = math.exp %274 : vector<8x64xf32>
    %cst_65 = arith.constant 1.000000e+00 : f32
    %276 = vector.broadcast %cst_65 : f32 to vector<8x64xf32>
    %277 = arith.addf %276, %275 : vector<8x64xf32>
    %278 = arith.divf %276, %277 : vector<8x64xf32>
    %279 = vector.extract_strided_slice %266 {offsets = [0, 128], sizes = [8, 64], strides = [1, 1]} : vector<8x256xf32> to vector<8x64xf32>
    %280 = math.tanh %279 : vector<8x64xf32>
    %281 = vector.extract_strided_slice %266 {offsets = [0, 192], sizes = [8, 64], strides = [1, 1]} : vector<8x256xf32> to vector<8x64xf32>
    %282 = arith.negf %281 : vector<8x64xf32>
    %283 = math.exp %282 : vector<8x64xf32>
    %cst_66 = arith.constant 1.000000e+00 : f32
    %284 = vector.broadcast %cst_66 : f32 to vector<8x64xf32>
    %285 = arith.addf %284, %283 : vector<8x64xf32>
    %286 = arith.divf %284, %285 : vector<8x64xf32>
    %287 = arith.mulf %278, %260 : vector<8x64xf32>
    %288 = arith.mulf %272, %280 : vector<8x64xf32>
    %289 = arith.addf %287, %288 : vector<8x64xf32>
    %290 = math.tanh %289 : vector<8x64xf32>
    %291 = arith.mulf %286, %290 : vector<8x64xf32>
    %292 = vector.extract_strided_slice %19 {offsets = [72, 0], sizes = [8, 256], strides = [1, 1]} : vector<80x256xf32> to vector<8x256xf32>
    %293 = arith.truncf %291 : vector<8x64xf32> to vector<8x64xbf16>
    %cst_67 = arith.constant dense<0.000000e+00> : vector<8x256xf32>
    %294 = tpu.matmul %293, %28, %cst_67 {dimension_numbers = #tpu.dot_dimension_numbers<[1], [0], [0], [1], [0, 0, 1, 1], [], []>} : vector<8x64xbf16>, vector<64x256xbf16>, vector<8x256xf32> -> vector<8x256xf32>
    %295 = arith.addf %292, %294 : vector<8x256xf32>
    %296 = vector.extract_strided_slice %295 {offsets = [0, 0], sizes = [8, 64], strides = [1, 1]} : vector<8x256xf32> to vector<8x64xf32>
    %297 = arith.negf %296 : vector<8x64xf32>
    %298 = math.exp %297 : vector<8x64xf32>
    %cst_68 = arith.constant 1.000000e+00 : f32
    %299 = vector.broadcast %cst_68 : f32 to vector<8x64xf32>
    %300 = arith.addf %299, %298 : vector<8x64xf32>
    %301 = arith.divf %299, %300 : vector<8x64xf32>
    %302 = vector.extract_strided_slice %295 {offsets = [0, 64], sizes = [8, 64], strides = [1, 1]} : vector<8x256xf32> to vector<8x64xf32>
    %303 = arith.negf %302 : vector<8x64xf32>
    %304 = math.exp %303 : vector<8x64xf32>
    %cst_69 = arith.constant 1.000000e+00 : f32
    %305 = vector.broadcast %cst_69 : f32 to vector<8x64xf32>
    %306 = arith.addf %305, %304 : vector<8x64xf32>
    %307 = arith.divf %305, %306 : vector<8x64xf32>
    %308 = vector.extract_strided_slice %295 {offsets = [0, 128], sizes = [8, 64], strides = [1, 1]} : vector<8x256xf32> to vector<8x64xf32>
    %309 = math.tanh %308 : vector<8x64xf32>
    %310 = vector.extract_strided_slice %295 {offsets = [0, 192], sizes = [8, 64], strides = [1, 1]} : vector<8x256xf32> to vector<8x64xf32>
    %311 = arith.negf %310 : vector<8x64xf32>
    %312 = math.exp %311 : vector<8x64xf32>
    %cst_70 = arith.constant 1.000000e+00 : f32
    %313 = vector.broadcast %cst_70 : f32 to vector<8x64xf32>
    %314 = arith.addf %313, %312 : vector<8x64xf32>
    %315 = arith.divf %313, %314 : vector<8x64xf32>
    %316 = arith.mulf %307, %289 : vector<8x64xf32>
    %317 = arith.mulf %301, %309 : vector<8x64xf32>
    %318 = arith.addf %316, %317 : vector<8x64xf32>
    %319 = math.tanh %318 : vector<8x64xf32>
    %320 = arith.mulf %315, %319 : vector<8x64xf32>
    %321 = vector.extract_strided_slice %2 {offsets = [1, 0, 0], sizes = [1, 64, 256], strides = [1, 1, 1]} : vector<4x64x256xbf16> to vector<1x64x256xbf16>
    %322 = vector.shape_cast %321 : vector<1x64x256xbf16> to vector<64x256xbf16>
    %cst_71 = arith.constant 0.000000e+00 : f32
    %323 = vector.broadcast %cst_71 : f32 to vector<8x64xf32>
    %cst_72 = arith.constant 0.000000e+00 : f32
    %324 = vector.broadcast %cst_72 : f32 to vector<8x64xf32>
    %325 = vector.extract_strided_slice %26 {offsets = [72, 0], sizes = [8, 256], strides = [1, 1]} : vector<80x256xf32> to vector<8x256xf32>
    %326 = arith.truncf %323 : vector<8x64xf32> to vector<8x64xbf16>
    %cst_73 = arith.constant dense<0.000000e+00> : vector<8x256xf32>
    %327 = tpu.matmul %326, %322, %cst_73 {dimension_numbers = #tpu.dot_dimension_numbers<[1], [0], [0], [1], [0, 0, 1, 1], [], []>} : vector<8x64xbf16>, vector<64x256xbf16>, vector<8x256xf32> -> vector<8x256xf32>
    %328 = arith.addf %325, %327 : vector<8x256xf32>
    %329 = vector.extract_strided_slice %328 {offsets = [0, 0], sizes = [8, 64], strides = [1, 1]} : vector<8x256xf32> to vector<8x64xf32>
    %330 = arith.negf %329 : vector<8x64xf32>
    %331 = math.exp %330 : vector<8x64xf32>
    %cst_74 = arith.constant 1.000000e+00 : f32
    %332 = vector.broadcast %cst_74 : f32 to vector<8x64xf32>
    %333 = arith.addf %332, %331 : vector<8x64xf32>
    %334 = arith.divf %332, %333 : vector<8x64xf32>
    %335 = vector.extract_strided_slice %328 {offsets = [0, 64], sizes = [8, 64], strides = [1, 1]} : vector<8x256xf32> to vector<8x64xf32>
    %336 = arith.negf %335 : vector<8x64xf32>
    %337 = math.exp %336 : vector<8x64xf32>
    %cst_75 = arith.constant 1.000000e+00 : f32
    %338 = vector.broadcast %cst_75 : f32 to vector<8x64xf32>
    %339 = arith.addf %338, %337 : vector<8x64xf32>
    %340 = arith.divf %338, %339 : vector<8x64xf32>
    %341 = vector.extract_strided_slice %328 {offsets = [0, 128], sizes = [8, 64], strides = [1, 1]} : vector<8x256xf32> to vector<8x64xf32>
    %342 = math.tanh %341 : vector<8x64xf32>
    %343 = vector.extract_strided_slice %328 {offsets = [0, 192], sizes = [8, 64], strides = [1, 1]} : vector<8x256xf32> to vector<8x64xf32>
    %344 = arith.negf %343 : vector<8x64xf32>
    %345 = math.exp %344 : vector<8x64xf32>
    %cst_76 = arith.constant 1.000000e+00 : f32
    %346 = vector.broadcast %cst_76 : f32 to vector<8x64xf32>
    %347 = arith.addf %346, %345 : vector<8x64xf32>
    %348 = arith.divf %346, %347 : vector<8x64xf32>
    %349 = arith.mulf %340, %324 : vector<8x64xf32>
    %350 = arith.mulf %334, %342 : vector<8x64xf32>
    %351 = arith.addf %349, %350 : vector<8x64xf32>
    %352 = math.tanh %351 : vector<8x64xf32>
    %353 = arith.mulf %348, %352 : vector<8x64xf32>
    %354 = vector.extract_strided_slice %26 {offsets = [64, 0], sizes = [8, 256], strides = [1, 1]} : vector<80x256xf32> to vector<8x256xf32>
    %355 = arith.truncf %353 : vector<8x64xf32> to vector<8x64xbf16>
    %cst_77 = arith.constant dense<0.000000e+00> : vector<8x256xf32>
    %356 = tpu.matmul %355, %322, %cst_77 {dimension_numbers = #tpu.dot_dimension_numbers<[1], [0], [0], [1], [0, 0, 1, 1], [], []>} : vector<8x64xbf16>, vector<64x256xbf16>, vector<8x256xf32> -> vector<8x256xf32>
    %357 = arith.addf %354, %356 : vector<8x256xf32>
    %358 = vector.extract_strided_slice %357 {offsets = [0, 0], sizes = [8, 64], strides = [1, 1]} : vector<8x256xf32> to vector<8x64xf32>
    %359 = arith.negf %358 : vector<8x64xf32>
    %360 = math.exp %359 : vector<8x64xf32>
    %cst_78 = arith.constant 1.000000e+00 : f32
    %361 = vector.broadcast %cst_78 : f32 to vector<8x64xf32>
    %362 = arith.addf %361, %360 : vector<8x64xf32>
    %363 = arith.divf %361, %362 : vector<8x64xf32>
    %364 = vector.extract_strided_slice %357 {offsets = [0, 64], sizes = [8, 64], strides = [1, 1]} : vector<8x256xf32> to vector<8x64xf32>
    %365 = arith.negf %364 : vector<8x64xf32>
    %366 = math.exp %365 : vector<8x64xf32>
    %cst_79 = arith.constant 1.000000e+00 : f32
    %367 = vector.broadcast %cst_79 : f32 to vector<8x64xf32>
    %368 = arith.addf %367, %366 : vector<8x64xf32>
    %369 = arith.divf %367, %368 : vector<8x64xf32>
    %370 = vector.extract_strided_slice %357 {offsets = [0, 128], sizes = [8, 64], strides = [1, 1]} : vector<8x256xf32> to vector<8x64xf32>
    %371 = math.tanh %370 : vector<8x64xf32>
    %372 = vector.extract_strided_slice %357 {offsets = [0, 192], sizes = [8, 64], strides = [1, 1]} : vector<8x256xf32> to vector<8x64xf32>
    %373 = arith.negf %372 : vector<8x64xf32>
    %374 = math.exp %373 : vector<8x64xf32>
    %cst_80 = arith.constant 1.000000e+00 : f32
    %375 = vector.broadcast %cst_80 : f32 to vector<8x64xf32>
    %376 = arith.addf %375, %374 : vector<8x64xf32>
    %377 = arith.divf %375, %376 : vector<8x64xf32>
    %378 = arith.mulf %369, %351 : vector<8x64xf32>
    %379 = arith.mulf %363, %371 : vector<8x64xf32>
    %380 = arith.addf %378, %379 : vector<8x64xf32>
    %381 = math.tanh %380 : vector<8x64xf32>
    %382 = arith.mulf %377, %381 : vector<8x64xf32>
    %383 = vector.extract_strided_slice %26 {offsets = [56, 0], sizes = [8, 256], strides = [1, 1]} : vector<80x256xf32> to vector<8x256xf32>
    %384 = arith.truncf %382 : vector<8x64xf32> to vector<8x64xbf16>
    %cst_81 = arith.constant dense<0.000000e+00> : vector<8x256xf32>
    %385 = tpu.matmul %384, %322, %cst_81 {dimension_numbers = #tpu.dot_dimension_numbers<[1], [0], [0], [1], [0, 0, 1, 1], [], []>} : vector<8x64xbf16>, vector<64x256xbf16>, vector<8x256xf32> -> vector<8x256xf32>
    %386 = arith.addf %383, %385 : vector<8x256xf32>
    %387 = vector.extract_strided_slice %386 {offsets = [0, 0], sizes = [8, 64], strides = [1, 1]} : vector<8x256xf32> to vector<8x64xf32>
    %388 = arith.negf %387 : vector<8x64xf32>
    %389 = math.exp %388 : vector<8x64xf32>
    %cst_82 = arith.constant 1.000000e+00 : f32
    %390 = vector.broadcast %cst_82 : f32 to vector<8x64xf32>
    %391 = arith.addf %390, %389 : vector<8x64xf32>
    %392 = arith.divf %390, %391 : vector<8x64xf32>
    %393 = vector.extract_strided_slice %386 {offsets = [0, 64], sizes = [8, 64], strides = [1, 1]} : vector<8x256xf32> to vector<8x64xf32>
    %394 = arith.negf %393 : vector<8x64xf32>
    %395 = math.exp %394 : vector<8x64xf32>
    %cst_83 = arith.constant 1.000000e+00 : f32
    %396 = vector.broadcast %cst_83 : f32 to vector<8x64xf32>
    %397 = arith.addf %396, %395 : vector<8x64xf32>
    %398 = arith.divf %396, %397 : vector<8x64xf32>
    %399 = vector.extract_strided_slice %386 {offsets = [0, 128], sizes = [8, 64], strides = [1, 1]} : vector<8x256xf32> to vector<8x64xf32>
    %400 = math.tanh %399 : vector<8x64xf32>
    %401 = vector.extract_strided_slice %386 {offsets = [0, 192], sizes = [8, 64], strides = [1, 1]} : vector<8x256xf32> to vector<8x64xf32>
    %402 = arith.negf %401 : vector<8x64xf32>
    %403 = math.exp %402 : vector<8x64xf32>
    %cst_84 = arith.constant 1.000000e+00 : f32
    %404 = vector.broadcast %cst_84 : f32 to vector<8x64xf32>
    %405 = arith.addf %404, %403 : vector<8x64xf32>
    %406 = arith.divf %404, %405 : vector<8x64xf32>
    %407 = arith.mulf %398, %380 : vector<8x64xf32>
    %408 = arith.mulf %392, %400 : vector<8x64xf32>
    %409 = arith.addf %407, %408 : vector<8x64xf32>
    %410 = math.tanh %409 : vector<8x64xf32>
    %411 = arith.mulf %406, %410 : vector<8x64xf32>
    %412 = vector.extract_strided_slice %26 {offsets = [48, 0], sizes = [8, 256], strides = [1, 1]} : vector<80x256xf32> to vector<8x256xf32>
    %413 = arith.truncf %411 : vector<8x64xf32> to vector<8x64xbf16>
    %cst_85 = arith.constant dense<0.000000e+00> : vector<8x256xf32>
    %414 = tpu.matmul %413, %322, %cst_85 {dimension_numbers = #tpu.dot_dimension_numbers<[1], [0], [0], [1], [0, 0, 1, 1], [], []>} : vector<8x64xbf16>, vector<64x256xbf16>, vector<8x256xf32> -> vector<8x256xf32>
    %415 = arith.addf %412, %414 : vector<8x256xf32>
    %416 = vector.extract_strided_slice %415 {offsets = [0, 0], sizes = [8, 64], strides = [1, 1]} : vector<8x256xf32> to vector<8x64xf32>
    %417 = arith.negf %416 : vector<8x64xf32>
    %418 = math.exp %417 : vector<8x64xf32>
    %cst_86 = arith.constant 1.000000e+00 : f32
    %419 = vector.broadcast %cst_86 : f32 to vector<8x64xf32>
    %420 = arith.addf %419, %418 : vector<8x64xf32>
    %421 = arith.divf %419, %420 : vector<8x64xf32>
    %422 = vector.extract_strided_slice %415 {offsets = [0, 64], sizes = [8, 64], strides = [1, 1]} : vector<8x256xf32> to vector<8x64xf32>
    %423 = arith.negf %422 : vector<8x64xf32>
    %424 = math.exp %423 : vector<8x64xf32>
    %cst_87 = arith.constant 1.000000e+00 : f32
    %425 = vector.broadcast %cst_87 : f32 to vector<8x64xf32>
    %426 = arith.addf %425, %424 : vector<8x64xf32>
    %427 = arith.divf %425, %426 : vector<8x64xf32>
    %428 = vector.extract_strided_slice %415 {offsets = [0, 128], sizes = [8, 64], strides = [1, 1]} : vector<8x256xf32> to vector<8x64xf32>
    %429 = math.tanh %428 : vector<8x64xf32>
    %430 = vector.extract_strided_slice %415 {offsets = [0, 192], sizes = [8, 64], strides = [1, 1]} : vector<8x256xf32> to vector<8x64xf32>
    %431 = arith.negf %430 : vector<8x64xf32>
    %432 = math.exp %431 : vector<8x64xf32>
    %cst_88 = arith.constant 1.000000e+00 : f32
    %433 = vector.broadcast %cst_88 : f32 to vector<8x64xf32>
    %434 = arith.addf %433, %432 : vector<8x64xf32>
    %435 = arith.divf %433, %434 : vector<8x64xf32>
    %436 = arith.mulf %427, %409 : vector<8x64xf32>
    %437 = arith.mulf %421, %429 : vector<8x64xf32>
    %438 = arith.addf %436, %437 : vector<8x64xf32>
    %439 = math.tanh %438 : vector<8x64xf32>
    %440 = arith.mulf %435, %439 : vector<8x64xf32>
    %441 = vector.extract_strided_slice %26 {offsets = [40, 0], sizes = [8, 256], strides = [1, 1]} : vector<80x256xf32> to vector<8x256xf32>
    %442 = arith.truncf %440 : vector<8x64xf32> to vector<8x64xbf16>
    %cst_89 = arith.constant dense<0.000000e+00> : vector<8x256xf32>
    %443 = tpu.matmul %442, %322, %cst_89 {dimension_numbers = #tpu.dot_dimension_numbers<[1], [0], [0], [1], [0, 0, 1, 1], [], []>} : vector<8x64xbf16>, vector<64x256xbf16>, vector<8x256xf32> -> vector<8x256xf32>
    %444 = arith.addf %441, %443 : vector<8x256xf32>
    %445 = vector.extract_strided_slice %444 {offsets = [0, 0], sizes = [8, 64], strides = [1, 1]} : vector<8x256xf32> to vector<8x64xf32>
    %446 = arith.negf %445 : vector<8x64xf32>
    %447 = math.exp %446 : vector<8x64xf32>
    %cst_90 = arith.constant 1.000000e+00 : f32
    %448 = vector.broadcast %cst_90 : f32 to vector<8x64xf32>
    %449 = arith.addf %448, %447 : vector<8x64xf32>
    %450 = arith.divf %448, %449 : vector<8x64xf32>
    %451 = vector.extract_strided_slice %444 {offsets = [0, 64], sizes = [8, 64], strides = [1, 1]} : vector<8x256xf32> to vector<8x64xf32>
    %452 = arith.negf %451 : vector<8x64xf32>
    %453 = math.exp %452 : vector<8x64xf32>
    %cst_91 = arith.constant 1.000000e+00 : f32
    %454 = vector.broadcast %cst_91 : f32 to vector<8x64xf32>
    %455 = arith.addf %454, %453 : vector<8x64xf32>
    %456 = arith.divf %454, %455 : vector<8x64xf32>
    %457 = vector.extract_strided_slice %444 {offsets = [0, 128], sizes = [8, 64], strides = [1, 1]} : vector<8x256xf32> to vector<8x64xf32>
    %458 = math.tanh %457 : vector<8x64xf32>
    %459 = vector.extract_strided_slice %444 {offsets = [0, 192], sizes = [8, 64], strides = [1, 1]} : vector<8x256xf32> to vector<8x64xf32>
    %460 = arith.negf %459 : vector<8x64xf32>
    %461 = math.exp %460 : vector<8x64xf32>
    %cst_92 = arith.constant 1.000000e+00 : f32
    %462 = vector.broadcast %cst_92 : f32 to vector<8x64xf32>
    %463 = arith.addf %462, %461 : vector<8x64xf32>
    %464 = arith.divf %462, %463 : vector<8x64xf32>
    %465 = arith.mulf %456, %438 : vector<8x64xf32>
    %466 = arith.mulf %450, %458 : vector<8x64xf32>
    %467 = arith.addf %465, %466 : vector<8x64xf32>
    %468 = math.tanh %467 : vector<8x64xf32>
    %469 = arith.mulf %464, %468 : vector<8x64xf32>
    %470 = vector.extract_strided_slice %26 {offsets = [32, 0], sizes = [8, 256], strides = [1, 1]} : vector<80x256xf32> to vector<8x256xf32>
    %471 = arith.truncf %469 : vector<8x64xf32> to vector<8x64xbf16>
    %cst_93 = arith.constant dense<0.000000e+00> : vector<8x256xf32>
    %472 = tpu.matmul %471, %322, %cst_93 {dimension_numbers = #tpu.dot_dimension_numbers<[1], [0], [0], [1], [0, 0, 1, 1], [], []>} : vector<8x64xbf16>, vector<64x256xbf16>, vector<8x256xf32> -> vector<8x256xf32>
    %473 = arith.addf %470, %472 : vector<8x256xf32>
    %474 = vector.extract_strided_slice %473 {offsets = [0, 0], sizes = [8, 64], strides = [1, 1]} : vector<8x256xf32> to vector<8x64xf32>
    %475 = arith.negf %474 : vector<8x64xf32>
    %476 = math.exp %475 : vector<8x64xf32>
    %cst_94 = arith.constant 1.000000e+00 : f32
    %477 = vector.broadcast %cst_94 : f32 to vector<8x64xf32>
    %478 = arith.addf %477, %476 : vector<8x64xf32>
    %479 = arith.divf %477, %478 : vector<8x64xf32>
    %480 = vector.extract_strided_slice %473 {offsets = [0, 64], sizes = [8, 64], strides = [1, 1]} : vector<8x256xf32> to vector<8x64xf32>
    %481 = arith.negf %480 : vector<8x64xf32>
    %482 = math.exp %481 : vector<8x64xf32>
    %cst_95 = arith.constant 1.000000e+00 : f32
    %483 = vector.broadcast %cst_95 : f32 to vector<8x64xf32>
    %484 = arith.addf %483, %482 : vector<8x64xf32>
    %485 = arith.divf %483, %484 : vector<8x64xf32>
    %486 = vector.extract_strided_slice %473 {offsets = [0, 128], sizes = [8, 64], strides = [1, 1]} : vector<8x256xf32> to vector<8x64xf32>
    %487 = math.tanh %486 : vector<8x64xf32>
    %488 = vector.extract_strided_slice %473 {offsets = [0, 192], sizes = [8, 64], strides = [1, 1]} : vector<8x256xf32> to vector<8x64xf32>
    %489 = arith.negf %488 : vector<8x64xf32>
    %490 = math.exp %489 : vector<8x64xf32>
    %cst_96 = arith.constant 1.000000e+00 : f32
    %491 = vector.broadcast %cst_96 : f32 to vector<8x64xf32>
    %492 = arith.addf %491, %490 : vector<8x64xf32>
    %493 = arith.divf %491, %492 : vector<8x64xf32>
    %494 = arith.mulf %485, %467 : vector<8x64xf32>
    %495 = arith.mulf %479, %487 : vector<8x64xf32>
    %496 = arith.addf %494, %495 : vector<8x64xf32>
    %497 = math.tanh %496 : vector<8x64xf32>
    %498 = arith.mulf %493, %497 : vector<8x64xf32>
    %499 = vector.extract_strided_slice %26 {offsets = [24, 0], sizes = [8, 256], strides = [1, 1]} : vector<80x256xf32> to vector<8x256xf32>
    %500 = arith.truncf %498 : vector<8x64xf32> to vector<8x64xbf16>
    %cst_97 = arith.constant dense<0.000000e+00> : vector<8x256xf32>
    %501 = tpu.matmul %500, %322, %cst_97 {dimension_numbers = #tpu.dot_dimension_numbers<[1], [0], [0], [1], [0, 0, 1, 1], [], []>} : vector<8x64xbf16>, vector<64x256xbf16>, vector<8x256xf32> -> vector<8x256xf32>
    %502 = arith.addf %499, %501 : vector<8x256xf32>
    %503 = vector.extract_strided_slice %502 {offsets = [0, 0], sizes = [8, 64], strides = [1, 1]} : vector<8x256xf32> to vector<8x64xf32>
    %504 = arith.negf %503 : vector<8x64xf32>
    %505 = math.exp %504 : vector<8x64xf32>
    %cst_98 = arith.constant 1.000000e+00 : f32
    %506 = vector.broadcast %cst_98 : f32 to vector<8x64xf32>
    %507 = arith.addf %506, %505 : vector<8x64xf32>
    %508 = arith.divf %506, %507 : vector<8x64xf32>
    %509 = vector.extract_strided_slice %502 {offsets = [0, 64], sizes = [8, 64], strides = [1, 1]} : vector<8x256xf32> to vector<8x64xf32>
    %510 = arith.negf %509 : vector<8x64xf32>
    %511 = math.exp %510 : vector<8x64xf32>
    %cst_99 = arith.constant 1.000000e+00 : f32
    %512 = vector.broadcast %cst_99 : f32 to vector<8x64xf32>
    %513 = arith.addf %512, %511 : vector<8x64xf32>
    %514 = arith.divf %512, %513 : vector<8x64xf32>
    %515 = vector.extract_strided_slice %502 {offsets = [0, 128], sizes = [8, 64], strides = [1, 1]} : vector<8x256xf32> to vector<8x64xf32>
    %516 = math.tanh %515 : vector<8x64xf32>
    %517 = vector.extract_strided_slice %502 {offsets = [0, 192], sizes = [8, 64], strides = [1, 1]} : vector<8x256xf32> to vector<8x64xf32>
    %518 = arith.negf %517 : vector<8x64xf32>
    %519 = math.exp %518 : vector<8x64xf32>
    %cst_100 = arith.constant 1.000000e+00 : f32
    %520 = vector.broadcast %cst_100 : f32 to vector<8x64xf32>
    %521 = arith.addf %520, %519 : vector<8x64xf32>
    %522 = arith.divf %520, %521 : vector<8x64xf32>
    %523 = arith.mulf %514, %496 : vector<8x64xf32>
    %524 = arith.mulf %508, %516 : vector<8x64xf32>
    %525 = arith.addf %523, %524 : vector<8x64xf32>
    %526 = math.tanh %525 : vector<8x64xf32>
    %527 = arith.mulf %522, %526 : vector<8x64xf32>
    %528 = vector.extract_strided_slice %26 {offsets = [16, 0], sizes = [8, 256], strides = [1, 1]} : vector<80x256xf32> to vector<8x256xf32>
    %529 = arith.truncf %527 : vector<8x64xf32> to vector<8x64xbf16>
    %cst_101 = arith.constant dense<0.000000e+00> : vector<8x256xf32>
    %530 = tpu.matmul %529, %322, %cst_101 {dimension_numbers = #tpu.dot_dimension_numbers<[1], [0], [0], [1], [0, 0, 1, 1], [], []>} : vector<8x64xbf16>, vector<64x256xbf16>, vector<8x256xf32> -> vector<8x256xf32>
    %531 = arith.addf %528, %530 : vector<8x256xf32>
    %532 = vector.extract_strided_slice %531 {offsets = [0, 0], sizes = [8, 64], strides = [1, 1]} : vector<8x256xf32> to vector<8x64xf32>
    %533 = arith.negf %532 : vector<8x64xf32>
    %534 = math.exp %533 : vector<8x64xf32>
    %cst_102 = arith.constant 1.000000e+00 : f32
    %535 = vector.broadcast %cst_102 : f32 to vector<8x64xf32>
    %536 = arith.addf %535, %534 : vector<8x64xf32>
    %537 = arith.divf %535, %536 : vector<8x64xf32>
    %538 = vector.extract_strided_slice %531 {offsets = [0, 64], sizes = [8, 64], strides = [1, 1]} : vector<8x256xf32> to vector<8x64xf32>
    %539 = arith.negf %538 : vector<8x64xf32>
    %540 = math.exp %539 : vector<8x64xf32>
    %cst_103 = arith.constant 1.000000e+00 : f32
    %541 = vector.broadcast %cst_103 : f32 to vector<8x64xf32>
    %542 = arith.addf %541, %540 : vector<8x64xf32>
    %543 = arith.divf %541, %542 : vector<8x64xf32>
    %544 = vector.extract_strided_slice %531 {offsets = [0, 128], sizes = [8, 64], strides = [1, 1]} : vector<8x256xf32> to vector<8x64xf32>
    %545 = math.tanh %544 : vector<8x64xf32>
    %546 = vector.extract_strided_slice %531 {offsets = [0, 192], sizes = [8, 64], strides = [1, 1]} : vector<8x256xf32> to vector<8x64xf32>
    %547 = arith.negf %546 : vector<8x64xf32>
    %548 = math.exp %547 : vector<8x64xf32>
    %cst_104 = arith.constant 1.000000e+00 : f32
    %549 = vector.broadcast %cst_104 : f32 to vector<8x64xf32>
    %550 = arith.addf %549, %548 : vector<8x64xf32>
    %551 = arith.divf %549, %550 : vector<8x64xf32>
    %552 = arith.mulf %543, %525 : vector<8x64xf32>
    %553 = arith.mulf %537, %545 : vector<8x64xf32>
    %554 = arith.addf %552, %553 : vector<8x64xf32>
    %555 = math.tanh %554 : vector<8x64xf32>
    %556 = arith.mulf %551, %555 : vector<8x64xf32>
    %557 = vector.extract_strided_slice %26 {offsets = [8, 0], sizes = [8, 256], strides = [1, 1]} : vector<80x256xf32> to vector<8x256xf32>
    %558 = arith.truncf %556 : vector<8x64xf32> to vector<8x64xbf16>
    %cst_105 = arith.constant dense<0.000000e+00> : vector<8x256xf32>
    %559 = tpu.matmul %558, %322, %cst_105 {dimension_numbers = #tpu.dot_dimension_numbers<[1], [0], [0], [1], [0, 0, 1, 1], [], []>} : vector<8x64xbf16>, vector<64x256xbf16>, vector<8x256xf32> -> vector<8x256xf32>
    %560 = arith.addf %557, %559 : vector<8x256xf32>
    %561 = vector.extract_strided_slice %560 {offsets = [0, 0], sizes = [8, 64], strides = [1, 1]} : vector<8x256xf32> to vector<8x64xf32>
    %562 = arith.negf %561 : vector<8x64xf32>
    %563 = math.exp %562 : vector<8x64xf32>
    %cst_106 = arith.constant 1.000000e+00 : f32
    %564 = vector.broadcast %cst_106 : f32 to vector<8x64xf32>
    %565 = arith.addf %564, %563 : vector<8x64xf32>
    %566 = arith.divf %564, %565 : vector<8x64xf32>
    %567 = vector.extract_strided_slice %560 {offsets = [0, 64], sizes = [8, 64], strides = [1, 1]} : vector<8x256xf32> to vector<8x64xf32>
    %568 = arith.negf %567 : vector<8x64xf32>
    %569 = math.exp %568 : vector<8x64xf32>
    %cst_107 = arith.constant 1.000000e+00 : f32
    %570 = vector.broadcast %cst_107 : f32 to vector<8x64xf32>
    %571 = arith.addf %570, %569 : vector<8x64xf32>
    %572 = arith.divf %570, %571 : vector<8x64xf32>
    %573 = vector.extract_strided_slice %560 {offsets = [0, 128], sizes = [8, 64], strides = [1, 1]} : vector<8x256xf32> to vector<8x64xf32>
    %574 = math.tanh %573 : vector<8x64xf32>
    %575 = vector.extract_strided_slice %560 {offsets = [0, 192], sizes = [8, 64], strides = [1, 1]} : vector<8x256xf32> to vector<8x64xf32>
    %576 = arith.negf %575 : vector<8x64xf32>
    %577 = math.exp %576 : vector<8x64xf32>
    %cst_108 = arith.constant 1.000000e+00 : f32
    %578 = vector.broadcast %cst_108 : f32 to vector<8x64xf32>
    %579 = arith.addf %578, %577 : vector<8x64xf32>
    %580 = arith.divf %578, %579 : vector<8x64xf32>
    %581 = arith.mulf %572, %554 : vector<8x64xf32>
    %582 = arith.mulf %566, %574 : vector<8x64xf32>
    %583 = arith.addf %581, %582 : vector<8x64xf32>
    %584 = math.tanh %583 : vector<8x64xf32>
    %585 = arith.mulf %580, %584 : vector<8x64xf32>
    %586 = vector.extract_strided_slice %26 {offsets = [0, 0], sizes = [8, 256], strides = [1, 1]} : vector<80x256xf32> to vector<8x256xf32>
    %587 = arith.truncf %585 : vector<8x64xf32> to vector<8x64xbf16>
    %cst_109 = arith.constant dense<0.000000e+00> : vector<8x256xf32>
    %588 = tpu.matmul %587, %322, %cst_109 {dimension_numbers = #tpu.dot_dimension_numbers<[1], [0], [0], [1], [0, 0, 1, 1], [], []>} : vector<8x64xbf16>, vector<64x256xbf16>, vector<8x256xf32> -> vector<8x256xf32>
    %589 = arith.addf %586, %588 : vector<8x256xf32>
    %590 = vector.extract_strided_slice %589 {offsets = [0, 0], sizes = [8, 64], strides = [1, 1]} : vector<8x256xf32> to vector<8x64xf32>
    %591 = arith.negf %590 : vector<8x64xf32>
    %592 = math.exp %591 : vector<8x64xf32>
    %cst_110 = arith.constant 1.000000e+00 : f32
    %593 = vector.broadcast %cst_110 : f32 to vector<8x64xf32>
    %594 = arith.addf %593, %592 : vector<8x64xf32>
    %595 = arith.divf %593, %594 : vector<8x64xf32>
    %596 = vector.extract_strided_slice %589 {offsets = [0, 64], sizes = [8, 64], strides = [1, 1]} : vector<8x256xf32> to vector<8x64xf32>
    %597 = arith.negf %596 : vector<8x64xf32>
    %598 = math.exp %597 : vector<8x64xf32>
    %cst_111 = arith.constant 1.000000e+00 : f32
    %599 = vector.broadcast %cst_111 : f32 to vector<8x64xf32>
    %600 = arith.addf %599, %598 : vector<8x64xf32>
    %601 = arith.divf %599, %600 : vector<8x64xf32>
    %602 = vector.extract_strided_slice %589 {offsets = [0, 128], sizes = [8, 64], strides = [1, 1]} : vector<8x256xf32> to vector<8x64xf32>
    %603 = math.tanh %602 : vector<8x64xf32>
    %604 = vector.extract_strided_slice %589 {offsets = [0, 192], sizes = [8, 64], strides = [1, 1]} : vector<8x256xf32> to vector<8x64xf32>
    %605 = arith.negf %604 : vector<8x64xf32>
    %606 = math.exp %605 : vector<8x64xf32>
    %cst_112 = arith.constant 1.000000e+00 : f32
    %607 = vector.broadcast %cst_112 : f32 to vector<8x64xf32>
    %608 = arith.addf %607, %606 : vector<8x64xf32>
    %609 = arith.divf %607, %608 : vector<8x64xf32>
    %610 = arith.mulf %601, %583 : vector<8x64xf32>
    %611 = arith.mulf %595, %603 : vector<8x64xf32>
    %612 = arith.addf %610, %611 : vector<8x64xf32>
    %613 = math.tanh %612 : vector<8x64xf32>
    %614 = arith.mulf %609, %613 : vector<8x64xf32>
    %615 = tpu.concatenate %59, %614 in 1 : vector<8x64xf32>, vector<8x64xf32> -> vector<8x128xf32>
    %616 = tpu.concatenate %88, %585 in 1 : vector<8x64xf32>, vector<8x64xf32> -> vector<8x128xf32>
    %617 = tpu.concatenate %117, %556 in 1 : vector<8x64xf32>, vector<8x64xf32> -> vector<8x128xf32>
    %618 = tpu.concatenate %146, %527 in 1 : vector<8x64xf32>, vector<8x64xf32> -> vector<8x128xf32>
    %619 = tpu.concatenate %175, %498 in 1 : vector<8x64xf32>, vector<8x64xf32> -> vector<8x128xf32>
    %620 = tpu.concatenate %204, %469 in 1 : vector<8x64xf32>, vector<8x64xf32> -> vector<8x128xf32>
    %621 = tpu.concatenate %233, %440 in 1 : vector<8x64xf32>, vector<8x64xf32> -> vector<8x128xf32>
    %622 = tpu.concatenate %262, %411 in 1 : vector<8x64xf32>, vector<8x64xf32> -> vector<8x128xf32>
    %623 = tpu.concatenate %291, %382 in 1 : vector<8x64xf32>, vector<8x64xf32> -> vector<8x128xf32>
    %624 = tpu.concatenate %320, %353 in 1 : vector<8x64xf32>, vector<8x64xf32> -> vector<8x128xf32>
    %625 = tpu.concatenate %615, %616, %617, %618, %619, %620, %621, %622, %623, %624 in 0 : vector<8x128xf32>, vector<8x128xf32>, vector<8x128xf32>, vector<8x128xf32>, vector<8x128xf32>, vector<8x128xf32>, vector<8x128xf32>, vector<8x128xf32>, vector<8x128xf32>, vector<8x128xf32> -> vector<80x128xf32>
    %626 = vector.extract_strided_slice %1 {offsets = [0, 0, 0], sizes = [1, 128, 256], strides = [1, 1, 1]} : vector<2x128x256xbf16> to vector<1x128x256xbf16>
    %627 = vector.shape_cast %626 : vector<1x128x256xbf16> to vector<128x256xbf16>
    %628 = arith.truncf %625 : vector<80x128xf32> to vector<80x128xbf16>
    %cst_113 = arith.constant dense<0.000000e+00> : vector<80x256xf32>
    %629 = tpu.matmul %628, %627, %cst_113 {dimension_numbers = #tpu.dot_dimension_numbers<[1], [0], [0], [1], [0, 0, 1, 1], [], []>} : vector<80x128xbf16>, vector<128x256xbf16>, vector<80x256xf32> -> vector<80x256xf32>
    %630 = vector.extract_strided_slice %3 {offsets = [2, 0], sizes = [1, 256], strides = [1, 1]} : vector<4x256xf32> to vector<1x256xf32>
    %631 = vector.broadcast %630 : vector<1x256xf32> to vector<80x256xf32>
    %632 = arith.addf %629, %631 : vector<80x256xf32>
    %633 = vector.extract_strided_slice %1 {offsets = [1, 0, 0], sizes = [1, 128, 256], strides = [1, 1, 1]} : vector<2x128x256xbf16> to vector<1x128x256xbf16>
    %634 = vector.shape_cast %633 : vector<1x128x256xbf16> to vector<128x256xbf16>
    %635 = arith.truncf %625 : vector<80x128xf32> to vector<80x128xbf16>
    %cst_114 = arith.constant dense<0.000000e+00> : vector<80x256xf32>
    %636 = tpu.matmul %635, %634, %cst_114 {dimension_numbers = #tpu.dot_dimension_numbers<[1], [0], [0], [1], [0, 0, 1, 1], [], []>} : vector<80x128xbf16>, vector<128x256xbf16>, vector<80x256xf32> -> vector<80x256xf32>
    %637 = vector.extract_strided_slice %3 {offsets = [3, 0], sizes = [1, 256], strides = [1, 1]} : vector<4x256xf32> to vector<1x256xf32>
    %638 = vector.broadcast %637 : vector<1x256xf32> to vector<80x256xf32>
    %639 = arith.addf %636, %638 : vector<80x256xf32>
    %640 = vector.extract_strided_slice %2 {offsets = [2, 0, 0], sizes = [1, 64, 256], strides = [1, 1, 1]} : vector<4x64x256xbf16> to vector<1x64x256xbf16>
    %641 = vector.shape_cast %640 : vector<1x64x256xbf16> to vector<64x256xbf16>
    %cst_115 = arith.constant 0.000000e+00 : f32
    %642 = vector.broadcast %cst_115 : f32 to vector<8x64xf32>
    %cst_116 = arith.constant 0.000000e+00 : f32
    %643 = vector.broadcast %cst_116 : f32 to vector<8x64xf32>
    %644 = vector.extract_strided_slice %632 {offsets = [0, 0], sizes = [8, 256], strides = [1, 1]} : vector<80x256xf32> to vector<8x256xf32>
    %645 = arith.truncf %642 : vector<8x64xf32> to vector<8x64xbf16>
    %cst_117 = arith.constant dense<0.000000e+00> : vector<8x256xf32>
    %646 = tpu.matmul %645, %641, %cst_117 {dimension_numbers = #tpu.dot_dimension_numbers<[1], [0], [0], [1], [0, 0, 1, 1], [], []>} : vector<8x64xbf16>, vector<64x256xbf16>, vector<8x256xf32> -> vector<8x256xf32>
    %647 = arith.addf %644, %646 : vector<8x256xf32>
    %648 = vector.extract_strided_slice %647 {offsets = [0, 0], sizes = [8, 64], strides = [1, 1]} : vector<8x256xf32> to vector<8x64xf32>
    %649 = arith.negf %648 : vector<8x64xf32>
    %650 = math.exp %649 : vector<8x64xf32>
    %cst_118 = arith.constant 1.000000e+00 : f32
    %651 = vector.broadcast %cst_118 : f32 to vector<8x64xf32>
    %652 = arith.addf %651, %650 : vector<8x64xf32>
    %653 = arith.divf %651, %652 : vector<8x64xf32>
    %654 = vector.extract_strided_slice %647 {offsets = [0, 64], sizes = [8, 64], strides = [1, 1]} : vector<8x256xf32> to vector<8x64xf32>
    %655 = arith.negf %654 : vector<8x64xf32>
    %656 = math.exp %655 : vector<8x64xf32>
    %cst_119 = arith.constant 1.000000e+00 : f32
    %657 = vector.broadcast %cst_119 : f32 to vector<8x64xf32>
    %658 = arith.addf %657, %656 : vector<8x64xf32>
    %659 = arith.divf %657, %658 : vector<8x64xf32>
    %660 = vector.extract_strided_slice %647 {offsets = [0, 128], sizes = [8, 64], strides = [1, 1]} : vector<8x256xf32> to vector<8x64xf32>
    %661 = math.tanh %660 : vector<8x64xf32>
    %662 = vector.extract_strided_slice %647 {offsets = [0, 192], sizes = [8, 64], strides = [1, 1]} : vector<8x256xf32> to vector<8x64xf32>
    %663 = arith.negf %662 : vector<8x64xf32>
    %664 = math.exp %663 : vector<8x64xf32>
    %cst_120 = arith.constant 1.000000e+00 : f32
    %665 = vector.broadcast %cst_120 : f32 to vector<8x64xf32>
    %666 = arith.addf %665, %664 : vector<8x64xf32>
    %667 = arith.divf %665, %666 : vector<8x64xf32>
    %668 = arith.mulf %659, %643 : vector<8x64xf32>
    %669 = arith.mulf %653, %661 : vector<8x64xf32>
    %670 = arith.addf %668, %669 : vector<8x64xf32>
    %671 = math.tanh %670 : vector<8x64xf32>
    %672 = arith.mulf %667, %671 : vector<8x64xf32>
    %673 = vector.extract_strided_slice %632 {offsets = [8, 0], sizes = [8, 256], strides = [1, 1]} : vector<80x256xf32> to vector<8x256xf32>
    %674 = arith.truncf %672 : vector<8x64xf32> to vector<8x64xbf16>
    %cst_121 = arith.constant dense<0.000000e+00> : vector<8x256xf32>
    %675 = tpu.matmul %674, %641, %cst_121 {dimension_numbers = #tpu.dot_dimension_numbers<[1], [0], [0], [1], [0, 0, 1, 1], [], []>} : vector<8x64xbf16>, vector<64x256xbf16>, vector<8x256xf32> -> vector<8x256xf32>
    %676 = arith.addf %673, %675 : vector<8x256xf32>
    %677 = vector.extract_strided_slice %676 {offsets = [0, 0], sizes = [8, 64], strides = [1, 1]} : vector<8x256xf32> to vector<8x64xf32>
    %678 = arith.negf %677 : vector<8x64xf32>
    %679 = math.exp %678 : vector<8x64xf32>
    %cst_122 = arith.constant 1.000000e+00 : f32
    %680 = vector.broadcast %cst_122 : f32 to vector<8x64xf32>
    %681 = arith.addf %680, %679 : vector<8x64xf32>
    %682 = arith.divf %680, %681 : vector<8x64xf32>
    %683 = vector.extract_strided_slice %676 {offsets = [0, 64], sizes = [8, 64], strides = [1, 1]} : vector<8x256xf32> to vector<8x64xf32>
    %684 = arith.negf %683 : vector<8x64xf32>
    %685 = math.exp %684 : vector<8x64xf32>
    %cst_123 = arith.constant 1.000000e+00 : f32
    %686 = vector.broadcast %cst_123 : f32 to vector<8x64xf32>
    %687 = arith.addf %686, %685 : vector<8x64xf32>
    %688 = arith.divf %686, %687 : vector<8x64xf32>
    %689 = vector.extract_strided_slice %676 {offsets = [0, 128], sizes = [8, 64], strides = [1, 1]} : vector<8x256xf32> to vector<8x64xf32>
    %690 = math.tanh %689 : vector<8x64xf32>
    %691 = vector.extract_strided_slice %676 {offsets = [0, 192], sizes = [8, 64], strides = [1, 1]} : vector<8x256xf32> to vector<8x64xf32>
    %692 = arith.negf %691 : vector<8x64xf32>
    %693 = math.exp %692 : vector<8x64xf32>
    %cst_124 = arith.constant 1.000000e+00 : f32
    %694 = vector.broadcast %cst_124 : f32 to vector<8x64xf32>
    %695 = arith.addf %694, %693 : vector<8x64xf32>
    %696 = arith.divf %694, %695 : vector<8x64xf32>
    %697 = arith.mulf %688, %670 : vector<8x64xf32>
    %698 = arith.mulf %682, %690 : vector<8x64xf32>
    %699 = arith.addf %697, %698 : vector<8x64xf32>
    %700 = math.tanh %699 : vector<8x64xf32>
    %701 = arith.mulf %696, %700 : vector<8x64xf32>
    %702 = vector.extract_strided_slice %632 {offsets = [16, 0], sizes = [8, 256], strides = [1, 1]} : vector<80x256xf32> to vector<8x256xf32>
    %703 = arith.truncf %701 : vector<8x64xf32> to vector<8x64xbf16>
    %cst_125 = arith.constant dense<0.000000e+00> : vector<8x256xf32>
    %704 = tpu.matmul %703, %641, %cst_125 {dimension_numbers = #tpu.dot_dimension_numbers<[1], [0], [0], [1], [0, 0, 1, 1], [], []>} : vector<8x64xbf16>, vector<64x256xbf16>, vector<8x256xf32> -> vector<8x256xf32>
    %705 = arith.addf %702, %704 : vector<8x256xf32>
    %706 = vector.extract_strided_slice %705 {offsets = [0, 0], sizes = [8, 64], strides = [1, 1]} : vector<8x256xf32> to vector<8x64xf32>
    %707 = arith.negf %706 : vector<8x64xf32>
    %708 = math.exp %707 : vector<8x64xf32>
    %cst_126 = arith.constant 1.000000e+00 : f32
    %709 = vector.broadcast %cst_126 : f32 to vector<8x64xf32>
    %710 = arith.addf %709, %708 : vector<8x64xf32>
    %711 = arith.divf %709, %710 : vector<8x64xf32>
    %712 = vector.extract_strided_slice %705 {offsets = [0, 64], sizes = [8, 64], strides = [1, 1]} : vector<8x256xf32> to vector<8x64xf32>
    %713 = arith.negf %712 : vector<8x64xf32>
    %714 = math.exp %713 : vector<8x64xf32>
    %cst_127 = arith.constant 1.000000e+00 : f32
    %715 = vector.broadcast %cst_127 : f32 to vector<8x64xf32>
    %716 = arith.addf %715, %714 : vector<8x64xf32>
    %717 = arith.divf %715, %716 : vector<8x64xf32>
    %718 = vector.extract_strided_slice %705 {offsets = [0, 128], sizes = [8, 64], strides = [1, 1]} : vector<8x256xf32> to vector<8x64xf32>
    %719 = math.tanh %718 : vector<8x64xf32>
    %720 = vector.extract_strided_slice %705 {offsets = [0, 192], sizes = [8, 64], strides = [1, 1]} : vector<8x256xf32> to vector<8x64xf32>
    %721 = arith.negf %720 : vector<8x64xf32>
    %722 = math.exp %721 : vector<8x64xf32>
    %cst_128 = arith.constant 1.000000e+00 : f32
    %723 = vector.broadcast %cst_128 : f32 to vector<8x64xf32>
    %724 = arith.addf %723, %722 : vector<8x64xf32>
    %725 = arith.divf %723, %724 : vector<8x64xf32>
    %726 = arith.mulf %717, %699 : vector<8x64xf32>
    %727 = arith.mulf %711, %719 : vector<8x64xf32>
    %728 = arith.addf %726, %727 : vector<8x64xf32>
    %729 = math.tanh %728 : vector<8x64xf32>
    %730 = arith.mulf %725, %729 : vector<8x64xf32>
    %731 = vector.extract_strided_slice %632 {offsets = [24, 0], sizes = [8, 256], strides = [1, 1]} : vector<80x256xf32> to vector<8x256xf32>
    %732 = arith.truncf %730 : vector<8x64xf32> to vector<8x64xbf16>
    %cst_129 = arith.constant dense<0.000000e+00> : vector<8x256xf32>
    %733 = tpu.matmul %732, %641, %cst_129 {dimension_numbers = #tpu.dot_dimension_numbers<[1], [0], [0], [1], [0, 0, 1, 1], [], []>} : vector<8x64xbf16>, vector<64x256xbf16>, vector<8x256xf32> -> vector<8x256xf32>
    %734 = arith.addf %731, %733 : vector<8x256xf32>
    %735 = vector.extract_strided_slice %734 {offsets = [0, 0], sizes = [8, 64], strides = [1, 1]} : vector<8x256xf32> to vector<8x64xf32>
    %736 = arith.negf %735 : vector<8x64xf32>
    %737 = math.exp %736 : vector<8x64xf32>
    %cst_130 = arith.constant 1.000000e+00 : f32
    %738 = vector.broadcast %cst_130 : f32 to vector<8x64xf32>
    %739 = arith.addf %738, %737 : vector<8x64xf32>
    %740 = arith.divf %738, %739 : vector<8x64xf32>
    %741 = vector.extract_strided_slice %734 {offsets = [0, 64], sizes = [8, 64], strides = [1, 1]} : vector<8x256xf32> to vector<8x64xf32>
    %742 = arith.negf %741 : vector<8x64xf32>
    %743 = math.exp %742 : vector<8x64xf32>
    %cst_131 = arith.constant 1.000000e+00 : f32
    %744 = vector.broadcast %cst_131 : f32 to vector<8x64xf32>
    %745 = arith.addf %744, %743 : vector<8x64xf32>
    %746 = arith.divf %744, %745 : vector<8x64xf32>
    %747 = vector.extract_strided_slice %734 {offsets = [0, 128], sizes = [8, 64], strides = [1, 1]} : vector<8x256xf32> to vector<8x64xf32>
    %748 = math.tanh %747 : vector<8x64xf32>
    %749 = vector.extract_strided_slice %734 {offsets = [0, 192], sizes = [8, 64], strides = [1, 1]} : vector<8x256xf32> to vector<8x64xf32>
    %750 = arith.negf %749 : vector<8x64xf32>
    %751 = math.exp %750 : vector<8x64xf32>
    %cst_132 = arith.constant 1.000000e+00 : f32
    %752 = vector.broadcast %cst_132 : f32 to vector<8x64xf32>
    %753 = arith.addf %752, %751 : vector<8x64xf32>
    %754 = arith.divf %752, %753 : vector<8x64xf32>
    %755 = arith.mulf %746, %728 : vector<8x64xf32>
    %756 = arith.mulf %740, %748 : vector<8x64xf32>
    %757 = arith.addf %755, %756 : vector<8x64xf32>
    %758 = math.tanh %757 : vector<8x64xf32>
    %759 = arith.mulf %754, %758 : vector<8x64xf32>
    %760 = vector.extract_strided_slice %632 {offsets = [32, 0], sizes = [8, 256], strides = [1, 1]} : vector<80x256xf32> to vector<8x256xf32>
    %761 = arith.truncf %759 : vector<8x64xf32> to vector<8x64xbf16>
    %cst_133 = arith.constant dense<0.000000e+00> : vector<8x256xf32>
    %762 = tpu.matmul %761, %641, %cst_133 {dimension_numbers = #tpu.dot_dimension_numbers<[1], [0], [0], [1], [0, 0, 1, 1], [], []>} : vector<8x64xbf16>, vector<64x256xbf16>, vector<8x256xf32> -> vector<8x256xf32>
    %763 = arith.addf %760, %762 : vector<8x256xf32>
    %764 = vector.extract_strided_slice %763 {offsets = [0, 0], sizes = [8, 64], strides = [1, 1]} : vector<8x256xf32> to vector<8x64xf32>
    %765 = arith.negf %764 : vector<8x64xf32>
    %766 = math.exp %765 : vector<8x64xf32>
    %cst_134 = arith.constant 1.000000e+00 : f32
    %767 = vector.broadcast %cst_134 : f32 to vector<8x64xf32>
    %768 = arith.addf %767, %766 : vector<8x64xf32>
    %769 = arith.divf %767, %768 : vector<8x64xf32>
    %770 = vector.extract_strided_slice %763 {offsets = [0, 64], sizes = [8, 64], strides = [1, 1]} : vector<8x256xf32> to vector<8x64xf32>
    %771 = arith.negf %770 : vector<8x64xf32>
    %772 = math.exp %771 : vector<8x64xf32>
    %cst_135 = arith.constant 1.000000e+00 : f32
    %773 = vector.broadcast %cst_135 : f32 to vector<8x64xf32>
    %774 = arith.addf %773, %772 : vector<8x64xf32>
    %775 = arith.divf %773, %774 : vector<8x64xf32>
    %776 = vector.extract_strided_slice %763 {offsets = [0, 128], sizes = [8, 64], strides = [1, 1]} : vector<8x256xf32> to vector<8x64xf32>
    %777 = math.tanh %776 : vector<8x64xf32>
    %778 = vector.extract_strided_slice %763 {offsets = [0, 192], sizes = [8, 64], strides = [1, 1]} : vector<8x256xf32> to vector<8x64xf32>
    %779 = arith.negf %778 : vector<8x64xf32>
    %780 = math.exp %779 : vector<8x64xf32>
    %cst_136 = arith.constant 1.000000e+00 : f32
    %781 = vector.broadcast %cst_136 : f32 to vector<8x64xf32>
    %782 = arith.addf %781, %780 : vector<8x64xf32>
    %783 = arith.divf %781, %782 : vector<8x64xf32>
    %784 = arith.mulf %775, %757 : vector<8x64xf32>
    %785 = arith.mulf %769, %777 : vector<8x64xf32>
    %786 = arith.addf %784, %785 : vector<8x64xf32>
    %787 = math.tanh %786 : vector<8x64xf32>
    %788 = arith.mulf %783, %787 : vector<8x64xf32>
    %789 = vector.extract_strided_slice %632 {offsets = [40, 0], sizes = [8, 256], strides = [1, 1]} : vector<80x256xf32> to vector<8x256xf32>
    %790 = arith.truncf %788 : vector<8x64xf32> to vector<8x64xbf16>
    %cst_137 = arith.constant dense<0.000000e+00> : vector<8x256xf32>
    %791 = tpu.matmul %790, %641, %cst_137 {dimension_numbers = #tpu.dot_dimension_numbers<[1], [0], [0], [1], [0, 0, 1, 1], [], []>} : vector<8x64xbf16>, vector<64x256xbf16>, vector<8x256xf32> -> vector<8x256xf32>
    %792 = arith.addf %789, %791 : vector<8x256xf32>
    %793 = vector.extract_strided_slice %792 {offsets = [0, 0], sizes = [8, 64], strides = [1, 1]} : vector<8x256xf32> to vector<8x64xf32>
    %794 = arith.negf %793 : vector<8x64xf32>
    %795 = math.exp %794 : vector<8x64xf32>
    %cst_138 = arith.constant 1.000000e+00 : f32
    %796 = vector.broadcast %cst_138 : f32 to vector<8x64xf32>
    %797 = arith.addf %796, %795 : vector<8x64xf32>
    %798 = arith.divf %796, %797 : vector<8x64xf32>
    %799 = vector.extract_strided_slice %792 {offsets = [0, 64], sizes = [8, 64], strides = [1, 1]} : vector<8x256xf32> to vector<8x64xf32>
    %800 = arith.negf %799 : vector<8x64xf32>
    %801 = math.exp %800 : vector<8x64xf32>
    %cst_139 = arith.constant 1.000000e+00 : f32
    %802 = vector.broadcast %cst_139 : f32 to vector<8x64xf32>
    %803 = arith.addf %802, %801 : vector<8x64xf32>
    %804 = arith.divf %802, %803 : vector<8x64xf32>
    %805 = vector.extract_strided_slice %792 {offsets = [0, 128], sizes = [8, 64], strides = [1, 1]} : vector<8x256xf32> to vector<8x64xf32>
    %806 = math.tanh %805 : vector<8x64xf32>
    %807 = vector.extract_strided_slice %792 {offsets = [0, 192], sizes = [8, 64], strides = [1, 1]} : vector<8x256xf32> to vector<8x64xf32>
    %808 = arith.negf %807 : vector<8x64xf32>
    %809 = math.exp %808 : vector<8x64xf32>
    %cst_140 = arith.constant 1.000000e+00 : f32
    %810 = vector.broadcast %cst_140 : f32 to vector<8x64xf32>
    %811 = arith.addf %810, %809 : vector<8x64xf32>
    %812 = arith.divf %810, %811 : vector<8x64xf32>
    %813 = arith.mulf %804, %786 : vector<8x64xf32>
    %814 = arith.mulf %798, %806 : vector<8x64xf32>
    %815 = arith.addf %813, %814 : vector<8x64xf32>
    %816 = math.tanh %815 : vector<8x64xf32>
    %817 = arith.mulf %812, %816 : vector<8x64xf32>
    %818 = vector.extract_strided_slice %632 {offsets = [48, 0], sizes = [8, 256], strides = [1, 1]} : vector<80x256xf32> to vector<8x256xf32>
    %819 = arith.truncf %817 : vector<8x64xf32> to vector<8x64xbf16>
    %cst_141 = arith.constant dense<0.000000e+00> : vector<8x256xf32>
    %820 = tpu.matmul %819, %641, %cst_141 {dimension_numbers = #tpu.dot_dimension_numbers<[1], [0], [0], [1], [0, 0, 1, 1], [], []>} : vector<8x64xbf16>, vector<64x256xbf16>, vector<8x256xf32> -> vector<8x256xf32>
    %821 = arith.addf %818, %820 : vector<8x256xf32>
    %822 = vector.extract_strided_slice %821 {offsets = [0, 0], sizes = [8, 64], strides = [1, 1]} : vector<8x256xf32> to vector<8x64xf32>
    %823 = arith.negf %822 : vector<8x64xf32>
    %824 = math.exp %823 : vector<8x64xf32>
    %cst_142 = arith.constant 1.000000e+00 : f32
    %825 = vector.broadcast %cst_142 : f32 to vector<8x64xf32>
    %826 = arith.addf %825, %824 : vector<8x64xf32>
    %827 = arith.divf %825, %826 : vector<8x64xf32>
    %828 = vector.extract_strided_slice %821 {offsets = [0, 64], sizes = [8, 64], strides = [1, 1]} : vector<8x256xf32> to vector<8x64xf32>
    %829 = arith.negf %828 : vector<8x64xf32>
    %830 = math.exp %829 : vector<8x64xf32>
    %cst_143 = arith.constant 1.000000e+00 : f32
    %831 = vector.broadcast %cst_143 : f32 to vector<8x64xf32>
    %832 = arith.addf %831, %830 : vector<8x64xf32>
    %833 = arith.divf %831, %832 : vector<8x64xf32>
    %834 = vector.extract_strided_slice %821 {offsets = [0, 128], sizes = [8, 64], strides = [1, 1]} : vector<8x256xf32> to vector<8x64xf32>
    %835 = math.tanh %834 : vector<8x64xf32>
    %836 = vector.extract_strided_slice %821 {offsets = [0, 192], sizes = [8, 64], strides = [1, 1]} : vector<8x256xf32> to vector<8x64xf32>
    %837 = arith.negf %836 : vector<8x64xf32>
    %838 = math.exp %837 : vector<8x64xf32>
    %cst_144 = arith.constant 1.000000e+00 : f32
    %839 = vector.broadcast %cst_144 : f32 to vector<8x64xf32>
    %840 = arith.addf %839, %838 : vector<8x64xf32>
    %841 = arith.divf %839, %840 : vector<8x64xf32>
    %842 = arith.mulf %833, %815 : vector<8x64xf32>
    %843 = arith.mulf %827, %835 : vector<8x64xf32>
    %844 = arith.addf %842, %843 : vector<8x64xf32>
    %845 = math.tanh %844 : vector<8x64xf32>
    %846 = arith.mulf %841, %845 : vector<8x64xf32>
    %847 = vector.extract_strided_slice %632 {offsets = [56, 0], sizes = [8, 256], strides = [1, 1]} : vector<80x256xf32> to vector<8x256xf32>
    %848 = arith.truncf %846 : vector<8x64xf32> to vector<8x64xbf16>
    %cst_145 = arith.constant dense<0.000000e+00> : vector<8x256xf32>
    %849 = tpu.matmul %848, %641, %cst_145 {dimension_numbers = #tpu.dot_dimension_numbers<[1], [0], [0], [1], [0, 0, 1, 1], [], []>} : vector<8x64xbf16>, vector<64x256xbf16>, vector<8x256xf32> -> vector<8x256xf32>
    %850 = arith.addf %847, %849 : vector<8x256xf32>
    %851 = vector.extract_strided_slice %850 {offsets = [0, 0], sizes = [8, 64], strides = [1, 1]} : vector<8x256xf32> to vector<8x64xf32>
    %852 = arith.negf %851 : vector<8x64xf32>
    %853 = math.exp %852 : vector<8x64xf32>
    %cst_146 = arith.constant 1.000000e+00 : f32
    %854 = vector.broadcast %cst_146 : f32 to vector<8x64xf32>
    %855 = arith.addf %854, %853 : vector<8x64xf32>
    %856 = arith.divf %854, %855 : vector<8x64xf32>
    %857 = vector.extract_strided_slice %850 {offsets = [0, 64], sizes = [8, 64], strides = [1, 1]} : vector<8x256xf32> to vector<8x64xf32>
    %858 = arith.negf %857 : vector<8x64xf32>
    %859 = math.exp %858 : vector<8x64xf32>
    %cst_147 = arith.constant 1.000000e+00 : f32
    %860 = vector.broadcast %cst_147 : f32 to vector<8x64xf32>
    %861 = arith.addf %860, %859 : vector<8x64xf32>
    %862 = arith.divf %860, %861 : vector<8x64xf32>
    %863 = vector.extract_strided_slice %850 {offsets = [0, 128], sizes = [8, 64], strides = [1, 1]} : vector<8x256xf32> to vector<8x64xf32>
    %864 = math.tanh %863 : vector<8x64xf32>
    %865 = vector.extract_strided_slice %850 {offsets = [0, 192], sizes = [8, 64], strides = [1, 1]} : vector<8x256xf32> to vector<8x64xf32>
    %866 = arith.negf %865 : vector<8x64xf32>
    %867 = math.exp %866 : vector<8x64xf32>
    %cst_148 = arith.constant 1.000000e+00 : f32
    %868 = vector.broadcast %cst_148 : f32 to vector<8x64xf32>
    %869 = arith.addf %868, %867 : vector<8x64xf32>
    %870 = arith.divf %868, %869 : vector<8x64xf32>
    %871 = arith.mulf %862, %844 : vector<8x64xf32>
    %872 = arith.mulf %856, %864 : vector<8x64xf32>
    %873 = arith.addf %871, %872 : vector<8x64xf32>
    %874 = math.tanh %873 : vector<8x64xf32>
    %875 = arith.mulf %870, %874 : vector<8x64xf32>
    %876 = vector.extract_strided_slice %632 {offsets = [64, 0], sizes = [8, 256], strides = [1, 1]} : vector<80x256xf32> to vector<8x256xf32>
    %877 = arith.truncf %875 : vector<8x64xf32> to vector<8x64xbf16>
    %cst_149 = arith.constant dense<0.000000e+00> : vector<8x256xf32>
    %878 = tpu.matmul %877, %641, %cst_149 {dimension_numbers = #tpu.dot_dimension_numbers<[1], [0], [0], [1], [0, 0, 1, 1], [], []>} : vector<8x64xbf16>, vector<64x256xbf16>, vector<8x256xf32> -> vector<8x256xf32>
    %879 = arith.addf %876, %878 : vector<8x256xf32>
    %880 = vector.extract_strided_slice %879 {offsets = [0, 0], sizes = [8, 64], strides = [1, 1]} : vector<8x256xf32> to vector<8x64xf32>
    %881 = arith.negf %880 : vector<8x64xf32>
    %882 = math.exp %881 : vector<8x64xf32>
    %cst_150 = arith.constant 1.000000e+00 : f32
    %883 = vector.broadcast %cst_150 : f32 to vector<8x64xf32>
    %884 = arith.addf %883, %882 : vector<8x64xf32>
    %885 = arith.divf %883, %884 : vector<8x64xf32>
    %886 = vector.extract_strided_slice %879 {offsets = [0, 64], sizes = [8, 64], strides = [1, 1]} : vector<8x256xf32> to vector<8x64xf32>
    %887 = arith.negf %886 : vector<8x64xf32>
    %888 = math.exp %887 : vector<8x64xf32>
    %cst_151 = arith.constant 1.000000e+00 : f32
    %889 = vector.broadcast %cst_151 : f32 to vector<8x64xf32>
    %890 = arith.addf %889, %888 : vector<8x64xf32>
    %891 = arith.divf %889, %890 : vector<8x64xf32>
    %892 = vector.extract_strided_slice %879 {offsets = [0, 128], sizes = [8, 64], strides = [1, 1]} : vector<8x256xf32> to vector<8x64xf32>
    %893 = math.tanh %892 : vector<8x64xf32>
    %894 = vector.extract_strided_slice %879 {offsets = [0, 192], sizes = [8, 64], strides = [1, 1]} : vector<8x256xf32> to vector<8x64xf32>
    %895 = arith.negf %894 : vector<8x64xf32>
    %896 = math.exp %895 : vector<8x64xf32>
    %cst_152 = arith.constant 1.000000e+00 : f32
    %897 = vector.broadcast %cst_152 : f32 to vector<8x64xf32>
    %898 = arith.addf %897, %896 : vector<8x64xf32>
    %899 = arith.divf %897, %898 : vector<8x64xf32>
    %900 = arith.mulf %891, %873 : vector<8x64xf32>
    %901 = arith.mulf %885, %893 : vector<8x64xf32>
    %902 = arith.addf %900, %901 : vector<8x64xf32>
    %903 = math.tanh %902 : vector<8x64xf32>
    %904 = arith.mulf %899, %903 : vector<8x64xf32>
    %905 = vector.extract_strided_slice %632 {offsets = [72, 0], sizes = [8, 256], strides = [1, 1]} : vector<80x256xf32> to vector<8x256xf32>
    %906 = arith.truncf %904 : vector<8x64xf32> to vector<8x64xbf16>
    %cst_153 = arith.constant dense<0.000000e+00> : vector<8x256xf32>
    %907 = tpu.matmul %906, %641, %cst_153 {dimension_numbers = #tpu.dot_dimension_numbers<[1], [0], [0], [1], [0, 0, 1, 1], [], []>} : vector<8x64xbf16>, vector<64x256xbf16>, vector<8x256xf32> -> vector<8x256xf32>
    %908 = arith.addf %905, %907 : vector<8x256xf32>
    %909 = vector.extract_strided_slice %908 {offsets = [0, 0], sizes = [8, 64], strides = [1, 1]} : vector<8x256xf32> to vector<8x64xf32>
    %910 = arith.negf %909 : vector<8x64xf32>
    %911 = math.exp %910 : vector<8x64xf32>
    %cst_154 = arith.constant 1.000000e+00 : f32
    %912 = vector.broadcast %cst_154 : f32 to vector<8x64xf32>
    %913 = arith.addf %912, %911 : vector<8x64xf32>
    %914 = arith.divf %912, %913 : vector<8x64xf32>
    %915 = vector.extract_strided_slice %908 {offsets = [0, 64], sizes = [8, 64], strides = [1, 1]} : vector<8x256xf32> to vector<8x64xf32>
    %916 = arith.negf %915 : vector<8x64xf32>
    %917 = math.exp %916 : vector<8x64xf32>
    %cst_155 = arith.constant 1.000000e+00 : f32
    %918 = vector.broadcast %cst_155 : f32 to vector<8x64xf32>
    %919 = arith.addf %918, %917 : vector<8x64xf32>
    %920 = arith.divf %918, %919 : vector<8x64xf32>
    %921 = vector.extract_strided_slice %908 {offsets = [0, 128], sizes = [8, 64], strides = [1, 1]} : vector<8x256xf32> to vector<8x64xf32>
    %922 = math.tanh %921 : vector<8x64xf32>
    %923 = vector.extract_strided_slice %908 {offsets = [0, 192], sizes = [8, 64], strides = [1, 1]} : vector<8x256xf32> to vector<8x64xf32>
    %924 = arith.negf %923 : vector<8x64xf32>
    %925 = math.exp %924 : vector<8x64xf32>
    %cst_156 = arith.constant 1.000000e+00 : f32
    %926 = vector.broadcast %cst_156 : f32 to vector<8x64xf32>
    %927 = arith.addf %926, %925 : vector<8x64xf32>
    %928 = arith.divf %926, %927 : vector<8x64xf32>
    %929 = arith.mulf %920, %902 : vector<8x64xf32>
    %930 = arith.mulf %914, %922 : vector<8x64xf32>
    %931 = arith.addf %929, %930 : vector<8x64xf32>
    %932 = math.tanh %931 : vector<8x64xf32>
    %933 = arith.mulf %928, %932 : vector<8x64xf32>
    %934 = vector.extract_strided_slice %2 {offsets = [3, 0, 0], sizes = [1, 64, 256], strides = [1, 1, 1]} : vector<4x64x256xbf16> to vector<1x64x256xbf16>
    %935 = vector.shape_cast %934 : vector<1x64x256xbf16> to vector<64x256xbf16>
    %cst_157 = arith.constant 0.000000e+00 : f32
    %936 = vector.broadcast %cst_157 : f32 to vector<8x64xf32>
    %cst_158 = arith.constant 0.000000e+00 : f32
    %937 = vector.broadcast %cst_158 : f32 to vector<8x64xf32>
    %938 = vector.extract_strided_slice %639 {offsets = [72, 0], sizes = [8, 256], strides = [1, 1]} : vector<80x256xf32> to vector<8x256xf32>
    %939 = arith.truncf %936 : vector<8x64xf32> to vector<8x64xbf16>
    %cst_159 = arith.constant dense<0.000000e+00> : vector<8x256xf32>
    %940 = tpu.matmul %939, %935, %cst_159 {dimension_numbers = #tpu.dot_dimension_numbers<[1], [0], [0], [1], [0, 0, 1, 1], [], []>} : vector<8x64xbf16>, vector<64x256xbf16>, vector<8x256xf32> -> vector<8x256xf32>
    %941 = arith.addf %938, %940 : vector<8x256xf32>
    %942 = vector.extract_strided_slice %941 {offsets = [0, 0], sizes = [8, 64], strides = [1, 1]} : vector<8x256xf32> to vector<8x64xf32>
    %943 = arith.negf %942 : vector<8x64xf32>
    %944 = math.exp %943 : vector<8x64xf32>
    %cst_160 = arith.constant 1.000000e+00 : f32
    %945 = vector.broadcast %cst_160 : f32 to vector<8x64xf32>
    %946 = arith.addf %945, %944 : vector<8x64xf32>
    %947 = arith.divf %945, %946 : vector<8x64xf32>
    %948 = vector.extract_strided_slice %941 {offsets = [0, 64], sizes = [8, 64], strides = [1, 1]} : vector<8x256xf32> to vector<8x64xf32>
    %949 = arith.negf %948 : vector<8x64xf32>
    %950 = math.exp %949 : vector<8x64xf32>
    %cst_161 = arith.constant 1.000000e+00 : f32
    %951 = vector.broadcast %cst_161 : f32 to vector<8x64xf32>
    %952 = arith.addf %951, %950 : vector<8x64xf32>
    %953 = arith.divf %951, %952 : vector<8x64xf32>
    %954 = vector.extract_strided_slice %941 {offsets = [0, 128], sizes = [8, 64], strides = [1, 1]} : vector<8x256xf32> to vector<8x64xf32>
    %955 = math.tanh %954 : vector<8x64xf32>
    %956 = vector.extract_strided_slice %941 {offsets = [0, 192], sizes = [8, 64], strides = [1, 1]} : vector<8x256xf32> to vector<8x64xf32>
    %957 = arith.negf %956 : vector<8x64xf32>
    %958 = math.exp %957 : vector<8x64xf32>
    %cst_162 = arith.constant 1.000000e+00 : f32
    %959 = vector.broadcast %cst_162 : f32 to vector<8x64xf32>
    %960 = arith.addf %959, %958 : vector<8x64xf32>
    %961 = arith.divf %959, %960 : vector<8x64xf32>
    %962 = arith.mulf %953, %937 : vector<8x64xf32>
    %963 = arith.mulf %947, %955 : vector<8x64xf32>
    %964 = arith.addf %962, %963 : vector<8x64xf32>
    %965 = math.tanh %964 : vector<8x64xf32>
    %966 = arith.mulf %961, %965 : vector<8x64xf32>
    %967 = vector.extract_strided_slice %639 {offsets = [64, 0], sizes = [8, 256], strides = [1, 1]} : vector<80x256xf32> to vector<8x256xf32>
    %968 = arith.truncf %966 : vector<8x64xf32> to vector<8x64xbf16>
    %cst_163 = arith.constant dense<0.000000e+00> : vector<8x256xf32>
    %969 = tpu.matmul %968, %935, %cst_163 {dimension_numbers = #tpu.dot_dimension_numbers<[1], [0], [0], [1], [0, 0, 1, 1], [], []>} : vector<8x64xbf16>, vector<64x256xbf16>, vector<8x256xf32> -> vector<8x256xf32>
    %970 = arith.addf %967, %969 : vector<8x256xf32>
    %971 = vector.extract_strided_slice %970 {offsets = [0, 0], sizes = [8, 64], strides = [1, 1]} : vector<8x256xf32> to vector<8x64xf32>
    %972 = arith.negf %971 : vector<8x64xf32>
    %973 = math.exp %972 : vector<8x64xf32>
    %cst_164 = arith.constant 1.000000e+00 : f32
    %974 = vector.broadcast %cst_164 : f32 to vector<8x64xf32>
    %975 = arith.addf %974, %973 : vector<8x64xf32>
    %976 = arith.divf %974, %975 : vector<8x64xf32>
    %977 = vector.extract_strided_slice %970 {offsets = [0, 64], sizes = [8, 64], strides = [1, 1]} : vector<8x256xf32> to vector<8x64xf32>
    %978 = arith.negf %977 : vector<8x64xf32>
    %979 = math.exp %978 : vector<8x64xf32>
    %cst_165 = arith.constant 1.000000e+00 : f32
    %980 = vector.broadcast %cst_165 : f32 to vector<8x64xf32>
    %981 = arith.addf %980, %979 : vector<8x64xf32>
    %982 = arith.divf %980, %981 : vector<8x64xf32>
    %983 = vector.extract_strided_slice %970 {offsets = [0, 128], sizes = [8, 64], strides = [1, 1]} : vector<8x256xf32> to vector<8x64xf32>
    %984 = math.tanh %983 : vector<8x64xf32>
    %985 = vector.extract_strided_slice %970 {offsets = [0, 192], sizes = [8, 64], strides = [1, 1]} : vector<8x256xf32> to vector<8x64xf32>
    %986 = arith.negf %985 : vector<8x64xf32>
    %987 = math.exp %986 : vector<8x64xf32>
    %cst_166 = arith.constant 1.000000e+00 : f32
    %988 = vector.broadcast %cst_166 : f32 to vector<8x64xf32>
    %989 = arith.addf %988, %987 : vector<8x64xf32>
    %990 = arith.divf %988, %989 : vector<8x64xf32>
    %991 = arith.mulf %982, %964 : vector<8x64xf32>
    %992 = arith.mulf %976, %984 : vector<8x64xf32>
    %993 = arith.addf %991, %992 : vector<8x64xf32>
    %994 = math.tanh %993 : vector<8x64xf32>
    %995 = arith.mulf %990, %994 : vector<8x64xf32>
    %996 = vector.extract_strided_slice %639 {offsets = [56, 0], sizes = [8, 256], strides = [1, 1]} : vector<80x256xf32> to vector<8x256xf32>
    %997 = arith.truncf %995 : vector<8x64xf32> to vector<8x64xbf16>
    %cst_167 = arith.constant dense<0.000000e+00> : vector<8x256xf32>
    %998 = tpu.matmul %997, %935, %cst_167 {dimension_numbers = #tpu.dot_dimension_numbers<[1], [0], [0], [1], [0, 0, 1, 1], [], []>} : vector<8x64xbf16>, vector<64x256xbf16>, vector<8x256xf32> -> vector<8x256xf32>
    %999 = arith.addf %996, %998 : vector<8x256xf32>
    %1000 = vector.extract_strided_slice %999 {offsets = [0, 0], sizes = [8, 64], strides = [1, 1]} : vector<8x256xf32> to vector<8x64xf32>
    %1001 = arith.negf %1000 : vector<8x64xf32>
    %1002 = math.exp %1001 : vector<8x64xf32>
    %cst_168 = arith.constant 1.000000e+00 : f32
    %1003 = vector.broadcast %cst_168 : f32 to vector<8x64xf32>
    %1004 = arith.addf %1003, %1002 : vector<8x64xf32>
    %1005 = arith.divf %1003, %1004 : vector<8x64xf32>
    %1006 = vector.extract_strided_slice %999 {offsets = [0, 64], sizes = [8, 64], strides = [1, 1]} : vector<8x256xf32> to vector<8x64xf32>
    %1007 = arith.negf %1006 : vector<8x64xf32>
    %1008 = math.exp %1007 : vector<8x64xf32>
    %cst_169 = arith.constant 1.000000e+00 : f32
    %1009 = vector.broadcast %cst_169 : f32 to vector<8x64xf32>
    %1010 = arith.addf %1009, %1008 : vector<8x64xf32>
    %1011 = arith.divf %1009, %1010 : vector<8x64xf32>
    %1012 = vector.extract_strided_slice %999 {offsets = [0, 128], sizes = [8, 64], strides = [1, 1]} : vector<8x256xf32> to vector<8x64xf32>
    %1013 = math.tanh %1012 : vector<8x64xf32>
    %1014 = vector.extract_strided_slice %999 {offsets = [0, 192], sizes = [8, 64], strides = [1, 1]} : vector<8x256xf32> to vector<8x64xf32>
    %1015 = arith.negf %1014 : vector<8x64xf32>
    %1016 = math.exp %1015 : vector<8x64xf32>
    %cst_170 = arith.constant 1.000000e+00 : f32
    %1017 = vector.broadcast %cst_170 : f32 to vector<8x64xf32>
    %1018 = arith.addf %1017, %1016 : vector<8x64xf32>
    %1019 = arith.divf %1017, %1018 : vector<8x64xf32>
    %1020 = arith.mulf %1011, %993 : vector<8x64xf32>
    %1021 = arith.mulf %1005, %1013 : vector<8x64xf32>
    %1022 = arith.addf %1020, %1021 : vector<8x64xf32>
    %1023 = math.tanh %1022 : vector<8x64xf32>
    %1024 = arith.mulf %1019, %1023 : vector<8x64xf32>
    %1025 = vector.extract_strided_slice %639 {offsets = [48, 0], sizes = [8, 256], strides = [1, 1]} : vector<80x256xf32> to vector<8x256xf32>
    %1026 = arith.truncf %1024 : vector<8x64xf32> to vector<8x64xbf16>
    %cst_171 = arith.constant dense<0.000000e+00> : vector<8x256xf32>
    %1027 = tpu.matmul %1026, %935, %cst_171 {dimension_numbers = #tpu.dot_dimension_numbers<[1], [0], [0], [1], [0, 0, 1, 1], [], []>} : vector<8x64xbf16>, vector<64x256xbf16>, vector<8x256xf32> -> vector<8x256xf32>
    %1028 = arith.addf %1025, %1027 : vector<8x256xf32>
    %1029 = vector.extract_strided_slice %1028 {offsets = [0, 0], sizes = [8, 64], strides = [1, 1]} : vector<8x256xf32> to vector<8x64xf32>
    %1030 = arith.negf %1029 : vector<8x64xf32>
    %1031 = math.exp %1030 : vector<8x64xf32>
    %cst_172 = arith.constant 1.000000e+00 : f32
    %1032 = vector.broadcast %cst_172 : f32 to vector<8x64xf32>
    %1033 = arith.addf %1032, %1031 : vector<8x64xf32>
    %1034 = arith.divf %1032, %1033 : vector<8x64xf32>
    %1035 = vector.extract_strided_slice %1028 {offsets = [0, 64], sizes = [8, 64], strides = [1, 1]} : vector<8x256xf32> to vector<8x64xf32>
    %1036 = arith.negf %1035 : vector<8x64xf32>
    %1037 = math.exp %1036 : vector<8x64xf32>
    %cst_173 = arith.constant 1.000000e+00 : f32
    %1038 = vector.broadcast %cst_173 : f32 to vector<8x64xf32>
    %1039 = arith.addf %1038, %1037 : vector<8x64xf32>
    %1040 = arith.divf %1038, %1039 : vector<8x64xf32>
    %1041 = vector.extract_strided_slice %1028 {offsets = [0, 128], sizes = [8, 64], strides = [1, 1]} : vector<8x256xf32> to vector<8x64xf32>
    %1042 = math.tanh %1041 : vector<8x64xf32>
    %1043 = vector.extract_strided_slice %1028 {offsets = [0, 192], sizes = [8, 64], strides = [1, 1]} : vector<8x256xf32> to vector<8x64xf32>
    %1044 = arith.negf %1043 : vector<8x64xf32>
    %1045 = math.exp %1044 : vector<8x64xf32>
    %cst_174 = arith.constant 1.000000e+00 : f32
    %1046 = vector.broadcast %cst_174 : f32 to vector<8x64xf32>
    %1047 = arith.addf %1046, %1045 : vector<8x64xf32>
    %1048 = arith.divf %1046, %1047 : vector<8x64xf32>
    %1049 = arith.mulf %1040, %1022 : vector<8x64xf32>
    %1050 = arith.mulf %1034, %1042 : vector<8x64xf32>
    %1051 = arith.addf %1049, %1050 : vector<8x64xf32>
    %1052 = math.tanh %1051 : vector<8x64xf32>
    %1053 = arith.mulf %1048, %1052 : vector<8x64xf32>
    %1054 = vector.extract_strided_slice %639 {offsets = [40, 0], sizes = [8, 256], strides = [1, 1]} : vector<80x256xf32> to vector<8x256xf32>
    %1055 = arith.truncf %1053 : vector<8x64xf32> to vector<8x64xbf16>
    %cst_175 = arith.constant dense<0.000000e+00> : vector<8x256xf32>
    %1056 = tpu.matmul %1055, %935, %cst_175 {dimension_numbers = #tpu.dot_dimension_numbers<[1], [0], [0], [1], [0, 0, 1, 1], [], []>} : vector<8x64xbf16>, vector<64x256xbf16>, vector<8x256xf32> -> vector<8x256xf32>
    %1057 = arith.addf %1054, %1056 : vector<8x256xf32>
    %1058 = vector.extract_strided_slice %1057 {offsets = [0, 0], sizes = [8, 64], strides = [1, 1]} : vector<8x256xf32> to vector<8x64xf32>
    %1059 = arith.negf %1058 : vector<8x64xf32>
    %1060 = math.exp %1059 : vector<8x64xf32>
    %cst_176 = arith.constant 1.000000e+00 : f32
    %1061 = vector.broadcast %cst_176 : f32 to vector<8x64xf32>
    %1062 = arith.addf %1061, %1060 : vector<8x64xf32>
    %1063 = arith.divf %1061, %1062 : vector<8x64xf32>
    %1064 = vector.extract_strided_slice %1057 {offsets = [0, 64], sizes = [8, 64], strides = [1, 1]} : vector<8x256xf32> to vector<8x64xf32>
    %1065 = arith.negf %1064 : vector<8x64xf32>
    %1066 = math.exp %1065 : vector<8x64xf32>
    %cst_177 = arith.constant 1.000000e+00 : f32
    %1067 = vector.broadcast %cst_177 : f32 to vector<8x64xf32>
    %1068 = arith.addf %1067, %1066 : vector<8x64xf32>
    %1069 = arith.divf %1067, %1068 : vector<8x64xf32>
    %1070 = vector.extract_strided_slice %1057 {offsets = [0, 128], sizes = [8, 64], strides = [1, 1]} : vector<8x256xf32> to vector<8x64xf32>
    %1071 = math.tanh %1070 : vector<8x64xf32>
    %1072 = vector.extract_strided_slice %1057 {offsets = [0, 192], sizes = [8, 64], strides = [1, 1]} : vector<8x256xf32> to vector<8x64xf32>
    %1073 = arith.negf %1072 : vector<8x64xf32>
    %1074 = math.exp %1073 : vector<8x64xf32>
    %cst_178 = arith.constant 1.000000e+00 : f32
    %1075 = vector.broadcast %cst_178 : f32 to vector<8x64xf32>
    %1076 = arith.addf %1075, %1074 : vector<8x64xf32>
    %1077 = arith.divf %1075, %1076 : vector<8x64xf32>
    %1078 = arith.mulf %1069, %1051 : vector<8x64xf32>
    %1079 = arith.mulf %1063, %1071 : vector<8x64xf32>
    %1080 = arith.addf %1078, %1079 : vector<8x64xf32>
    %1081 = math.tanh %1080 : vector<8x64xf32>
    %1082 = arith.mulf %1077, %1081 : vector<8x64xf32>
    %1083 = vector.extract_strided_slice %639 {offsets = [32, 0], sizes = [8, 256], strides = [1, 1]} : vector<80x256xf32> to vector<8x256xf32>
    %1084 = arith.truncf %1082 : vector<8x64xf32> to vector<8x64xbf16>
    %cst_179 = arith.constant dense<0.000000e+00> : vector<8x256xf32>
    %1085 = tpu.matmul %1084, %935, %cst_179 {dimension_numbers = #tpu.dot_dimension_numbers<[1], [0], [0], [1], [0, 0, 1, 1], [], []>} : vector<8x64xbf16>, vector<64x256xbf16>, vector<8x256xf32> -> vector<8x256xf32>
    %1086 = arith.addf %1083, %1085 : vector<8x256xf32>
    %1087 = vector.extract_strided_slice %1086 {offsets = [0, 0], sizes = [8, 64], strides = [1, 1]} : vector<8x256xf32> to vector<8x64xf32>
    %1088 = arith.negf %1087 : vector<8x64xf32>
    %1089 = math.exp %1088 : vector<8x64xf32>
    %cst_180 = arith.constant 1.000000e+00 : f32
    %1090 = vector.broadcast %cst_180 : f32 to vector<8x64xf32>
    %1091 = arith.addf %1090, %1089 : vector<8x64xf32>
    %1092 = arith.divf %1090, %1091 : vector<8x64xf32>
    %1093 = vector.extract_strided_slice %1086 {offsets = [0, 64], sizes = [8, 64], strides = [1, 1]} : vector<8x256xf32> to vector<8x64xf32>
    %1094 = arith.negf %1093 : vector<8x64xf32>
    %1095 = math.exp %1094 : vector<8x64xf32>
    %cst_181 = arith.constant 1.000000e+00 : f32
    %1096 = vector.broadcast %cst_181 : f32 to vector<8x64xf32>
    %1097 = arith.addf %1096, %1095 : vector<8x64xf32>
    %1098 = arith.divf %1096, %1097 : vector<8x64xf32>
    %1099 = vector.extract_strided_slice %1086 {offsets = [0, 128], sizes = [8, 64], strides = [1, 1]} : vector<8x256xf32> to vector<8x64xf32>
    %1100 = math.tanh %1099 : vector<8x64xf32>
    %1101 = vector.extract_strided_slice %1086 {offsets = [0, 192], sizes = [8, 64], strides = [1, 1]} : vector<8x256xf32> to vector<8x64xf32>
    %1102 = arith.negf %1101 : vector<8x64xf32>
    %1103 = math.exp %1102 : vector<8x64xf32>
    %cst_182 = arith.constant 1.000000e+00 : f32
    %1104 = vector.broadcast %cst_182 : f32 to vector<8x64xf32>
    %1105 = arith.addf %1104, %1103 : vector<8x64xf32>
    %1106 = arith.divf %1104, %1105 : vector<8x64xf32>
    %1107 = arith.mulf %1098, %1080 : vector<8x64xf32>
    %1108 = arith.mulf %1092, %1100 : vector<8x64xf32>
    %1109 = arith.addf %1107, %1108 : vector<8x64xf32>
    %1110 = math.tanh %1109 : vector<8x64xf32>
    %1111 = arith.mulf %1106, %1110 : vector<8x64xf32>
    %1112 = vector.extract_strided_slice %639 {offsets = [24, 0], sizes = [8, 256], strides = [1, 1]} : vector<80x256xf32> to vector<8x256xf32>
    %1113 = arith.truncf %1111 : vector<8x64xf32> to vector<8x64xbf16>
    %cst_183 = arith.constant dense<0.000000e+00> : vector<8x256xf32>
    %1114 = tpu.matmul %1113, %935, %cst_183 {dimension_numbers = #tpu.dot_dimension_numbers<[1], [0], [0], [1], [0, 0, 1, 1], [], []>} : vector<8x64xbf16>, vector<64x256xbf16>, vector<8x256xf32> -> vector<8x256xf32>
    %1115 = arith.addf %1112, %1114 : vector<8x256xf32>
    %1116 = vector.extract_strided_slice %1115 {offsets = [0, 0], sizes = [8, 64], strides = [1, 1]} : vector<8x256xf32> to vector<8x64xf32>
    %1117 = arith.negf %1116 : vector<8x64xf32>
    %1118 = math.exp %1117 : vector<8x64xf32>
    %cst_184 = arith.constant 1.000000e+00 : f32
    %1119 = vector.broadcast %cst_184 : f32 to vector<8x64xf32>
    %1120 = arith.addf %1119, %1118 : vector<8x64xf32>
    %1121 = arith.divf %1119, %1120 : vector<8x64xf32>
    %1122 = vector.extract_strided_slice %1115 {offsets = [0, 64], sizes = [8, 64], strides = [1, 1]} : vector<8x256xf32> to vector<8x64xf32>
    %1123 = arith.negf %1122 : vector<8x64xf32>
    %1124 = math.exp %1123 : vector<8x64xf32>
    %cst_185 = arith.constant 1.000000e+00 : f32
    %1125 = vector.broadcast %cst_185 : f32 to vector<8x64xf32>
    %1126 = arith.addf %1125, %1124 : vector<8x64xf32>
    %1127 = arith.divf %1125, %1126 : vector<8x64xf32>
    %1128 = vector.extract_strided_slice %1115 {offsets = [0, 128], sizes = [8, 64], strides = [1, 1]} : vector<8x256xf32> to vector<8x64xf32>
    %1129 = math.tanh %1128 : vector<8x64xf32>
    %1130 = vector.extract_strided_slice %1115 {offsets = [0, 192], sizes = [8, 64], strides = [1, 1]} : vector<8x256xf32> to vector<8x64xf32>
    %1131 = arith.negf %1130 : vector<8x64xf32>
    %1132 = math.exp %1131 : vector<8x64xf32>
    %cst_186 = arith.constant 1.000000e+00 : f32
    %1133 = vector.broadcast %cst_186 : f32 to vector<8x64xf32>
    %1134 = arith.addf %1133, %1132 : vector<8x64xf32>
    %1135 = arith.divf %1133, %1134 : vector<8x64xf32>
    %1136 = arith.mulf %1127, %1109 : vector<8x64xf32>
    %1137 = arith.mulf %1121, %1129 : vector<8x64xf32>
    %1138 = arith.addf %1136, %1137 : vector<8x64xf32>
    %1139 = math.tanh %1138 : vector<8x64xf32>
    %1140 = arith.mulf %1135, %1139 : vector<8x64xf32>
    %1141 = vector.extract_strided_slice %639 {offsets = [16, 0], sizes = [8, 256], strides = [1, 1]} : vector<80x256xf32> to vector<8x256xf32>
    %1142 = arith.truncf %1140 : vector<8x64xf32> to vector<8x64xbf16>
    %cst_187 = arith.constant dense<0.000000e+00> : vector<8x256xf32>
    %1143 = tpu.matmul %1142, %935, %cst_187 {dimension_numbers = #tpu.dot_dimension_numbers<[1], [0], [0], [1], [0, 0, 1, 1], [], []>} : vector<8x64xbf16>, vector<64x256xbf16>, vector<8x256xf32> -> vector<8x256xf32>
    %1144 = arith.addf %1141, %1143 : vector<8x256xf32>
    %1145 = vector.extract_strided_slice %1144 {offsets = [0, 0], sizes = [8, 64], strides = [1, 1]} : vector<8x256xf32> to vector<8x64xf32>
    %1146 = arith.negf %1145 : vector<8x64xf32>
    %1147 = math.exp %1146 : vector<8x64xf32>
    %cst_188 = arith.constant 1.000000e+00 : f32
    %1148 = vector.broadcast %cst_188 : f32 to vector<8x64xf32>
    %1149 = arith.addf %1148, %1147 : vector<8x64xf32>
    %1150 = arith.divf %1148, %1149 : vector<8x64xf32>
    %1151 = vector.extract_strided_slice %1144 {offsets = [0, 64], sizes = [8, 64], strides = [1, 1]} : vector<8x256xf32> to vector<8x64xf32>
    %1152 = arith.negf %1151 : vector<8x64xf32>
    %1153 = math.exp %1152 : vector<8x64xf32>
    %cst_189 = arith.constant 1.000000e+00 : f32
    %1154 = vector.broadcast %cst_189 : f32 to vector<8x64xf32>
    %1155 = arith.addf %1154, %1153 : vector<8x64xf32>
    %1156 = arith.divf %1154, %1155 : vector<8x64xf32>
    %1157 = vector.extract_strided_slice %1144 {offsets = [0, 128], sizes = [8, 64], strides = [1, 1]} : vector<8x256xf32> to vector<8x64xf32>
    %1158 = math.tanh %1157 : vector<8x64xf32>
    %1159 = vector.extract_strided_slice %1144 {offsets = [0, 192], sizes = [8, 64], strides = [1, 1]} : vector<8x256xf32> to vector<8x64xf32>
    %1160 = arith.negf %1159 : vector<8x64xf32>
    %1161 = math.exp %1160 : vector<8x64xf32>
    %cst_190 = arith.constant 1.000000e+00 : f32
    %1162 = vector.broadcast %cst_190 : f32 to vector<8x64xf32>
    %1163 = arith.addf %1162, %1161 : vector<8x64xf32>
    %1164 = arith.divf %1162, %1163 : vector<8x64xf32>
    %1165 = arith.mulf %1156, %1138 : vector<8x64xf32>
    %1166 = arith.mulf %1150, %1158 : vector<8x64xf32>
    %1167 = arith.addf %1165, %1166 : vector<8x64xf32>
    %1168 = math.tanh %1167 : vector<8x64xf32>
    %1169 = arith.mulf %1164, %1168 : vector<8x64xf32>
    %1170 = vector.extract_strided_slice %639 {offsets = [8, 0], sizes = [8, 256], strides = [1, 1]} : vector<80x256xf32> to vector<8x256xf32>
    %1171 = arith.truncf %1169 : vector<8x64xf32> to vector<8x64xbf16>
    %cst_191 = arith.constant dense<0.000000e+00> : vector<8x256xf32>
    %1172 = tpu.matmul %1171, %935, %cst_191 {dimension_numbers = #tpu.dot_dimension_numbers<[1], [0], [0], [1], [0, 0, 1, 1], [], []>} : vector<8x64xbf16>, vector<64x256xbf16>, vector<8x256xf32> -> vector<8x256xf32>
    %1173 = arith.addf %1170, %1172 : vector<8x256xf32>
    %1174 = vector.extract_strided_slice %1173 {offsets = [0, 0], sizes = [8, 64], strides = [1, 1]} : vector<8x256xf32> to vector<8x64xf32>
    %1175 = arith.negf %1174 : vector<8x64xf32>
    %1176 = math.exp %1175 : vector<8x64xf32>
    %cst_192 = arith.constant 1.000000e+00 : f32
    %1177 = vector.broadcast %cst_192 : f32 to vector<8x64xf32>
    %1178 = arith.addf %1177, %1176 : vector<8x64xf32>
    %1179 = arith.divf %1177, %1178 : vector<8x64xf32>
    %1180 = vector.extract_strided_slice %1173 {offsets = [0, 64], sizes = [8, 64], strides = [1, 1]} : vector<8x256xf32> to vector<8x64xf32>
    %1181 = arith.negf %1180 : vector<8x64xf32>
    %1182 = math.exp %1181 : vector<8x64xf32>
    %cst_193 = arith.constant 1.000000e+00 : f32
    %1183 = vector.broadcast %cst_193 : f32 to vector<8x64xf32>
    %1184 = arith.addf %1183, %1182 : vector<8x64xf32>
    %1185 = arith.divf %1183, %1184 : vector<8x64xf32>
    %1186 = vector.extract_strided_slice %1173 {offsets = [0, 128], sizes = [8, 64], strides = [1, 1]} : vector<8x256xf32> to vector<8x64xf32>
    %1187 = math.tanh %1186 : vector<8x64xf32>
    %1188 = vector.extract_strided_slice %1173 {offsets = [0, 192], sizes = [8, 64], strides = [1, 1]} : vector<8x256xf32> to vector<8x64xf32>
    %1189 = arith.negf %1188 : vector<8x64xf32>
    %1190 = math.exp %1189 : vector<8x64xf32>
    %cst_194 = arith.constant 1.000000e+00 : f32
    %1191 = vector.broadcast %cst_194 : f32 to vector<8x64xf32>
    %1192 = arith.addf %1191, %1190 : vector<8x64xf32>
    %1193 = arith.divf %1191, %1192 : vector<8x64xf32>
    %1194 = arith.mulf %1185, %1167 : vector<8x64xf32>
    %1195 = arith.mulf %1179, %1187 : vector<8x64xf32>
    %1196 = arith.addf %1194, %1195 : vector<8x64xf32>
    %1197 = math.tanh %1196 : vector<8x64xf32>
    %1198 = arith.mulf %1193, %1197 : vector<8x64xf32>
    %1199 = vector.extract_strided_slice %639 {offsets = [0, 0], sizes = [8, 256], strides = [1, 1]} : vector<80x256xf32> to vector<8x256xf32>
    %1200 = arith.truncf %1198 : vector<8x64xf32> to vector<8x64xbf16>
    %cst_195 = arith.constant dense<0.000000e+00> : vector<8x256xf32>
    %1201 = tpu.matmul %1200, %935, %cst_195 {dimension_numbers = #tpu.dot_dimension_numbers<[1], [0], [0], [1], [0, 0, 1, 1], [], []>} : vector<8x64xbf16>, vector<64x256xbf16>, vector<8x256xf32> -> vector<8x256xf32>
    %1202 = arith.addf %1199, %1201 : vector<8x256xf32>
    %1203 = vector.extract_strided_slice %1202 {offsets = [0, 0], sizes = [8, 64], strides = [1, 1]} : vector<8x256xf32> to vector<8x64xf32>
    %1204 = arith.negf %1203 : vector<8x64xf32>
    %1205 = math.exp %1204 : vector<8x64xf32>
    %cst_196 = arith.constant 1.000000e+00 : f32
    %1206 = vector.broadcast %cst_196 : f32 to vector<8x64xf32>
    %1207 = arith.addf %1206, %1205 : vector<8x64xf32>
    %1208 = arith.divf %1206, %1207 : vector<8x64xf32>
    %1209 = vector.extract_strided_slice %1202 {offsets = [0, 64], sizes = [8, 64], strides = [1, 1]} : vector<8x256xf32> to vector<8x64xf32>
    %1210 = arith.negf %1209 : vector<8x64xf32>
    %1211 = math.exp %1210 : vector<8x64xf32>
    %cst_197 = arith.constant 1.000000e+00 : f32
    %1212 = vector.broadcast %cst_197 : f32 to vector<8x64xf32>
    %1213 = arith.addf %1212, %1211 : vector<8x64xf32>
    %1214 = arith.divf %1212, %1213 : vector<8x64xf32>
    %1215 = vector.extract_strided_slice %1202 {offsets = [0, 128], sizes = [8, 64], strides = [1, 1]} : vector<8x256xf32> to vector<8x64xf32>
    %1216 = math.tanh %1215 : vector<8x64xf32>
    %1217 = vector.extract_strided_slice %1202 {offsets = [0, 192], sizes = [8, 64], strides = [1, 1]} : vector<8x256xf32> to vector<8x64xf32>
    %1218 = arith.negf %1217 : vector<8x64xf32>
    %1219 = math.exp %1218 : vector<8x64xf32>
    %cst_198 = arith.constant 1.000000e+00 : f32
    %1220 = vector.broadcast %cst_198 : f32 to vector<8x64xf32>
    %1221 = arith.addf %1220, %1219 : vector<8x64xf32>
    %1222 = arith.divf %1220, %1221 : vector<8x64xf32>
    %1223 = arith.mulf %1214, %1196 : vector<8x64xf32>
    %1224 = arith.mulf %1208, %1216 : vector<8x64xf32>
    %1225 = arith.addf %1223, %1224 : vector<8x64xf32>
    %1226 = math.tanh %1225 : vector<8x64xf32>
    %1227 = arith.mulf %1222, %1226 : vector<8x64xf32>
    %1228 = arith.addf %672, %1227 : vector<8x64xf32>
    %cst_199 = arith.constant 0.000000e+00 : f32
    %1229 = vector.broadcast %cst_199 : f32 to vector<8x64xf32>
    %1230 = arith.maximumf %1228, %1229 : vector<8x64xf32>
    %1231 = arith.addf %701, %1198 : vector<8x64xf32>
    %cst_200 = arith.constant 0.000000e+00 : f32
    %1232 = vector.broadcast %cst_200 : f32 to vector<8x64xf32>
    %1233 = arith.maximumf %1231, %1232 : vector<8x64xf32>
    %1234 = arith.addf %730, %1169 : vector<8x64xf32>
    %cst_201 = arith.constant 0.000000e+00 : f32
    %1235 = vector.broadcast %cst_201 : f32 to vector<8x64xf32>
    %1236 = arith.maximumf %1234, %1235 : vector<8x64xf32>
    %1237 = arith.addf %759, %1140 : vector<8x64xf32>
    %cst_202 = arith.constant 0.000000e+00 : f32
    %1238 = vector.broadcast %cst_202 : f32 to vector<8x64xf32>
    %1239 = arith.maximumf %1237, %1238 : vector<8x64xf32>
    %1240 = arith.addf %788, %1111 : vector<8x64xf32>
    %cst_203 = arith.constant 0.000000e+00 : f32
    %1241 = vector.broadcast %cst_203 : f32 to vector<8x64xf32>
    %1242 = arith.maximumf %1240, %1241 : vector<8x64xf32>
    %1243 = arith.addf %817, %1082 : vector<8x64xf32>
    %cst_204 = arith.constant 0.000000e+00 : f32
    %1244 = vector.broadcast %cst_204 : f32 to vector<8x64xf32>
    %1245 = arith.maximumf %1243, %1244 : vector<8x64xf32>
    %1246 = arith.addf %846, %1053 : vector<8x64xf32>
    %cst_205 = arith.constant 0.000000e+00 : f32
    %1247 = vector.broadcast %cst_205 : f32 to vector<8x64xf32>
    %1248 = arith.maximumf %1246, %1247 : vector<8x64xf32>
    %1249 = arith.addf %875, %1024 : vector<8x64xf32>
    %cst_206 = arith.constant 0.000000e+00 : f32
    %1250 = vector.broadcast %cst_206 : f32 to vector<8x64xf32>
    %1251 = arith.maximumf %1249, %1250 : vector<8x64xf32>
    %1252 = arith.addf %904, %995 : vector<8x64xf32>
    %cst_207 = arith.constant 0.000000e+00 : f32
    %1253 = vector.broadcast %cst_207 : f32 to vector<8x64xf32>
    %1254 = arith.maximumf %1252, %1253 : vector<8x64xf32>
    %1255 = arith.addf %933, %966 : vector<8x64xf32>
    %cst_208 = arith.constant 0.000000e+00 : f32
    %1256 = vector.broadcast %cst_208 : f32 to vector<8x64xf32>
    %1257 = arith.maximumf %1255, %1256 : vector<8x64xf32>
    %1258 = tpu.concatenate %1230, %1233, %1236, %1239, %1242, %1245, %1248, %1251, %1254, %1257 in 1 : vector<8x64xf32>, vector<8x64xf32>, vector<8x64xf32>, vector<8x64xf32>, vector<8x64xf32>, vector<8x64xf32>, vector<8x64xf32>, vector<8x64xf32>, vector<8x64xf32>, vector<8x64xf32> -> vector<8x640xf32>
    %1259 = arith.truncf %1258 : vector<8x640xf32> to vector<8x640xbf16>
    %cst_209 = arith.constant dense<0.000000e+00> : vector<8x384xf32>
    %1260 = tpu.matmul %1259, %4, %cst_209 {dimension_numbers = #tpu.dot_dimension_numbers<[1], [0], [0], [1], [0, 0, 1, 1], [], []>} : vector<8x640xbf16>, vector<640x384xbf16>, vector<8x384xf32> -> vector<8x384xf32>
    %1261 = vector.extract_strided_slice %7 {offsets = [0, 0], sizes = [1, 384], strides = [1, 1]} : vector<3x384xf32> to vector<1x384xf32>
    %1262 = vector.broadcast %1261 : vector<1x384xf32> to vector<8x384xf32>
    %1263 = arith.addf %1260, %1262 : vector<8x384xf32>
    %cst_210 = arith.constant 0.000000e+00 : f32
    %1264 = vector.broadcast %cst_210 : f32 to vector<8x384xf32>
    %1265 = arith.maximumf %1263, %1264 : vector<8x384xf32>
    %1266 = arith.truncf %1265 : vector<8x384xf32> to vector<8x384xbf16>
    %cst_211 = arith.constant dense<0.000000e+00> : vector<8x256xf32>
    %1267 = tpu.matmul %1266, %5, %cst_211 {dimension_numbers = #tpu.dot_dimension_numbers<[1], [0], [0], [1], [0, 0, 1, 1], [], []>} : vector<8x384xbf16>, vector<384x256xbf16>, vector<8x256xf32> -> vector<8x256xf32>
    %1268 = vector.extract_strided_slice %7 {offsets = [1, 0], sizes = [1, 256], strides = [1, 1]} : vector<3x384xf32> to vector<1x256xf32>
    %1269 = vector.broadcast %1268 : vector<1x256xf32> to vector<8x256xf32>
    %1270 = arith.addf %1267, %1269 : vector<8x256xf32>
    %cst_212 = arith.constant 0.000000e+00 : f32
    %1271 = vector.broadcast %cst_212 : f32 to vector<8x256xf32>
    %1272 = arith.maximumf %1270, %1271 : vector<8x256xf32>
    %1273 = arith.truncf %1272 : vector<8x256xf32> to vector<8x256xbf16>
    %cst_213 = arith.constant dense<0.000000e+00> : vector<8x64xf32>
    %1274 = tpu.matmul %1273, %6, %cst_213 {dimension_numbers = #tpu.dot_dimension_numbers<[1], [0], [0], [1], [0, 0, 1, 1], [], []>} : vector<8x256xbf16>, vector<256x64xbf16>, vector<8x64xf32> -> vector<8x64xf32>
    %1275 = vector.extract_strided_slice %7 {offsets = [2, 0], sizes = [1, 64], strides = [1, 1]} : vector<3x384xf32> to vector<1x64xf32>
    %1276 = vector.broadcast %1275 : vector<1x64xf32> to vector<8x64xf32>
    %1277 = arith.addf %1274, %1276 : vector<8x64xf32>
    %cst_214 = arith.constant 0.000000e+00 : f32
    %1278 = vector.broadcast %cst_214 : f32 to vector<8x64xf32>
    %1279 = arith.maximumf %1277, %1278 : vector<8x64xf32>
    %1280 = arith.truncf %1279 : vector<8x64xf32> to vector<8x64xbf16>
    %cst_215 = arith.constant dense<0.000000e+00> : vector<8x128xf32>
    %1281 = tpu.matmul %1280, %8, %cst_215 {dimension_numbers = #tpu.dot_dimension_numbers<[1], [0], [0], [1], [0, 0, 1, 1], [], []>} : vector<8x64xbf16>, vector<64x128xbf16>, vector<8x128xf32> -> vector<8x128xf32>
    %1282 = vector.broadcast %9 : vector<1x128xf32> to vector<8x128xf32>
    %1283 = arith.addf %1281, %1282 : vector<8x128xf32>
    %1284 = vector.extract_strided_slice %1283 {offsets = [0, 0], sizes = [8, 64], strides = [1, 1]} : vector<8x128xf32> to vector<8x64xf32>
    %1285 = math.tanh %1284 : vector<8x64xf32>
    %1286 = vector.extract_strided_slice %1283 {offsets = [0, 64], sizes = [8, 64], strides = [1, 1]} : vector<8x128xf32> to vector<8x64xf32>
    %1287 = arith.negf %1286 : vector<8x64xf32>
    %1288 = math.exp %1287 : vector<8x64xf32>
    %cst_216 = arith.constant 1.000000e+00 : f32
    %1289 = vector.broadcast %cst_216 : f32 to vector<8x64xf32>
    %1290 = arith.addf %1289, %1288 : vector<8x64xf32>
    %1291 = arith.divf %1289, %1290 : vector<8x64xf32>
    %1292 = arith.mulf %1285, %1291 : vector<8x64xf32>
    %1293 = vector.extract_strided_slice %10 {offsets = [0, 0], sizes = [64, 1], strides = [1, 1]} : vector<64x2xbf16> to vector<64x1xbf16>
    %1294 = arith.truncf %1292 : vector<8x64xf32> to vector<8x64xbf16>
    %cst_217 = arith.constant dense<0.000000e+00> : vector<8x1xf32>
    %1295 = tpu.matmul %1294, %1293, %cst_217 {dimension_numbers = #tpu.dot_dimension_numbers<[1], [0], [0], [1], [0, 0, 1, 1], [], []>} : vector<8x64xbf16>, vector<64x1xbf16>, vector<8x1xf32> -> vector<8x1xf32>
    %1296 = vector.extract_strided_slice %11 {offsets = [0, 0], sizes = [1, 1], strides = [1, 1]} : vector<1x2xf32> to vector<1x1xf32>
    %1297 = vector.broadcast %1296 : vector<1x1xf32> to vector<8x1xf32>
    %1298 = arith.addf %1295, %1297 : vector<8x1xf32>
    %cst_218 = arith.constant dense<0xFF800000> : vector<1xf32>
    %1299 = vector.multi_reduction <maximumf>, %1298, %cst_218 [0] : vector<8x1xf32> to vector<1xf32>
    %1300 = vector.shape_cast %1299 : vector<1xf32> to vector<1x1xf32>
    %1301 = vector.broadcast %1300 : vector<1x1xf32> to vector<8x1xf32>
    %1302 = arith.subf %1298, %1301 : vector<8x1xf32>
    %1303 = math.exp %1302 : vector<8x1xf32>
    %cst_219 = arith.constant dense<0.000000e+00> : vector<1xf32>
    %1304 = vector.multi_reduction <add>, %1303, %cst_219 [0] : vector<8x1xf32> to vector<1xf32>
    %1305 = vector.shape_cast %1304 : vector<1xf32> to vector<1x1xf32>
    %1306 = tpu.reciprocal %1305 {approx = true} : vector<1x1xf32> -> vector<1x1xf32>
    %1307 = vector.broadcast %1306 : vector<1x1xf32> to vector<8x1xf32>
    %1308 = arith.mulf %1303, %1307 : vector<8x1xf32>
    %1309 = vector.broadcast %1308 : vector<8x1xf32> to vector<8x64xf32>
    %1310 = arith.mulf %1309, %1279 : vector<8x64xf32>
    %cst_220 = arith.constant dense<0.000000e+00> : vector<64xf32>
    %1311 = vector.multi_reduction <add>, %1310, %cst_220 [0] : vector<8x64xf32> to vector<64xf32>
    %1312 = vector.shape_cast %1311 : vector<64xf32> to vector<1x64xf32>
    %1313 = vector.extract_strided_slice %10 {offsets = [0, 1], sizes = [64, 1], strides = [1, 1]} : vector<64x2xbf16> to vector<64x1xbf16>
    %1314 = arith.truncf %1312 : vector<1x64xf32> to vector<1x64xbf16>
    %cst_221 = arith.constant dense<0.000000e+00> : vector<1x1xf32>
    %1315 = tpu.matmul %1314, %1313, %cst_221 {dimension_numbers = #tpu.dot_dimension_numbers<[1], [0], [0], [1], [0, 0, 1, 1], [], []>} : vector<1x64xbf16>, vector<64x1xbf16>, vector<1x1xf32> -> vector<1x1xf32>
    %1316 = vector.extract_strided_slice %11 {offsets = [0, 1], sizes = [1, 1], strides = [1, 1]} : vector<1x2xf32> to vector<1x1xf32>
    %1317 = arith.addf %1315, %1316 : vector<1x1xf32>
    %1318 = arith.negf %1317 : vector<1x1xf32>
    %1319 = math.exp %1318 : vector<1x1xf32>
    %cst_222 = arith.constant 1.000000e+00 : f32
    %1320 = vector.broadcast %cst_222 : f32 to vector<1x1xf32>
    %1321 = arith.addf %1320, %1319 : vector<1x1xf32>
    %1322 = arith.divf %1320, %1321 : vector<1x1xf32>
    %cst_223 = arith.constant 5.000000e-01 : f32
    %1323 = vector.broadcast %cst_223 : f32 to vector<1x1xf32>
    %1324 = arith.cmpf oge, %1322, %1323 : vector<1x1xf32>
    %1325 = arith.extui %1324 : vector<1x1xi1> to vector<1x1xi32>
    %1326 = arith.sitofp %1325 : vector<1x1xi32> to vector<1x1xf32>
    %c0_224 = arith.constant 0 : index
    %c0_225 = arith.constant 0 : index
    %1327 = vector.load %arg13[%c0_224, %c0_225] : memref<1x1xf32, #tpu.memory_space<vmem>>, vector<1x1xf32>
    tpu.vector_store %arg13[%c0_224, %c0_225], %1322 {strides = array<i32>} : memref<1x1xf32, #tpu.memory_space<vmem>>, vector<1x1xf32>,
    %c0_226 = arith.constant 0 : index
    %c0_227 = arith.constant 0 : index
    %1328 = vector.load %arg14[%c0_226, %c0_227] : memref<1x1xf32, #tpu.memory_space<vmem>>, vector<1x1xf32>
    tpu.vector_store %arg14[%c0_226, %c0_227], %1326 {strides = array<i32>} : memref<1x1xf32, #tpu.memory_space<vmem>>, vector<1x1xf32>,
    %c0_228 = arith.constant 0 : index
    %c0_229 = arith.constant 0 : index
    %1329 = vector.load %arg15[%c0_228, %c0_229] : memref<8x1xf32, #tpu.memory_space<vmem>>, vector<8x1xf32>
    tpu.vector_store %arg15[%c0_228, %c0_229], %1308 {strides = array<i32>} : memref<8x1xf32, #tpu.memory_space<vmem>>, vector<8x1xf32>,
    return
  }
}

</mosaic_0001>

<llo_original>
// kernel: tpu_custom_call.1
$region0: #{tpu_custom_call.1}
  #allocation0 [shape = 'u32[]', space=smem, size = 0x4, offset = 0x4, fixed_abs, tag = 'smem constant byte address 0x4 - core index']
  #allocation1 [shape = 'u32[144,128]{1,0:T(1,128)}', space=vmem, size = 0x12000, scoped, tag = 'internal scratch']
  %s0 = inlined_call_operand.vmem [shape: f32[80,64], index: 0, kind: input, shape index: {}]
  %s1 = inlined_call_operand.hbm [shape: bf16[2,64,256], index: 1, kind: input, shape index: {}]
  %s2 = inlined_call_operand.hbm [shape: bf16[2,128,256], index: 2, kind: input, shape index: {}]
  %s3 = inlined_call_operand.hbm [shape: bf16[4,64,256], index: 3, kind: input, shape index: {}]
  %s4 = inlined_call_operand.hbm [shape: f32[4,256], index: 4, kind: input, shape index: {}]
  %s5 = inlined_call_operand.hbm [shape: bf16[640,384], index: 5, kind: input, shape index: {}]
  %s6 = inlined_call_operand.vmem [shape: bf16[384,256], index: 6, kind: input, shape index: {}]
  %s7 = inlined_call_operand.vmem [shape: bf16[256,64], index: 7, kind: input, shape index: {}]
  %s8 = inlined_call_operand.vmem [shape: f32[3,384], index: 8, kind: input, shape index: {}]
  %s9 = inlined_call_operand.hbm [shape: bf16[64,128], index: 9, kind: input, shape index: {}]
  %s10 = inlined_call_operand.vmem [shape: f32[1,128], index: 10, kind: input, shape index: {}]
  %s11 = inlined_call_operand.vmem [shape: bf16[64,2], index: 11, kind: input, shape index: {}]
  %s12 = inlined_call_operand.vmem [shape: f32[1,2], index: 12, kind: input, shape index: {}]
  %s13 = inlined_call_operand.hbm [shape: f32[1,1], index: 13, kind: output, shape index: {0}]
  %s14 = inlined_call_operand.hbm [shape: f32[1,1], index: 14, kind: output, shape index: {1}]
  %s15 = inlined_call_operand.vmem [shape: f32[8,1], index: 15, kind: output, shape index: {2}]
  %16 = xla_tuple %s13, %s14, %s15
  %s17 = sld [smem:[#allocation0]]
  $region102: #{tpu_custom_call.1} parent=0
    _
  %s19 = ssub.s32 1, %s17
  %s20 = scalar_select 0, %s19, %s17
  $region1: #{tpu_custom_call.1} parent=0
    #allocation2 [shape = 'u8[65536]{0}', space=vmem, size = 0x10000, scoped, tag = 'input window, operand 1, single buffered']
    #allocation3 [shape = 's32[1]{0}', space=sflag, size = 0x4, scoped, tag = 'scoped memory for tpu_custom_call.1']
    #allocation4 [shape = 's32[1]{0}', space=sflag, size = 0x4, scoped, tag = 'scoped memory for tpu_custom_call.1']
    #allocation5 [shape = 'u8[131072]{0}', space=vmem, size = 0x20000, scoped, tag = 'input window, operand 2, single buffered']
    #allocation6 [shape = 's32[1]{0}', space=sflag, size = 0x4, scoped, tag = 'scoped memory for tpu_custom_call.1']
    #allocation7 [shape = 'u8[131072]{0}', space=vmem, size = 0x20000, scoped, tag = 'input window, operand 3, single buffered']
    #allocation8 [shape = 'u8[4096]{0}', space=vmem, size = 0x1000, scoped, tag = 'input window, operand 4, single buffered']
    #allocation9 [shape = 's32[1]{0}', space=sflag, size = 0x4, scoped, tag = 'scoped memory for tpu_custom_call.1']
    #allocation10 [shape = 'u8[491520]{0}', space=vmem, size = 0x78000, scoped, tag = 'input window, operand 5, single buffered']
    #allocation11 [shape = 'u8[16384]{0}', space=vmem, size = 0x4000, scoped, tag = 'input window, operand 9, single buffered']
    #allocation12 [shape = 's32[1]{0}', space=sflag, size = 0x4, scoped, tag = 'scoped memory for tpu_custom_call.1']
    #allocation13 [shape = 'u8[512]{0}', space=vmem, size = 0x400, scoped, tag = 'output window, operand 0, single buffered']
    #allocation14 [shape = 'u8[512]{0}', space=vmem, size = 0x400, scoped, tag = 'output window, operand 1, single buffered']
    #allocation15 [shape = 's32[1]{0}', space=sflag, size = 0x4, scoped, tag = 'scoped memory for tpu_custom_call.1']
    %21 = vsyncpa [#allocation3], 0
    %22 = vsyncpa [#allocation6], 0
    %23 = vsyncpa [#allocation9], 0
    %24 = vsyncpa [#allocation12], 0
    %25 = vsyncpa [#allocation4], 0
    %26 = vsyncpa [#allocation15], 0
    // Predicated region
    $region2: #{tpu_custom_call.1} parent=1 // pred_check
      _
    $region3: #{tpu_custom_call.1} parent=1 // pred_check_branch
      %28 = sbr.rel (0) target = $region5
    $region4: #{tpu_custom_call.1} parent=1 // pred_region
      _
    $region5: #{tpu_custom_call.1} parent=1 // pred_fallthru
      _
    // Predicated region
    $region6: #{tpu_custom_call.1} parent=1 // pred_check
      _
    $region7: #{tpu_custom_call.1} parent=1 // pred_check_branch
      %30 = sbr.rel (0) target = $region9
    $region8: #{tpu_custom_call.1} parent=1 // pred_region
      %s32 = ssub.s32 2048, 2048
      %33 = vsyncadd [#allocation3], %s32
      %s34 = sshll.u32 [#allocation2], 4
      %s35 = int_to_ptr.vmem [resolvable:$true] %s34
      %40 = dma.hbm_to_vmem [thread:$0]  %s1, 2048, %s35, [#allocation3], 128, 128, 8
    $region9: #{tpu_custom_call.1} parent=1 // pred_fallthru
      _
    // Predicated region
    $region10: #{tpu_custom_call.1} parent=1 // pred_check
      _
    $region11: #{tpu_custom_call.1} parent=1 // pred_check_branch
      %42 = sbr.rel (0) target = $region13
    $region12: #{tpu_custom_call.1} parent=1 // pred_region
      %s44 = ssub.s32 4096, 4096
      %45 = vsyncadd [#allocation6], %s44
      %s46 = sshll.u32 [#allocation5], 4
      %s47 = int_to_ptr.vmem [resolvable:$true] %s46
      %52 = dma.hbm_to_vmem [thread:$0]  %s2, 4096, %s47, [#allocation6], 128, 128, 8
    $region13: #{tpu_custom_call.1} parent=1 // pred_fallthru
      _
    // Predicated region
    $region14: #{tpu_custom_call.1} parent=1 // pred_check
      _
    $region15: #{tpu_custom_call.1} parent=1 // pred_check_branch
      %54 = sbr.rel (0) target = $region17
    $region16: #{tpu_custom_call.1} parent=1 // pred_region
      %s56 = ssub.s32 4096, 4096
      %57 = vsyncadd [#allocation6], %s56
      %s58 = sshll.u32 [#allocation7], 4
      %s59 = int_to_ptr.vmem [resolvable:$true] %s58
      %64 = dma.hbm_to_vmem [thread:$0]  %s3, 4096, %s59, [#allocation6], 128, 128, 8
    $region17: #{tpu_custom_call.1} parent=1 // pred_fallthru
      _
    // Predicated region
    $region18: #{tpu_custom_call.1} parent=1 // pred_check
      _
    $region19: #{tpu_custom_call.1} parent=1 // pred_check_branch
      %66 = sbr.rel (0) target = $region21
    $region20: #{tpu_custom_call.1} parent=1 // pred_region
      %s68 = ssub.s32 128, 128
      %69 = vsyncadd [#allocation9], %s68
      %s71 = sshll.u32 [#allocation8], 4
      %s72 = int_to_ptr.vmem [resolvable:$true] %s71
      %74 = dma.hbm_to_vmem [thread:$0]  %s4, 128, %s72, [#allocation9]
    $region21: #{tpu_custom_call.1} parent=1 // pred_fallthru
      _
    // Predicated region
    $region22: #{tpu_custom_call.1} parent=1 // pred_check
      _
    $region23: #{tpu_custom_call.1} parent=1 // pred_check_branch
      %76 = sbr.rel (0) target = $region25
    $region24: #{tpu_custom_call.1} parent=1 // pred_region
      %s78 = ssub.s32 15360, 15360
      %79 = vsyncadd [#allocation9], %s78
      %s80 = sshll.u32 [#allocation10], 4
      %s81 = int_to_ptr.vmem [resolvable:$true] %s80
      %86 = dma.hbm_to_vmem [thread:$0]  %s5, 15360, %s81, [#allocation9], 192, 192, 12
    $region25: #{tpu_custom_call.1} parent=1 // pred_fallthru
      _
    // Predicated region
    $region26: #{tpu_custom_call.1} parent=1 // pred_check
      _
    $region27: #{tpu_custom_call.1} parent=1 // pred_check_branch
      %88 = sbr.rel (0) target = $region29
    $region28: #{tpu_custom_call.1} parent=1 // pred_region
      _
    $region29: #{tpu_custom_call.1} parent=1 // pred_fallthru
      _
    // Predicated region
    $region30: #{tpu_custom_call.1} parent=1 // pred_check
      _
    $region31: #{tpu_custom_call.1} parent=1 // pred_check_branch
      %90 = sbr.rel (0) target = $region33
    $region32: #{tpu_custom_call.1} parent=1 // pred_region
      _
    $region33: #{tpu_custom_call.1} parent=1 // pred_fallthru
      _
    // Predicated region
    $region34: #{tpu_custom_call.1} parent=1 // pred_check
      _
    $region35: #{tpu_custom_call.1} parent=1 // pred_check_branch
      %92 = sbr.rel (0) target = $region37
    $region36: #{tpu_custom_call.1} parent=1 // pred_region
      _
    $region37: #{tpu_custom_call.1} parent=1 // pred_fallthru
      _
    // Predicated region
    $region38: #{tpu_custom_call.1} parent=1 // pred_check
      _
    $region39: #{tpu_custom_call.1} parent=1 // pred_check_branch
      %94 = sbr.rel (0) target = $region41
    $region40: #{tpu_custom_call.1} parent=1 // pred_region
      %s96 = ssub.s32 512, 512
      %97 = vsyncadd [#allocation12], %s96
      %s98 = sshll.u32 [#allocation11], 4
      %s99 = int_to_ptr.vmem [resolvable:$true] %s98
      %104 = dma.hbm_to_vmem [thread:$0]  %s9, 512, %s99, [#allocation12], 64, 64, 4
    $region41: #{tpu_custom_call.1} parent=1 // pred_fallthru
      _
    // Predicated region
    $region42: #{tpu_custom_call.1} parent=1 // pred_check
      _
    $region43: #{tpu_custom_call.1} parent=1 // pred_check_branch
      %106 = sbr.rel (0) target = $region45
    $region44: #{tpu_custom_call.1} parent=1 // pred_region
      _
    $region45: #{tpu_custom_call.1} parent=1 // pred_fallthru
      _
    // Predicated region
    $region46: #{tpu_custom_call.1} parent=1 // pred_check
      _
    $region47: #{tpu_custom_call.1} parent=1 // pred_check_branch
      %108 = sbr.rel (0) target = $region49
    $region48: #{tpu_custom_call.1} parent=1 // pred_region
      _
    $region49: #{tpu_custom_call.1} parent=1 // pred_fallthru
      _
    // Predicated region
    $region50: #{tpu_custom_call.1} parent=1 // pred_check
      _
    $region51: #{tpu_custom_call.1} parent=1 // pred_check_branch
      %110 = sbr.rel (0) target = $region53
    $region52: #{tpu_custom_call.1} parent=1 // pred_region
      _
    $region53: #{tpu_custom_call.1} parent=1 // pred_fallthru
      _
    // Predicated region
    $region54: #{tpu_custom_call.1} parent=1 // pred_check
      _
    $region55: #{tpu_custom_call.1} parent=1 // pred_check_branch
      %112 = sbr.rel (0) target = $region57
    $region56: #{tpu_custom_call.1} parent=1 // pred_region
      %113 = dma.done [#allocation3], 2048
    $region57: #{tpu_custom_call.1} parent=1 // pred_fallthru
      _
    // Predicated region
    $region58: #{tpu_custom_call.1} parent=1 // pred_check
      _
    $region59: #{tpu_custom_call.1} parent=1 // pred_check_branch
      %115 = sbr.rel (0) target = $region61
    $region60: #{tpu_custom_call.1} parent=1 // pred_region
      %116 = dma.done [#allocation6], 4096
    $region61: #{tpu_custom_call.1} parent=1 // pred_fallthru
      _
    // Predicated region
    $region62: #{tpu_custom_call.1} parent=1 // pred_check
      _
    $region63: #{tpu_custom_call.1} parent=1 // pred_check_branch
      %118 = sbr.rel (0) target = $region65
    $region64: #{tpu_custom_call.1} parent=1 // pred_region
      %119 = dma.done [#allocation6], 4096
    $region65: #{tpu_custom_call.1} parent=1 // pred_fallthru
      _
    // Predicated region
    $region66: #{tpu_custom_call.1} parent=1 // pred_check
      _
    $region67: #{tpu_custom_call.1} parent=1 // pred_check_branch
      %121 = sbr.rel (0) target = $region69
    $region68: #{tpu_custom_call.1} parent=1 // pred_region
      %122 = dma.done [#allocation9], 128
    $region69: #{tpu_custom_call.1} parent=1 // pred_fallthru
      _
    // Predicated region
    $region70: #{tpu_custom_call.1} parent=1 // pred_check
      _
    $region71: #{tpu_custom_call.1} parent=1 // pred_check_branch
      %124 = sbr.rel (0) target = $region73
    $region72: #{tpu_custom_call.1} parent=1 // pred_region
      %125 = dma.done [#allocation9], 15360
    $region73: #{tpu_custom_call.1} parent=1 // pred_fallthru
      _
    // Predicated region
    $region74: #{tpu_custom_call.1} parent=1 // pred_check
      _
    $region75: #{tpu_custom_call.1} parent=1 // pred_check_branch
      %127 = sbr.rel (0) target = $region77
    $region76: #{tpu_custom_call.1} parent=1 // pred_region
      %128 = dma.done [#allocation12], 512
    $region77: #{tpu_custom_call.1} parent=1 // pred_fallthru
      _
    %v130 = vld [vmem:[#allocation2] sm:$0xff]
    %v131 = vld [vmem:[#allocation2 + $0x8] sm:$0xff]
    %v132 = vld [vmem:[#allocation2 + $0x10] sm:$0xff]
    %v133 = vld [vmem:[#allocation2 + $0x18] sm:$0xff]
    %v134 = vld [vmem:[#allocation2 + $0x20] sm:$0xff]
    %v135 = vld [vmem:[#allocation2 + $0x28] sm:$0xff]
    %v136 = vld [vmem:[#allocation2 + $0x30] sm:$0xff]
    %v137 = vld [vmem:[#allocation2 + $0x38] sm:$0xff]
    %v138 = vld [vmem:[#allocation2 + $0x40] sm:$0xff]
    %v139 = vld [vmem:[#allocation2 + $0x48] sm:$0xff]
    %v140 = vld [vmem:[#allocation2 + $0x50] sm:$0xff]
    %v141 = vld [vmem:[#allocation2 + $0x58] sm:$0xff]
    %v142 = vld [vmem:[#allocation2 + $0x60] sm:$0xff]
    %v143 = vld [vmem:[#allocation2 + $0x68] sm:$0xff]
    %v144 = vld [vmem:[#allocation2 + $0x70] sm:$0xff]
    %v145 = vld [vmem:[#allocation2 + $0x78] sm:$0xff]
    %v146 = vld [vmem:[#allocation5] sm:$0xff]
    %v147 = vld [vmem:[#allocation5 + $0x8] sm:$0xff]
    %v148 = vld [vmem:[#allocation5 + $0x10] sm:$0xff]
    %v149 = vld [vmem:[#allocation5 + $0x18] sm:$0xff]
    %v150 = vld [vmem:[#allocation5 + $0x20] sm:$0xff]
    %v151 = vld [vmem:[#allocation5 + $0x28] sm:$0xff]
    %v152 = vld [vmem:[#allocation5 + $0x30] sm:$0xff]
    %v153 = vld [vmem:[#allocation5 + $0x38] sm:$0xff]
    %v154 = vld [vmem:[#allocation5 + $0x40] sm:$0xff]
    %v155 = vld [vmem:[#allocation5 + $0x48] sm:$0xff]
    %v156 = vld [vmem:[#allocation5 + $0x50] sm:$0xff]
    %v157 = vld [vmem:[#allocation5 + $0x58] sm:$0xff]
    %v158 = vld [vmem:[#allocation5 + $0x60] sm:$0xff]
    %v159 = vld [vmem:[#allocation5 + $0x68] sm:$0xff]
    %v160 = vld [vmem:[#allocation5 + $0x70] sm:$0xff]
    %v161 = vld [vmem:[#allocation5 + $0x78] sm:$0xff]
    %v162 = vld [vmem:[#allocation5 + $0x80] sm:$0xff]
    %v163 = vld [vmem:[#allocation5 + $0x88] sm:$0xff]
    %v164 = vld [vmem:[#allocation5 + $0x90] sm:$0xff]
    %v165 = vld [vmem:[#allocation5 + $0x98] sm:$0xff]
    %v166 = vld [vmem:[#allocation5 + $0xa0] sm:$0xff]
    %v167 = vld [vmem:[#allocation5 + $0xa8] sm:$0xff]
    %v168 = vld [vmem:[#allocation5 + $0xb0] sm:$0xff]
    %v169 = vld [vmem:[#allocation5 + $0xb8] sm:$0xff]
    %v170 = vld [vmem:[#allocation5 + $0xc0] sm:$0xff]
    %v171 = vld [vmem:[#allocation5 + $0xc8] sm:$0xff]
    %v172 = vld [vmem:[#allocation5 + $0xd0] sm:$0xff]
    %v173 = vld [vmem:[#allocation5 + $0xd8] sm:$0xff]
    %v174 = vld [vmem:[#allocation5 + $0xe0] sm:$0xff]
    %v175 = vld [vmem:[#allocation5 + $0xe8] sm:$0xff]
    %v176 = vld [vmem:[#allocation5 + $0xf0] sm:$0xff]
    %v177 = vld [vmem:[#allocation5 + $0xf8] sm:$0xff]
    %v178 = vld [vmem:[#allocation7] sm:$0xff]
    %v179 = vld [vmem:[#allocation7 + $0x8] sm:$0xff]
    %v180 = vld [vmem:[#allocation7 + $0x10] sm:$0xff]
    %v181 = vld [vmem:[#allocation7 + $0x18] sm:$0xff]
    %v182 = vld [vmem:[#allocation7 + $0x20] sm:$0xff]
    %v183 = vld [vmem:[#allocation7 + $0x28] sm:$0xff]
    %v184 = vld [vmem:[#allocation7 + $0x30] sm:$0xff]
    %v185 = vld [vmem:[#allocation7 + $0x38] sm:$0xff]
    %v186 = vld [vmem:[#allocation7 + $0x40] sm:$0xff]
    %v187 = vld [vmem:[#allocation7 + $0x48] sm:$0xff]
    %v188 = vld [vmem:[#allocation7 + $0x50] sm:$0xff]
    %v189 = vld [vmem:[#allocation7 + $0x58] sm:$0xff]
    %v190 = vld [vmem:[#allocation7 + $0x60] sm:$0xff]
    %v191 = vld [vmem:[#allocation7 + $0x68] sm:$0xff]
    %v192 = vld [vmem:[#allocation7 + $0x70] sm:$0xff]
    %v193 = vld [vmem:[#allocation7 + $0x78] sm:$0xff]
    %v194 = vld [vmem:[#allocation7 + $0x80] sm:$0xff]
    %v195 = vld [vmem:[#allocation7 + $0x88] sm:$0xff]
    %v196 = vld [vmem:[#allocation7 + $0x90] sm:$0xff]
    %v197 = vld [vmem:[#allocation7 + $0x98] sm:$0xff]
    %v198 = vld [vmem:[#allocation7 + $0xa0] sm:$0xff]
    %v199 = vld [vmem:[#allocation7 + $0xa8] sm:$0xff]
    %v200 = vld [vmem:[#allocation7 + $0xb0] sm:$0xff]
    %v201 = vld [vmem:[#allocation7 + $0xb8] sm:$0xff]
    %v202 = vld [vmem:[#allocation7 + $0xc0] sm:$0xff]
    %v203 = vld [vmem:[#allocation7 + $0xc8] sm:$0xff]
    %v204 = vld [vmem:[#allocation7 + $0xd0] sm:$0xff]
    %v205 = vld [vmem:[#allocation7 + $0xd8] sm:$0xff]
    %v206 = vld [vmem:[#allocation7 + $0xe0] sm:$0xff]
    %v207 = vld [vmem:[#allocation7 + $0xe8] sm:$0xff]
    %v208 = vld [vmem:[#allocation7 + $0xf0] sm:$0xff]
    %v209 = vld [vmem:[#allocation7 + $0xf8] sm:$0xff]
    %v210 = vld [vmem:[#allocation8] sm:$0xff]
    %v211 = vld [vmem:[#allocation10] sm:$0xff]
    %v212 = vld [vmem:[#allocation10 + $0x8] sm:$0xf]
    %v213 = vld [vmem:[#allocation10 + $0xc] sm:$0xff]
    %v214 = vld [vmem:[#allocation10 + $0x14] sm:$0xf]
    %v215 = vld [vmem:[#allocation10 + $0x18] sm:$0xff]
    %v216 = vld [vmem:[#allocation10 + $0x20] sm:$0xf]
    %v217 = vld [vmem:[#allocation10 + $0x24] sm:$0xff]
    %v218 = vld [vmem:[#allocation10 + $0x2c] sm:$0xf]
    %v219 = vld [vmem:[#allocation10 + $0x30] sm:$0xff]
    %v220 = vld [vmem:[#allocation10 + $0x38] sm:$0xf]
    %v221 = vld [vmem:[#allocation10 + $0x3c] sm:$0xff]
    %v222 = vld [vmem:[#allocation10 + $0x44] sm:$0xf]
    %v223 = vld [vmem:[#allocation10 + $0x48] sm:$0xff]
    %v224 = vld [vmem:[#allocation10 + $0x50] sm:$0xf]
    %v225 = vld [vmem:[#allocation10 + $0x54] sm:$0xff]
    %v226 = vld [vmem:[#allocation10 + $0x5c] sm:$0xf]
    %v227 = vld [vmem:[#allocation10 + $0x60] sm:$0xff]
    %v228 = vld [vmem:[#allocation10 + $0x68] sm:$0xf]
    %v229 = vld [vmem:[#allocation10 + $0x6c] sm:$0xff]
    %v230 = vld [vmem:[#allocation10 + $0x74] sm:$0xf]
    %v231 = vld [vmem:[#allocation10 + $0x78] sm:$0xff]
    %v232 = vld [vmem:[#allocation10 + $0x80] sm:$0xf]
    %v233 = vld [vmem:[#allocation10 + $0x84] sm:$0xff]
    %v234 = vld [vmem:[#allocation10 + $0x8c] sm:$0xf]
    %v235 = vld [vmem:[#allocation10 + $0x90] sm:$0xff]
    %v236 = vld [vmem:[#allocation10 + $0x98] sm:$0xf]
    %v237 = vld [vmem:[#allocation10 + $0x9c] sm:$0xff]
    %v238 = vld [vmem:[#allocation10 + $0xa4] sm:$0xf]
    %v239 = vld [vmem:[#allocation10 + $0xa8] sm:$0xff]
    %v240 = vld [vmem:[#allocation10 + $0xb0] sm:$0xf]
    %v241 = vld [vmem:[#allocation10 + $0xb4] sm:$0xff]
    %v242 = vld [vmem:[#allocation10 + $0xbc] sm:$0xf]
    %v243 = vld [vmem:[#allocation10 + $0xc0] sm:$0xff]
    %v244 = vld [vmem:[#allocation10 + $0xc8] sm:$0xf]
    %v245 = vld [vmem:[#allocation10 + $0xcc] sm:$0xff]
    %v246 = vld [vmem:[#allocation10 + $0xd4] sm:$0xf]
    %v247 = vld [vmem:[#allocation10 + $0xd8] sm:$0xff]
    %v248 = vld [vmem:[#allocation10 + $0xe0] sm:$0xf]
    %v249 = vld [vmem:[#allocation10 + $0xe4] sm:$0xff]
    %v250 = vld [vmem:[#allocation10 + $0xec] sm:$0xf]
    %v251 = vld [vmem:[#allocation10 + $0xf0] sm:$0xff]
    %v252 = vld [vmem:[#allocation10 + $0xf8] sm:$0xf]
    %v253 = vld [vmem:[#allocation10 + $0xfc] sm:$0xff]
    %v254 = vld [vmem:[#allocation10 + $0x104] sm:$0xf]
    %v255 = vld [vmem:[#allocation10 + $0x108] sm:$0xff]
    %v256 = vld [vmem:[#allocation10 + $0x110] sm:$0xf]
    %v257 = vld [vmem:[#allocation10 + $0x114] sm:$0xff]
    %v258 = vld [vmem:[#allocation10 + $0x11c] sm:$0xf]
    %v259 = vld [vmem:[#allocation10 + $0x120] sm:$0xff]
    %v260 = vld [vmem:[#allocation10 + $0x128] sm:$0xf]
    %v261 = vld [vmem:[#allocation10 + $0x12c] sm:$0xff]
    %v262 = vld [vmem:[#allocation10 + $0x134] sm:$0xf]
    %v263 = vld [vmem:[#allocation10 + $0x138] sm:$0xff]
    %v264 = vld [vmem:[#allocation10 + $0x140] sm:$0xf]
    %v265 = vld [vmem:[#allocation10 + $0x144] sm:$0xff]
    %v266 = vld [vmem:[#allocation10 + $0x14c] sm:$0xf]
    %v267 = vld [vmem:[#allocation10 + $0x150] sm:$0xff]
    %v268 = vld [vmem:[#allocation10 + $0x158] sm:$0xf]
    %v269 = vld [vmem:[#allocation10 + $0x15c] sm:$0xff]
    %v270 = vld [vmem:[#allocation10 + $0x164] sm:$0xf]
    %v271 = vld [vmem:[#allocation10 + $0x168] sm:$0xff]
    %v272 = vld [vmem:[#allocation10 + $0x170] sm:$0xf]
    %v273 = vld [vmem:[#allocation10 + $0x174] sm:$0xff]
    %v274 = vld [vmem:[#allocation10 + $0x17c] sm:$0xf]
    %v275 = vld [vmem:[#allocation10 + $0x180] sm:$0xff]
    %v276 = vld [vmem:[#allocation10 + $0x188] sm:$0xf]
    %v277 = vld [vmem:[#allocation10 + $0x18c] sm:$0xff]
    %v278 = vld [vmem:[#allocation10 + $0x194] sm:$0xf]
    %v279 = vld [vmem:[#allocation10 + $0x198] sm:$0xff]
    %v280 = vld [vmem:[#allocation10 + $0x1a0] sm:$0xf]
    %v281 = vld [vmem:[#allocation10 + $0x1a4] sm:$0xff]
    %v282 = vld [vmem:[#allocation10 + $0x1ac] sm:$0xf]
    %v283 = vld [vmem:[#allocation10 + $0x1b0] sm:$0xff]
    %v284 = vld [vmem:[#allocation10 + $0x1b8] sm:$0xf]
    %v285 = vld [vmem:[#allocation10 + $0x1bc] sm:$0xff]
    %v286 = vld [vmem:[#allocation10 + $0x1c4] sm:$0xf]
    %v287 = vld [vmem:[#allocation10 + $0x1c8] sm:$0xff]
    %v288 = vld [vmem:[#allocation10 + $0x1d0] sm:$0xf]
    %v289 = vld [vmem:[#allocation10 + $0x1d4] sm:$0xff]
    %v290 = vld [vmem:[#allocation10 + $0x1dc] sm:$0xf]
    %v291 = vld [vmem:[#allocation10 + $0x1e0] sm:$0xff]
    %v292 = vld [vmem:[#allocation10 + $0x1e8] sm:$0xf]
    %v293 = vld [vmem:[#allocation10 + $0x1ec] sm:$0xff]
    %v294 = vld [vmem:[#allocation10 + $0x1f4] sm:$0xf]
    %v295 = vld [vmem:[#allocation10 + $0x1f8] sm:$0xff]
    %v296 = vld [vmem:[#allocation10 + $0x200] sm:$0xf]
    %v297 = vld [vmem:[#allocation10 + $0x204] sm:$0xff]
    %v298 = vld [vmem:[#allocation10 + $0x20c] sm:$0xf]
    %v299 = vld [vmem:[#allocation10 + $0x210] sm:$0xff]
    %v300 = vld [vmem:[#allocation10 + $0x218] sm:$0xf]
    %v301 = vld [vmem:[#allocation10 + $0x21c] sm:$0xff]
    %v302 = vld [vmem:[#allocation10 + $0x224] sm:$0xf]
    %v303 = vld [vmem:[#allocation10 + $0x228] sm:$0xff]
    %v304 = vld [vmem:[#allocation10 + $0x230] sm:$0xf]
    %v305 = vld [vmem:[#allocation10 + $0x234] sm:$0xff]
    %v306 = vld [vmem:[#allocation10 + $0x23c] sm:$0xf]
    %v307 = vld [vmem:[#allocation10 + $0x240] sm:$0xff]
    %v308 = vld [vmem:[#allocation10 + $0x248] sm:$0xf]
    %v309 = vld [vmem:[#allocation10 + $0x24c] sm:$0xff]
    %v310 = vld [vmem:[#allocation10 + $0x254] sm:$0xf]
    %v311 = vld [vmem:[#allocation10 + $0x258] sm:$0xff]
    %v312 = vld [vmem:[#allocation10 + $0x260] sm:$0xf]
    %v313 = vld [vmem:[#allocation10 + $0x264] sm:$0xff]
    %v314 = vld [vmem:[#allocation10 + $0x26c] sm:$0xf]
    %v315 = vld [vmem:[#allocation10 + $0x270] sm:$0xff]
    %v316 = vld [vmem:[#allocation10 + $0x278] sm:$0xf]
    %v317 = vld [vmem:[#allocation10 + $0x27c] sm:$0xff]
    %v318 = vld [vmem:[#allocation10 + $0x284] sm:$0xf]
    %v319 = vld [vmem:[#allocation10 + $0x288] sm:$0xff]
    %v320 = vld [vmem:[#allocation10 + $0x290] sm:$0xf]
    %v321 = vld [vmem:[#allocation10 + $0x294] sm:$0xff]
    %v322 = vld [vmem:[#allocation10 + $0x29c] sm:$0xf]
    %v323 = vld [vmem:[#allocation10 + $0x2a0] sm:$0xff]
    %v324 = vld [vmem:[#allocation10 + $0x2a8] sm:$0xf]
    %v325 = vld [vmem:[#allocation10 + $0x2ac] sm:$0xff]
    %v326 = vld [vmem:[#allocation10 + $0x2b4] sm:$0xf]
    %v327 = vld [vmem:[#allocation10 + $0x2b8] sm:$0xff]
    %v328 = vld [vmem:[#allocation10 + $0x2c0] sm:$0xf]
    %v329 = vld [vmem:[#allocation10 + $0x2c4] sm:$0xff]
    %v330 = vld [vmem:[#allocation10 + $0x2cc] sm:$0xf]
    %v331 = vld [vmem:[#allocation10 + $0x2d0] sm:$0xff]
    %v332 = vld [vmem:[#allocation10 + $0x2d8] sm:$0xf]
    %v333 = vld [vmem:[#allocation10 + $0x2dc] sm:$0xff]
    %v334 = vld [vmem:[#allocation10 + $0x2e4] sm:$0xf]
    %v335 = vld [vmem:[#allocation10 + $0x2e8] sm:$0xff]
    %v336 = vld [vmem:[#allocation10 + $0x2f0] sm:$0xf]
    %v337 = vld [vmem:[#allocation10 + $0x2f4] sm:$0xff]
    %v338 = vld [vmem:[#allocation10 + $0x2fc] sm:$0xf]
    %v339 = vld [vmem:[#allocation10 + $0x300] sm:$0xff]
    %v340 = vld [vmem:[#allocation10 + $0x308] sm:$0xf]
    %v341 = vld [vmem:[#allocation10 + $0x30c] sm:$0xff]
    %v342 = vld [vmem:[#allocation10 + $0x314] sm:$0xf]
    %v343 = vld [vmem:[#allocation10 + $0x318] sm:$0xff]
    %v344 = vld [vmem:[#allocation10 + $0x320] sm:$0xf]
    %v345 = vld [vmem:[#allocation10 + $0x324] sm:$0xff]
    %v346 = vld [vmem:[#allocation10 + $0x32c] sm:$0xf]
    %v347 = vld [vmem:[#allocation10 + $0x330] sm:$0xff]
    %v348 = vld [vmem:[#allocation10 + $0x338] sm:$0xf]
    %v349 = vld [vmem:[#allocation10 + $0x33c] sm:$0xff]
    %v350 = vld [vmem:[#allocation10 + $0x344] sm:$0xf]
    %v351 = vld [vmem:[#allocation10 + $0x348] sm:$0xff]
    %v352 = vld [vmem:[#allocation10 + $0x350] sm:$0xf]
    %v353 = vld [vmem:[#allocation10 + $0x354] sm:$0xff]
    %v354 = vld [vmem:[#allocation10 + $0x35c] sm:$0xf]
    %v355 = vld [vmem:[#allocation10 + $0x360] sm:$0xff]
    %v356 = vld [vmem:[#allocation10 + $0x368] sm:$0xf]
    %v357 = vld [vmem:[#allocation10 + $0x36c] sm:$0xff]
    %v358 = vld [vmem:[#allocation10 + $0x374] sm:$0xf]
    %v359 = vld [vmem:[#allocation10 + $0x378] sm:$0xff]
    %v360 = vld [vmem:[#allocation10 + $0x380] sm:$0xf]
    %v361 = vld [vmem:[#allocation10 + $0x384] sm:$0xff]
    %v362 = vld [vmem:[#allocation10 + $0x38c] sm:$0xf]
    %v363 = vld [vmem:[#allocation10 + $0x390] sm:$0xff]
    %v364 = vld [vmem:[#allocation10 + $0x398] sm:$0xf]
    %v365 = vld [vmem:[#allocation10 + $0x39c] sm:$0xff]
    %v366 = vld [vmem:[#allocation10 + $0x3a4] sm:$0xf]
    %v367 = vld [vmem:[#allocation10 + $0x3a8] sm:$0xff]
    %v368 = vld [vmem:[#allocation10 + $0x3b0] sm:$0xf]
    %v369 = vld [vmem:[#allocation10 + $0x3b4] sm:$0xff]
    %v370 = vld [vmem:[#allocation10 + $0x3bc] sm:$0xf]
    %v371 = vld [vmem:[%s6] sm:$0xff]
    %v372 = vld [vmem:[%s6 + $0x8] sm:$0xff]
    %v373 = vld [vmem:[%s6 + $0x10] sm:$0xff]
    %v374 = vld [vmem:[%s6 + $0x18] sm:$0xff]
    %v375 = vld [vmem:[%s6 + $0x20] sm:$0xff]
    %v376 = vld [vmem:[%s6 + $0x28] sm:$0xff]
    %v377 = vld [vmem:[%s6 + $0x30] sm:$0xff]
    %v378 = vld [vmem:[%s6 + $0x38] sm:$0xff]
    %v379 = vld [vmem:[%s6 + $0x40] sm:$0xff]
    %v380 = vld [vmem:[%s6 + $0x48] sm:$0xff]
    %v381 = vld [vmem:[%s6 + $0x50] sm:$0xff]
    %v382 = vld [vmem:[%s6 + $0x58] sm:$0xff]
    %v383 = vld [vmem:[%s6 + $0x60] sm:$0xff]
    %v384 = vld [vmem:[%s6 + $0x68] sm:$0xff]
    %v385 = vld [vmem:[%s6 + $0x70] sm:$0xff]
    %v386 = vld [vmem:[%s6 + $0x78] sm:$0xff]
    %v387 = vld [vmem:[%s6 + $0x80] sm:$0xff]
    %v388 = vld [vmem:[%s6 + $0x88] sm:$0xff]
    %v389 = vld [vmem:[%s6 + $0x90] sm:$0xff]
    %v390 = vld [vmem:[%s6 + $0x98] sm:$0xff]
    %v391 = vld [vmem:[%s6 + $0xa0] sm:$0xff]
    %v392 = vld [vmem:[%s6 + $0xa8] sm:$0xff]
    %v393 = vld [vmem:[%s6 + $0xb0] sm:$0xff]
    %v394 = vld [vmem:[%s6 + $0xb8] sm:$0xff]
    %v395 = vld [vmem:[%s6 + $0xc0] sm:$0xff]
    %v396 = vld [vmem:[%s6 + $0xc8] sm:$0xff]
    %v397 = vld [vmem:[%s6 + $0xd0] sm:$0xff]
    %v398 = vld [vmem:[%s6 + $0xd8] sm:$0xff]
    %v399 = vld [vmem:[%s6 + $0xe0] sm:$0xff]
    %v400 = vld [vmem:[%s6 + $0xe8] sm:$0xff]
    %v401 = vld [vmem:[%s6 + $0xf0] sm:$0xff]
    %v402 = vld [vmem:[%s6 + $0xf8] sm:$0xff]
    %v403 = vld [vmem:[%s6 + $0x100] sm:$0xff]
    %v404 = vld [vmem:[%s6 + $0x108] sm:$0xff]
    %v405 = vld [vmem:[%s6 + $0x110] sm:$0xff]
    %v406 = vld [vmem:[%s6 + $0x118] sm:$0xff]
    %v407 = vld [vmem:[%s6 + $0x120] sm:$0xff]
    %v408 = vld [vmem:[%s6 + $0x128] sm:$0xff]
    %v409 = vld [vmem:[%s6 + $0x130] sm:$0xff]
    %v410 = vld [vmem:[%s6 + $0x138] sm:$0xff]
    %v411 = vld [vmem:[%s6 + $0x140] sm:$0xff]
    %v412 = vld [vmem:[%s6 + $0x148] sm:$0xff]
    %v413 = vld [vmem:[%s6 + $0x150] sm:$0xff]
    %v414 = vld [vmem:[%s6 + $0x158] sm:$0xff]
    %v415 = vld [vmem:[%s6 + $0x160] sm:$0xff]
    %v416 = vld [vmem:[%s6 + $0x168] sm:$0xff]
    %v417 = vld [vmem:[%s6 + $0x170] sm:$0xff]
    %v418 = vld [vmem:[%s6 + $0x178] sm:$0xff]
    %v419 = vld [vmem:[%s7] sm:$0xf]
    %v420 = vld [vmem:[%s7 + $0x4] sm:$0xf]
    %v421 = vld [vmem:[%s7 + $0x8] sm:$0xf]
    %v422 = vld [vmem:[%s7 + $0xc] sm:$0xf]
    %v423 = vld [vmem:[%s7 + $0x10] sm:$0xf]
    %v424 = vld [vmem:[%s7 + $0x14] sm:$0xf]
    %v425 = vld [vmem:[%s7 + $0x18] sm:$0xf]
    %v426 = vld [vmem:[%s7 + $0x1c] sm:$0xf]
    %v427 = vld [vmem:[%s7 + $0x20] sm:$0xf]
    %v428 = vld [vmem:[%s7 + $0x24] sm:$0xf]
    %v429 = vld [vmem:[%s7 + $0x28] sm:$0xf]
    %v430 = vld [vmem:[%s7 + $0x2c] sm:$0xf]
    %v431 = vld [vmem:[%s7 + $0x30] sm:$0xf]
    %v432 = vld [vmem:[%s7 + $0x34] sm:$0xf]
    %v433 = vld [vmem:[%s7 + $0x38] sm:$0xf]
    %v434 = vld [vmem:[%s7 + $0x3c] sm:$0xf]
    %v435 = vld [vmem:[%s7 + $0x40] sm:$0xf]
    %v436 = vld [vmem:[%s7 + $0x44] sm:$0xf]
    %v437 = vld [vmem:[%s7 + $0x48] sm:$0xf]
    %v438 = vld [vmem:[%s7 + $0x4c] sm:$0xf]
    %v439 = vld [vmem:[%s7 + $0x50] sm:$0xf]
    %v440 = vld [vmem:[%s7 + $0x54] sm:$0xf]
    %v441 = vld [vmem:[%s7 + $0x58] sm:$0xf]
    %v442 = vld [vmem:[%s7 + $0x5c] sm:$0xf]
    %v443 = vld [vmem:[%s7 + $0x60] sm:$0xf]
    %v444 = vld [vmem:[%s7 + $0x64] sm:$0xf]
    %v445 = vld [vmem:[%s7 + $0x68] sm:$0xf]
    %v446 = vld [vmem:[%s7 + $0x6c] sm:$0xf]
    %v447 = vld [vmem:[%s7 + $0x70] sm:$0xf]
    %v448 = vld [vmem:[%s7 + $0x74] sm:$0xf]
    %v449 = vld [vmem:[%s7 + $0x78] sm:$0xf]
    %v450 = vld [vmem:[%s7 + $0x7c] sm:$0xf]
    %v451 = vld [vmem:[%s8] sm:$0x77]
    %v452 = vld [vmem:[%s8 + $0x8] sm:$0x7]
    %v453 = vld [vmem:[#allocation11] sm:$0xf]
    %v454 = vld [vmem:[#allocation11 + $0x4] sm:$0xf]
    %v455 = vld [vmem:[#allocation11 + $0x8] sm:$0xf]
    %v456 = vld [vmem:[#allocation11 + $0xc] sm:$0xf]
    %v457 = vld [vmem:[#allocation11 + $0x10] sm:$0xf]
    %v458 = vld [vmem:[#allocation11 + $0x14] sm:$0xf]
    %v459 = vld [vmem:[#allocation11 + $0x18] sm:$0xf]
    %v460 = vld [vmem:[#allocation11 + $0x1c] sm:$0xf]
    %v461 = vld [vmem:[%s10] sm:$0x1]
    %v462 = vld [vmem:[%s11] sm:$0xf]
    %v463 = vld [vmem:[%s11 + $0x4] sm:$0xf]
    %v464 = vld [vmem:[%s11 + $0x8] sm:$0xf]
    %v465 = vld [vmem:[%s11 + $0xc] sm:$0xf]
    %v466 = vld [vmem:[%s11 + $0x10] sm:$0xf]
    %v467 = vld [vmem:[%s11 + $0x14] sm:$0xf]
    %v468 = vld [vmem:[%s11 + $0x18] sm:$0xf]
    %v469 = vld [vmem:[%s11 + $0x1c] sm:$0xf]
    %v470 = vld [vmem:[%s12] sm:$0x1]
    %v471 = vld [vmem:[%s0] sm:$0xff]
    %v472 = vld [vmem:[%s0 + $0x8] sm:$0xff]
    %v473 = vld [vmem:[%s0 + $0x10] sm:$0xff]
    %v474 = vld [vmem:[%s0 + $0x18] sm:$0xff]
    %v475 = vld [vmem:[%s0 + $0x20] sm:$0xff]
    %v476 = vld [vmem:[%s0 + $0x28] sm:$0xff]
    %v477 = vld [vmem:[%s0 + $0x30] sm:$0xff]
    %v478 = vld [vmem:[%s0 + $0x38] sm:$0xff]
    %v479 = vld [vmem:[%s0 + $0x40] sm:$0xff]
    %v480 = vld [vmem:[%s0 + $0x48] sm:$0xff]
    %v481 = vpack.c.bf16 %v472, %v471
    %v482 = vpack.c.bf16 %v474, %v473
    %v483 = vpack.c.bf16 %v476, %v475
    %v484 = vpack.c.bf16 %v478, %v477
    %v485 = vpack.c.bf16 %v480, %v479
    %v487 = vlaneseq
    %v488 = vshrl.u32 %v487, 7
    %v489 = vsub.s32 0, %v488
    %v490 = vrot.slane %v210, %v489
    %v491 = vlaneseq
    %v492 = vshrl.u32 %v491, 7
    %v493 = vsub.s32 4, %v492
    %v494 = vrot.slane %v210, %v493
    %v497 = vlaneseq
    %v498 = vshrl.u32 %v497, 7
    %v499 = vsub.s32 0, %v498
    %v500 = vrot.slane %v490, %v499
    %v501 = vlaneseq
    %v502 = vshrl.u32 %v501, 7
    %v503 = vsub.s32 0, %v502
    %v504 = vrot.slane %v494, %v503
    %v513 = vunpack.c.l.b16 %v130
    %v514 = vunpack.c.h.b16 %v130
    %v515 = vunpack.c.l.b16 %v131
    %v516 = vunpack.c.h.b16 %v131
    %v517 = vunpack.c.l.b16 %v132
    %v518 = vunpack.c.h.b16 %v132
    %v519 = vunpack.c.l.b16 %v133
    %v520 = vunpack.c.h.b16 %v133
    %v521 = vunpack.c.l.b16 %v134
    %v522 = vunpack.c.h.b16 %v134
    %v523 = vunpack.c.l.b16 %v135
    %v524 = vunpack.c.h.b16 %v135
    %v525 = vunpack.c.l.b16 %v136
    %v526 = vunpack.c.h.b16 %v136
    %v527 = vunpack.c.l.b16 %v137
    %v528 = vunpack.c.h.b16 %v137
    %v529 = vpack.c.b16 %v515, %v513
    %v530 = vpack.c.b16 %v516, %v514
    %v531 = vpack.c.b16 %v519, %v517
    %v532 = vpack.c.b16 %v520, %v518
    %v533 = vpack.c.b16 %v523, %v521
    %v534 = vpack.c.b16 %v524, %v522
    %v535 = vpack.c.b16 %v527, %v525
    %v536 = vpack.c.b16 %v528, %v526
    %vm545 = vcmask 523264
    %v547 = vsel %vm545, %v481, 0
    %v550 = vsel %vm545, %v482, 0
    %v553 = vsel %vm545, %v483, 0
    %v556 = vsel %vm545, %v484, 0
    %v559 = vsel %vm545, %v485, 0
    %561 = vmatprep.subr.bf16.mxu0 %v530
    %562 = vmatpush1.bf16.msra.mxu0 %v529
    %563 = vmatprep.subr.bf16.mxu0 %v532
    %564 = vmatpush1.bf16.msra.mxu0 %v531
    %565 = vmatprep.subr.bf16.mxu0 %v534
    %566 = vmatpush1.bf16.msra.mxu0 %v533
    %567 = vmatprep.subr.bf16.mxu0 %v536
    %568 = vmatpush1.bf16.msra.mxu0 %v535
    %569 = vmatprep.subr.bf16.mxu0 0
    %570 = vmatpush1.bf16.msra.mxu0 0
    %571 = vmatprep.subr.bf16.mxu0 0
    %572 = vmatpush1.bf16.msra.mxu0 0
    %573 = vmatprep.subr.bf16.mxu0 0
    %574 = vmatpush1.bf16.msra.mxu0 0
    %575 = vmatprep.subr.bf16.mxu0 0
    %576 = vmatpush1.bf16.msra.mxu0 0
    %577 = vmatprep.subr.bf16.mxu0 0
    %578 = vmatpush1.bf16.msra.mxu0 0
    %579 = vmatprep.subr.bf16.mxu0 0
    %580 = vmatpush1.bf16.msra.mxu0 0
    %581 = vmatprep.subr.bf16.mxu0 0
    %582 = vmatpush1.bf16.msra.mxu0 0
    %583 = vmatprep.subr.bf16.mxu0 0
    %584 = vmatpush1.bf16.msra.mxu0 0
    %585 = vmatprep.subr.bf16.mxu0 0
    %586 = vmatpush1.bf16.msra.mxu0 0
    %587 = vmatprep.subr.bf16.mxu0 0
    %588 = vmatpush1.bf16.msra.mxu0 0
    %589 = vmatprep.subr.bf16.mxu0 0
    %590 = vmatpush1.bf16.msra.mxu0 0
    %591 = vmatprep.subr.bf16.mxu0 0
    %592 = vmatpush1.bf16.msra.mxu0 0
    %593 = vmatprep.mubr.bf16.mxu0 0
    %594 = vmatmul.mubr.bf16.gmra.mrb[0].mxu0 %v547
    %v595 = vpop.f32.mrb[0].mxu0
    %v596 = vadd.f32 %v500, %v595
    %v597 = vpop.f32.mrb[0].mxu0
    %v598 = vadd.f32 %v504, %v597
    %v599 = vpop.f32.mrb[0].mxu0
    %v600 = vadd.f32 %v500, %v599
    %v601 = vpop.f32.mrb[0].mxu0
    %v602 = vadd.f32 %v504, %v601
    %603 = vmatprep.mubr.bf16.mxu0 0
    %604 = vmatmul.mubr.bf16.gmra.mrb[0].mxu0 %v550
    %v605 = vpop.f32.mrb[0].mxu0
    %v606 = vadd.f32 %v500, %v605
    %v607 = vpop.f32.mrb[0].mxu0
    %v608 = vadd.f32 %v504, %v607
    %v609 = vpop.f32.mrb[0].mxu0
    %v610 = vadd.f32 %v500, %v609
    %v611 = vpop.f32.mrb[0].mxu0
    %v612 = vadd.f32 %v504, %v611
    %613 = vmatprep.mubr.bf16.mxu0 0
    %614 = vmatmul.mubr.bf16.gmra.mrb[0].mxu0 %v553
    %v615 = vpop.f32.mrb[0].mxu0
    %v616 = vadd.f32 %v500, %v615
    %v617 = vpop.f32.mrb[0].mxu0
    %v618 = vadd.f32 %v504, %v617
    %v619 = vpop.f32.mrb[0].mxu0
    %v620 = vadd.f32 %v500, %v619
    %v621 = vpop.f32.mrb[0].mxu0
    %v622 = vadd.f32 %v504, %v621
    %623 = vmatprep.mubr.bf16.mxu0 0
    %624 = vmatmul.mubr.bf16.gmra.mrb[0].mxu0 %v556
    %v625 = vpop.f32.mrb[0].mxu0
    %v626 = vadd.f32 %v500, %v625
    %v627 = vpop.f32.mrb[0].mxu0
    %v628 = vadd.f32 %v504, %v627
    %v629 = vpop.f32.mrb[0].mxu0
    %v630 = vadd.f32 %v500, %v629
    %v631 = vpop.f32.mrb[0].mxu0
    %v632 = vadd.f32 %v504, %v631
    %633 = vmatprep.mubr.bf16.mxu0 0
    %634 = vmatmul.mubr.bf16.gmra.mrb[0].mxu0 %v559
    %v635 = vpop.f32.mrb[0].mxu0
    %v636 = vadd.f32 %v500, %v635
    %v637 = vpop.f32.mrb[0].mxu0
    %v638 = vadd.f32 %v504, %v637
    %v639 = vpop.f32.mrb[0].mxu0
    %v640 = vadd.f32 %v500, %v639
    %v641 = vpop.f32.mrb[0].mxu0
    %v642 = vadd.f32 %v504, %v641
    %643 = vdwg.mxu0
    %v644 = vlaneseq
    %v645 = vshrl.u32 %v644, 7
    %v646 = vsub.s32 1, %v645
    %v647 = vrot.slane %v210, %v646
    %v648 = vlaneseq
    %v649 = vshrl.u32 %v648, 7
    %v650 = vsub.s32 5, %v649
    %v651 = vrot.slane %v210, %v650
    %v654 = vlaneseq
    %v655 = vshrl.u32 %v654, 7
    %v656 = vsub.s32 1, %v655
    %v657 = vrot.slane %v647, %v656
    %v658 = vlaneseq
    %v659 = vshrl.u32 %v658, 7
    %v660 = vsub.s32 1, %v659
    %v661 = vrot.slane %v651, %v660
    %v670 = vunpack.c.l.b16 %v138
    %v671 = vunpack.c.h.b16 %v138
    %v672 = vunpack.c.l.b16 %v139
    %v673 = vunpack.c.h.b16 %v139
    %v674 = vunpack.c.l.b16 %v140
    %v675 = vunpack.c.h.b16 %v140
    %v676 = vunpack.c.l.b16 %v141
    %v677 = vunpack.c.h.b16 %v141
    %v678 = vunpack.c.l.b16 %v142
    %v679 = vunpack.c.h.b16 %v142
    %v680 = vunpack.c.l.b16 %v143
    %v681 = vunpack.c.h.b16 %v143
    %v682 = vunpack.c.l.b16 %v144
    %v683 = vunpack.c.h.b16 %v144
    %v684 = vunpack.c.l.b16 %v145
    %v685 = vunpack.c.h.b16 %v145
    %v686 = vpack.c.b16 %v672, %v670
    %v687 = vpack.c.b16 %v673, %v671
    %v688 = vpack.c.b16 %v676, %v674
    %v689 = vpack.c.b16 %v677, %v675
    %v690 = vpack.c.b16 %v680, %v678
    %v691 = vpack.c.b16 %v681, %v679
    %v692 = vpack.c.b16 %v684, %v682
    %v693 = vpack.c.b16 %v685, %v683
    %702 = vmatprep.subr.bf16.mxu0 %v687
    %703 = vmatpush1.bf16.msra.mxu0 %v686
    %704 = vmatprep.subr.bf16.mxu0 %v689
    %705 = vmatpush1.bf16.msra.mxu0 %v688
    %706 = vmatprep.subr.bf16.mxu0 %v691
    %707 = vmatpush1.bf16.msra.mxu0 %v690
    %708 = vmatprep.subr.bf16.mxu0 %v693
    %709 = vmatpush1.bf16.msra.mxu0 %v692
    %710 = vmatprep.subr.bf16.mxu0 0
    %711 = vmatpush1.bf16.msra.mxu0 0
    %712 = vmatprep.subr.bf16.mxu0 0
    %713 = vmatpush1.bf16.msra.mxu0 0
    %714 = vmatprep.subr.bf16.mxu0 0
    %715 = vmatpush1.bf16.msra.mxu0 0
    %716 = vmatprep.subr.bf16.mxu0 0
    %717 = vmatpush1.bf16.msra.mxu0 0
    %718 = vmatprep.subr.bf16.mxu0 0
    %719 = vmatpush1.bf16.msra.mxu0 0
    %720 = vmatprep.subr.bf16.mxu0 0
    %721 = vmatpush1.bf16.msra.mxu0 0
    %722 = vmatprep.subr.bf16.mxu0 0
    %723 = vmatpush1.bf16.msra.mxu0 0
    %724 = vmatprep.subr.bf16.mxu0 0
    %725 = vmatpush1.bf16.msra.mxu0 0
    %726 = vmatprep.subr.bf16.mxu0 0
    %727 = vmatpush1.bf16.msra.mxu0 0
    %728 = vmatprep.subr.bf16.mxu0 0
    %729 = vmatpush1.bf16.msra.mxu0 0
    %730 = vmatprep.subr.bf16.mxu0 0
    %731 = vmatpush1.bf16.msra.mxu0 0
    %732 = vmatprep.subr.bf16.mxu0 0
    %733 = vmatpush1.bf16.msra.mxu0 0
    %734 = vmatprep.mubr.bf16.mxu0 0
    %735 = vmatmul.mubr.bf16.gmra.mrb[0].mxu0 %v547
    %v736 = vpop.f32.mrb[0].mxu0
    %v737 = vadd.f32 %v657, %v736
    %v738 = vpop.f32.mrb[0].mxu0
    %v739 = vadd.f32 %v661, %v738
    %v740 = vpop.f32.mrb[0].mxu0
    %v741 = vadd.f32 %v657, %v740
    %v742 = vpop.f32.mrb[0].mxu0
    %v743 = vadd.f32 %v661, %v742
    %744 = vmatprep.mubr.bf16.mxu0 0
    %745 = vmatmul.mubr.bf16.gmra.mrb[0].mxu0 %v550
    %v746 = vpop.f32.mrb[0].mxu0
    %v747 = vadd.f32 %v657, %v746
    %v748 = vpop.f32.mrb[0].mxu0
    %v749 = vadd.f32 %v661, %v748
    %v750 = vpop.f32.mrb[0].mxu0
    %v751 = vadd.f32 %v657, %v750
    %v752 = vpop.f32.mrb[0].mxu0
    %v753 = vadd.f32 %v661, %v752
    %754 = vmatprep.mubr.bf16.mxu0 0
    %755 = vmatmul.mubr.bf16.gmra.mrb[0].mxu0 %v553
    %v756 = vpop.f32.mrb[0].mxu0
    %v757 = vadd.f32 %v657, %v756
    %v758 = vpop.f32.mrb[0].mxu0
    %v759 = vadd.f32 %v661, %v758
    %v760 = vpop.f32.mrb[0].mxu0
    %v761 = vadd.f32 %v657, %v760
    %v762 = vpop.f32.mrb[0].mxu0
    %v763 = vadd.f32 %v661, %v762
    %764 = vmatprep.mubr.bf16.mxu0 0
    %765 = vmatmul.mubr.bf16.gmra.mrb[0].mxu0 %v556
    %v766 = vpop.f32.mrb[0].mxu0
    %v767 = vadd.f32 %v657, %v766
    %v768 = vpop.f32.mrb[0].mxu0
    %v769 = vadd.f32 %v661, %v768
    %v770 = vpop.f32.mrb[0].mxu0
    %v771 = vadd.f32 %v657, %v770
    %v772 = vpop.f32.mrb[0].mxu0
    %v773 = vadd.f32 %v661, %v772
    %774 = vmatprep.mubr.bf16.mxu0 0
    %775 = vmatmul.mubr.bf16.gmra.mrb[0].mxu0 %v559
    %v776 = vpop.f32.mrb[0].mxu0
    %v777 = vadd.f32 %v657, %v776
    %v778 = vpop.f32.mrb[0].mxu0
    %v779 = vadd.f32 %v661, %v778
    %v780 = vpop.f32.mrb[0].mxu0
    %v781 = vadd.f32 %v657, %v780
    %v782 = vpop.f32.mrb[0].mxu0
    %v783 = vadd.f32 %v661, %v782
    %784 = vdwg.mxu0
    %v793 = vunpack.c.l.b16 %v178
    %v794 = vunpack.c.h.b16 %v178
    %v795 = vunpack.c.l.b16 %v179
    %v796 = vunpack.c.h.b16 %v179
    %v797 = vunpack.c.l.b16 %v180
    %v798 = vunpack.c.h.b16 %v180
    %v799 = vunpack.c.l.b16 %v181
    %v800 = vunpack.c.h.b16 %v181
    %v801 = vunpack.c.l.b16 %v182
    %v802 = vunpack.c.h.b16 %v182
    %v803 = vunpack.c.l.b16 %v183
    %v804 = vunpack.c.h.b16 %v183
    %v805 = vunpack.c.l.b16 %v184
    %v806 = vunpack.c.h.b16 %v184
    %v807 = vunpack.c.l.b16 %v185
    %v808 = vunpack.c.h.b16 %v185
    %v809 = vpack.c.b16 %v795, %v793
    %v810 = vpack.c.b16 %v796, %v794
    %v811 = vpack.c.b16 %v799, %v797
    %v812 = vpack.c.b16 %v800, %v798
    %v813 = vpack.c.b16 %v803, %v801
    %v814 = vpack.c.b16 %v804, %v802
    %v815 = vpack.c.b16 %v807, %v805
    %v816 = vpack.c.b16 %v808, %v806
    %v826 = vsel %vm545, 0, 0
    %828 = vmatprep.subr.bf16.mxu0 %v810
    %829 = vmatpush1.bf16.msra.mxu0 %v809
    %830 = vmatprep.subr.bf16.mxu0 %v812
    %831 = vmatpush1.bf16.msra.mxu0 %v811
    %832 = vmatprep.subr.bf16.mxu0 %v814
    %833 = vmatpush1.bf16.msra.mxu0 %v813
    %834 = vmatprep.subr.bf16.mxu0 %v816
    %835 = vmatpush1.bf16.msra.mxu0 %v815
    %836 = vmatprep.subr.bf16.mxu0 0
    %837 = vmatpush1.bf16.msra.mxu0 0
    %838 = vmatprep.subr.bf16.mxu0 0
    %839 = vmatpush1.bf16.msra.mxu0 0
    %840 = vmatprep.subr.bf16.mxu0 0
    %841 = vmatpush1.bf16.msra.mxu0 0
    %842 = vmatprep.subr.bf16.mxu0 0
    %843 = vmatpush1.bf16.msra.mxu0 0
    %844 = vmatprep.subr.bf16.mxu0 0
    %845 = vmatpush1.bf16.msra.mxu0 0
    %846 = vmatprep.subr.bf16.mxu0 0
    %847 = vmatpush1.bf16.msra.mxu0 0
    %848 = vmatprep.subr.bf16.mxu0 0
    %849 = vmatpush1.bf16.msra.mxu0 0
    %850 = vmatprep.subr.bf16.mxu0 0
    %851 = vmatpush1.bf16.msra.mxu0 0
    %852 = vmatprep.subr.bf16.mxu0 0
    %853 = vmatpush1.bf16.msra.mxu0 0
    %854 = vmatprep.subr.bf16.mxu0 0
    %855 = vmatpush1.bf16.msra.mxu0 0
    %856 = vmatprep.subr.bf16.mxu0 0
    %857 = vmatpush1.bf16.msra.mxu0 0
    %858 = vmatprep.subr.bf16.mxu0 0
    %859 = vmatpush1.bf16.msra.mxu0 0
    %860 = vmatprep.mubr.bf16.mxu0 0
    %861 = vmatmul.mubr.bf16.gmra.mrb[0].mxu0 %v826
    %v862 = vpop.f32.mrb[0].mxu0
    %v863 = vadd.f32 0.0, %v862
    %v864 = vpop.f32.mrb[0].mxu0
    %v865 = vadd.f32 0.0, %v864
    %v866 = vpop.f32.mrb[0].mxu0
    %v867 = vpop.f32.mrb[0].mxu0
    %868 = vdwg.mxu0
    %v869 = vadd.f32 %v596, %v863
    %v870 = vadd.f32 %v598, %v865
    %v871 = vxor.u32 %v869, 2147483648
    %v872 = vmul.f32 %v871, 1.442695
    %v873 = vpow.pop %v872
    %v874 = vadd.f32 %v873, 1.0
    %v875 = vrcp.pop %v874
    %v876 = vmul.f32 1.0, %v875
    %v877 = vtanh.pop %v870
    %v878 = vxor.u32 %v870, 2147483648
    %v879 = vmul.f32 %v878, 1.442695
    %v880 = vpow.pop %v879
    %v881 = vadd.f32 %v880, 1.0
    %v882 = vrcp.pop %v881
    %v883 = vmul.f32 1.0, %v882
    %v884 = vmul.f32 %v876, 0.0
    %v885 = vmul.f32 %v876, %v877
    %887 = vrot.lane.b32.xlu0 %v885, 64
    %v888 = vpop.permute.xlu0 %887
    %v890 = vadd.f32 %v884, %v888
    %v891 = vtanh.pop %v890
    %v892 = vmul.f32 %v883, %v891
    %v893 = vpack.c.bf16 %v892, %v892
    %895 = vrot.lane.b32.xlu0 %v893, 64
    %v896 = vpop.permute.xlu0 %895
    %v898 = vsel %vm545, %v896, 0
    %900 = vmatprep.subr.bf16.mxu0 %v810
    %901 = vmatpush1.bf16.msra.mxu0 %v809
    %902 = vmatprep.subr.bf16.mxu0 %v812
    %903 = vmatpush1.bf16.msra.mxu0 %v811
    %904 = vmatprep.subr.bf16.mxu0 %v814
    %905 = vmatpush1.bf16.msra.mxu0 %v813
    %906 = vmatprep.subr.bf16.mxu0 %v816
    %907 = vmatpush1.bf16.msra.mxu0 %v815
    %908 = vmatprep.subr.bf16.mxu0 0
    %909 = vmatpush1.bf16.msra.mxu0 0
    %910 = vmatprep.subr.bf16.mxu0 0
    %911 = vmatpush1.bf16.msra.mxu0 0
    %912 = vmatprep.subr.bf16.mxu0 0
    %913 = vmatpush1.bf16.msra.mxu0 0
    %914 = vmatprep.subr.bf16.mxu0 0
    %915 = vmatpush1.bf16.msra.mxu0 0
    %916 = vmatprep.subr.bf16.mxu0 0
    %917 = vmatpush1.bf16.msra.mxu0 0
    %918 = vmatprep.subr.bf16.mxu0 0
    %919 = vmatpush1.bf16.msra.mxu0 0
    %920 = vmatprep.subr.bf16.mxu0 0
    %921 = vmatpush1.bf16.msra.mxu0 0
    %922 = vmatprep.subr.bf16.mxu0 0
    %923 = vmatpush1.bf16.msra.mxu0 0
    %924 = vmatprep.subr.bf16.mxu0 0
    %925 = vmatpush1.bf16.msra.mxu0 0
    %926 = vmatprep.subr.bf16.mxu0 0
    %927 = vmatpush1.bf16.msra.mxu0 0
    %928 = vmatprep.subr.bf16.mxu0 0
    %929 = vmatpush1.bf16.msra.mxu0 0
    %930 = vmatprep.subr.bf16.mxu0 0
    %931 = vmatpush1.bf16.msra.mxu0 0
    %932 = vmatprep.mubr.bf16.mxu0 0
    %933 = vmatmul.mubr.bf16.gmra.mrb[0].mxu0 %v898
    %v934 = vpop.f32.mrb[0].mxu0
    %v935 = vadd.f32 0.0, %v934
    %v936 = vpop.f32.mrb[0].mxu0
    %v937 = vadd.f32 0.0, %v936
    %v938 = vpop.f32.mrb[0].mxu0
    %v939 = vpop.f32.mrb[0].mxu0
    %940 = vdwg.mxu0
    %v941 = vadd.f32 %v600, %v935
    %v942 = vadd.f32 %v602, %v937
    %v943 = vxor.u32 %v941, 2147483648
    %v944 = vmul.f32 %v943, 1.442695
    %v945 = vpow.pop %v944
    %v946 = vadd.f32 %v945, 1.0
    %v947 = vrcp.pop %v946
    %v948 = vmul.f32 1.0, %v947
    %v949 = vtanh.pop %v942
    %v950 = vxor.u32 %v942, 2147483648
    %v951 = vmul.f32 %v950, 1.442695
    %v952 = vpow.pop %v951
    %v953 = vadd.f32 %v952, 1.0
    %v954 = vrcp.pop %v953
    %v955 = vmul.f32 1.0, %v954
    %v956 = vmul.f32 %v948, %v890
    %v957 = vmul.f32 %v948, %v949
    %959 = vrot.lane.b32.xlu0 %v957, 64
    %v960 = vpop.permute.xlu0 %959
    %v962 = vadd.f32 %v956, %v960
    %v963 = vtanh.pop %v962
    %v964 = vmul.f32 %v955, %v963
    %v965 = vpack.c.bf16 %v964, %v964
    %967 = vrot.lane.b32.xlu0 %v965, 64
    %v968 = vpop.permute.xlu0 %967
    %v970 = vsel %vm545, %v968, 0
    %972 = vmatprep.subr.bf16.mxu0 %v810
    %973 = vmatpush1.bf16.msra.mxu0 %v809
    %974 = vmatprep.subr.bf16.mxu0 %v812
    %975 = vmatpush1.bf16.msra.mxu0 %v811
    %976 = vmatprep.subr.bf16.mxu0 %v814
    %977 = vmatpush1.bf16.msra.mxu0 %v813
    %978 = vmatprep.subr.bf16.mxu0 %v816
    %979 = vmatpush1.bf16.msra.mxu0 %v815
    %980 = vmatprep.subr.bf16.mxu0 0
    %981 = vmatpush1.bf16.msra.mxu0 0
    %982 = vmatprep.subr.bf16.mxu0 0
    %983 = vmatpush1.bf16.msra.mxu0 0
    %984 = vmatprep.subr.bf16.mxu0 0
    %985 = vmatpush1.bf16.msra.mxu0 0
    %986 = vmatprep.subr.bf16.mxu0 0
    %987 = vmatpush1.bf16.msra.mxu0 0
    %988 = vmatprep.subr.bf16.mxu0 0
    %989 = vmatpush1.bf16.msra.mxu0 0
    %990 = vmatprep.subr.bf16.mxu0 0
    %991 = vmatpush1.bf16.msra.mxu0 0
    %992 = vmatprep.subr.bf16.mxu0 0
    %993 = vmatpush1.bf16.msra.mxu0 0
    %994 = vmatprep.subr.bf16.mxu0 0
    %995 = vmatpush1.bf16.msra.mxu0 0
    %996 = vmatprep.subr.bf16.mxu0 0
    %997 = vmatpush1.bf16.msra.mxu0 0
    %998 = vmatprep.subr.bf16.mxu0 0
    %999 = vmatpush1.bf16.msra.mxu0 0
    %1000 = vmatprep.subr.bf16.mxu0 0
    %1001 = vmatpush1.bf16.msra.mxu0 0
    %1002 = vmatprep.subr.bf16.mxu0 0
    %1003 = vmatpush1.bf16.msra.mxu0 0
    %1004 = vmatprep.mubr.bf16.mxu0 0
    %1005 = vmatmul.mubr.bf16.gmra.mrb[0].mxu0 %v970
    %v1006 = vpop.f32.mrb[0].mxu0
    %v1007 = vadd.f32 0.0, %v1006
    %v1008 = vpop.f32.mrb[0].mxu0
    %v1009 = vadd.f32 0.0, %v1008
    %v1010 = vpop.f32.mrb[0].mxu0
    %v1011 = vpop.f32.mrb[0].mxu0
    %1012 = vdwg.mxu0
    %v1013 = vadd.f32 %v606, %v1007
    %v1014 = vadd.f32 %v608, %v1009
    %v1015 = vxor.u32 %v1013, 2147483648
    %v1016 = vmul.f32 %v1015, 1.442695
    %v1017 = vpow.pop %v1016
    %v1018 = vadd.f32 %v1017, 1.0
    %v1019 = vrcp.pop %v1018
    %v1020 = vmul.f32 1.0, %v1019
    %v1021 = vtanh.pop %v1014
    %v1022 = vxor.u32 %v1014, 2147483648
    %v1023 = vmul.f32 %v1022, 1.442695
    %v1024 = vpow.pop %v1023
    %v1025 = vadd.f32 %v1024, 1.0
    %v1026 = vrcp.pop %v1025
    %v1027 = vmul.f32 1.0, %v1026
    %v1028 = vmul.f32 %v1020, %v962
    %v1029 = vmul.f32 %v1020, %v1021
    %1031 = vrot.lane.b32.xlu0 %v1029, 64
    %v1032 = vpop.permute.xlu0 %1031
    %v1034 = vadd.f32 %v1028, %v1032
    %v1035 = vtanh.pop %v1034
    %v1036 = vmul.f32 %v1027, %v1035
    %v1037 = vpack.c.bf16 %v1036, %v1036
    %1039 = vrot.lane.b32.xlu0 %v1037, 64
    %v1040 = vpop.permute.xlu0 %1039
    %v1042 = vsel %vm545, %v1040, 0
    %1044 = vmatprep.subr.bf16.mxu0 %v810
    %1045 = vmatpush1.bf16.msra.mxu0 %v809
    %1046 = vmatprep.subr.bf16.mxu0 %v812
    %1047 = vmatpush1.bf16.msra.mxu0 %v811
    %1048 = vmatprep.subr.bf16.mxu0 %v814
    %1049 = vmatpush1.bf16.msra.mxu0 %v813
    %1050 = vmatprep.subr.bf16.mxu0 %v816
    %1051 = vmatpush1.bf16.msra.mxu0 %v815
    %1052 = vmatprep.subr.bf16.mxu0 0
    %1053 = vmatpush1.bf16.msra.mxu0 0
    %1054 = vmatprep.subr.bf16.mxu0 0
    %1055 = vmatpush1.bf16.msra.mxu0 0
    %1056 = vmatprep.subr.bf16.mxu0 0
    %1057 = vmatpush1.bf16.msra.mxu0 0
    %1058 = vmatprep.subr.bf16.mxu0 0
    %1059 = vmatpush1.bf16.msra.mxu0 0
    %1060 = vmatprep.subr.bf16.mxu0 0
    %1061 = vmatpush1.bf16.msra.mxu0 0
    %1062 = vmatprep.subr.bf16.mxu0 0
    %1063 = vmatpush1.bf16.msra.mxu0 0
    %1064 = vmatprep.subr.bf16.mxu0 0
    %1065 = vmatpush1.bf16.msra.mxu0 0
    %1066 = vmatprep.subr.bf16.mxu0 0
    %1067 = vmatpush1.bf16.msra.mxu0 0
    %1068 = vmatprep.subr.bf16.mxu0 0
    %1069 = vmatpush1.bf16.msra.mxu0 0
    %1070 = vmatprep.subr.bf16.mxu0 0
    %1071 = vmatpush1.bf16.msra.mxu0 0
    %1072 = vmatprep.subr.bf16.mxu0 0
    %1073 = vmatpush1.bf16.msra.mxu0 0
    %1074 = vmatprep.subr.bf16.mxu0 0
    %1075 = vmatpush1.bf16.msra.mxu0 0
    %1076 = vmatprep.mubr.bf16.mxu0 0
    %1077 = vmatmul.mubr.bf16.gmra.mrb[0].mxu0 %v1042
    %v1078 = vpop.f32.mrb[0].mxu0
    %v1079 = vadd.f32 0.0, %v1078
    %v1080 = vpop.f32.mrb[0].mxu0
    %v1081 = vadd.f32 0.0, %v1080
    %v1082 = vpop.f32.mrb[0].mxu0
    %v1083 = vpop.f32.mrb[0].mxu0
    %1084 = vdwg.mxu0
    %v1085 = vadd.f32 %v610, %v1079
    %v1086 = vadd.f32 %v612, %v1081
    %v1087 = vxor.u32 %v1085, 2147483648
    %v1088 = vmul.f32 %v1087, 1.442695
    %v1089 = vpow.pop %v1088
    %v1090 = vadd.f32 %v1089, 1.0
    %v1091 = vrcp.pop %v1090
    %v1092 = vmul.f32 1.0, %v1091
    %v1093 = vtanh.pop %v1086
    %v1094 = vxor.u32 %v1086, 2147483648
    %v1095 = vmul.f32 %v1094, 1.442695
    %v1096 = vpow.pop %v1095
    %v1097 = vadd.f32 %v1096, 1.0
    %v1098 = vrcp.pop %v1097
    %v1099 = vmul.f32 1.0, %v1098
    %v1100 = vmul.f32 %v1092, %v1034
    %v1101 = vmul.f32 %v1092, %v1093
    %1103 = vrot.lane.b32.xlu0 %v1101, 64
    %v1104 = vpop.permute.xlu0 %1103
    %v1106 = vadd.f32 %v1100, %v1104
    %v1107 = vtanh.pop %v1106
    %v1108 = vmul.f32 %v1099, %v1107
    %v1109 = vpack.c.bf16 %v1108, %v1108
    %1111 = vrot.lane.b32.xlu0 %v1109, 64
    %v1112 = vpop.permute.xlu0 %1111
    %v1114 = vsel %vm545, %v1112, 0
    %1116 = vmatprep.subr.bf16.mxu0 %v810
    %1117 = vmatpush1.bf16.msra.mxu0 %v809
    %1118 = vmatprep.subr.bf16.mxu0 %v812
    %1119 = vmatpush1.bf16.msra.mxu0 %v811
    %1120 = vmatprep.subr.bf16.mxu0 %v814
    %1121 = vmatpush1.bf16.msra.mxu0 %v813
    %1122 = vmatprep.subr.bf16.mxu0 %v816
    %1123 = vmatpush1.bf16.msra.mxu0 %v815
    %1124 = vmatprep.subr.bf16.mxu0 0
    %1125 = vmatpush1.bf16.msra.mxu0 0
    %1126 = vmatprep.subr.bf16.mxu0 0
    %1127 = vmatpush1.bf16.msra.mxu0 0
    %1128 = vmatprep.subr.bf16.mxu0 0
    %1129 = vmatpush1.bf16.msra.mxu0 0
    %1130 = vmatprep.subr.bf16.mxu0 0
    %1131 = vmatpush1.bf16.msra.mxu0 0
    %1132 = vmatprep.subr.bf16.mxu0 0
    %1133 = vmatpush1.bf16.msra.mxu0 0
    %1134 = vmatprep.subr.bf16.mxu0 0
    %1135 = vmatpush1.bf16.msra.mxu0 0
    %1136 = vmatprep.subr.bf16.mxu0 0
    %1137 = vmatpush1.bf16.msra.mxu0 0
    %1138 = vmatprep.subr.bf16.mxu0 0
    %1139 = vmatpush1.bf16.msra.mxu0 0
    %1140 = vmatprep.subr.bf16.mxu0 0
    %1141 = vmatpush1.bf16.msra.mxu0 0
    %1142 = vmatprep.subr.bf16.mxu0 0
    %1143 = vmatpush1.bf16.msra.mxu0 0
    %1144 = vmatprep.subr.bf16.mxu0 0
    %1145 = vmatpush1.bf16.msra.mxu0 0
    %1146 = vmatprep.subr.bf16.mxu0 0
    %1147 = vmatpush1.bf16.msra.mxu0 0
    %1148 = vmatprep.mubr.bf16.mxu0 0
    %1149 = vmatmul.mubr.bf16.gmra.mrb[0].mxu0 %v1114
    %v1150 = vpop.f32.mrb[0].mxu0
    %v1151 = vadd.f32 0.0, %v1150
    %v1152 = vpop.f32.mrb[0].mxu0
    %v1153 = vadd.f32 0.0, %v1152
    %v1154 = vpop.f32.mrb[0].mxu0
    %v1155 = vpop.f32.mrb[0].mxu0
    %1156 = vdwg.mxu0
    %v1157 = vadd.f32 %v616, %v1151
    %v1158 = vadd.f32 %v618, %v1153
    %v1159 = vxor.u32 %v1157, 2147483648
    %v1160 = vmul.f32 %v1159, 1.442695
    %v1161 = vpow.pop %v1160
    %v1162 = vadd.f32 %v1161, 1.0
    %v1163 = vrcp.pop %v1162
    %v1164 = vmul.f32 1.0, %v1163
    %v1165 = vtanh.pop %v1158
    %v1166 = vxor.u32 %v1158, 2147483648
    %v1167 = vmul.f32 %v1166, 1.442695
    %v1168 = vpow.pop %v1167
    %v1169 = vadd.f32 %v1168, 1.0
    %v1170 = vrcp.pop %v1169
    %v1171 = vmul.f32 1.0, %v1170
    %v1172 = vmul.f32 %v1164, %v1106
    %v1173 = vmul.f32 %v1164, %v1165
    %1175 = vrot.lane.b32.xlu0 %v1173, 64
    %v1176 = vpop.permute.xlu0 %1175
    %v1178 = vadd.f32 %v1172, %v1176
    %v1179 = vtanh.pop %v1178
    %v1180 = vmul.f32 %v1171, %v1179
    %v1181 = vpack.c.bf16 %v1180, %v1180
    %1183 = vrot.lane.b32.xlu0 %v1181, 64
    %v1184 = vpop.permute.xlu0 %1183
    %v1186 = vsel %vm545, %v1184, 0
    %1188 = vmatprep.subr.bf16.mxu0 %v810
    %1189 = vmatpush1.bf16.msra.mxu0 %v809
    %1190 = vmatprep.subr.bf16.mxu0 %v812
    %1191 = vmatpush1.bf16.msra.mxu0 %v811
    %1192 = vmatprep.subr.bf16.mxu0 %v814
    %1193 = vmatpush1.bf16.msra.mxu0 %v813
    %1194 = vmatprep.subr.bf16.mxu0 %v816
    %1195 = vmatpush1.bf16.msra.mxu0 %v815
    %1196 = vmatprep.subr.bf16.mxu0 0
    %1197 = vmatpush1.bf16.msra.mxu0 0
    %1198 = vmatprep.subr.bf16.mxu0 0
    %1199 = vmatpush1.bf16.msra.mxu0 0
    %1200 = vmatprep.subr.bf16.mxu0 0
    %1201 = vmatpush1.bf16.msra.mxu0 0
    %1202 = vmatprep.subr.bf16.mxu0 0
    %1203 = vmatpush1.bf16.msra.mxu0 0
    %1204 = vmatprep.subr.bf16.mxu0 0
    %1205 = vmatpush1.bf16.msra.mxu0 0
    %1206 = vmatprep.subr.bf16.mxu0 0
    %1207 = vmatpush1.bf16.msra.mxu0 0
    %1208 = vmatprep.subr.bf16.mxu0 0
    %1209 = vmatpush1.bf16.msra.mxu0 0
    %1210 = vmatprep.subr.bf16.mxu0 0
    %1211 = vmatpush1.bf16.msra.mxu0 0
    %1212 = vmatprep.subr.bf16.mxu0 0
    %1213 = vmatpush1.bf16.msra.mxu0 0
    %1214 = vmatprep.subr.bf16.mxu0 0
    %1215 = vmatpush1.bf16.msra.mxu0 0
    %1216 = vmatprep.subr.bf16.mxu0 0
    %1217 = vmatpush1.bf16.msra.mxu0 0
    %1218 = vmatprep.subr.bf16.mxu0 0
    %1219 = vmatpush1.bf16.msra.mxu0 0
    %1220 = vmatprep.mubr.bf16.mxu0 0
    %1221 = vmatmul.mubr.bf16.gmra.mrb[0].mxu0 %v1186
    %v1222 = vpop.f32.mrb[0].mxu0
    %v1223 = vadd.f32 0.0, %v1222
    %v1224 = vpop.f32.mrb[0].mxu0
    %v1225 = vadd.f32 0.0, %v1224
    %v1226 = vpop.f32.mrb[0].mxu0
    %v1227 = vpop.f32.mrb[0].mxu0
    %1228 = vdwg.mxu0
    %v1229 = vadd.f32 %v620, %v1223
    %v1230 = vadd.f32 %v622, %v1225
    %v1231 = vxor.u32 %v1229, 2147483648
    %v1232 = vmul.f32 %v1231, 1.442695
    %v1233 = vpow.pop %v1232
    %v1234 = vadd.f32 %v1233, 1.0
    %v1235 = vrcp.pop %v1234
    %v1236 = vmul.f32 1.0, %v1235
    %v1237 = vtanh.pop %v1230
    %v1238 = vxor.u32 %v1230, 2147483648
    %v1239 = vmul.f32 %v1238, 1.442695
    %v1240 = vpow.pop %v1239
    %v1241 = vadd.f32 %v1240, 1.0
    %v1242 = vrcp.pop %v1241
    %v1243 = vmul.f32 1.0, %v1242
    %v1244 = vmul.f32 %v1236, %v1178
    %v1245 = vmul.f32 %v1236, %v1237
    %1247 = vrot.lane.b32.xlu0 %v1245, 64
    %v1248 = vpop.permute.xlu0 %1247
    %v1250 = vadd.f32 %v1244, %v1248
    %v1251 = vtanh.pop %v1250
    %v1252 = vmul.f32 %v1243, %v1251
    %v1253 = vpack.c.bf16 %v1252, %v1252
    %1255 = vrot.lane.b32.xlu0 %v1253, 64
    %v1256 = vpop.permute.xlu0 %1255
    %v1258 = vsel %vm545, %v1256, 0
    %1260 = vmatprep.subr.bf16.mxu0 %v810
    %1261 = vmatpush1.bf16.msra.mxu0 %v809
    %1262 = vmatprep.subr.bf16.mxu0 %v812
    %1263 = vmatpush1.bf16.msra.mxu0 %v811
    %1264 = vmatprep.subr.bf16.mxu0 %v814
    %1265 = vmatpush1.bf16.msra.mxu0 %v813
    %1266 = vmatprep.subr.bf16.mxu0 %v816
    %1267 = vmatpush1.bf16.msra.mxu0 %v815
    %1268 = vmatprep.subr.bf16.mxu0 0
    %1269 = vmatpush1.bf16.msra.mxu0 0
    %1270 = vmatprep.subr.bf16.mxu0 0
    %1271 = vmatpush1.bf16.msra.mxu0 0
    %1272 = vmatprep.subr.bf16.mxu0 0
    %1273 = vmatpush1.bf16.msra.mxu0 0
    %1274 = vmatprep.subr.bf16.mxu0 0
    %1275 = vmatpush1.bf16.msra.mxu0 0
    %1276 = vmatprep.subr.bf16.mxu0 0
    %1277 = vmatpush1.bf16.msra.mxu0 0
    %1278 = vmatprep.subr.bf16.mxu0 0
    %1279 = vmatpush1.bf16.msra.mxu0 0
    %1280 = vmatprep.subr.bf16.mxu0 0
    %1281 = vmatpush1.bf16.msra.mxu0 0
    %1282 = vmatprep.subr.bf16.mxu0 0
    %1283 = vmatpush1.bf16.msra.mxu0 0
    %1284 = vmatprep.subr.bf16.mxu0 0
    %1285 = vmatpush1.bf16.msra.mxu0 0
    %1286 = vmatprep.subr.bf16.mxu0 0
    %1287 = vmatpush1.bf16.msra.mxu0 0
    %1288 = vmatprep.subr.bf16.mxu0 0
    %1289 = vmatpush1.bf16.msra.mxu0 0
    %1290 = vmatprep.subr.bf16.mxu0 0
    %1291 = vmatpush1.bf16.msra.mxu0 0
    %1292 = vmatprep.mubr.bf16.mxu0 0
    %1293 = vmatmul.mubr.bf16.gmra.mrb[0].mxu0 %v1258
    %v1294 = vpop.f32.mrb[0].mxu0
    %v1295 = vadd.f32 0.0, %v1294
    %v1296 = vpop.f32.mrb[0].mxu0
    %v1297 = vadd.f32 0.0, %v1296
    %v1298 = vpop.f32.mrb[0].mxu0
    %v1299 = vpop.f32.mrb[0].mxu0
    %1300 = vdwg.mxu0
    %v1301 = vadd.f32 %v626, %v1295
    %v1302 = vadd.f32 %v628, %v1297
    %v1303 = vxor.u32 %v1301, 2147483648
    %v1304 = vmul.f32 %v1303, 1.442695
    %v1305 = vpow.pop %v1304
    %v1306 = vadd.f32 %v1305, 1.0
    %v1307 = vrcp.pop %v1306
    %v1308 = vmul.f32 1.0, %v1307
    %v1309 = vtanh.pop %v1302
    %v1310 = vxor.u32 %v1302, 2147483648
    %v1311 = vmul.f32 %v1310, 1.442695
    %v1312 = vpow.pop %v1311
    %v1313 = vadd.f32 %v1312, 1.0
    %v1314 = vrcp.pop %v1313
    %v1315 = vmul.f32 1.0, %v1314
    %v1316 = vmul.f32 %v1308, %v1250
    %v1317 = vmul.f32 %v1308, %v1309
    %1319 = vrot.lane.b32.xlu0 %v1317, 64
    %v1320 = vpop.permute.xlu0 %1319
    %v1322 = vadd.f32 %v1316, %v1320
    %v1323 = vtanh.pop %v1322
    %v1324 = vmul.f32 %v1315, %v1323
    %v1325 = vpack.c.bf16 %v1324, %v1324
    %1327 = vrot.lane.b32.xlu0 %v1325, 64
    %v1328 = vpop.permute.xlu0 %1327
    %v1330 = vsel %vm545, %v1328, 0
    %1332 = vmatprep.subr.bf16.mxu0 %v810
    %1333 = vmatpush1.bf16.msra.mxu0 %v809
    %1334 = vmatprep.subr.bf16.mxu0 %v812
    %1335 = vmatpush1.bf16.msra.mxu0 %v811
    %1336 = vmatprep.subr.bf16.mxu0 %v814
    %1337 = vmatpush1.bf16.msra.mxu0 %v813
    %1338 = vmatprep.subr.bf16.mxu0 %v816
    %1339 = vmatpush1.bf16.msra.mxu0 %v815
    %1340 = vmatprep.subr.bf16.mxu0 0
    %1341 = vmatpush1.bf16.msra.mxu0 0
    %1342 = vmatprep.subr.bf16.mxu0 0
    %1343 = vmatpush1.bf16.msra.mxu0 0
    %1344 = vmatprep.subr.bf16.mxu0 0
    %1345 = vmatpush1.bf16.msra.mxu0 0
    %1346 = vmatprep.subr.bf16.mxu0 0
    %1347 = vmatpush1.bf16.msra.mxu0 0
    %1348 = vmatprep.subr.bf16.mxu0 0
    %1349 = vmatpush1.bf16.msra.mxu0 0
    %1350 = vmatprep.subr.bf16.mxu0 0
    %1351 = vmatpush1.bf16.msra.mxu0 0
    %1352 = vmatprep.subr.bf16.mxu0 0
    %1353 = vmatpush1.bf16.msra.mxu0 0
    %1354 = vmatprep.subr.bf16.mxu0 0
    %1355 = vmatpush1.bf16.msra.mxu0 0
    %1356 = vmatprep.subr.bf16.mxu0 0
    %1357 = vmatpush1.bf16.msra.mxu0 0
    %1358 = vmatprep.subr.bf16.mxu0 0
    %1359 = vmatpush1.bf16.msra.mxu0 0
    %1360 = vmatprep.subr.bf16.mxu0 0
    %1361 = vmatpush1.bf16.msra.mxu0 0
    %1362 = vmatprep.subr.bf16.mxu0 0
    %1363 = vmatpush1.bf16.msra.mxu0 0
    %1364 = vmatprep.mubr.bf16.mxu0 0
    %1365 = vmatmul.mubr.bf16.gmra.mrb[0].mxu0 %v1330
    %v1366 = vpop.f32.mrb[0].mxu0
    %v1367 = vadd.f32 0.0, %v1366
    %v1368 = vpop.f32.mrb[0].mxu0
    %v1369 = vadd.f32 0.0, %v1368
    %v1370 = vpop.f32.mrb[0].mxu0
    %v1371 = vpop.f32.mrb[0].mxu0
    %1372 = vdwg.mxu0
    %v1373 = vadd.f32 %v630, %v1367
    %v1374 = vadd.f32 %v632, %v1369
    %v1375 = vxor.u32 %v1373, 2147483648
    %v1376 = vmul.f32 %v1375, 1.442695
    %v1377 = vpow.pop %v1376
    %v1378 = vadd.f32 %v1377, 1.0
    %v1379 = vrcp.pop %v1378
    %v1380 = vmul.f32 1.0, %v1379
    %v1381 = vtanh.pop %v1374
    %v1382 = vxor.u32 %v1374, 2147483648
    %v1383 = vmul.f32 %v1382, 1.442695
    %v1384 = vpow.pop %v1383
    %v1385 = vadd.f32 %v1384, 1.0
    %v1386 = vrcp.pop %v1385
    %v1387 = vmul.f32 1.0, %v1386
    %v1388 = vmul.f32 %v1380, %v1322
    %v1389 = vmul.f32 %v1380, %v1381
    %1391 = vrot.lane.b32.xlu0 %v1389, 64
    %v1392 = vpop.permute.xlu0 %1391
    %v1394 = vadd.f32 %v1388, %v1392
    %v1395 = vtanh.pop %v1394
    %v1396 = vmul.f32 %v1387, %v1395
    %v1397 = vpack.c.bf16 %v1396, %v1396
    %1399 = vrot.lane.b32.xlu0 %v1397, 64
    %v1400 = vpop.permute.xlu0 %1399
    %v1402 = vsel %vm545, %v1400, 0
    %1404 = vmatprep.subr.bf16.mxu0 %v810
    %1405 = vmatpush1.bf16.msra.mxu0 %v809
    %1406 = vmatprep.subr.bf16.mxu0 %v812
    %1407 = vmatpush1.bf16.msra.mxu0 %v811
    %1408 = vmatprep.subr.bf16.mxu0 %v814
    %1409 = vmatpush1.bf16.msra.mxu0 %v813
    %1410 = vmatprep.subr.bf16.mxu0 %v816
    %1411 = vmatpush1.bf16.msra.mxu0 %v815
    %1412 = vmatprep.subr.bf16.mxu0 0
    %1413 = vmatpush1.bf16.msra.mxu0 0
    %1414 = vmatprep.subr.bf16.mxu0 0
    %1415 = vmatpush1.bf16.msra.mxu0 0
    %1416 = vmatprep.subr.bf16.mxu0 0
    %1417 = vmatpush1.bf16.msra.mxu0 0
    %1418 = vmatprep.subr.bf16.mxu0 0
    %1419 = vmatpush1.bf16.msra.mxu0 0
    %1420 = vmatprep.subr.bf16.mxu0 0
    %1421 = vmatpush1.bf16.msra.mxu0 0
    %1422 = vmatprep.subr.bf16.mxu0 0
    %1423 = vmatpush1.bf16.msra.mxu0 0
    %1424 = vmatprep.subr.bf16.mxu0 0
    %1425 = vmatpush1.bf16.msra.mxu0 0
    %1426 = vmatprep.subr.bf16.mxu0 0
    %1427 = vmatpush1.bf16.msra.mxu0 0
    %1428 = vmatprep.subr.bf16.mxu0 0
    %1429 = vmatpush1.bf16.msra.mxu0 0
    %1430 = vmatprep.subr.bf16.mxu0 0
    %1431 = vmatpush1.bf16.msra.mxu0 0
    %1432 = vmatprep.subr.bf16.mxu0 0
    %1433 = vmatpush1.bf16.msra.mxu0 0
    %1434 = vmatprep.subr.bf16.mxu0 0
    %1435 = vmatpush1.bf16.msra.mxu0 0
    %1436 = vmatprep.mubr.bf16.mxu0 0
    %1437 = vmatmul.mubr.bf16.gmra.mrb[0].mxu0 %v1402
    %v1438 = vpop.f32.mrb[0].mxu0
    %v1439 = vadd.f32 0.0, %v1438
    %v1440 = vpop.f32.mrb[0].mxu0
    %v1441 = vadd.f32 0.0, %v1440
    %v1442 = vpop.f32.mrb[0].mxu0
    %v1443 = vpop.f32.mrb[0].mxu0
    %1444 = vdwg.mxu0
    %v1445 = vadd.f32 %v636, %v1439
    %v1446 = vadd.f32 %v638, %v1441
    %v1447 = vxor.u32 %v1445, 2147483648
    %v1448 = vmul.f32 %v1447, 1.442695
    %v1449 = vpow.pop %v1448
    %v1450 = vadd.f32 %v1449, 1.0
    %v1451 = vrcp.pop %v1450
    %v1452 = vmul.f32 1.0, %v1451
    %v1453 = vtanh.pop %v1446
    %v1454 = vxor.u32 %v1446, 2147483648
    %v1455 = vmul.f32 %v1454, 1.442695
    %v1456 = vpow.pop %v1455
    %v1457 = vadd.f32 %v1456, 1.0
    %v1458 = vrcp.pop %v1457
    %v1459 = vmul.f32 1.0, %v1458
    %v1460 = vmul.f32 %v1452, %v1394
    %v1461 = vmul.f32 %v1452, %v1453
    %1463 = vrot.lane.b32.xlu0 %v1461, 64
    %v1464 = vpop.permute.xlu0 %1463
    %v1466 = vadd.f32 %v1460, %v1464
    %v1467 = vtanh.pop %v1466
    %v1468 = vmul.f32 %v1459, %v1467
    %v1469 = vpack.c.bf16 %v1468, %v1468
    %1471 = vrot.lane.b32.xlu0 %v1469, 64
    %v1472 = vpop.permute.xlu0 %1471
    %v1474 = vsel %vm545, %v1472, 0
    %1476 = vmatprep.subr.bf16.mxu0 %v810
    %1477 = vmatpush1.bf16.msra.mxu0 %v809
    %1478 = vmatprep.subr.bf16.mxu0 %v812
    %1479 = vmatpush1.bf16.msra.mxu0 %v811
    %1480 = vmatprep.subr.bf16.mxu0 %v814
    %1481 = vmatpush1.bf16.msra.mxu0 %v813
    %1482 = vmatprep.subr.bf16.mxu0 %v816
    %1483 = vmatpush1.bf16.msra.mxu0 %v815
    %1484 = vmatprep.subr.bf16.mxu0 0
    %1485 = vmatpush1.bf16.msra.mxu0 0
    %1486 = vmatprep.subr.bf16.mxu0 0
    %1487 = vmatpush1.bf16.msra.mxu0 0
    %1488 = vmatprep.subr.bf16.mxu0 0
    %1489 = vmatpush1.bf16.msra.mxu0 0
    %1490 = vmatprep.subr.bf16.mxu0 0
    %1491 = vmatpush1.bf16.msra.mxu0 0
    %1492 = vmatprep.subr.bf16.mxu0 0
    %1493 = vmatpush1.bf16.msra.mxu0 0
    %1494 = vmatprep.subr.bf16.mxu0 0
    %1495 = vmatpush1.bf16.msra.mxu0 0
    %1496 = vmatprep.subr.bf16.mxu0 0
    %1497 = vmatpush1.bf16.msra.mxu0 0
    %1498 = vmatprep.subr.bf16.mxu0 0
    %1499 = vmatpush1.bf16.msra.mxu0 0
    %1500 = vmatprep.subr.bf16.mxu0 0
    %1501 = vmatpush1.bf16.msra.mxu0 0
    %1502 = vmatprep.subr.bf16.mxu0 0
    %1503 = vmatpush1.bf16.msra.mxu0 0
    %1504 = vmatprep.subr.bf16.mxu0 0
    %1505 = vmatpush1.bf16.msra.mxu0 0
    %1506 = vmatprep.subr.bf16.mxu0 0
    %1507 = vmatpush1.bf16.msra.mxu0 0
    %1508 = vmatprep.mubr.bf16.mxu0 0
    %1509 = vmatmul.mubr.bf16.gmra.mrb[0].mxu0 %v1474
    %v1510 = vpop.f32.mrb[0].mxu0
    %v1511 = vadd.f32 0.0, %v1510
    %v1512 = vpop.f32.mrb[0].mxu0
    %v1513 = vadd.f32 0.0, %v1512
    %v1514 = vpop.f32.mrb[0].mxu0
    %v1515 = vpop.f32.mrb[0].mxu0
    %1516 = vdwg.mxu0
    %v1517 = vadd.f32 %v640, %v1511
    %v1518 = vadd.f32 %v642, %v1513
    %v1519 = vxor.u32 %v1517, 2147483648
    %v1520 = vmul.f32 %v1519, 1.442695
    %v1521 = vpow.pop %v1520
    %v1522 = vadd.f32 %v1521, 1.0
    %v1523 = vrcp.pop %v1522
    %v1524 = vmul.f32 1.0, %v1523
    %v1525 = vtanh.pop %v1518
    %v1526 = vxor.u32 %v1518, 2147483648
    %v1527 = vmul.f32 %v1526, 1.442695
    %v1528 = vpow.pop %v1527
    %v1529 = vadd.f32 %v1528, 1.0
    %v1530 = vrcp.pop %v1529
    %v1531 = vmul.f32 1.0, %v1530
    %v1532 = vmul.f32 %v1524, %v1466
    %v1533 = vmul.f32 %v1524, %v1525
    %1535 = vrot.lane.b32.xlu0 %v1533, 64
    %v1536 = vpop.permute.xlu0 %1535
    %v1538 = vadd.f32 %v1532, %v1536
    %v1539 = vtanh.pop %v1538
    %v1540 = vmul.f32 %v1531, %v1539
    %v1549 = vunpack.c.l.b16 %v186
    %v1550 = vunpack.c.h.b16 %v186
    %v1551 = vunpack.c.l.b16 %v187
    %v1552 = vunpack.c.h.b16 %v187
    %v1553 = vunpack.c.l.b16 %v188
    %v1554 = vunpack.c.h.b16 %v188
    %v1555 = vunpack.c.l.b16 %v189
    %v1556 = vunpack.c.h.b16 %v189
    %v1557 = vunpack.c.l.b16 %v190
    %v1558 = vunpack.c.h.b16 %v190
    %v1559 = vunpack.c.l.b16 %v191
    %v1560 = vunpack.c.h.b16 %v191
    %v1561 = vunpack.c.l.b16 %v192
    %v1562 = vunpack.c.h.b16 %v192
    %v1563 = vunpack.c.l.b16 %v193
    %v1564 = vunpack.c.h.b16 %v193
    %v1565 = vpack.c.b16 %v1551, %v1549
    %v1566 = vpack.c.b16 %v1552, %v1550
    %v1567 = vpack.c.b16 %v1555, %v1553
    %v1568 = vpack.c.b16 %v1556, %v1554
    %v1569 = vpack.c.b16 %v1559, %v1557
    %v1570 = vpack.c.b16 %v1560, %v1558
    %v1571 = vpack.c.b16 %v1563, %v1561
    %v1572 = vpack.c.b16 %v1564, %v1562
    %1581 = vmatprep.subr.bf16.mxu0 %v1566
    %1582 = vmatpush1.bf16.msra.mxu0 %v1565
    %1583 = vmatprep.subr.bf16.mxu0 %v1568
    %1584 = vmatpush1.bf16.msra.mxu0 %v1567
    %1585 = vmatprep.subr.bf16.mxu0 %v1570
    %1586 = vmatpush1.bf16.msra.mxu0 %v1569
    %1587 = vmatprep.subr.bf16.mxu0 %v1572
    %1588 = vmatpush1.bf16.msra.mxu0 %v1571
    %1589 = vmatprep.subr.bf16.mxu0 0
    %1590 = vmatpush1.bf16.msra.mxu0 0
    %1591 = vmatprep.subr.bf16.mxu0 0
    %1592 = vmatpush1.bf16.msra.mxu0 0
    %1593 = vmatprep.subr.bf16.mxu0 0
    %1594 = vmatpush1.bf16.msra.mxu0 0
    %1595 = vmatprep.subr.bf16.mxu0 0
    %1596 = vmatpush1.bf16.msra.mxu0 0
    %1597 = vmatprep.subr.bf16.mxu0 0
    %1598 = vmatpush1.bf16.msra.mxu0 0
    %1599 = vmatprep.subr.bf16.mxu0 0
    %1600 = vmatpush1.bf16.msra.mxu0 0
    %1601 = vmatprep.subr.bf16.mxu0 0
    %1602 = vmatpush1.bf16.msra.mxu0 0
    %1603 = vmatprep.subr.bf16.mxu0 0
    %1604 = vmatpush1.bf16.msra.mxu0 0
    %1605 = vmatprep.subr.bf16.mxu0 0
    %1606 = vmatpush1.bf16.msra.mxu0 0
    %1607 = vmatprep.subr.bf16.mxu0 0
    %1608 = vmatpush1.bf16.msra.mxu0 0
    %1609 = vmatprep.subr.bf16.mxu0 0
    %1610 = vmatpush1.bf16.msra.mxu0 0
    %1611 = vmatprep.subr.bf16.mxu0 0
    %1612 = vmatpush1.bf16.msra.mxu0 0
    %1613 = vmatprep.mubr.bf16.mxu0 0
    %1614 = vmatmul.mubr.bf16.gmra.mrb[0].mxu0 %v826
    %v1615 = vpop.f32.mrb[0].mxu0
    %v1616 = vadd.f32 0.0, %v1615
    %v1617 = vpop.f32.mrb[0].mxu0
    %v1618 = vadd.f32 0.0, %v1617
    %v1619 = vpop.f32.mrb[0].mxu0
    %v1620 = vpop.f32.mrb[0].mxu0
    %1621 = vdwg.mxu0
    %v1622 = vadd.f32 %v781, %v1616
    %v1623 = vadd.f32 %v783, %v1618
    %v1624 = vxor.u32 %v1622, 2147483648
    %v1625 = vmul.f32 %v1624, 1.442695
    %v1626 = vpow.pop %v1625
    %v1627 = vadd.f32 %v1626, 1.0
    %v1628 = vrcp.pop %v1627
    %v1629 = vmul.f32 1.0, %v1628
    %v1630 = vtanh.pop %v1623
    %v1631 = vxor.u32 %v1623, 2147483648
    %v1632 = vmul.f32 %v1631, 1.442695
    %v1633 = vpow.pop %v1632
    %v1634 = vadd.f32 %v1633, 1.0
    %v1635 = vrcp.pop %v1634
    %v1636 = vmul.f32 1.0, %v1635
    %v1637 = vmul.f32 %v1629, 0.0
    %v1638 = vmul.f32 %v1629, %v1630
    %1640 = vrot.lane.b32.xlu0 %v1638, 64
    %v1641 = vpop.permute.xlu0 %1640
    %v1643 = vadd.f32 %v1637, %v1641
    %v1644 = vtanh.pop %v1643
    %v1645 = vmul.f32 %v1636, %v1644
    %v1646 = vpack.c.bf16 %v1645, %v1645
    %1648 = vrot.lane.b32.xlu0 %v1646, 64
    %v1649 = vpop.permute.xlu0 %1648
    %v1651 = vsel %vm545, %v1649, 0
    %1653 = vmatprep.subr.bf16.mxu0 %v1566
    %1654 = vmatpush1.bf16.msra.mxu0 %v1565
    %1655 = vmatprep.subr.bf16.mxu0 %v1568
    %1656 = vmatpush1.bf16.msra.mxu0 %v1567
    %1657 = vmatprep.subr.bf16.mxu0 %v1570
    %1658 = vmatpush1.bf16.msra.mxu0 %v1569
    %1659 = vmatprep.subr.bf16.mxu0 %v1572
    %1660 = vmatpush1.bf16.msra.mxu0 %v1571
    %1661 = vmatprep.subr.bf16.mxu0 0
    %1662 = vmatpush1.bf16.msra.mxu0 0
    %1663 = vmatprep.subr.bf16.mxu0 0
    %1664 = vmatpush1.bf16.msra.mxu0 0
    %1665 = vmatprep.subr.bf16.mxu0 0
    %1666 = vmatpush1.bf16.msra.mxu0 0
    %1667 = vmatprep.subr.bf16.mxu0 0
    %1668 = vmatpush1.bf16.msra.mxu0 0
    %1669 = vmatprep.subr.bf16.mxu0 0
    %1670 = vmatpush1.bf16.msra.mxu0 0
    %1671 = vmatprep.subr.bf16.mxu0 0
    %1672 = vmatpush1.bf16.msra.mxu0 0
    %1673 = vmatprep.subr.bf16.mxu0 0
    %1674 = vmatpush1.bf16.msra.mxu0 0
    %1675 = vmatprep.subr.bf16.mxu0 0
    %1676 = vmatpush1.bf16.msra.mxu0 0
    %1677 = vmatprep.subr.bf16.mxu0 0
    %1678 = vmatpush1.bf16.msra.mxu0 0
    %1679 = vmatprep.subr.bf16.mxu0 0
    %1680 = vmatpush1.bf16.msra.mxu0 0
    %1681 = vmatprep.subr.bf16.mxu0 0
    %1682 = vmatpush1.bf16.msra.mxu0 0
    %1683 = vmatprep.subr.bf16.mxu0 0
    %1684 = vmatpush1.bf16.msra.mxu0 0
    %1685 = vmatprep.mubr.bf16.mxu0 0
    %1686 = vmatmul.mubr.bf16.gmra.mrb[0].mxu0 %v1651
    %v1687 = vpop.f32.mrb[0].mxu0
    %v1688 = vadd.f32 0.0, %v1687
    %v1689 = vpop.f32.mrb[0].mxu0
    %v1690 = vadd.f32 0.0, %v1689
    %v1691 = vpop.f32.mrb[0].mxu0
    %v1692 = vpop.f32.mrb[0].mxu0
    %1693 = vdwg.mxu0
    %v1694 = vadd.f32 %v777, %v1688
    %v1695 = vadd.f32 %v779, %v1690
    %v1696 = vxor.u32 %v1694, 2147483648
    %v1697 = vmul.f32 %v1696, 1.442695
    %v1698 = vpow.pop %v1697
    %v1699 = vadd.f32 %v1698, 1.0
    %v1700 = vrcp.pop %v1699
    %v1701 = vmul.f32 1.0, %v1700
    %v1702 = vtanh.pop %v1695
    %v1703 = vxor.u32 %v1695, 2147483648
    %v1704 = vmul.f32 %v1703, 1.442695
    %v1705 = vpow.pop %v1704
    %v1706 = vadd.f32 %v1705, 1.0
    %v1707 = vrcp.pop %v1706
    %v1708 = vmul.f32 1.0, %v1707
    %v1709 = vmul.f32 %v1701, %v1643
    %v1710 = vmul.f32 %v1701, %v1702
    %1712 = vrot.lane.b32.xlu0 %v1710, 64
    %v1713 = vpop.permute.xlu0 %1712
    %v1715 = vadd.f32 %v1709, %v1713
    %v1716 = vtanh.pop %v1715
    %v1717 = vmul.f32 %v1708, %v1716
    %v1718 = vpack.c.bf16 %v1717, %v1717
    %1720 = vrot.lane.b32.xlu0 %v1718, 64
    %v1721 = vpop.permute.xlu0 %1720
    %v1723 = vsel %vm545, %v1721, 0
    %1725 = vmatprep.subr.bf16.mxu0 %v1566
    %1726 = vmatpush1.bf16.msra.mxu0 %v1565
    %1727 = vmatprep.subr.bf16.mxu0 %v1568
    %1728 = vmatpush1.bf16.msra.mxu0 %v1567
    %1729 = vmatprep.subr.bf16.mxu0 %v1570
    %1730 = vmatpush1.bf16.msra.mxu0 %v1569
    %1731 = vmatprep.subr.bf16.mxu0 %v1572
    %1732 = vmatpush1.bf16.msra.mxu0 %v1571
    %1733 = vmatprep.subr.bf16.mxu0 0
    %1734 = vmatpush1.bf16.msra.mxu0 0
    %1735 = vmatprep.subr.bf16.mxu0 0
    %1736 = vmatpush1.bf16.msra.mxu0 0
    %1737 = vmatprep.subr.bf16.mxu0 0
    %1738 = vmatpush1.bf16.msra.mxu0 0
    %1739 = vmatprep.subr.bf16.mxu0 0
    %1740 = vmatpush1.bf16.msra.mxu0 0
    %1741 = vmatprep.subr.bf16.mxu0 0
    %1742 = vmatpush1.bf16.msra.mxu0 0
    %1743 = vmatprep.subr.bf16.mxu0 0
    %1744 = vmatpush1.bf16.msra.mxu0 0
    %1745 = vmatprep.subr.bf16.mxu0 0
    %1746 = vmatpush1.bf16.msra.mxu0 0
    %1747 = vmatprep.subr.bf16.mxu0 0
    %1748 = vmatpush1.bf16.msra.mxu0 0
    %1749 = vmatprep.subr.bf16.mxu0 0
    %1750 = vmatpush1.bf16.msra.mxu0 0
    %1751 = vmatprep.subr.bf16.mxu0 0
    %1752 = vmatpush1.bf16.msra.mxu0 0
    %1753 = vmatprep.subr.bf16.mxu0 0
    %1754 = vmatpush1.bf16.msra.mxu0 0
    %1755 = vmatprep.subr.bf16.mxu0 0
    %1756 = vmatpush1.bf16.msra.mxu0 0
    %1757 = vmatprep.mubr.bf16.mxu0 0
    %1758 = vmatmul.mubr.bf16.gmra.mrb[0].mxu0 %v1723
    %v1759 = vpop.f32.mrb[0].mxu0
    %v1760 = vadd.f32 0.0, %v1759
    %v1761 = vpop.f32.mrb[0].mxu0
    %v1762 = vadd.f32 0.0, %v1761
    %v1763 = vpop.f32.mrb[0].mxu0
    %v1764 = vpop.f32.mrb[0].mxu0
    %1765 = vdwg.mxu0
    %v1766 = vadd.f32 %v771, %v1760
    %v1767 = vadd.f32 %v773, %v1762
    %v1768 = vxor.u32 %v1766, 2147483648
    %v1769 = vmul.f32 %v1768, 1.442695
    %v1770 = vpow.pop %v1769
    %v1771 = vadd.f32 %v1770, 1.0
    %v1772 = vrcp.pop %v1771
    %v1773 = vmul.f32 1.0, %v1772
    %v1774 = vtanh.pop %v1767
    %v1775 = vxor.u32 %v1767, 2147483648
    %v1776 = vmul.f32 %v1775, 1.442695
    %v1777 = vpow.pop %v1776
    %v1778 = vadd.f32 %v1777, 1.0
    %v1779 = vrcp.pop %v1778
    %v1780 = vmul.f32 1.0, %v1779
    %v1781 = vmul.f32 %v1773, %v1715
    %v1782 = vmul.f32 %v1773, %v1774
    %1784 = vrot.lane.b32.xlu0 %v1782, 64
    %v1785 = vpop.permute.xlu0 %1784
    %v1787 = vadd.f32 %v1781, %v1785
    %v1788 = vtanh.pop %v1787
    %v1789 = vmul.f32 %v1780, %v1788
    %v1790 = vpack.c.bf16 %v1789, %v1789
    %1792 = vrot.lane.b32.xlu0 %v1790, 64
    %v1793 = vpop.permute.xlu0 %1792
    %v1795 = vsel %vm545, %v1793, 0
    %1797 = vmatprep.subr.bf16.mxu0 %v1566
    %1798 = vmatpush1.bf16.msra.mxu0 %v1565
    %1799 = vmatprep.subr.bf16.mxu0 %v1568
    %1800 = vmatpush1.bf16.msra.mxu0 %v1567
    %1801 = vmatprep.subr.bf16.mxu0 %v1570
    %1802 = vmatpush1.bf16.msra.mxu0 %v1569
    %1803 = vmatprep.subr.bf16.mxu0 %v1572
    %1804 = vmatpush1.bf16.msra.mxu0 %v1571
    %1805 = vmatprep.subr.bf16.mxu0 0
    %1806 = vmatpush1.bf16.msra.mxu0 0
    %1807 = vmatprep.subr.bf16.mxu0 0
    %1808 = vmatpush1.bf16.msra.mxu0 0
    %1809 = vmatprep.subr.bf16.mxu0 0
    %1810 = vmatpush1.bf16.msra.mxu0 0
    %1811 = vmatprep.subr.bf16.mxu0 0
    %1812 = vmatpush1.bf16.msra.mxu0 0
    %1813 = vmatprep.subr.bf16.mxu0 0
    %1814 = vmatpush1.bf16.msra.mxu0 0
    %1815 = vmatprep.subr.bf16.mxu0 0
    %1816 = vmatpush1.bf16.msra.mxu0 0
    %1817 = vmatprep.subr.bf16.mxu0 0
    %1818 = vmatpush1.bf16.msra.mxu0 0
    %1819 = vmatprep.subr.bf16.mxu0 0
    %1820 = vmatpush1.bf16.msra.mxu0 0
    %1821 = vmatprep.subr.bf16.mxu0 0
    %1822 = vmatpush1.bf16.msra.mxu0 0
    %1823 = vmatprep.subr.bf16.mxu0 0
    %1824 = vmatpush1.bf16.msra.mxu0 0
    %1825 = vmatprep.subr.bf16.mxu0 0
    %1826 = vmatpush1.bf16.msra.mxu0 0
    %1827 = vmatprep.subr.bf16.mxu0 0
    %1828 = vmatpush1.bf16.msra.mxu0 0
    %1829 = vmatprep.mubr.bf16.mxu0 0
    %1830 = vmatmul.mubr.bf16.gmra.mrb[0].mxu0 %v1795
    %v1831 = vpop.f32.mrb[0].mxu0
    %v1832 = vadd.f32 0.0, %v1831
    %v1833 = vpop.f32.mrb[0].mxu0
    %v1834 = vadd.f32 0.0, %v1833
    %v1835 = vpop.f32.mrb[0].mxu0
    %v1836 = vpop.f32.mrb[0].mxu0
    %1837 = vdwg.mxu0
    %v1838 = vadd.f32 %v767, %v1832
    %v1839 = vadd.f32 %v769, %v1834
    %v1840 = vxor.u32 %v1838, 2147483648
    %v1841 = vmul.f32 %v1840, 1.442695
    %v1842 = vpow.pop %v1841
    %v1843 = vadd.f32 %v1842, 1.0
    %v1844 = vrcp.pop %v1843
    %v1845 = vmul.f32 1.0, %v1844
    %v1846 = vtanh.pop %v1839
    %v1847 = vxor.u32 %v1839, 2147483648
    %v1848 = vmul.f32 %v1847, 1.442695
    %v1849 = vpow.pop %v1848
    %v1850 = vadd.f32 %v1849, 1.0
    %v1851 = vrcp.pop %v1850
    %v1852 = vmul.f32 1.0, %v1851
    %v1853 = vmul.f32 %v1845, %v1787
    %v1854 = vmul.f32 %v1845, %v1846
    %1856 = vrot.lane.b32.xlu0 %v1854, 64
    %v1857 = vpop.permute.xlu0 %1856
    %v1859 = vadd.f32 %v1853, %v1857
    %v1860 = vtanh.pop %v1859
    %v1861 = vmul.f32 %v1852, %v1860
    %v1862 = vpack.c.bf16 %v1861, %v1861
    %1864 = vrot.lane.b32.xlu0 %v1862, 64
    %v1865 = vpop.permute.xlu0 %1864
    %v1867 = vsel %vm545, %v1865, 0
    %1869 = vmatprep.subr.bf16.mxu0 %v1566
    %1870 = vmatpush1.bf16.msra.mxu0 %v1565
    %1871 = vmatprep.subr.bf16.mxu0 %v1568
    %1872 = vmatpush1.bf16.msra.mxu0 %v1567
    %1873 = vmatprep.subr.bf16.mxu0 %v1570
    %1874 = vmatpush1.bf16.msra.mxu0 %v1569
    %1875 = vmatprep.subr.bf16.mxu0 %v1572
    %1876 = vmatpush1.bf16.msra.mxu0 %v1571
    %1877 = vmatprep.subr.bf16.mxu0 0
    %1878 = vmatpush1.bf16.msra.mxu0 0
    %1879 = vmatprep.subr.bf16.mxu0 0
    %1880 = vmatpush1.bf16.msra.mxu0 0
    %1881 = vmatprep.subr.bf16.mxu0 0
    %1882 = vmatpush1.bf16.msra.mxu0 0
    %1883 = vmatprep.subr.bf16.mxu0 0
    %1884 = vmatpush1.bf16.msra.mxu0 0
    %1885 = vmatprep.subr.bf16.mxu0 0
    %1886 = vmatpush1.bf16.msra.mxu0 0
    %1887 = vmatprep.subr.bf16.mxu0 0
    %1888 = vmatpush1.bf16.msra.mxu0 0
    %1889 = vmatprep.subr.bf16.mxu0 0
    %1890 = vmatpush1.bf16.msra.mxu0 0
    %1891 = vmatprep.subr.bf16.mxu0 0
    %1892 = vmatpush1.bf16.msra.mxu0 0
    %1893 = vmatprep.subr.bf16.mxu0 0
    %1894 = vmatpush1.bf16.msra.mxu0 0
    %1895 = vmatprep.subr.bf16.mxu0 0
    %1896 = vmatpush1.bf16.msra.mxu0 0
    %1897 = vmatprep.subr.bf16.mxu0 0
    %1898 = vmatpush1.bf16.msra.mxu0 0
    %1899 = vmatprep.subr.bf16.mxu0 0
    %1900 = vmatpush1.bf16.msra.mxu0 0
    %1901 = vmatprep.mubr.bf16.mxu0 0
    %1902 = vmatmul.mubr.bf16.gmra.mrb[0].mxu0 %v1867
    %v1903 = vpop.f32.mrb[0].mxu0
    %v1904 = vadd.f32 0.0, %v1903
    %v1905 = vpop.f32.mrb[0].mxu0
    %v1906 = vadd.f32 0.0, %v1905
    %v1907 = vpop.f32.mrb[0].mxu0
    %v1908 = vpop.f32.mrb[0].mxu0
    %1909 = vdwg.mxu0
    %v1910 = vadd.f32 %v761, %v1904
    %v1911 = vadd.f32 %v763, %v1906
    %v1912 = vxor.u32 %v1910, 2147483648
    %v1913 = vmul.f32 %v1912, 1.442695
    %v1914 = vpow.pop %v1913
    %v1915 = vadd.f32 %v1914, 1.0
    %v1916 = vrcp.pop %v1915
    %v1917 = vmul.f32 1.0, %v1916
    %v1918 = vtanh.pop %v1911
    %v1919 = vxor.u32 %v1911, 2147483648
    %v1920 = vmul.f32 %v1919, 1.442695
    %v1921 = vpow.pop %v1920
    %v1922 = vadd.f32 %v1921, 1.0
    %v1923 = vrcp.pop %v1922
    %v1924 = vmul.f32 1.0, %v1923
    %v1925 = vmul.f32 %v1917, %v1859
    %v1926 = vmul.f32 %v1917, %v1918
    %1928 = vrot.lane.b32.xlu0 %v1926, 64
    %v1929 = vpop.permute.xlu0 %1928
    %v1931 = vadd.f32 %v1925, %v1929
    %v1932 = vtanh.pop %v1931
    %v1933 = vmul.f32 %v1924, %v1932
    %v1934 = vpack.c.bf16 %v1933, %v1933
    %1936 = vrot.lane.b32.xlu0 %v1934, 64
    %v1937 = vpop.permute.xlu0 %1936
    %v1939 = vsel %vm545, %v1937, 0
    %1941 = vmatprep.subr.bf16.mxu0 %v1566
    %1942 = vmatpush1.bf16.msra.mxu0 %v1565
    %1943 = vmatprep.subr.bf16.mxu0 %v1568
    %1944 = vmatpush1.bf16.msra.mxu0 %v1567
    %1945 = vmatprep.subr.bf16.mxu0 %v1570
    %1946 = vmatpush1.bf16.msra.mxu0 %v1569
    %1947 = vmatprep.subr.bf16.mxu0 %v1572
    %1948 = vmatpush1.bf16.msra.mxu0 %v1571
    %1949 = vmatprep.subr.bf16.mxu0 0
    %1950 = vmatpush1.bf16.msra.mxu0 0
    %1951 = vmatprep.subr.bf16.mxu0 0
    %1952 = vmatpush1.bf16.msra.mxu0 0
    %1953 = vmatprep.subr.bf16.mxu0 0
    %1954 = vmatpush1.bf16.msra.mxu0 0
    %1955 = vmatprep.subr.bf16.mxu0 0
    %1956 = vmatpush1.bf16.msra.mxu0 0
    %1957 = vmatprep.subr.bf16.mxu0 0
    %1958 = vmatpush1.bf16.msra.mxu0 0
    %1959 = vmatprep.subr.bf16.mxu0 0
    %1960 = vmatpush1.bf16.msra.mxu0 0
    %1961 = vmatprep.subr.bf16.mxu0 0
    %1962 = vmatpush1.bf16.msra.mxu0 0
    %1963 = vmatprep.subr.bf16.mxu0 0
    %1964 = vmatpush1.bf16.msra.mxu0 0
    %1965 = vmatprep.subr.bf16.mxu0 0
    %1966 = vmatpush1.bf16.msra.mxu0 0
    %1967 = vmatprep.subr.bf16.mxu0 0
    %1968 = vmatpush1.bf16.msra.mxu0 0
    %1969 = vmatprep.subr.bf16.mxu0 0
    %1970 = vmatpush1.bf16.msra.mxu0 0
    %1971 = vmatprep.subr.bf16.mxu0 0
    %1972 = vmatpush1.bf16.msra.mxu0 0
    %1973 = vmatprep.mubr.bf16.mxu0 0
    %1974 = vmatmul.mubr.bf16.gmra.mrb[0].mxu0 %v1939
    %v1975 = vpop.f32.mrb[0].mxu0
    %v1976 = vadd.f32 0.0, %v1975
    %v1977 = vpop.f32.mrb[0].mxu0
    %v1978 = vadd.f32 0.0, %v1977
    %v1979 = vpop.f32.mrb[0].mxu0
    %v1980 = vpop.f32.mrb[0].mxu0
    %1981 = vdwg.mxu0
    %v1982 = vadd.f32 %v757, %v1976
    %v1983 = vadd.f32 %v759, %v1978
    %v1984 = vxor.u32 %v1982, 2147483648
    %v1985 = vmul.f32 %v1984, 1.442695
    %v1986 = vpow.pop %v1985
    %v1987 = vadd.f32 %v1986, 1.0
    %v1988 = vrcp.pop %v1987
    %v1989 = vmul.f32 1.0, %v1988
    %v1990 = vtanh.pop %v1983
    %v1991 = vxor.u32 %v1983, 2147483648
    %v1992 = vmul.f32 %v1991, 1.442695
    %v1993 = vpow.pop %v1992
    %v1994 = vadd.f32 %v1993, 1.0
    %v1995 = vrcp.pop %v1994
    %v1996 = vmul.f32 1.0, %v1995
    %v1997 = vmul.f32 %v1989, %v1931
    %v1998 = vmul.f32 %v1989, %v1990
    %2000 = vrot.lane.b32.xlu0 %v1998, 64
    %v2001 = vpop.permute.xlu0 %2000
    %v2003 = vadd.f32 %v1997, %v2001
    %v2004 = vtanh.pop %v2003
    %v2005 = vmul.f32 %v1996, %v2004
    %v2006 = vpack.c.bf16 %v2005, %v2005
    %2008 = vrot.lane.b32.xlu0 %v2006, 64
    %v2009 = vpop.permute.xlu0 %2008
    %v2011 = vsel %vm545, %v2009, 0
    %2013 = vmatprep.subr.bf16.mxu0 %v1566
    %2014 = vmatpush1.bf16.msra.mxu0 %v1565
    %2015 = vmatprep.subr.bf16.mxu0 %v1568
    %2016 = vmatpush1.bf16.msra.mxu0 %v1567
    %2017 = vmatprep.subr.bf16.mxu0 %v1570
    %2018 = vmatpush1.bf16.msra.mxu0 %v1569
    %2019 = vmatprep.subr.bf16.mxu0 %v1572
    %2020 = vmatpush1.bf16.msra.mxu0 %v1571
    %2021 = vmatprep.subr.bf16.mxu0 0
    %2022 = vmatpush1.bf16.msra.mxu0 0
    %2023 = vmatprep.subr.bf16.mxu0 0
    %2024 = vmatpush1.bf16.msra.mxu0 0
    %2025 = vmatprep.subr.bf16.mxu0 0
    %2026 = vmatpush1.bf16.msra.mxu0 0
    %2027 = vmatprep.subr.bf16.mxu0 0
    %2028 = vmatpush1.bf16.msra.mxu0 0
    %2029 = vmatprep.subr.bf16.mxu0 0
    %2030 = vmatpush1.bf16.msra.mxu0 0
    %2031 = vmatprep.subr.bf16.mxu0 0
    %2032 = vmatpush1.bf16.msra.mxu0 0
    %2033 = vmatprep.subr.bf16.mxu0 0
    %2034 = vmatpush1.bf16.msra.mxu0 0
    %2035 = vmatprep.subr.bf16.mxu0 0
    %2036 = vmatpush1.bf16.msra.mxu0 0
    %2037 = vmatprep.subr.bf16.mxu0 0
    %2038 = vmatpush1.bf16.msra.mxu0 0
    %2039 = vmatprep.subr.bf16.mxu0 0
    %2040 = vmatpush1.bf16.msra.mxu0 0
    %2041 = vmatprep.subr.bf16.mxu0 0
    %2042 = vmatpush1.bf16.msra.mxu0 0
    %2043 = vmatprep.subr.bf16.mxu0 0
    %2044 = vmatpush1.bf16.msra.mxu0 0
    %2045 = vmatprep.mubr.bf16.mxu0 0
    %2046 = vmatmul.mubr.bf16.gmra.mrb[0].mxu0 %v2011
    %v2047 = vpop.f32.mrb[0].mxu0
    %v2048 = vadd.f32 0.0, %v2047
    %v2049 = vpop.f32.mrb[0].mxu0
    %v2050 = vadd.f32 0.0, %v2049
    %v2051 = vpop.f32.mrb[0].mxu0
    %v2052 = vpop.f32.mrb[0].mxu0
    %2053 = vdwg.mxu0
    %v2054 = vadd.f32 %v751, %v2048
    %v2055 = vadd.f32 %v753, %v2050
    %v2056 = vxor.u32 %v2054, 2147483648
    %v2057 = vmul.f32 %v2056, 1.442695
    %v2058 = vpow.pop %v2057
    %v2059 = vadd.f32 %v2058, 1.0
    %v2060 = vrcp.pop %v2059
    %v2061 = vmul.f32 1.0, %v2060
    %v2062 = vtanh.pop %v2055
    %v2063 = vxor.u32 %v2055, 2147483648
    %v2064 = vmul.f32 %v2063, 1.442695
    %v2065 = vpow.pop %v2064
    %v2066 = vadd.f32 %v2065, 1.0
    %v2067 = vrcp.pop %v2066
    %v2068 = vmul.f32 1.0, %v2067
    %v2069 = vmul.f32 %v2061, %v2003
    %v2070 = vmul.f32 %v2061, %v2062
    %2072 = vrot.lane.b32.xlu0 %v2070, 64
    %v2073 = vpop.permute.xlu0 %2072
    %v2075 = vadd.f32 %v2069, %v2073
    %v2076 = vtanh.pop %v2075
    %v2077 = vmul.f32 %v2068, %v2076
    %v2078 = vpack.c.bf16 %v2077, %v2077
    %2080 = vrot.lane.b32.xlu0 %v2078, 64
    %v2081 = vpop.permute.xlu0 %2080
    %v2083 = vsel %vm545, %v2081, 0
    %2085 = vmatprep.subr.bf16.mxu0 %v1566
    %2086 = vmatpush1.bf16.msra.mxu0 %v1565
    %2087 = vmatprep.subr.bf16.mxu0 %v1568
    %2088 = vmatpush1.bf16.msra.mxu0 %v1567
    %2089 = vmatprep.subr.bf16.mxu0 %v1570
    %2090 = vmatpush1.bf16.msra.mxu0 %v1569
    %2091 = vmatprep.subr.bf16.mxu0 %v1572
    %2092 = vmatpush1.bf16.msra.mxu0 %v1571
    %2093 = vmatprep.subr.bf16.mxu0 0
    %2094 = vmatpush1.bf16.msra.mxu0 0
    %2095 = vmatprep.subr.bf16.mxu0 0
    %2096 = vmatpush1.bf16.msra.mxu0 0
    %2097 = vmatprep.subr.bf16.mxu0 0
    %2098 = vmatpush1.bf16.msra.mxu0 0
    %2099 = vmatprep.subr.bf16.mxu0 0
    %2100 = vmatpush1.bf16.msra.mxu0 0
    %2101 = vmatprep.subr.bf16.mxu0 0
    %2102 = vmatpush1.bf16.msra.mxu0 0
    %2103 = vmatprep.subr.bf16.mxu0 0
    %2104 = vmatpush1.bf16.msra.mxu0 0
    %2105 = vmatprep.subr.bf16.mxu0 0
    %2106 = vmatpush1.bf16.msra.mxu0 0
    %2107 = vmatprep.subr.bf16.mxu0 0
    %2108 = vmatpush1.bf16.msra.mxu0 0
    %2109 = vmatprep.subr.bf16.mxu0 0
    %2110 = vmatpush1.bf16.msra.mxu0 0
    %2111 = vmatprep.subr.bf16.mxu0 0
    %2112 = vmatpush1.bf16.msra.mxu0 0
    %2113 = vmatprep.subr.bf16.mxu0 0
    %2114 = vmatpush1.bf16.msra.mxu0 0
    %2115 = vmatprep.subr.bf16.mxu0 0
    %2116 = vmatpush1.bf16.msra.mxu0 0
    %2117 = vmatprep.mubr.bf16.mxu0 0
    %2118 = vmatmul.mubr.bf16.gmra.mrb[0].mxu0 %v2083
    %v2119 = vpop.f32.mrb[0].mxu0
    %v2120 = vadd.f32 0.0, %v2119
    %v2121 = vpop.f32.mrb[0].mxu0
    %v2122 = vadd.f32 0.0, %v2121
    %v2123 = vpop.f32.mrb[0].mxu0
    %v2124 = vpop.f32.mrb[0].mxu0
    %2125 = vdwg.mxu0
    %v2126 = vadd.f32 %v747, %v2120
    %v2127 = vadd.f32 %v749, %v2122
    %v2128 = vxor.u32 %v2126, 2147483648
    %v2129 = vmul.f32 %v2128, 1.442695
    %v2130 = vpow.pop %v2129
    %v2131 = vadd.f32 %v2130, 1.0
    %v2132 = vrcp.pop %v2131
    %v2133 = vmul.f32 1.0, %v2132
    %v2134 = vtanh.pop %v2127
    %v2135 = vxor.u32 %v2127, 2147483648
    %v2136 = vmul.f32 %v2135, 1.442695
    %v2137 = vpow.pop %v2136
    %v2138 = vadd.f32 %v2137, 1.0
    %v2139 = vrcp.pop %v2138
    %v2140 = vmul.f32 1.0, %v2139
    %v2141 = vmul.f32 %v2133, %v2075
    %v2142 = vmul.f32 %v2133, %v2134
    %2144 = vrot.lane.b32.xlu0 %v2142, 64
    %v2145 = vpop.permute.xlu0 %2144
    %v2147 = vadd.f32 %v2141, %v2145
    %v2148 = vtanh.pop %v2147
    %v2149 = vmul.f32 %v2140, %v2148
    %v2150 = vpack.c.bf16 %v2149, %v2149
    %2152 = vrot.lane.b32.xlu0 %v2150, 64
    %v2153 = vpop.permute.xlu0 %2152
    %v2155 = vsel %vm545, %v2153, 0
    %2157 = vmatprep.subr.bf16.mxu0 %v1566
    %2158 = vmatpush1.bf16.msra.mxu0 %v1565
    %2159 = vmatprep.subr.bf16.mxu0 %v1568
    %2160 = vmatpush1.bf16.msra.mxu0 %v1567
    %2161 = vmatprep.subr.bf16.mxu0 %v1570
    %2162 = vmatpush1.bf16.msra.mxu0 %v1569
    %2163 = vmatprep.subr.bf16.mxu0 %v1572
    %2164 = vmatpush1.bf16.msra.mxu0 %v1571
    %2165 = vmatprep.subr.bf16.mxu0 0
    %2166 = vmatpush1.bf16.msra.mxu0 0
    %2167 = vmatprep.subr.bf16.mxu0 0
    %2168 = vmatpush1.bf16.msra.mxu0 0
    %2169 = vmatprep.subr.bf16.mxu0 0
    %2170 = vmatpush1.bf16.msra.mxu0 0
    %2171 = vmatprep.subr.bf16.mxu0 0
    %2172 = vmatpush1.bf16.msra.mxu0 0
    %2173 = vmatprep.subr.bf16.mxu0 0
    %2174 = vmatpush1.bf16.msra.mxu0 0
    %2175 = vmatprep.subr.bf16.mxu0 0
    %2176 = vmatpush1.bf16.msra.mxu0 0
    %2177 = vmatprep.subr.bf16.mxu0 0
    %2178 = vmatpush1.bf16.msra.mxu0 0
    %2179 = vmatprep.subr.bf16.mxu0 0
    %2180 = vmatpush1.bf16.msra.mxu0 0
    %2181 = vmatprep.subr.bf16.mxu0 0
    %2182 = vmatpush1.bf16.msra.mxu0 0
    %2183 = vmatprep.subr.bf16.mxu0 0
    %2184 = vmatpush1.bf16.msra.mxu0 0
    %2185 = vmatprep.subr.bf16.mxu0 0
    %2186 = vmatpush1.bf16.msra.mxu0 0
    %2187 = vmatprep.subr.bf16.mxu0 0
    %2188 = vmatpush1.bf16.msra.mxu0 0
    %2189 = vmatprep.mubr.bf16.mxu0 0
    %2190 = vmatmul.mubr.bf16.gmra.mrb[0].mxu0 %v2155
    %v2191 = vpop.f32.mrb[0].mxu0
    %v2192 = vadd.f32 0.0, %v2191
    %v2193 = vpop.f32.mrb[0].mxu0
    %v2194 = vadd.f32 0.0, %v2193
    %v2195 = vpop.f32.mrb[0].mxu0
    %v2196 = vpop.f32.mrb[0].mxu0
    %2197 = vdwg.mxu0
    %v2198 = vadd.f32 %v741, %v2192
    %v2199 = vadd.f32 %v743, %v2194
    %v2200 = vxor.u32 %v2198, 2147483648
    %v2201 = vmul.f32 %v2200, 1.442695
    %v2202 = vpow.pop %v2201
    %v2203 = vadd.f32 %v2202, 1.0
    %v2204 = vrcp.pop %v2203
    %v2205 = vmul.f32 1.0, %v2204
    %v2206 = vtanh.pop %v2199
    %v2207 = vxor.u32 %v2199, 2147483648
    %v2208 = vmul.f32 %v2207, 1.442695
    %v2209 = vpow.pop %v2208
    %v2210 = vadd.f32 %v2209, 1.0
    %v2211 = vrcp.pop %v2210
    %v2212 = vmul.f32 1.0, %v2211
    %v2213 = vmul.f32 %v2205, %v2147
    %v2214 = vmul.f32 %v2205, %v2206
    %2216 = vrot.lane.b32.xlu0 %v2214, 64
    %v2217 = vpop.permute.xlu0 %2216
    %v2219 = vadd.f32 %v2213, %v2217
    %v2220 = vtanh.pop %v2219
    %v2221 = vmul.f32 %v2212, %v2220
    %v2222 = vpack.c.bf16 %v2221, %v2221
    %2224 = vrot.lane.b32.xlu0 %v2222, 64
    %v2225 = vpop.permute.xlu0 %2224
    %v2227 = vsel %vm545, %v2225, 0
    %2229 = vmatprep.subr.bf16.mxu0 %v1566
    %2230 = vmatpush1.bf16.msra.mxu0 %v1565
    %2231 = vmatprep.subr.bf16.mxu0 %v1568
    %2232 = vmatpush1.bf16.msra.mxu0 %v1567
    %2233 = vmatprep.subr.bf16.mxu0 %v1570
    %2234 = vmatpush1.bf16.msra.mxu0 %v1569
    %2235 = vmatprep.subr.bf16.mxu0 %v1572
    %2236 = vmatpush1.bf16.msra.mxu0 %v1571
    %2237 = vmatprep.subr.bf16.mxu0 0
    %2238 = vmatpush1.bf16.msra.mxu0 0
    %2239 = vmatprep.subr.bf16.mxu0 0
    %2240 = vmatpush1.bf16.msra.mxu0 0
    %2241 = vmatprep.subr.bf16.mxu0 0
    %2242 = vmatpush1.bf16.msra.mxu0 0
    %2243 = vmatprep.subr.bf16.mxu0 0
    %2244 = vmatpush1.bf16.msra.mxu0 0
    %2245 = vmatprep.subr.bf16.mxu0 0
    %2246 = vmatpush1.bf16.msra.mxu0 0
    %2247 = vmatprep.subr.bf16.mxu0 0
    %2248 = vmatpush1.bf16.msra.mxu0 0
    %2249 = vmatprep.subr.bf16.mxu0 0
    %2250 = vmatpush1.bf16.msra.mxu0 0
    %2251 = vmatprep.subr.bf16.mxu0 0
    %2252 = vmatpush1.bf16.msra.mxu0 0
    %2253 = vmatprep.subr.bf16.mxu0 0
    %2254 = vmatpush1.bf16.msra.mxu0 0
    %2255 = vmatprep.subr.bf16.mxu0 0
    %2256 = vmatpush1.bf16.msra.mxu0 0
    %2257 = vmatprep.subr.bf16.mxu0 0
    %2258 = vmatpush1.bf16.msra.mxu0 0
    %2259 = vmatprep.subr.bf16.mxu0 0
    %2260 = vmatpush1.bf16.msra.mxu0 0
    %2261 = vmatprep.mubr.bf16.mxu0 0
    %2262 = vmatmul.mubr.bf16.gmra.mrb[0].mxu0 %v2227
    %v2263 = vpop.f32.mrb[0].mxu0
    %v2264 = vadd.f32 0.0, %v2263
    %v2265 = vpop.f32.mrb[0].mxu0
    %v2266 = vadd.f32 0.0, %v2265
    %v2267 = vpop.f32.mrb[0].mxu0
    %v2268 = vpop.f32.mrb[0].mxu0
    %2269 = vdwg.mxu0
    %v2270 = vadd.f32 %v737, %v2264
    %v2271 = vadd.f32 %v739, %v2266
    %v2272 = vxor.u32 %v2270, 2147483648
    %v2273 = vmul.f32 %v2272, 1.442695
    %v2274 = vpow.pop %v2273
    %v2275 = vadd.f32 %v2274, 1.0
    %v2276 = vrcp.pop %v2275
    %v2277 = vmul.f32 1.0, %v2276
    %v2278 = vtanh.pop %v2271
    %v2279 = vxor.u32 %v2271, 2147483648
    %v2280 = vmul.f32 %v2279, 1.442695
    %v2281 = vpow.pop %v2280
    %v2282 = vadd.f32 %v2281, 1.0
    %v2283 = vrcp.pop %v2282
    %v2284 = vmul.f32 1.0, %v2283
    %v2285 = vmul.f32 %v2277, %v2219
    %v2286 = vmul.f32 %v2277, %v2278
    %2288 = vrot.lane.b32.xlu0 %v2286, 64
    %v2289 = vpop.permute.xlu0 %2288
    %v2291 = vadd.f32 %v2285, %v2289
    %v2292 = vtanh.pop %v2291
    %v2293 = vmul.f32 %v2284, %v2292
    %2295 = vrot.lane.b32.xlu0 %v892, 64
    %v2296 = vpop.permute.xlu0 %2295
    %v2298 = vsel %vm545, %v2296, %v2293
    %2300 = vrot.lane.b32.xlu0 %v964, 64
    %v2301 = vpop.permute.xlu0 %2300
    %v2303 = vsel %vm545, %v2301, %v2221
    %2305 = vrot.lane.b32.xlu0 %v1036, 64
    %v2306 = vpop.permute.xlu0 %2305
    %v2308 = vsel %vm545, %v2306, %v2149
    %2310 = vrot.lane.b32.xlu0 %v1108, 64
    %v2311 = vpop.permute.xlu0 %2310
    %v2313 = vsel %vm545, %v2311, %v2077
    %2315 = vrot.lane.b32.xlu0 %v1180, 64
    %v2316 = vpop.permute.xlu0 %2315
    %v2318 = vsel %vm545, %v2316, %v2005
    %2320 = vrot.lane.b32.xlu0 %v1252, 64
    %v2321 = vpop.permute.xlu0 %2320
    %v2323 = vsel %vm545, %v2321, %v1933
    %2325 = vrot.lane.b32.xlu0 %v1324, 64
    %v2326 = vpop.permute.xlu0 %2325
    %v2328 = vsel %vm545, %v2326, %v1861
    %2330 = vrot.lane.b32.xlu0 %v1396, 64
    %v2331 = vpop.permute.xlu0 %2330
    %v2333 = vsel %vm545, %v2331, %v1789
    %2335 = vrot.lane.b32.xlu0 %v1468, 64
    %v2336 = vpop.permute.xlu0 %2335
    %v2338 = vsel %vm545, %v2336, %v1717
    %2340 = vrot.lane.b32.xlu0 %v1540, 64
    %v2341 = vpop.permute.xlu0 %2340
    %v2343 = vsel %vm545, %v2341, %v1645
    %v2344 = vpack.c.bf16 %v2303, %v2298
    %v2345 = vpack.c.bf16 %v2313, %v2308
    %v2346 = vpack.c.bf16 %v2323, %v2318
    %v2347 = vpack.c.bf16 %v2333, %v2328
    %v2348 = vpack.c.bf16 %v2343, %v2338
    %v2349 = vlaneseq
    %v2350 = vshrl.u32 %v2349, 7
    %v2351 = vsub.s32 2, %v2350
    %v2352 = vrot.slane %v210, %v2351
    %v2353 = vlaneseq
    %v2354 = vshrl.u32 %v2353, 7
    %v2355 = vsub.s32 6, %v2354
    %v2356 = vrot.slane %v210, %v2355
    %v2359 = vlaneseq
    %v2360 = vshrl.u32 %v2359, 7
    %v2361 = vsub.s32 2, %v2360
    %v2362 = vrot.slane %v2352, %v2361
    %v2363 = vlaneseq
    %v2364 = vshrl.u32 %v2363, 7
    %v2365 = vsub.s32 2, %v2364
    %v2366 = vrot.slane %v2356, %v2365
    %v2383 = vunpack.c.l.b16 %v146
    %v2384 = vunpack.c.h.b16 %v146
    %v2385 = vunpack.c.l.b16 %v147
    %v2386 = vunpack.c.h.b16 %v147
    %v2387 = vunpack.c.l.b16 %v148
    %v2388 = vunpack.c.h.b16 %v148
    %v2389 = vunpack.c.l.b16 %v149
    %v2390 = vunpack.c.h.b16 %v149
    %v2391 = vunpack.c.l.b16 %v150
    %v2392 = vunpack.c.h.b16 %v150
    %v2393 = vunpack.c.l.b16 %v151
    %v2394 = vunpack.c.h.b16 %v151
    %v2395 = vunpack.c.l.b16 %v152
    %v2396 = vunpack.c.h.b16 %v152
    %v2397 = vunpack.c.l.b16 %v153
    %v2398 = vunpack.c.h.b16 %v153
    %v2399 = vunpack.c.l.b16 %v154
    %v2400 = vunpack.c.h.b16 %v154
    %v2401 = vunpack.c.l.b16 %v155
    %v2402 = vunpack.c.h.b16 %v155
    %v2403 = vunpack.c.l.b16 %v156
    %v2404 = vunpack.c.h.b16 %v156
    %v2405 = vunpack.c.l.b16 %v157
    %v2406 = vunpack.c.h.b16 %v157
    %v2407 = vunpack.c.l.b16 %v158
    %v2408 = vunpack.c.h.b16 %v158
    %v2409 = vunpack.c.l.b16 %v159
    %v2410 = vunpack.c.h.b16 %v159
    %v2411 = vunpack.c.l.b16 %v160
    %v2412 = vunpack.c.h.b16 %v160
    %v2413 = vunpack.c.l.b16 %v161
    %v2414 = vunpack.c.h.b16 %v161
    %v2415 = vpack.c.b16 %v2385, %v2383
    %v2416 = vpack.c.b16 %v2386, %v2384
    %v2417 = vpack.c.b16 %v2389, %v2387
    %v2418 = vpack.c.b16 %v2390, %v2388
    %v2419 = vpack.c.b16 %v2393, %v2391
    %v2420 = vpack.c.b16 %v2394, %v2392
    %v2421 = vpack.c.b16 %v2397, %v2395
    %v2422 = vpack.c.b16 %v2398, %v2396
    %v2423 = vpack.c.b16 %v2401, %v2399
    %v2424 = vpack.c.b16 %v2402, %v2400
    %v2425 = vpack.c.b16 %v2405, %v2403
    %v2426 = vpack.c.b16 %v2406, %v2404
    %v2427 = vpack.c.b16 %v2409, %v2407
    %v2428 = vpack.c.b16 %v2410, %v2408
    %v2429 = vpack.c.b16 %v2413, %v2411
    %v2430 = vpack.c.b16 %v2414, %v2412
    %2447 = vmatprep.subr.bf16.mxu0 %v2416
    %2448 = vmatpush1.bf16.msra.mxu0 %v2415
    %2449 = vmatprep.subr.bf16.mxu0 %v2418
    %2450 = vmatpush1.bf16.msra.mxu0 %v2417
    %2451 = vmatprep.subr.bf16.mxu0 %v2420
    %2452 = vmatpush1.bf16.msra.mxu0 %v2419
    %2453 = vmatprep.subr.bf16.mxu0 %v2422
    %2454 = vmatpush1.bf16.msra.mxu0 %v2421
    %2455 = vmatprep.subr.bf16.mxu0 %v2424
    %2456 = vmatpush1.bf16.msra.mxu0 %v2423
    %2457 = vmatprep.subr.bf16.mxu0 %v2426
    %2458 = vmatpush1.bf16.msra.mxu0 %v2425
    %2459 = vmatprep.subr.bf16.mxu0 %v2428
    %2460 = vmatpush1.bf16.msra.mxu0 %v2427
    %2461 = vmatprep.subr.bf16.mxu0 %v2430
    %2462 = vmatpush1.bf16.msra.mxu0 %v2429
    %2463 = vmatprep.subr.bf16.mxu0 0
    %2464 = vmatpush1.bf16.msra.mxu0 0
    %2465 = vmatprep.subr.bf16.mxu0 0
    %2466 = vmatpush1.bf16.msra.mxu0 0
    %2467 = vmatprep.subr.bf16.mxu0 0
    %2468 = vmatpush1.bf16.msra.mxu0 0
    %2469 = vmatprep.subr.bf16.mxu0 0
    %2470 = vmatpush1.bf16.msra.mxu0 0
    %2471 = vmatprep.subr.bf16.mxu0 0
    %2472 = vmatpush1.bf16.msra.mxu0 0
    %2473 = vmatprep.subr.bf16.mxu0 0
    %2474 = vmatpush1.bf16.msra.mxu0 0
    %2475 = vmatprep.subr.bf16.mxu0 0
    %2476 = vmatpush1.bf16.msra.mxu0 0
    %2477 = vmatprep.subr.bf16.mxu0 0
    %2478 = vmatpush1.bf16.msra.mxu0 0
    %2479 = vmatprep.mubr.bf16.mxu0 0
    %2480 = vmatmul.mubr.bf16.gmra.mrb[0].mxu0 %v2344
    %v2481 = vpop.f32.mrb[0].mxu0
    %v2482 = vadd.f32 %v2362, %v2481
    %v2483 = vpop.f32.mrb[0].mxu0
    %v2484 = vadd.f32 %v2366, %v2483
    %v2485 = vpop.f32.mrb[0].mxu0
    %v2486 = vadd.f32 %v2362, %v2485
    %v2487 = vpop.f32.mrb[0].mxu0
    %v2488 = vadd.f32 %v2366, %v2487
    %2489 = vmatprep.mubr.bf16.mxu0 0
    %2490 = vmatmul.mubr.bf16.gmra.mrb[0].mxu0 %v2345
    %v2491 = vpop.f32.mrb[0].mxu0
    %v2492 = vadd.f32 %v2362, %v2491
    %v2493 = vpop.f32.mrb[0].mxu0
    %v2494 = vadd.f32 %v2366, %v2493
    %v2495 = vpop.f32.mrb[0].mxu0
    %v2496 = vadd.f32 %v2362, %v2495
    %v2497 = vpop.f32.mrb[0].mxu0
    %v2498 = vadd.f32 %v2366, %v2497
    %2499 = vmatprep.mubr.bf16.mxu0 0
    %2500 = vmatmul.mubr.bf16.gmra.mrb[0].mxu0 %v2346
    %v2501 = vpop.f32.mrb[0].mxu0
    %v2502 = vadd.f32 %v2362, %v2501
    %v2503 = vpop.f32.mrb[0].mxu0
    %v2504 = vadd.f32 %v2366, %v2503
    %v2505 = vpop.f32.mrb[0].mxu0
    %v2506 = vadd.f32 %v2362, %v2505
    %v2507 = vpop.f32.mrb[0].mxu0
    %v2508 = vadd.f32 %v2366, %v2507
    %2509 = vmatprep.mubr.bf16.mxu0 0
    %2510 = vmatmul.mubr.bf16.gmra.mrb[0].mxu0 %v2347
    %v2511 = vpop.f32.mrb[0].mxu0
    %v2512 = vadd.f32 %v2362, %v2511
    %v2513 = vpop.f32.mrb[0].mxu0
    %v2514 = vadd.f32 %v2366, %v2513
    %v2515 = vpop.f32.mrb[0].mxu0
    %v2516 = vadd.f32 %v2362, %v2515
    %v2517 = vpop.f32.mrb[0].mxu0
    %v2518 = vadd.f32 %v2366, %v2517
    %2519 = vmatprep.mubr.bf16.mxu0 0
    %2520 = vmatmul.mubr.bf16.gmra.mrb[0].mxu0 %v2348
    %v2521 = vpop.f32.mrb[0].mxu0
    %v2522 = vadd.f32 %v2362, %v2521
    %v2523 = vpop.f32.mrb[0].mxu0
    %v2524 = vadd.f32 %v2366, %v2523
    %v2525 = vpop.f32.mrb[0].mxu0
    %v2526 = vadd.f32 %v2362, %v2525
    %v2527 = vpop.f32.mrb[0].mxu0
    %v2528 = vadd.f32 %v2366, %v2527
    %2529 = vdwg.mxu0
    %v2530 = vlaneseq
    %v2531 = vshrl.u32 %v2530, 7
    %v2532 = vsub.s32 3, %v2531
    %v2533 = vrot.slane %v210, %v2532
    %v2534 = vlaneseq
    %v2535 = vshrl.u32 %v2534, 7
    %v2536 = vsub.s32 7, %v2535
    %v2537 = vrot.slane %v210, %v2536
    %v2540 = vlaneseq
    %v2541 = vshrl.u32 %v2540, 7
    %v2542 = vsub.s32 3, %v2541
    %v2543 = vrot.slane %v2533, %v2542
    %v2544 = vlaneseq
    %v2545 = vshrl.u32 %v2544, 7
    %v2546 = vsub.s32 3, %v2545
    %v2547 = vrot.slane %v2537, %v2546
    %v2564 = vunpack.c.l.b16 %v162
    %v2565 = vunpack.c.h.b16 %v162
    %v2566 = vunpack.c.l.b16 %v163
    %v2567 = vunpack.c.h.b16 %v163
    %v2568 = vunpack.c.l.b16 %v164
    %v2569 = vunpack.c.h.b16 %v164
    %v2570 = vunpack.c.l.b16 %v165
    %v2571 = vunpack.c.h.b16 %v165
    %v2572 = vunpack.c.l.b16 %v166
    %v2573 = vunpack.c.h.b16 %v166
    %v2574 = vunpack.c.l.b16 %v167
    %v2575 = vunpack.c.h.b16 %v167
    %v2576 = vunpack.c.l.b16 %v168
    %v2577 = vunpack.c.h.b16 %v168
    %v2578 = vunpack.c.l.b16 %v169
    %v2579 = vunpack.c.h.b16 %v169
    %v2580 = vunpack.c.l.b16 %v170
    %v2581 = vunpack.c.h.b16 %v170
    %v2582 = vunpack.c.l.b16 %v171
    %v2583 = vunpack.c.h.b16 %v171
    %v2584 = vunpack.c.l.b16 %v172
    %v2585 = vunpack.c.h.b16 %v172
    %v2586 = vunpack.c.l.b16 %v173
    %v2587 = vunpack.c.h.b16 %v173
    %v2588 = vunpack.c.l.b16 %v174
    %v2589 = vunpack.c.h.b16 %v174
    %v2590 = vunpack.c.l.b16 %v175
    %v2591 = vunpack.c.h.b16 %v175
    %v2592 = vunpack.c.l.b16 %v176
    %v2593 = vunpack.c.h.b16 %v176
    %v2594 = vunpack.c.l.b16 %v177
    %v2595 = vunpack.c.h.b16 %v177
    %v2596 = vpack.c.b16 %v2566, %v2564
    %v2597 = vpack.c.b16 %v2567, %v2565
    %v2598 = vpack.c.b16 %v2570, %v2568
    %v2599 = vpack.c.b16 %v2571, %v2569
    %v2600 = vpack.c.b16 %v2574, %v2572
    %v2601 = vpack.c.b16 %v2575, %v2573
    %v2602 = vpack.c.b16 %v2578, %v2576
    %v2603 = vpack.c.b16 %v2579, %v2577
    %v2604 = vpack.c.b16 %v2582, %v2580
    %v2605 = vpack.c.b16 %v2583, %v2581
    %v2606 = vpack.c.b16 %v2586, %v2584
    %v2607 = vpack.c.b16 %v2587, %v2585
    %v2608 = vpack.c.b16 %v2590, %v2588
    %v2609 = vpack.c.b16 %v2591, %v2589
    %v2610 = vpack.c.b16 %v2594, %v2592
    %v2611 = vpack.c.b16 %v2595, %v2593
    %2628 = vmatprep.subr.bf16.mxu0 %v2597
    %2629 = vmatpush1.bf16.msra.mxu0 %v2596
    %2630 = vmatprep.subr.bf16.mxu0 %v2599
    %2631 = vmatpush1.bf16.msra.mxu0 %v2598
    %2632 = vmatprep.subr.bf16.mxu0 %v2601
    %2633 = vmatpush1.bf16.msra.mxu0 %v2600
    %2634 = vmatprep.subr.bf16.mxu0 %v2603
    %2635 = vmatpush1.bf16.msra.mxu0 %v2602
    %2636 = vmatprep.subr.bf16.mxu0 %v2605
    %2637 = vmatpush1.bf16.msra.mxu0 %v2604
    %2638 = vmatprep.subr.bf16.mxu0 %v2607
    %2639 = vmatpush1.bf16.msra.mxu0 %v2606
    %2640 = vmatprep.subr.bf16.mxu0 %v2609
    %2641 = vmatpush1.bf16.msra.mxu0 %v2608
    %2642 = vmatprep.subr.bf16.mxu0 %v2611
    %2643 = vmatpush1.bf16.msra.mxu0 %v2610
    %2644 = vmatprep.subr.bf16.mxu0 0
    %2645 = vmatpush1.bf16.msra.mxu0 0
    %2646 = vmatprep.subr.bf16.mxu0 0
    %2647 = vmatpush1.bf16.msra.mxu0 0
    %2648 = vmatprep.subr.bf16.mxu0 0
    %2649 = vmatpush1.bf16.msra.mxu0 0
    %2650 = vmatprep.subr.bf16.mxu0 0
    %2651 = vmatpush1.bf16.msra.mxu0 0
    %2652 = vmatprep.subr.bf16.mxu0 0
    %2653 = vmatpush1.bf16.msra.mxu0 0
    %2654 = vmatprep.subr.bf16.mxu0 0
    %2655 = vmatpush1.bf16.msra.mxu0 0
    %2656 = vmatprep.subr.bf16.mxu0 0
    %2657 = vmatpush1.bf16.msra.mxu0 0
    %2658 = vmatprep.subr.bf16.mxu0 0
    %2659 = vmatpush1.bf16.msra.mxu0 0
    %2660 = vmatprep.mubr.bf16.mxu0 0
    %2661 = vmatmul.mubr.bf16.gmra.mrb[0].mxu0 %v2344
    %v2662 = vpop.f32.mrb[0].mxu0
    %v2663 = vadd.f32 %v2543, %v2662
    %v2664 = vpop.f32.mrb[0].mxu0
    %v2665 = vadd.f32 %v2547, %v2664
    %v2666 = vpop.f32.mrb[0].mxu0
    %v2667 = vadd.f32 %v2543, %v2666
    %v2668 = vpop.f32.mrb[0].mxu0
    %v2669 = vadd.f32 %v2547, %v2668
    %2670 = vmatprep.mubr.bf16.mxu0 0
    %2671 = vmatmul.mubr.bf16.gmra.mrb[0].mxu0 %v2345
    %v2672 = vpop.f32.mrb[0].mxu0
    %v2673 = vadd.f32 %v2543, %v2672
    %v2674 = vpop.f32.mrb[0].mxu0
    %v2675 = vadd.f32 %v2547, %v2674
    %v2676 = vpop.f32.mrb[0].mxu0
    %v2677 = vadd.f32 %v2543, %v2676
    %v2678 = vpop.f32.mrb[0].mxu0
    %v2679 = vadd.f32 %v2547, %v2678
    %2680 = vmatprep.mubr.bf16.mxu0 0
    %2681 = vmatmul.mubr.bf16.gmra.mrb[0].mxu0 %v2346
    %v2682 = vpop.f32.mrb[0].mxu0
    %v2683 = vadd.f32 %v2543, %v2682
    %v2684 = vpop.f32.mrb[0].mxu0
    %v2685 = vadd.f32 %v2547, %v2684
    %v2686 = vpop.f32.mrb[0].mxu0
    %v2687 = vadd.f32 %v2543, %v2686
    %v2688 = vpop.f32.mrb[0].mxu0
    %v2689 = vadd.f32 %v2547, %v2688
    %2690 = vmatprep.mubr.bf16.mxu0 0
    %2691 = vmatmul.mubr.bf16.gmra.mrb[0].mxu0 %v2347
    %v2692 = vpop.f32.mrb[0].mxu0
    %v2693 = vadd.f32 %v2543, %v2692
    %v2694 = vpop.f32.mrb[0].mxu0
    %v2695 = vadd.f32 %v2547, %v2694
    %v2696 = vpop.f32.mrb[0].mxu0
    %v2697 = vadd.f32 %v2543, %v2696
    %v2698 = vpop.f32.mrb[0].mxu0
    %v2699 = vadd.f32 %v2547, %v2698
    %2700 = vmatprep.mubr.bf16.mxu0 0
    %2701 = vmatmul.mubr.bf16.gmra.mrb[0].mxu0 %v2348
    %v2702 = vpop.f32.mrb[0].mxu0
    %v2703 = vadd.f32 %v2543, %v2702
    %v2704 = vpop.f32.mrb[0].mxu0
    %v2705 = vadd.f32 %v2547, %v2704
    %v2706 = vpop.f32.mrb[0].mxu0
    %v2707 = vadd.f32 %v2543, %v2706
    %v2708 = vpop.f32.mrb[0].mxu0
    %v2709 = vadd.f32 %v2547, %v2708
    %2710 = vdwg.mxu0
    %v2719 = vunpack.c.l.b16 %v194
    %v2720 = vunpack.c.h.b16 %v194
    %v2721 = vunpack.c.l.b16 %v195
    %v2722 = vunpack.c.h.b16 %v195
    %v2723 = vunpack.c.l.b16 %v196
    %v2724 = vunpack.c.h.b16 %v196
    %v2725 = vunpack.c.l.b16 %v197
    %v2726 = vunpack.c.h.b16 %v197
    %v2727 = vunpack.c.l.b16 %v198
    %v2728 = vunpack.c.h.b16 %v198
    %v2729 = vunpack.c.l.b16 %v199
    %v2730 = vunpack.c.h.b16 %v199
    %v2731 = vunpack.c.l.b16 %v200
    %v2732 = vunpack.c.h.b16 %v200
    %v2733 = vunpack.c.l.b16 %v201
    %v2734 = vunpack.c.h.b16 %v201
    %v2735 = vpack.c.b16 %v2721, %v2719
    %v2736 = vpack.c.b16 %v2722, %v2720
    %v2737 = vpack.c.b16 %v2725, %v2723
    %v2738 = vpack.c.b16 %v2726, %v2724
    %v2739 = vpack.c.b16 %v2729, %v2727
    %v2740 = vpack.c.b16 %v2730, %v2728
    %v2741 = vpack.c.b16 %v2733, %v2731
    %v2742 = vpack.c.b16 %v2734, %v2732
    %2751 = vmatprep.subr.bf16.mxu0 %v2736
    %2752 = vmatpush1.bf16.msra.mxu0 %v2735
    %2753 = vmatprep.subr.bf16.mxu0 %v2738
    %2754 = vmatpush1.bf16.msra.mxu0 %v2737
    %2755 = vmatprep.subr.bf16.mxu0 %v2740
    %2756 = vmatpush1.bf16.msra.mxu0 %v2739
    %2757 = vmatprep.subr.bf16.mxu0 %v2742
    %2758 = vmatpush1.bf16.msra.mxu0 %v2741
    %2759 = vmatprep.subr.bf16.mxu0 0
    %2760 = vmatpush1.bf16.msra.mxu0 0
    %2761 = vmatprep.subr.bf16.mxu0 0
    %2762 = vmatpush1.bf16.msra.mxu0 0
    %2763 = vmatprep.subr.bf16.mxu0 0
    %2764 = vmatpush1.bf16.msra.mxu0 0
    %2765 = vmatprep.subr.bf16.mxu0 0
    %2766 = vmatpush1.bf16.msra.mxu0 0
    %2767 = vmatprep.subr.bf16.mxu0 0
    %2768 = vmatpush1.bf16.msra.mxu0 0
    %2769 = vmatprep.subr.bf16.mxu0 0
    %2770 = vmatpush1.bf16.msra.mxu0 0
    %2771 = vmatprep.subr.bf16.mxu0 0
    %2772 = vmatpush1.bf16.msra.mxu0 0
    %2773 = vmatprep.subr.bf16.mxu0 0
    %2774 = vmatpush1.bf16.msra.mxu0 0
    %2775 = vmatprep.subr.bf16.mxu0 0
    %2776 = vmatpush1.bf16.msra.mxu0 0
    %2777 = vmatprep.subr.bf16.mxu0 0
    %2778 = vmatpush1.bf16.msra.mxu0 0
    %2779 = vmatprep.subr.bf16.mxu0 0
    %2780 = vmatpush1.bf16.msra.mxu0 0
    %2781 = vmatprep.subr.bf16.mxu0 0
    %2782 = vmatpush1.bf16.msra.mxu0 0
    %2783 = vmatprep.mubr.bf16.mxu0 0
    %2784 = vmatmul.mubr.bf16.gmra.mrb[0].mxu0 %v826
    %v2785 = vpop.f32.mrb[0].mxu0
    %v2786 = vadd.f32 0.0, %v2785
    %v2787 = vpop.f32.mrb[0].mxu0
    %v2788 = vadd.f32 0.0, %v2787
    %v2789 = vpop.f32.mrb[0].mxu0
    %v2790 = vpop.f32.mrb[0].mxu0
    %2791 = vdwg.mxu0
    %v2792 = vadd.f32 %v2482, %v2786
    %v2793 = vadd.f32 %v2484, %v2788
    %v2794 = vxor.u32 %v2792, 2147483648
    %v2795 = vmul.f32 %v2794, 1.442695
    %v2796 = vpow.pop %v2795
    %v2797 = vadd.f32 %v2796, 1.0
    %v2798 = vrcp.pop %v2797
    %v2799 = vmul.f32 1.0, %v2798
    %v2800 = vtanh.pop %v2793
    %v2801 = vxor.u32 %v2793, 2147483648
    %v2802 = vmul.f32 %v2801, 1.442695
    %v2803 = vpow.pop %v2802
    %v2804 = vadd.f32 %v2803, 1.0
    %v2805 = vrcp.pop %v2804
    %v2806 = vmul.f32 1.0, %v2805
    %v2807 = vmul.f32 %v2799, 0.0
    %v2808 = vmul.f32 %v2799, %v2800
    %2810 = vrot.lane.b32.xlu0 %v2808, 64
    %v2811 = vpop.permute.xlu0 %2810
    %v2813 = vadd.f32 %v2807, %v2811
    %v2814 = vtanh.pop %v2813
    %v2815 = vmul.f32 %v2806, %v2814
    %v2816 = vpack.c.bf16 %v2815, %v2815
    %2818 = vrot.lane.b32.xlu0 %v2816, 64
    %v2819 = vpop.permute.xlu0 %2818
    %v2821 = vsel %vm545, %v2819, 0
    %2823 = vmatprep.subr.bf16.mxu0 %v2736
    %2824 = vmatpush1.bf16.msra.mxu0 %v2735
    %2825 = vmatprep.subr.bf16.mxu0 %v2738
    %2826 = vmatpush1.bf16.msra.mxu0 %v2737
    %2827 = vmatprep.subr.bf16.mxu0 %v2740
    %2828 = vmatpush1.bf16.msra.mxu0 %v2739
    %2829 = vmatprep.subr.bf16.mxu0 %v2742
    %2830 = vmatpush1.bf16.msra.mxu0 %v2741
    %2831 = vmatprep.subr.bf16.mxu0 0
    %2832 = vmatpush1.bf16.msra.mxu0 0
    %2833 = vmatprep.subr.bf16.mxu0 0
    %2834 = vmatpush1.bf16.msra.mxu0 0
    %2835 = vmatprep.subr.bf16.mxu0 0
    %2836 = vmatpush1.bf16.msra.mxu0 0
    %2837 = vmatprep.subr.bf16.mxu0 0
    %2838 = vmatpush1.bf16.msra.mxu0 0
    %2839 = vmatprep.subr.bf16.mxu0 0
    %2840 = vmatpush1.bf16.msra.mxu0 0
    %2841 = vmatprep.subr.bf16.mxu0 0
    %2842 = vmatpush1.bf16.msra.mxu0 0
    %2843 = vmatprep.subr.bf16.mxu0 0
    %2844 = vmatpush1.bf16.msra.mxu0 0
    %2845 = vmatprep.subr.bf16.mxu0 0
    %2846 = vmatpush1.bf16.msra.mxu0 0
    %2847 = vmatprep.subr.bf16.mxu0 0
    %2848 = vmatpush1.bf16.msra.mxu0 0
    %2849 = vmatprep.subr.bf16.mxu0 0
    %2850 = vmatpush1.bf16.msra.mxu0 0
    %2851 = vmatprep.subr.bf16.mxu0 0
    %2852 = vmatpush1.bf16.msra.mxu0 0
    %2853 = vmatprep.subr.bf16.mxu0 0
    %2854 = vmatpush1.bf16.msra.mxu0 0
    %2855 = vmatprep.mubr.bf16.mxu0 0
    %2856 = vmatmul.mubr.bf16.gmra.mrb[0].mxu0 %v2821
    %v2857 = vpop.f32.mrb[0].mxu0
    %v2858 = vadd.f32 0.0, %v2857
    %v2859 = vpop.f32.mrb[0].mxu0
    %v2860 = vadd.f32 0.0, %v2859
    %v2861 = vpop.f32.mrb[0].mxu0
    %v2862 = vpop.f32.mrb[0].mxu0
    %2863 = vdwg.mxu0
    %v2864 = vadd.f32 %v2486, %v2858
    %v2865 = vadd.f32 %v2488, %v2860
    %v2866 = vxor.u32 %v2864, 2147483648
    %v2867 = vmul.f32 %v2866, 1.442695
    %v2868 = vpow.pop %v2867
    %v2869 = vadd.f32 %v2868, 1.0
    %v2870 = vrcp.pop %v2869
    %v2871 = vmul.f32 1.0, %v2870
    %v2872 = vtanh.pop %v2865
    %v2873 = vxor.u32 %v2865, 2147483648
    %v2874 = vmul.f32 %v2873, 1.442695
    %v2875 = vpow.pop %v2874
    %v2876 = vadd.f32 %v2875, 1.0
    %v2877 = vrcp.pop %v2876
    %v2878 = vmul.f32 1.0, %v2877
    %v2879 = vmul.f32 %v2871, %v2813
    %v2880 = vmul.f32 %v2871, %v2872
    %2882 = vrot.lane.b32.xlu0 %v2880, 64
    %v2883 = vpop.permute.xlu0 %2882
    %v2885 = vadd.f32 %v2879, %v2883
    %v2886 = vtanh.pop %v2885
    %v2887 = vmul.f32 %v2878, %v2886
    %v2888 = vpack.c.bf16 %v2887, %v2887
    %2890 = vrot.lane.b32.xlu0 %v2888, 64
    %v2891 = vpop.permute.xlu0 %2890
    %v2893 = vsel %vm545, %v2891, 0
    %2895 = vmatprep.subr.bf16.mxu0 %v2736
    %2896 = vmatpush1.bf16.msra.mxu0 %v2735
    %2897 = vmatprep.subr.bf16.mxu0 %v2738
    %2898 = vmatpush1.bf16.msra.mxu0 %v2737
    %2899 = vmatprep.subr.bf16.mxu0 %v2740
    %2900 = vmatpush1.bf16.msra.mxu0 %v2739
    %2901 = vmatprep.subr.bf16.mxu0 %v2742
    %2902 = vmatpush1.bf16.msra.mxu0 %v2741
    %2903 = vmatprep.subr.bf16.mxu0 0
    %2904 = vmatpush1.bf16.msra.mxu0 0
    %2905 = vmatprep.subr.bf16.mxu0 0
    %2906 = vmatpush1.bf16.msra.mxu0 0
    %2907 = vmatprep.subr.bf16.mxu0 0
    %2908 = vmatpush1.bf16.msra.mxu0 0
    %2909 = vmatprep.subr.bf16.mxu0 0
    %2910 = vmatpush1.bf16.msra.mxu0 0
    %2911 = vmatprep.subr.bf16.mxu0 0
    %2912 = vmatpush1.bf16.msra.mxu0 0
    %2913 = vmatprep.subr.bf16.mxu0 0
    %2914 = vmatpush1.bf16.msra.mxu0 0
    %2915 = vmatprep.subr.bf16.mxu0 0
    %2916 = vmatpush1.bf16.msra.mxu0 0
    %2917 = vmatprep.subr.bf16.mxu0 0
    %2918 = vmatpush1.bf16.msra.mxu0 0
    %2919 = vmatprep.subr.bf16.mxu0 0
    %2920 = vmatpush1.bf16.msra.mxu0 0
    %2921 = vmatprep.subr.bf16.mxu0 0
    %2922 = vmatpush1.bf16.msra.mxu0 0
    %2923 = vmatprep.subr.bf16.mxu0 0
    %2924 = vmatpush1.bf16.msra.mxu0 0
    %2925 = vmatprep.subr.bf16.mxu0 0
    %2926 = vmatpush1.bf16.msra.mxu0 0
    %2927 = vmatprep.mubr.bf16.mxu0 0
    %2928 = vmatmul.mubr.bf16.gmra.mrb[0].mxu0 %v2893
    %v2929 = vpop.f32.mrb[0].mxu0
    %v2930 = vadd.f32 0.0, %v2929
    %v2931 = vpop.f32.mrb[0].mxu0
    %v2932 = vadd.f32 0.0, %v2931
    %v2933 = vpop.f32.mrb[0].mxu0
    %v2934 = vpop.f32.mrb[0].mxu0
    %2935 = vdwg.mxu0
    %v2936 = vadd.f32 %v2492, %v2930
    %v2937 = vadd.f32 %v2494, %v2932
    %v2938 = vxor.u32 %v2936, 2147483648
    %v2939 = vmul.f32 %v2938, 1.442695
    %v2940 = vpow.pop %v2939
    %v2941 = vadd.f32 %v2940, 1.0
    %v2942 = vrcp.pop %v2941
    %v2943 = vmul.f32 1.0, %v2942
    %v2944 = vtanh.pop %v2937
    %v2945 = vxor.u32 %v2937, 2147483648
    %v2946 = vmul.f32 %v2945, 1.442695
    %v2947 = vpow.pop %v2946
    %v2948 = vadd.f32 %v2947, 1.0
    %v2949 = vrcp.pop %v2948
    %v2950 = vmul.f32 1.0, %v2949
    %v2951 = vmul.f32 %v2943, %v2885
    %v2952 = vmul.f32 %v2943, %v2944
    %2954 = vrot.lane.b32.xlu0 %v2952, 64
    %v2955 = vpop.permute.xlu0 %2954
    %v2957 = vadd.f32 %v2951, %v2955
    %v2958 = vtanh.pop %v2957
    %v2959 = vmul.f32 %v2950, %v2958
    %v2960 = vpack.c.bf16 %v2959, %v2959
    %2962 = vrot.lane.b32.xlu0 %v2960, 64
    %v2963 = vpop.permute.xlu0 %2962
    %v2965 = vsel %vm545, %v2963, 0
    %2967 = vmatprep.subr.bf16.mxu0 %v2736
    %2968 = vmatpush1.bf16.msra.mxu0 %v2735
    %2969 = vmatprep.subr.bf16.mxu0 %v2738
    %2970 = vmatpush1.bf16.msra.mxu0 %v2737
    %2971 = vmatprep.subr.bf16.mxu0 %v2740
    %2972 = vmatpush1.bf16.msra.mxu0 %v2739
    %2973 = vmatprep.subr.bf16.mxu0 %v2742
    %2974 = vmatpush1.bf16.msra.mxu0 %v2741
    %2975 = vmatprep.subr.bf16.mxu0 0
    %2976 = vmatpush1.bf16.msra.mxu0 0
    %2977 = vmatprep.subr.bf16.mxu0 0
    %2978 = vmatpush1.bf16.msra.mxu0 0
    %2979 = vmatprep.subr.bf16.mxu0 0
    %2980 = vmatpush1.bf16.msra.mxu0 0
    %2981 = vmatprep.subr.bf16.mxu0 0
    %2982 = vmatpush1.bf16.msra.mxu0 0
    %2983 = vmatprep.subr.bf16.mxu0 0
    %2984 = vmatpush1.bf16.msra.mxu0 0
    %2985 = vmatprep.subr.bf16.mxu0 0
    %2986 = vmatpush1.bf16.msra.mxu0 0
    %2987 = vmatprep.subr.bf16.mxu0 0
    %2988 = vmatpush1.bf16.msra.mxu0 0
    %2989 = vmatprep.subr.bf16.mxu0 0
    %2990 = vmatpush1.bf16.msra.mxu0 0
    %2991 = vmatprep.subr.bf16.mxu0 0
    %2992 = vmatpush1.bf16.msra.mxu0 0
    %2993 = vmatprep.subr.bf16.mxu0 0
    %2994 = vmatpush1.bf16.msra.mxu0 0
    %2995 = vmatprep.subr.bf16.mxu0 0
    %2996 = vmatpush1.bf16.msra.mxu0 0
    %2997 = vmatprep.subr.bf16.mxu0 0
    %2998 = vmatpush1.bf16.msra.mxu0 0
    %2999 = vmatprep.mubr.bf16.mxu0 0
    %3000 = vmatmul.mubr.bf16.gmra.mrb[0].mxu0 %v2965
    %v3001 = vpop.f32.mrb[0].mxu0
    %v3002 = vadd.f32 0.0, %v3001
    %v3003 = vpop.f32.mrb[0].mxu0
    %v3004 = vadd.f32 0.0, %v3003
    %v3005 = vpop.f32.mrb[0].mxu0
    %v3006 = vpop.f32.mrb[0].mxu0
    %3007 = vdwg.mxu0
    %v3008 = vadd.f32 %v2496, %v3002
    %v3009 = vadd.f32 %v2498, %v3004
    %v3010 = vxor.u32 %v3008, 2147483648
    %v3011 = vmul.f32 %v3010, 1.442695
    %v3012 = vpow.pop %v3011
    %v3013 = vadd.f32 %v3012, 1.0
    %v3014 = vrcp.pop %v3013
    %v3015 = vmul.f32 1.0, %v3014
    %v3016 = vtanh.pop %v3009
    %v3017 = vxor.u32 %v3009, 2147483648
    %v3018 = vmul.f32 %v3017, 1.442695
    %v3019 = vpow.pop %v3018
    %v3020 = vadd.f32 %v3019, 1.0
    %v3021 = vrcp.pop %v3020
    %v3022 = vmul.f32 1.0, %v3021
    %v3023 = vmul.f32 %v3015, %v2957
    %v3024 = vmul.f32 %v3015, %v3016
    %3026 = vrot.lane.b32.xlu0 %v3024, 64
    %v3027 = vpop.permute.xlu0 %3026
    %v3029 = vadd.f32 %v3023, %v3027
    %v3030 = vtanh.pop %v3029
    %v3031 = vmul.f32 %v3022, %v3030
    %v3032 = vpack.c.bf16 %v3031, %v3031
    %3034 = vrot.lane.b32.xlu0 %v3032, 64
    %v3035 = vpop.permute.xlu0 %3034
    %v3037 = vsel %vm545, %v3035, 0
    %3039 = vmatprep.subr.bf16.mxu0 %v2736
    %3040 = vmatpush1.bf16.msra.mxu0 %v2735
    %3041 = vmatprep.subr.bf16.mxu0 %v2738
    %3042 = vmatpush1.bf16.msra.mxu0 %v2737
    %3043 = vmatprep.subr.bf16.mxu0 %v2740
    %3044 = vmatpush1.bf16.msra.mxu0 %v2739
    %3045 = vmatprep.subr.bf16.mxu0 %v2742
    %3046 = vmatpush1.bf16.msra.mxu0 %v2741
    %3047 = vmatprep.subr.bf16.mxu0 0
    %3048 = vmatpush1.bf16.msra.mxu0 0
    %3049 = vmatprep.subr.bf16.mxu0 0
    %3050 = vmatpush1.bf16.msra.mxu0 0
    %3051 = vmatprep.subr.bf16.mxu0 0
    %3052 = vmatpush1.bf16.msra.mxu0 0
    %3053 = vmatprep.subr.bf16.mxu0 0
    %3054 = vmatpush1.bf16.msra.mxu0 0
    %3055 = vmatprep.subr.bf16.mxu0 0
    %3056 = vmatpush1.bf16.msra.mxu0 0
    %3057 = vmatprep.subr.bf16.mxu0 0
    %3058 = vmatpush1.bf16.msra.mxu0 0
    %3059 = vmatprep.subr.bf16.mxu0 0
    %3060 = vmatpush1.bf16.msra.mxu0 0
    %3061 = vmatprep.subr.bf16.mxu0 0
    %3062 = vmatpush1.bf16.msra.mxu0 0
    %3063 = vmatprep.subr.bf16.mxu0 0
    %3064 = vmatpush1.bf16.msra.mxu0 0
    %3065 = vmatprep.subr.bf16.mxu0 0
    %3066 = vmatpush1.bf16.msra.mxu0 0
    %3067 = vmatprep.subr.bf16.mxu0 0
    %3068 = vmatpush1.bf16.msra.mxu0 0
    %3069 = vmatprep.subr.bf16.mxu0 0
    %3070 = vmatpush1.bf16.msra.mxu0 0
    %3071 = vmatprep.mubr.bf16.mxu0 0
    %3072 = vmatmul.mubr.bf16.gmra.mrb[0].mxu0 %v3037
    %v3073 = vpop.f32.mrb[0].mxu0
    %v3074 = vadd.f32 0.0, %v3073
    %v3075 = vpop.f32.mrb[0].mxu0
    %v3076 = vadd.f32 0.0, %v3075
    %v3077 = vpop.f32.mrb[0].mxu0
    %v3078 = vpop.f32.mrb[0].mxu0
    %3079 = vdwg.mxu0
    %v3080 = vadd.f32 %v2502, %v3074
    %v3081 = vadd.f32 %v2504, %v3076
    %v3082 = vxor.u32 %v3080, 2147483648
    %v3083 = vmul.f32 %v3082, 1.442695
    %v3084 = vpow.pop %v3083
    %v3085 = vadd.f32 %v3084, 1.0
    %v3086 = vrcp.pop %v3085
    %v3087 = vmul.f32 1.0, %v3086
    %v3088 = vtanh.pop %v3081
    %v3089 = vxor.u32 %v3081, 2147483648
    %v3090 = vmul.f32 %v3089, 1.442695
    %v3091 = vpow.pop %v3090
    %v3092 = vadd.f32 %v3091, 1.0
    %v3093 = vrcp.pop %v3092
    %v3094 = vmul.f32 1.0, %v3093
    %v3095 = vmul.f32 %v3087, %v3029
    %v3096 = vmul.f32 %v3087, %v3088
    %3098 = vrot.lane.b32.xlu0 %v3096, 64
    %v3099 = vpop.permute.xlu0 %3098
    %v3101 = vadd.f32 %v3095, %v3099
    %v3102 = vtanh.pop %v3101
    %v3103 = vmul.f32 %v3094, %v3102
    %v3104 = vpack.c.bf16 %v3103, %v3103
    %3106 = vrot.lane.b32.xlu0 %v3104, 64
    %v3107 = vpop.permute.xlu0 %3106
    %v3109 = vsel %vm545, %v3107, 0
    %3111 = vmatprep.subr.bf16.mxu0 %v2736
    %3112 = vmatpush1.bf16.msra.mxu0 %v2735
    %3113 = vmatprep.subr.bf16.mxu0 %v2738
    %3114 = vmatpush1.bf16.msra.mxu0 %v2737
    %3115 = vmatprep.subr.bf16.mxu0 %v2740
    %3116 = vmatpush1.bf16.msra.mxu0 %v2739
    %3117 = vmatprep.subr.bf16.mxu0 %v2742
    %3118 = vmatpush1.bf16.msra.mxu0 %v2741
    %3119 = vmatprep.subr.bf16.mxu0 0
    %3120 = vmatpush1.bf16.msra.mxu0 0
    %3121 = vmatprep.subr.bf16.mxu0 0
    %3122 = vmatpush1.bf16.msra.mxu0 0
    %3123 = vmatprep.subr.bf16.mxu0 0
    %3124 = vmatpush1.bf16.msra.mxu0 0
    %3125 = vmatprep.subr.bf16.mxu0 0
    %3126 = vmatpush1.bf16.msra.mxu0 0
    %3127 = vmatprep.subr.bf16.mxu0 0
    %3128 = vmatpush1.bf16.msra.mxu0 0
    %3129 = vmatprep.subr.bf16.mxu0 0
    %3130 = vmatpush1.bf16.msra.mxu0 0
    %3131 = vmatprep.subr.bf16.mxu0 0
    %3132 = vmatpush1.bf16.msra.mxu0 0
    %3133 = vmatprep.subr.bf16.mxu0 0
    %3134 = vmatpush1.bf16.msra.mxu0 0
    %3135 = vmatprep.subr.bf16.mxu0 0
    %3136 = vmatpush1.bf16.msra.mxu0 0
    %3137 = vmatprep.subr.bf16.mxu0 0
    %3138 = vmatpush1.bf16.msra.mxu0 0
    %3139 = vmatprep.subr.bf16.mxu0 0
    %3140 = vmatpush1.bf16.msra.mxu0 0
    %3141 = vmatprep.subr.bf16.mxu0 0
    %3142 = vmatpush1.bf16.msra.mxu0 0
    %3143 = vmatprep.mubr.bf16.mxu0 0
    %3144 = vmatmul.mubr.bf16.gmra.mrb[0].mxu0 %v3109
    %v3145 = vpop.f32.mrb[0].mxu0
    %v3146 = vadd.f32 0.0, %v3145
    %v3147 = vpop.f32.mrb[0].mxu0
    %v3148 = vadd.f32 0.0, %v3147
    %v3149 = vpop.f32.mrb[0].mxu0
    %v3150 = vpop.f32.mrb[0].mxu0
    %3151 = vdwg.mxu0
    %v3152 = vadd.f32 %v2506, %v3146
    %v3153 = vadd.f32 %v2508, %v3148
    %v3154 = vxor.u32 %v3152, 2147483648
    %v3155 = vmul.f32 %v3154, 1.442695
    %v3156 = vpow.pop %v3155
    %v3157 = vadd.f32 %v3156, 1.0
    %v3158 = vrcp.pop %v3157
    %v3159 = vmul.f32 1.0, %v3158
    %v3160 = vtanh.pop %v3153
    %v3161 = vxor.u32 %v3153, 2147483648
    %v3162 = vmul.f32 %v3161, 1.442695
    %v3163 = vpow.pop %v3162
    %v3164 = vadd.f32 %v3163, 1.0
    %v3165 = vrcp.pop %v3164
    %v3166 = vmul.f32 1.0, %v3165
    %v3167 = vmul.f32 %v3159, %v3101
    %v3168 = vmul.f32 %v3159, %v3160
    %3170 = vrot.lane.b32.xlu0 %v3168, 64
    %v3171 = vpop.permute.xlu0 %3170
    %v3173 = vadd.f32 %v3167, %v3171
    %v3174 = vtanh.pop %v3173
    %v3175 = vmul.f32 %v3166, %v3174
    %v3176 = vpack.c.bf16 %v3175, %v3175
    %3178 = vrot.lane.b32.xlu0 %v3176, 64
    %v3179 = vpop.permute.xlu0 %3178
    %v3181 = vsel %vm545, %v3179, 0
    %3183 = vmatprep.subr.bf16.mxu0 %v2736
    %3184 = vmatpush1.bf16.msra.mxu0 %v2735
    %3185 = vmatprep.subr.bf16.mxu0 %v2738
    %3186 = vmatpush1.bf16.msra.mxu0 %v2737
    %3187 = vmatprep.subr.bf16.mxu0 %v2740
    %3188 = vmatpush1.bf16.msra.mxu0 %v2739
    %3189 = vmatprep.subr.bf16.mxu0 %v2742
    %3190 = vmatpush1.bf16.msra.mxu0 %v2741
    %3191 = vmatprep.subr.bf16.mxu0 0
    %3192 = vmatpush1.bf16.msra.mxu0 0
    %3193 = vmatprep.subr.bf16.mxu0 0
    %3194 = vmatpush1.bf16.msra.mxu0 0
    %3195 = vmatprep.subr.bf16.mxu0 0
    %3196 = vmatpush1.bf16.msra.mxu0 0
    %3197 = vmatprep.subr.bf16.mxu0 0
    %3198 = vmatpush1.bf16.msra.mxu0 0
    %3199 = vmatprep.subr.bf16.mxu0 0
    %3200 = vmatpush1.bf16.msra.mxu0 0
    %3201 = vmatprep.subr.bf16.mxu0 0
    %3202 = vmatpush1.bf16.msra.mxu0 0
    %3203 = vmatprep.subr.bf16.mxu0 0
    %3204 = vmatpush1.bf16.msra.mxu0 0
    %3205 = vmatprep.subr.bf16.mxu0 0
    %3206 = vmatpush1.bf16.msra.mxu0 0
    %3207 = vmatprep.subr.bf16.mxu0 0
    %3208 = vmatpush1.bf16.msra.mxu0 0
    %3209 = vmatprep.subr.bf16.mxu0 0
    %3210 = vmatpush1.bf16.msra.mxu0 0
    %3211 = vmatprep.subr.bf16.mxu0 0
    %3212 = vmatpush1.bf16.msra.mxu0 0
    %3213 = vmatprep.subr.bf16.mxu0 0
    %3214 = vmatpush1.bf16.msra.mxu0 0
    %3215 = vmatprep.mubr.bf16.mxu0 0
    %3216 = vmatmul.mubr.bf16.gmra.mrb[0].mxu0 %v3181
    %v3217 = vpop.f32.mrb[0].mxu0
    %v3218 = vadd.f32 0.0, %v3217
    %v3219 = vpop.f32.mrb[0].mxu0
    %v3220 = vadd.f32 0.0, %v3219
    %v3221 = vpop.f32.mrb[0].mxu0
    %v3222 = vpop.f32.mrb[0].mxu0
    %3223 = vdwg.mxu0
    %v3224 = vadd.f32 %v2512, %v3218
    %v3225 = vadd.f32 %v2514, %v3220
    %v3226 = vxor.u32 %v3224, 2147483648
    %v3227 = vmul.f32 %v3226, 1.442695
    %v3228 = vpow.pop %v3227
    %v3229 = vadd.f32 %v3228, 1.0
    %v3230 = vrcp.pop %v3229
    %v3231 = vmul.f32 1.0, %v3230
    %v3232 = vtanh.pop %v3225
    %v3233 = vxor.u32 %v3225, 2147483648
    %v3234 = vmul.f32 %v3233, 1.442695
    %v3235 = vpow.pop %v3234
    %v3236 = vadd.f32 %v3235, 1.0
    %v3237 = vrcp.pop %v3236
    %v3238 = vmul.f32 1.0, %v3237
    %v3239 = vmul.f32 %v3231, %v3173
    %v3240 = vmul.f32 %v3231, %v3232
    %3242 = vrot.lane.b32.xlu0 %v3240, 64
    %v3243 = vpop.permute.xlu0 %3242
    %v3245 = vadd.f32 %v3239, %v3243
    %v3246 = vtanh.pop %v3245
    %v3247 = vmul.f32 %v3238, %v3246
    %v3248 = vpack.c.bf16 %v3247, %v3247
    %3250 = vrot.lane.b32.xlu0 %v3248, 64
    %v3251 = vpop.permute.xlu0 %3250
    %v3253 = vsel %vm545, %v3251, 0
    %3255 = vmatprep.subr.bf16.mxu0 %v2736
    %3256 = vmatpush1.bf16.msra.mxu0 %v2735
    %3257 = vmatprep.subr.bf16.mxu0 %v2738
    %3258 = vmatpush1.bf16.msra.mxu0 %v2737
    %3259 = vmatprep.subr.bf16.mxu0 %v2740
    %3260 = vmatpush1.bf16.msra.mxu0 %v2739
    %3261 = vmatprep.subr.bf16.mxu0 %v2742
    %3262 = vmatpush1.bf16.msra.mxu0 %v2741
    %3263 = vmatprep.subr.bf16.mxu0 0
    %3264 = vmatpush1.bf16.msra.mxu0 0
    %3265 = vmatprep.subr.bf16.mxu0 0
    %3266 = vmatpush1.bf16.msra.mxu0 0
    %3267 = vmatprep.subr.bf16.mxu0 0
    %3268 = vmatpush1.bf16.msra.mxu0 0
    %3269 = vmatprep.subr.bf16.mxu0 0
    %3270 = vmatpush1.bf16.msra.mxu0 0
    %3271 = vmatprep.subr.bf16.mxu0 0
    %3272 = vmatpush1.bf16.msra.mxu0 0
    %3273 = vmatprep.subr.bf16.mxu0 0
    %3274 = vmatpush1.bf16.msra.mxu0 0
    %3275 = vmatprep.subr.bf16.mxu0 0
    %3276 = vmatpush1.bf16.msra.mxu0 0
    %3277 = vmatprep.subr.bf16.mxu0 0
    %3278 = vmatpush1.bf16.msra.mxu0 0
    %3279 = vmatprep.subr.bf16.mxu0 0
    %3280 = vmatpush1.bf16.msra.mxu0 0
    %3281 = vmatprep.subr.bf16.mxu0 0
    %3282 = vmatpush1.bf16.msra.mxu0 0
    %3283 = vmatprep.subr.bf16.mxu0 0
    %3284 = vmatpush1.bf16.msra.mxu0 0
    %3285 = vmatprep.subr.bf16.mxu0 0
    %3286 = vmatpush1.bf16.msra.mxu0 0
    %3287 = vmatprep.mubr.bf16.mxu0 0
    %3288 = vmatmul.mubr.bf16.gmra.mrb[0].mxu0 %v3253
    %v3289 = vpop.f32.mrb[0].mxu0
    %v3290 = vadd.f32 0.0, %v3289
    %v3291 = vpop.f32.mrb[0].mxu0
    %v3292 = vadd.f32 0.0, %v3291
    %v3293 = vpop.f32.mrb[0].mxu0
    %v3294 = vpop.f32.mrb[0].mxu0
    %3295 = vdwg.mxu0
    %v3296 = vadd.f32 %v2516, %v3290
    %v3297 = vadd.f32 %v2518, %v3292
    %v3298 = vxor.u32 %v3296, 2147483648
    %v3299 = vmul.f32 %v3298, 1.442695
    %v3300 = vpow.pop %v3299
    %v3301 = vadd.f32 %v3300, 1.0
    %v3302 = vrcp.pop %v3301
    %v3303 = vmul.f32 1.0, %v3302
    %v3304 = vtanh.pop %v3297
    %v3305 = vxor.u32 %v3297, 2147483648
    %v3306 = vmul.f32 %v3305, 1.442695
    %v3307 = vpow.pop %v3306
    %v3308 = vadd.f32 %v3307, 1.0
    %v3309 = vrcp.pop %v3308
    %v3310 = vmul.f32 1.0, %v3309
    %v3311 = vmul.f32 %v3303, %v3245
    %v3312 = vmul.f32 %v3303, %v3304
    %3314 = vrot.lane.b32.xlu0 %v3312, 64
    %v3315 = vpop.permute.xlu0 %3314
    %v3317 = vadd.f32 %v3311, %v3315
    %v3318 = vtanh.pop %v3317
    %v3319 = vmul.f32 %v3310, %v3318
    %v3320 = vpack.c.bf16 %v3319, %v3319
    %3322 = vrot.lane.b32.xlu0 %v3320, 64
    %v3323 = vpop.permute.xlu0 %3322
    %v3325 = vsel %vm545, %v3323, 0
    %3327 = vmatprep.subr.bf16.mxu0 %v2736
    %3328 = vmatpush1.bf16.msra.mxu0 %v2735
    %3329 = vmatprep.subr.bf16.mxu0 %v2738
    %3330 = vmatpush1.bf16.msra.mxu0 %v2737
    %3331 = vmatprep.subr.bf16.mxu0 %v2740
    %3332 = vmatpush1.bf16.msra.mxu0 %v2739
    %3333 = vmatprep.subr.bf16.mxu0 %v2742
    %3334 = vmatpush1.bf16.msra.mxu0 %v2741
    %3335 = vmatprep.subr.bf16.mxu0 0
    %3336 = vmatpush1.bf16.msra.mxu0 0
    %3337 = vmatprep.subr.bf16.mxu0 0
    %3338 = vmatpush1.bf16.msra.mxu0 0
    %3339 = vmatprep.subr.bf16.mxu0 0
    %3340 = vmatpush1.bf16.msra.mxu0 0
    %3341 = vmatprep.subr.bf16.mxu0 0
    %3342 = vmatpush1.bf16.msra.mxu0 0
    %3343 = vmatprep.subr.bf16.mxu0 0
    %3344 = vmatpush1.bf16.msra.mxu0 0
    %3345 = vmatprep.subr.bf16.mxu0 0
    %3346 = vmatpush1.bf16.msra.mxu0 0
    %3347 = vmatprep.subr.bf16.mxu0 0
    %3348 = vmatpush1.bf16.msra.mxu0 0
    %3349 = vmatprep.subr.bf16.mxu0 0
    %3350 = vmatpush1.bf16.msra.mxu0 0
    %3351 = vmatprep.subr.bf16.mxu0 0
    %3352 = vmatpush1.bf16.msra.mxu0 0
    %3353 = vmatprep.subr.bf16.mxu0 0
    %3354 = vmatpush1.bf16.msra.mxu0 0
    %3355 = vmatprep.subr.bf16.mxu0 0
    %3356 = vmatpush1.bf16.msra.mxu0 0
    %3357 = vmatprep.subr.bf16.mxu0 0
    %3358 = vmatpush1.bf16.msra.mxu0 0
    %3359 = vmatprep.mubr.bf16.mxu0 0
    %3360 = vmatmul.mubr.bf16.gmra.mrb[0].mxu0 %v3325
    %v3361 = vpop.f32.mrb[0].mxu0
    %v3362 = vadd.f32 0.0, %v3361
    %v3363 = vpop.f32.mrb[0].mxu0
    %v3364 = vadd.f32 0.0, %v3363
    %v3365 = vpop.f32.mrb[0].mxu0
    %v3366 = vpop.f32.mrb[0].mxu0
    %3367 = vdwg.mxu0
    %v3368 = vadd.f32 %v2522, %v3362
    %v3369 = vadd.f32 %v2524, %v3364
    %v3370 = vxor.u32 %v3368, 2147483648
    %v3371 = vmul.f32 %v3370, 1.442695
    %v3372 = vpow.pop %v3371
    %v3373 = vadd.f32 %v3372, 1.0
    %v3374 = vrcp.pop %v3373
    %v3375 = vmul.f32 1.0, %v3374
    %v3376 = vtanh.pop %v3369
    %v3377 = vxor.u32 %v3369, 2147483648
    %v3378 = vmul.f32 %v3377, 1.442695
    %v3379 = vpow.pop %v3378
    %v3380 = vadd.f32 %v3379, 1.0
    %v3381 = vrcp.pop %v3380
    %v3382 = vmul.f32 1.0, %v3381
    %v3383 = vmul.f32 %v3375, %v3317
    %v3384 = vmul.f32 %v3375, %v3376
    %3386 = vrot.lane.b32.xlu0 %v3384, 64
    %v3387 = vpop.permute.xlu0 %3386
    %v3389 = vadd.f32 %v3383, %v3387
    %v3390 = vtanh.pop %v3389
    %v3391 = vmul.f32 %v3382, %v3390
    %v3392 = vpack.c.bf16 %v3391, %v3391
    %3394 = vrot.lane.b32.xlu0 %v3392, 64
    %v3395 = vpop.permute.xlu0 %3394
    %v3397 = vsel %vm545, %v3395, 0
    %3399 = vmatprep.subr.bf16.mxu0 %v2736
    %3400 = vmatpush1.bf16.msra.mxu0 %v2735
    %3401 = vmatprep.subr.bf16.mxu0 %v2738
    %3402 = vmatpush1.bf16.msra.mxu0 %v2737
    %3403 = vmatprep.subr.bf16.mxu0 %v2740
    %3404 = vmatpush1.bf16.msra.mxu0 %v2739
    %3405 = vmatprep.subr.bf16.mxu0 %v2742
    %3406 = vmatpush1.bf16.msra.mxu0 %v2741
    %3407 = vmatprep.subr.bf16.mxu0 0
    %3408 = vmatpush1.bf16.msra.mxu0 0
    %3409 = vmatprep.subr.bf16.mxu0 0
    %3410 = vmatpush1.bf16.msra.mxu0 0
    %3411 = vmatprep.subr.bf16.mxu0 0
    %3412 = vmatpush1.bf16.msra.mxu0 0
    %3413 = vmatprep.subr.bf16.mxu0 0
    %3414 = vmatpush1.bf16.msra.mxu0 0
    %3415 = vmatprep.subr.bf16.mxu0 0
    %3416 = vmatpush1.bf16.msra.mxu0 0
    %3417 = vmatprep.subr.bf16.mxu0 0
    %3418 = vmatpush1.bf16.msra.mxu0 0
    %3419 = vmatprep.subr.bf16.mxu0 0
    %3420 = vmatpush1.bf16.msra.mxu0 0
    %3421 = vmatprep.subr.bf16.mxu0 0
    %3422 = vmatpush1.bf16.msra.mxu0 0
    %3423 = vmatprep.subr.bf16.mxu0 0
    %3424 = vmatpush1.bf16.msra.mxu0 0
    %3425 = vmatprep.subr.bf16.mxu0 0
    %3426 = vmatpush1.bf16.msra.mxu0 0
    %3427 = vmatprep.subr.bf16.mxu0 0
    %3428 = vmatpush1.bf16.msra.mxu0 0
    %3429 = vmatprep.subr.bf16.mxu0 0
    %3430 = vmatpush1.bf16.msra.mxu0 0
    %3431 = vmatprep.mubr.bf16.mxu0 0
    %3432 = vmatmul.mubr.bf16.gmra.mrb[0].mxu0 %v3397
    %v3433 = vpop.f32.mrb[0].mxu0
    %v3434 = vadd.f32 0.0, %v3433
    %v3435 = vpop.f32.mrb[0].mxu0
    %v3436 = vadd.f32 0.0, %v3435
    %v3437 = vpop.f32.mrb[0].mxu0
    %v3438 = vpop.f32.mrb[0].mxu0
    %3439 = vdwg.mxu0
    %v3440 = vadd.f32 %v2526, %v3434
    %v3441 = vadd.f32 %v2528, %v3436
    %v3442 = vxor.u32 %v3440, 2147483648
    %v3443 = vmul.f32 %v3442, 1.442695
    %v3444 = vpow.pop %v3443
    %v3445 = vadd.f32 %v3444, 1.0
    %v3446 = vrcp.pop %v3445
    %v3447 = vmul.f32 1.0, %v3446
    %v3448 = vtanh.pop %v3441
    %v3449 = vxor.u32 %v3441, 2147483648
    %v3450 = vmul.f32 %v3449, 1.442695
    %v3451 = vpow.pop %v3450
    %v3452 = vadd.f32 %v3451, 1.0
    %v3453 = vrcp.pop %v3452
    %v3454 = vmul.f32 1.0, %v3453
    %v3455 = vmul.f32 %v3447, %v3389
    %v3456 = vmul.f32 %v3447, %v3448
    %3458 = vrot.lane.b32.xlu0 %v3456, 64
    %v3459 = vpop.permute.xlu0 %3458
    %v3461 = vadd.f32 %v3455, %v3459
    %v3462 = vtanh.pop %v3461
    %v3463 = vmul.f32 %v3454, %v3462
    %v3472 = vunpack.c.l.b16 %v202
    %v3473 = vunpack.c.h.b16 %v202
    %v3474 = vunpack.c.l.b16 %v203
    %v3475 = vunpack.c.h.b16 %v203
    %v3476 = vunpack.c.l.b16 %v204
    %v3477 = vunpack.c.h.b16 %v204
    %v3478 = vunpack.c.l.b16 %v205
    %v3479 = vunpack.c.h.b16 %v205
    %v3480 = vunpack.c.l.b16 %v206
    %v3481 = vunpack.c.h.b16 %v206
    %v3482 = vunpack.c.l.b16 %v207
    %v3483 = vunpack.c.h.b16 %v207
    %v3484 = vunpack.c.l.b16 %v208
    %v3485 = vunpack.c.h.b16 %v208
    %v3486 = vunpack.c.l.b16 %v209
    %v3487 = vunpack.c.h.b16 %v209
    %v3488 = vpack.c.b16 %v3474, %v3472
    %v3489 = vpack.c.b16 %v3475, %v3473
    %v3490 = vpack.c.b16 %v3478, %v3476
    %v3491 = vpack.c.b16 %v3479, %v3477
    %v3492 = vpack.c.b16 %v3482, %v3480
    %v3493 = vpack.c.b16 %v3483, %v3481
    %v3494 = vpack.c.b16 %v3486, %v3484
    %v3495 = vpack.c.b16 %v3487, %v3485
    %3504 = vmatprep.subr.bf16.mxu0 %v3489
    %3505 = vmatpush1.bf16.msra.mxu0 %v3488
    %3506 = vmatprep.subr.bf16.mxu0 %v3491
    %3507 = vmatpush1.bf16.msra.mxu0 %v3490
    %3508 = vmatprep.subr.bf16.mxu0 %v3493
    %3509 = vmatpush1.bf16.msra.mxu0 %v3492
    %3510 = vmatprep.subr.bf16.mxu0 %v3495
    %3511 = vmatpush1.bf16.msra.mxu0 %v3494
    %3512 = vmatprep.subr.bf16.mxu0 0
    %3513 = vmatpush1.bf16.msra.mxu0 0
    %3514 = vmatprep.subr.bf16.mxu0 0
    %3515 = vmatpush1.bf16.msra.mxu0 0
    %3516 = vmatprep.subr.bf16.mxu0 0
    %3517 = vmatpush1.bf16.msra.mxu0 0
    %3518 = vmatprep.subr.bf16.mxu0 0
    %3519 = vmatpush1.bf16.msra.mxu0 0
    %3520 = vmatprep.subr.bf16.mxu0 0
    %3521 = vmatpush1.bf16.msra.mxu0 0
    %3522 = vmatprep.subr.bf16.mxu0 0
    %3523 = vmatpush1.bf16.msra.mxu0 0
    %3524 = vmatprep.subr.bf16.mxu0 0
    %3525 = vmatpush1.bf16.msra.mxu0 0
    %3526 = vmatprep.subr.bf16.mxu0 0
    %3527 = vmatpush1.bf16.msra.mxu0 0
    %3528 = vmatprep.subr.bf16.mxu0 0
    %3529 = vmatpush1.bf16.msra.mxu0 0
    %3530 = vmatprep.subr.bf16.mxu0 0
    %3531 = vmatpush1.bf16.msra.mxu0 0
    %3532 = vmatprep.subr.bf16.mxu0 0
    %3533 = vmatpush1.bf16.msra.mxu0 0
    %3534 = vmatprep.subr.bf16.mxu0 0
    %3535 = vmatpush1.bf16.msra.mxu0 0
    %3536 = vmatprep.mubr.bf16.mxu0 0
    %3537 = vmatmul.mubr.bf16.gmra.mrb[0].mxu0 %v826
    %v3538 = vpop.f32.mrb[0].mxu0
    %v3539 = vadd.f32 0.0, %v3538
    %v3540 = vpop.f32.mrb[0].mxu0
    %v3541 = vadd.f32 0.0, %v3540
    %v3542 = vpop.f32.mrb[0].mxu0
    %v3543 = vpop.f32.mrb[0].mxu0
    %3544 = vdwg.mxu0
    %v3545 = vadd.f32 %v2707, %v3539
    %v3546 = vadd.f32 %v2709, %v3541
    %v3547 = vxor.u32 %v3545, 2147483648
    %v3548 = vmul.f32 %v3547, 1.442695
    %v3549 = vpow.pop %v3548
    %v3550 = vadd.f32 %v3549, 1.0
    %v3551 = vrcp.pop %v3550
    %v3552 = vmul.f32 1.0, %v3551
    %v3553 = vtanh.pop %v3546
    %v3554 = vxor.u32 %v3546, 2147483648
    %v3555 = vmul.f32 %v3554, 1.442695
    %v3556 = vpow.pop %v3555
    %v3557 = vadd.f32 %v3556, 1.0
    %v3558 = vrcp.pop %v3557
    %v3559 = vmul.f32 1.0, %v3558
    %v3560 = vmul.f32 %v3552, 0.0
    %v3561 = vmul.f32 %v3552, %v3553
    %3563 = vrot.lane.b32.xlu0 %v3561, 64
    %v3564 = vpop.permute.xlu0 %3563
    %v3566 = vadd.f32 %v3560, %v3564
    %v3567 = vtanh.pop %v3566
    %v3568 = vmul.f32 %v3559, %v3567
    %v3569 = vpack.c.bf16 %v3568, %v3568
    %3571 = vrot.lane.b32.xlu0 %v3569, 64
    %v3572 = vpop.permute.xlu0 %3571
    %v3574 = vsel %vm545, %v3572, 0
    %3576 = vmatprep.subr.bf16.mxu0 %v3489
    %3577 = vmatpush1.bf16.msra.mxu0 %v3488
    %3578 = vmatprep.subr.bf16.mxu0 %v3491
    %3579 = vmatpush1.bf16.msra.mxu0 %v3490
    %3580 = vmatprep.subr.bf16.mxu0 %v3493
    %3581 = vmatpush1.bf16.msra.mxu0 %v3492
    %3582 = vmatprep.subr.bf16.mxu0 %v3495
    %3583 = vmatpush1.bf16.msra.mxu0 %v3494
    %3584 = vmatprep.subr.bf16.mxu0 0
    %3585 = vmatpush1.bf16.msra.mxu0 0
    %3586 = vmatprep.subr.bf16.mxu0 0
    %3587 = vmatpush1.bf16.msra.mxu0 0
    %3588 = vmatprep.subr.bf16.mxu0 0
    %3589 = vmatpush1.bf16.msra.mxu0 0
    %3590 = vmatprep.subr.bf16.mxu0 0
    %3591 = vmatpush1.bf16.msra.mxu0 0
    %3592 = vmatprep.subr.bf16.mxu0 0
    %3593 = vmatpush1.bf16.msra.mxu0 0
    %3594 = vmatprep.subr.bf16.mxu0 0
    %3595 = vmatpush1.bf16.msra.mxu0 0
    %3596 = vmatprep.subr.bf16.mxu0 0
    %3597 = vmatpush1.bf16.msra.mxu0 0
    %3598 = vmatprep.subr.bf16.mxu0 0
    %3599 = vmatpush1.bf16.msra.mxu0 0
    %3600 = vmatprep.subr.bf16.mxu0 0
    %3601 = vmatpush1.bf16.msra.mxu0 0
    %3602 = vmatprep.subr.bf16.mxu0 0
    %3603 = vmatpush1.bf16.msra.mxu0 0
    %3604 = vmatprep.subr.bf16.mxu0 0
    %3605 = vmatpush1.bf16.msra.mxu0 0
    %3606 = vmatprep.subr.bf16.mxu0 0
    %3607 = vmatpush1.bf16.msra.mxu0 0
    %3608 = vmatprep.mubr.bf16.mxu0 0
    %3609 = vmatmul.mubr.bf16.gmra.mrb[0].mxu0 %v3574
    %v3610 = vpop.f32.mrb[0].mxu0
    %v3611 = vadd.f32 0.0, %v3610
    %v3612 = vpop.f32.mrb[0].mxu0
    %v3613 = vadd.f32 0.0, %v3612
    %v3614 = vpop.f32.mrb[0].mxu0
    %v3615 = vpop.f32.mrb[0].mxu0
    %3616 = vdwg.mxu0
    %v3617 = vadd.f32 %v2703, %v3611
    %v3618 = vadd.f32 %v2705, %v3613
    %v3619 = vxor.u32 %v3617, 2147483648
    %v3620 = vmul.f32 %v3619, 1.442695
    %v3621 = vpow.pop %v3620
    %v3622 = vadd.f32 %v3621, 1.0
    %v3623 = vrcp.pop %v3622
    %v3624 = vmul.f32 1.0, %v3623
    %v3625 = vtanh.pop %v3618
    %v3626 = vxor.u32 %v3618, 2147483648
    %v3627 = vmul.f32 %v3626, 1.442695
    %v3628 = vpow.pop %v3627
    %v3629 = vadd.f32 %v3628, 1.0
    %v3630 = vrcp.pop %v3629
    %v3631 = vmul.f32 1.0, %v3630
    %v3632 = vmul.f32 %v3624, %v3566
    %v3633 = vmul.f32 %v3624, %v3625
    %3635 = vrot.lane.b32.xlu0 %v3633, 64
    %v3636 = vpop.permute.xlu0 %3635
    %v3638 = vadd.f32 %v3632, %v3636
    %v3639 = vtanh.pop %v3638
    %v3640 = vmul.f32 %v3631, %v3639
    %v3641 = vpack.c.bf16 %v3640, %v3640
    %3643 = vrot.lane.b32.xlu0 %v3641, 64
    %v3644 = vpop.permute.xlu0 %3643
    %v3646 = vsel %vm545, %v3644, 0
    %3648 = vmatprep.subr.bf16.mxu0 %v3489
    %3649 = vmatpush1.bf16.msra.mxu0 %v3488
    %3650 = vmatprep.subr.bf16.mxu0 %v3491
    %3651 = vmatpush1.bf16.msra.mxu0 %v3490
    %3652 = vmatprep.subr.bf16.mxu0 %v3493
    %3653 = vmatpush1.bf16.msra.mxu0 %v3492
    %3654 = vmatprep.subr.bf16.mxu0 %v3495
    %3655 = vmatpush1.bf16.msra.mxu0 %v3494
    %3656 = vmatprep.subr.bf16.mxu0 0
    %3657 = vmatpush1.bf16.msra.mxu0 0
    %3658 = vmatprep.subr.bf16.mxu0 0
    %3659 = vmatpush1.bf16.msra.mxu0 0
    %3660 = vmatprep.subr.bf16.mxu0 0
    %3661 = vmatpush1.bf16.msra.mxu0 0
    %3662 = vmatprep.subr.bf16.mxu0 0
    %3663 = vmatpush1.bf16.msra.mxu0 0
    %3664 = vmatprep.subr.bf16.mxu0 0
    %3665 = vmatpush1.bf16.msra.mxu0 0
    %3666 = vmatprep.subr.bf16.mxu0 0
    %3667 = vmatpush1.bf16.msra.mxu0 0
    %3668 = vmatprep.subr.bf16.mxu0 0
    %3669 = vmatpush1.bf16.msra.mxu0 0
    %3670 = vmatprep.subr.bf16.mxu0 0
    %3671 = vmatpush1.bf16.msra.mxu0 0
    %3672 = vmatprep.subr.bf16.mxu0 0
    %3673 = vmatpush1.bf16.msra.mxu0 0
    %3674 = vmatprep.subr.bf16.mxu0 0
    %3675 = vmatpush1.bf16.msra.mxu0 0
    %3676 = vmatprep.subr.bf16.mxu0 0
    %3677 = vmatpush1.bf16.msra.mxu0 0
    %3678 = vmatprep.subr.bf16.mxu0 0
    %3679 = vmatpush1.bf16.msra.mxu0 0
    %3680 = vmatprep.mubr.bf16.mxu0 0
    %3681 = vmatmul.mubr.bf16.gmra.mrb[0].mxu0 %v3646
    %v3682 = vpop.f32.mrb[0].mxu0
    %v3683 = vadd.f32 0.0, %v3682
    %v3684 = vpop.f32.mrb[0].mxu0
    %v3685 = vadd.f32 0.0, %v3684
    %v3686 = vpop.f32.mrb[0].mxu0
    %v3687 = vpop.f32.mrb[0].mxu0
    %3688 = vdwg.mxu0
    %v3689 = vadd.f32 %v2697, %v3683
    %v3690 = vadd.f32 %v2699, %v3685
    %v3691 = vxor.u32 %v3689, 2147483648
    %v3692 = vmul.f32 %v3691, 1.442695
    %v3693 = vpow.pop %v3692
    %v3694 = vadd.f32 %v3693, 1.0
    %v3695 = vrcp.pop %v3694
    %v3696 = vmul.f32 1.0, %v3695
    %v3697 = vtanh.pop %v3690
    %v3698 = vxor.u32 %v3690, 2147483648
    %v3699 = vmul.f32 %v3698, 1.442695
    %v3700 = vpow.pop %v3699
    %v3701 = vadd.f32 %v3700, 1.0
    %v3702 = vrcp.pop %v3701
    %v3703 = vmul.f32 1.0, %v3702
    %v3704 = vmul.f32 %v3696, %v3638
    %v3705 = vmul.f32 %v3696, %v3697
    %3707 = vrot.lane.b32.xlu0 %v3705, 64
    %v3708 = vpop.permute.xlu0 %3707
    %v3710 = vadd.f32 %v3704, %v3708
    %v3711 = vtanh.pop %v3710
    %v3712 = vmul.f32 %v3703, %v3711
    %v3713 = vpack.c.bf16 %v3712, %v3712
    %3715 = vrot.lane.b32.xlu0 %v3713, 64
    %v3716 = vpop.permute.xlu0 %3715
    %v3718 = vsel %vm545, %v3716, 0
    %3720 = vmatprep.subr.bf16.mxu0 %v3489
    %3721 = vmatpush1.bf16.msra.mxu0 %v3488
    %3722 = vmatprep.subr.bf16.mxu0 %v3491
    %3723 = vmatpush1.bf16.msra.mxu0 %v3490
    %3724 = vmatprep.subr.bf16.mxu0 %v3493
    %3725 = vmatpush1.bf16.msra.mxu0 %v3492
    %3726 = vmatprep.subr.bf16.mxu0 %v3495
    %3727 = vmatpush1.bf16.msra.mxu0 %v3494
    %3728 = vmatprep.subr.bf16.mxu0 0
    %3729 = vmatpush1.bf16.msra.mxu0 0
    %3730 = vmatprep.subr.bf16.mxu0 0
    %3731 = vmatpush1.bf16.msra.mxu0 0
    %3732 = vmatprep.subr.bf16.mxu0 0
    %3733 = vmatpush1.bf16.msra.mxu0 0
    %3734 = vmatprep.subr.bf16.mxu0 0
    %3735 = vmatpush1.bf16.msra.mxu0 0
    %3736 = vmatprep.subr.bf16.mxu0 0
    %3737 = vmatpush1.bf16.msra.mxu0 0
    %3738 = vmatprep.subr.bf16.mxu0 0
    %3739 = vmatpush1.bf16.msra.mxu0 0
    %3740 = vmatprep.subr.bf16.mxu0 0
    %3741 = vmatpush1.bf16.msra.mxu0 0
    %3742 = vmatprep.subr.bf16.mxu0 0
    %3743 = vmatpush1.bf16.msra.mxu0 0
    %3744 = vmatprep.subr.bf16.mxu0 0
    %3745 = vmatpush1.bf16.msra.mxu0 0
    %3746 = vmatprep.subr.bf16.mxu0 0
    %3747 = vmatpush1.bf16.msra.mxu0 0
    %3748 = vmatprep.subr.bf16.mxu0 0
    %3749 = vmatpush1.bf16.msra.mxu0 0
    %3750 = vmatprep.subr.bf16.mxu0 0
    %3751 = vmatpush1.bf16.msra.mxu0 0
    %3752 = vmatprep.mubr.bf16.mxu0 0
    %3753 = vmatmul.mubr.bf16.gmra.mrb[0].mxu0 %v3718
    %v3754 = vpop.f32.mrb[0].mxu0
    %v3755 = vadd.f32 0.0, %v3754
    %v3756 = vpop.f32.mrb[0].mxu0
    %v3757 = vadd.f32 0.0, %v3756
    %v3758 = vpop.f32.mrb[0].mxu0
    %v3759 = vpop.f32.mrb[0].mxu0
    %3760 = vdwg.mxu0
    %v3761 = vadd.f32 %v2693, %v3755
    %v3762 = vadd.f32 %v2695, %v3757
    %v3763 = vxor.u32 %v3761, 2147483648
    %v3764 = vmul.f32 %v3763, 1.442695
    %v3765 = vpow.pop %v3764
    %v3766 = vadd.f32 %v3765, 1.0
    %v3767 = vrcp.pop %v3766
    %v3768 = vmul.f32 1.0, %v3767
    %v3769 = vtanh.pop %v3762
    %v3770 = vxor.u32 %v3762, 2147483648
    %v3771 = vmul.f32 %v3770, 1.442695
    %v3772 = vpow.pop %v3771
    %v3773 = vadd.f32 %v3772, 1.0
    %v3774 = vrcp.pop %v3773
    %v3775 = vmul.f32 1.0, %v3774
    %v3776 = vmul.f32 %v3768, %v3710
    %v3777 = vmul.f32 %v3768, %v3769
    %3779 = vrot.lane.b32.xlu0 %v3777, 64
    %v3780 = vpop.permute.xlu0 %3779
    %v3782 = vadd.f32 %v3776, %v3780
    %v3783 = vtanh.pop %v3782
    %v3784 = vmul.f32 %v3775, %v3783
    %v3785 = vpack.c.bf16 %v3784, %v3784
    %3787 = vrot.lane.b32.xlu0 %v3785, 64
    %v3788 = vpop.permute.xlu0 %3787
    %v3790 = vsel %vm545, %v3788, 0
    %3792 = vmatprep.subr.bf16.mxu0 %v3489
    %3793 = vmatpush1.bf16.msra.mxu0 %v3488
    %3794 = vmatprep.subr.bf16.mxu0 %v3491
    %3795 = vmatpush1.bf16.msra.mxu0 %v3490
    %3796 = vmatprep.subr.bf16.mxu0 %v3493
    %3797 = vmatpush1.bf16.msra.mxu0 %v3492
    %3798 = vmatprep.subr.bf16.mxu0 %v3495
    %3799 = vmatpush1.bf16.msra.mxu0 %v3494
    %3800 = vmatprep.subr.bf16.mxu0 0
    %3801 = vmatpush1.bf16.msra.mxu0 0
    %3802 = vmatprep.subr.bf16.mxu0 0
    %3803 = vmatpush1.bf16.msra.mxu0 0
    %3804 = vmatprep.subr.bf16.mxu0 0
    %3805 = vmatpush1.bf16.msra.mxu0 0
    %3806 = vmatprep.subr.bf16.mxu0 0
    %3807 = vmatpush1.bf16.msra.mxu0 0
    %3808 = vmatprep.subr.bf16.mxu0 0
    %3809 = vmatpush1.bf16.msra.mxu0 0
    %3810 = vmatprep.subr.bf16.mxu0 0
    %3811 = vmatpush1.bf16.msra.mxu0 0
    %3812 = vmatprep.subr.bf16.mxu0 0
    %3813 = vmatpush1.bf16.msra.mxu0 0
    %3814 = vmatprep.subr.bf16.mxu0 0
    %3815 = vmatpush1.bf16.msra.mxu0 0
    %3816 = vmatprep.subr.bf16.mxu0 0
    %3817 = vmatpush1.bf16.msra.mxu0 0
    %3818 = vmatprep.subr.bf16.mxu0 0
    %3819 = vmatpush1.bf16.msra.mxu0 0
    %3820 = vmatprep.subr.bf16.mxu0 0
    %3821 = vmatpush1.bf16.msra.mxu0 0
    %3822 = vmatprep.subr.bf16.mxu0 0
    %3823 = vmatpush1.bf16.msra.mxu0 0
    %3824 = vmatprep.mubr.bf16.mxu0 0
    %3825 = vmatmul.mubr.bf16.gmra.mrb[0].mxu0 %v3790
    %v3826 = vpop.f32.mrb[0].mxu0
    %v3827 = vadd.f32 0.0, %v3826
    %v3828 = vpop.f32.mrb[0].mxu0
    %v3829 = vadd.f32 0.0, %v3828
    %v3830 = vpop.f32.mrb[0].mxu0
    %v3831 = vpop.f32.mrb[0].mxu0
    %3832 = vdwg.mxu0
    %v3833 = vadd.f32 %v2687, %v3827
    %v3834 = vadd.f32 %v2689, %v3829
    %v3835 = vxor.u32 %v3833, 2147483648
    %v3836 = vmul.f32 %v3835, 1.442695
    %v3837 = vpow.pop %v3836
    %v3838 = vadd.f32 %v3837, 1.0
    %v3839 = vrcp.pop %v3838
    %v3840 = vmul.f32 1.0, %v3839
    %v3841 = vtanh.pop %v3834
    %v3842 = vxor.u32 %v3834, 2147483648
    %v3843 = vmul.f32 %v3842, 1.442695
    %v3844 = vpow.pop %v3843
    %v3845 = vadd.f32 %v3844, 1.0
    %v3846 = vrcp.pop %v3845
    %v3847 = vmul.f32 1.0, %v3846
    %v3848 = vmul.f32 %v3840, %v3782
    %v3849 = vmul.f32 %v3840, %v3841
    %3851 = vrot.lane.b32.xlu0 %v3849, 64
    %v3852 = vpop.permute.xlu0 %3851
    %v3854 = vadd.f32 %v3848, %v3852
    %v3855 = vtanh.pop %v3854
    %v3856 = vmul.f32 %v3847, %v3855
    %v3857 = vpack.c.bf16 %v3856, %v3856
    %3859 = vrot.lane.b32.xlu0 %v3857, 64
    %v3860 = vpop.permute.xlu0 %3859
    %v3862 = vsel %vm545, %v3860, 0
    %3864 = vmatprep.subr.bf16.mxu0 %v3489
    %3865 = vmatpush1.bf16.msra.mxu0 %v3488
    %3866 = vmatprep.subr.bf16.mxu0 %v3491
    %3867 = vmatpush1.bf16.msra.mxu0 %v3490
    %3868 = vmatprep.subr.bf16.mxu0 %v3493
    %3869 = vmatpush1.bf16.msra.mxu0 %v3492
    %3870 = vmatprep.subr.bf16.mxu0 %v3495
    %3871 = vmatpush1.bf16.msra.mxu0 %v3494
    %3872 = vmatprep.subr.bf16.mxu0 0
    %3873 = vmatpush1.bf16.msra.mxu0 0
    %3874 = vmatprep.subr.bf16.mxu0 0
    %3875 = vmatpush1.bf16.msra.mxu0 0
    %3876 = vmatprep.subr.bf16.mxu0 0
    %3877 = vmatpush1.bf16.msra.mxu0 0
    %3878 = vmatprep.subr.bf16.mxu0 0
    %3879 = vmatpush1.bf16.msra.mxu0 0
    %3880 = vmatprep.subr.bf16.mxu0 0
    %3881 = vmatpush1.bf16.msra.mxu0 0
    %3882 = vmatprep.subr.bf16.mxu0 0
    %3883 = vmatpush1.bf16.msra.mxu0 0
    %3884 = vmatprep.subr.bf16.mxu0 0
    %3885 = vmatpush1.bf16.msra.mxu0 0
    %3886 = vmatprep.subr.bf16.mxu0 0
    %3887 = vmatpush1.bf16.msra.mxu0 0
    %3888 = vmatprep.subr.bf16.mxu0 0
    %3889 = vmatpush1.bf16.msra.mxu0 0
    %3890 = vmatprep.subr.bf16.mxu0 0
    %3891 = vmatpush1.bf16.msra.mxu0 0
    %3892 = vmatprep.subr.bf16.mxu0 0
    %3893 = vmatpush1.bf16.msra.mxu0 0
    %3894 = vmatprep.subr.bf16.mxu0 0
    %3895 = vmatpush1.bf16.msra.mxu0 0
    %3896 = vmatprep.mubr.bf16.mxu0 0
    %3897 = vmatmul.mubr.bf16.gmra.mrb[0].mxu0 %v3862
    %v3898 = vpop.f32.mrb[0].mxu0
    %v3899 = vadd.f32 0.0, %v3898
    %v3900 = vpop.f32.mrb[0].mxu0
    %v3901 = vadd.f32 0.0, %v3900
    %v3902 = vpop.f32.mrb[0].mxu0
    %v3903 = vpop.f32.mrb[0].mxu0
    %3904 = vdwg.mxu0
    %v3905 = vadd.f32 %v2683, %v3899
    %v3906 = vadd.f32 %v2685, %v3901
    %v3907 = vxor.u32 %v3905, 2147483648
    %v3908 = vmul.f32 %v3907, 1.442695
    %v3909 = vpow.pop %v3908
    %v3910 = vadd.f32 %v3909, 1.0
    %v3911 = vrcp.pop %v3910
    %v3912 = vmul.f32 1.0, %v3911
    %v3913 = vtanh.pop %v3906
    %v3914 = vxor.u32 %v3906, 2147483648
    %v3915 = vmul.f32 %v3914, 1.442695
    %v3916 = vpow.pop %v3915
    %v3917 = vadd.f32 %v3916, 1.0
    %v3918 = vrcp.pop %v3917
    %v3919 = vmul.f32 1.0, %v3918
    %v3920 = vmul.f32 %v3912, %v3854
    %v3921 = vmul.f32 %v3912, %v3913
    %3923 = vrot.lane.b32.xlu0 %v3921, 64
    %v3924 = vpop.permute.xlu0 %3923
    %v3926 = vadd.f32 %v3920, %v3924
    %v3927 = vtanh.pop %v3926
    %v3928 = vmul.f32 %v3919, %v3927
    %v3929 = vpack.c.bf16 %v3928, %v3928
    %3931 = vrot.lane.b32.xlu0 %v3929, 64
    %v3932 = vpop.permute.xlu0 %3931
    %v3934 = vsel %vm545, %v3932, 0
    %3936 = vmatprep.subr.bf16.mxu0 %v3489
    %3937 = vmatpush1.bf16.msra.mxu0 %v3488
    %3938 = vmatprep.subr.bf16.mxu0 %v3491
    %3939 = vmatpush1.bf16.msra.mxu0 %v3490
    %3940 = vmatprep.subr.bf16.mxu0 %v3493
    %3941 = vmatpush1.bf16.msra.mxu0 %v3492
    %3942 = vmatprep.subr.bf16.mxu0 %v3495
    %3943 = vmatpush1.bf16.msra.mxu0 %v3494
    %3944 = vmatprep.subr.bf16.mxu0 0
    %3945 = vmatpush1.bf16.msra.mxu0 0
    %3946 = vmatprep.subr.bf16.mxu0 0
    %3947 = vmatpush1.bf16.msra.mxu0 0
    %3948 = vmatprep.subr.bf16.mxu0 0
    %3949 = vmatpush1.bf16.msra.mxu0 0
    %3950 = vmatprep.subr.bf16.mxu0 0
    %3951 = vmatpush1.bf16.msra.mxu0 0
    %3952 = vmatprep.subr.bf16.mxu0 0
    %3953 = vmatpush1.bf16.msra.mxu0 0
    %3954 = vmatprep.subr.bf16.mxu0 0
    %3955 = vmatpush1.bf16.msra.mxu0 0
    %3956 = vmatprep.subr.bf16.mxu0 0
    %3957 = vmatpush1.bf16.msra.mxu0 0
    %3958 = vmatprep.subr.bf16.mxu0 0
    %3959 = vmatpush1.bf16.msra.mxu0 0
    %3960 = vmatprep.subr.bf16.mxu0 0
    %3961 = vmatpush1.bf16.msra.mxu0 0
    %3962 = vmatprep.subr.bf16.mxu0 0
    %3963 = vmatpush1.bf16.msra.mxu0 0
    %3964 = vmatprep.subr.bf16.mxu0 0
    %3965 = vmatpush1.bf16.msra.mxu0 0
    %3966 = vmatprep.subr.bf16.mxu0 0
    %3967 = vmatpush1.bf16.msra.mxu0 0
    %3968 = vmatprep.mubr.bf16.mxu0 0
    %3969 = vmatmul.mubr.bf16.gmra.mrb[0].mxu0 %v3934
    %v3970 = vpop.f32.mrb[0].mxu0
    %v3971 = vadd.f32 0.0, %v3970
    %v3972 = vpop.f32.mrb[0].mxu0
    %v3973 = vadd.f32 0.0, %v3972
    %v3974 = vpop.f32.mrb[0].mxu0
    %v3975 = vpop.f32.mrb[0].mxu0
    %3976 = vdwg.mxu0
    %v3977 = vadd.f32 %v2677, %v3971
    %v3978 = vadd.f32 %v2679, %v3973
    %v3979 = vxor.u32 %v3977, 2147483648
    %v3980 = vmul.f32 %v3979, 1.442695
    %v3981 = vpow.pop %v3980
    %v3982 = vadd.f32 %v3981, 1.0
    %v3983 = vrcp.pop %v3982
    %v3984 = vmul.f32 1.0, %v3983
    %v3985 = vtanh.pop %v3978
    %v3986 = vxor.u32 %v3978, 2147483648
    %v3987 = vmul.f32 %v3986, 1.442695
    %v3988 = vpow.pop %v3987
    %v3989 = vadd.f32 %v3988, 1.0
    %v3990 = vrcp.pop %v3989
    %v3991 = vmul.f32 1.0, %v3990
    %v3992 = vmul.f32 %v3984, %v3926
    %v3993 = vmul.f32 %v3984, %v3985
    %3995 = vrot.lane.b32.xlu0 %v3993, 64
    %v3996 = vpop.permute.xlu0 %3995
    %v3998 = vadd.f32 %v3992, %v3996
    %v3999 = vtanh.pop %v3998
    %v4000 = vmul.f32 %v3991, %v3999
    %v4001 = vpack.c.bf16 %v4000, %v4000
    %4003 = vrot.lane.b32.xlu0 %v4001, 64
    %v4004 = vpop.permute.xlu0 %4003
    %v4006 = vsel %vm545, %v4004, 0
    %4008 = vmatprep.subr.bf16.mxu0 %v3489
    %4009 = vmatpush1.bf16.msra.mxu0 %v3488
    %4010 = vmatprep.subr.bf16.mxu0 %v3491
    %4011 = vmatpush1.bf16.msra.mxu0 %v3490
    %4012 = vmatprep.subr.bf16.mxu0 %v3493
    %4013 = vmatpush1.bf16.msra.mxu0 %v3492
    %4014 = vmatprep.subr.bf16.mxu0 %v3495
    %4015 = vmatpush1.bf16.msra.mxu0 %v3494
    %4016 = vmatprep.subr.bf16.mxu0 0
    %4017 = vmatpush1.bf16.msra.mxu0 0
    %4018 = vmatprep.subr.bf16.mxu0 0
    %4019 = vmatpush1.bf16.msra.mxu0 0
    %4020 = vmatprep.subr.bf16.mxu0 0
    %4021 = vmatpush1.bf16.msra.mxu0 0
    %4022 = vmatprep.subr.bf16.mxu0 0
    %4023 = vmatpush1.bf16.msra.mxu0 0
    %4024 = vmatprep.subr.bf16.mxu0 0
    %4025 = vmatpush1.bf16.msra.mxu0 0
    %4026 = vmatprep.subr.bf16.mxu0 0
    %4027 = vmatpush1.bf16.msra.mxu0 0
    %4028 = vmatprep.subr.bf16.mxu0 0
    %4029 = vmatpush1.bf16.msra.mxu0 0
    %4030 = vmatprep.subr.bf16.mxu0 0
    %4031 = vmatpush1.bf16.msra.mxu0 0
    %4032 = vmatprep.subr.bf16.mxu0 0
    %4033 = vmatpush1.bf16.msra.mxu0 0
    %4034 = vmatprep.subr.bf16.mxu0 0
    %4035 = vmatpush1.bf16.msra.mxu0 0
    %4036 = vmatprep.subr.bf16.mxu0 0
    %4037 = vmatpush1.bf16.msra.mxu0 0
    %4038 = vmatprep.subr.bf16.mxu0 0
    %4039 = vmatpush1.bf16.msra.mxu0 0
    %4040 = vmatprep.mubr.bf16.mxu0 0
    %4041 = vmatmul.mubr.bf16.gmra.mrb[0].mxu0 %v4006
    %v4042 = vpop.f32.mrb[0].mxu0
    %v4043 = vadd.f32 0.0, %v4042
    %v4044 = vpop.f32.mrb[0].mxu0
    %v4045 = vadd.f32 0.0, %v4044
    %v4046 = vpop.f32.mrb[0].mxu0
    %v4047 = vpop.f32.mrb[0].mxu0
    %4048 = vdwg.mxu0
    %v4049 = vadd.f32 %v2673, %v4043
    %v4050 = vadd.f32 %v2675, %v4045
    %v4051 = vxor.u32 %v4049, 2147483648
    %v4052 = vmul.f32 %v4051, 1.442695
    %v4053 = vpow.pop %v4052
    %v4054 = vadd.f32 %v4053, 1.0
    %v4055 = vrcp.pop %v4054
    %v4056 = vmul.f32 1.0, %v4055
    %v4057 = vtanh.pop %v4050
    %v4058 = vxor.u32 %v4050, 2147483648
    %v4059 = vmul.f32 %v4058, 1.442695
    %v4060 = vpow.pop %v4059
    %v4061 = vadd.f32 %v4060, 1.0
    %v4062 = vrcp.pop %v4061
    %v4063 = vmul.f32 1.0, %v4062
    %v4064 = vmul.f32 %v4056, %v3998
    %v4065 = vmul.f32 %v4056, %v4057
    %4067 = vrot.lane.b32.xlu0 %v4065, 64
    %v4068 = vpop.permute.xlu0 %4067
    %v4070 = vadd.f32 %v4064, %v4068
    %v4071 = vtanh.pop %v4070
    %v4072 = vmul.f32 %v4063, %v4071
    %v4073 = vpack.c.bf16 %v4072, %v4072
    %4075 = vrot.lane.b32.xlu0 %v4073, 64
    %v4076 = vpop.permute.xlu0 %4075
    %v4078 = vsel %vm545, %v4076, 0
    %4080 = vmatprep.subr.bf16.mxu0 %v3489
    %4081 = vmatpush1.bf16.msra.mxu0 %v3488
    %4082 = vmatprep.subr.bf16.mxu0 %v3491
    %4083 = vmatpush1.bf16.msra.mxu0 %v3490
    %4084 = vmatprep.subr.bf16.mxu0 %v3493
    %4085 = vmatpush1.bf16.msra.mxu0 %v3492
    %4086 = vmatprep.subr.bf16.mxu0 %v3495
    %4087 = vmatpush1.bf16.msra.mxu0 %v3494
    %4088 = vmatprep.subr.bf16.mxu0 0
    %4089 = vmatpush1.bf16.msra.mxu0 0
    %4090 = vmatprep.subr.bf16.mxu0 0
    %4091 = vmatpush1.bf16.msra.mxu0 0
    %4092 = vmatprep.subr.bf16.mxu0 0
    %4093 = vmatpush1.bf16.msra.mxu0 0
    %4094 = vmatprep.subr.bf16.mxu0 0
    %4095 = vmatpush1.bf16.msra.mxu0 0
    %4096 = vmatprep.subr.bf16.mxu0 0
    %4097 = vmatpush1.bf16.msra.mxu0 0
    %4098 = vmatprep.subr.bf16.mxu0 0
    %4099 = vmatpush1.bf16.msra.mxu0 0
    %4100 = vmatprep.subr.bf16.mxu0 0
    %4101 = vmatpush1.bf16.msra.mxu0 0
    %4102 = vmatprep.subr.bf16.mxu0 0
    %4103 = vmatpush1.bf16.msra.mxu0 0
    %4104 = vmatprep.subr.bf16.mxu0 0
    %4105 = vmatpush1.bf16.msra.mxu0 0
    %4106 = vmatprep.subr.bf16.mxu0 0
    %4107 = vmatpush1.bf16.msra.mxu0 0
    %4108 = vmatprep.subr.bf16.mxu0 0
    %4109 = vmatpush1.bf16.msra.mxu0 0
    %4110 = vmatprep.subr.bf16.mxu0 0
    %4111 = vmatpush1.bf16.msra.mxu0 0
    %4112 = vmatprep.mubr.bf16.mxu0 0
    %4113 = vmatmul.mubr.bf16.gmra.mrb[0].mxu0 %v4078
    %v4114 = vpop.f32.mrb[0].mxu0
    %v4115 = vadd.f32 0.0, %v4114
    %v4116 = vpop.f32.mrb[0].mxu0
    %v4117 = vadd.f32 0.0, %v4116
    %v4118 = vpop.f32.mrb[0].mxu0
    %v4119 = vpop.f32.mrb[0].mxu0
    %4120 = vdwg.mxu0
    %v4121 = vadd.f32 %v2667, %v4115
    %v4122 = vadd.f32 %v2669, %v4117
    %v4123 = vxor.u32 %v4121, 2147483648
    %v4124 = vmul.f32 %v4123, 1.442695
    %v4125 = vpow.pop %v4124
    %v4126 = vadd.f32 %v4125, 1.0
    %v4127 = vrcp.pop %v4126
    %v4128 = vmul.f32 1.0, %v4127
    %v4129 = vtanh.pop %v4122
    %v4130 = vxor.u32 %v4122, 2147483648
    %v4131 = vmul.f32 %v4130, 1.442695
    %v4132 = vpow.pop %v4131
    %v4133 = vadd.f32 %v4132, 1.0
    %v4134 = vrcp.pop %v4133
    %v4135 = vmul.f32 1.0, %v4134
    %v4136 = vmul.f32 %v4128, %v4070
    %v4137 = vmul.f32 %v4128, %v4129
    %4139 = vrot.lane.b32.xlu0 %v4137, 64
    %v4140 = vpop.permute.xlu0 %4139
    %v4142 = vadd.f32 %v4136, %v4140
    %v4143 = vtanh.pop %v4142
    %v4144 = vmul.f32 %v4135, %v4143
    %v4145 = vpack.c.bf16 %v4144, %v4144
    %4147 = vrot.lane.b32.xlu0 %v4145, 64
    %v4148 = vpop.permute.xlu0 %4147
    %v4150 = vsel %vm545, %v4148, 0
    %4152 = vmatprep.subr.bf16.mxu0 %v3489
    %4153 = vmatpush1.bf16.msra.mxu0 %v3488
    %4154 = vmatprep.subr.bf16.mxu0 %v3491
    %4155 = vmatpush1.bf16.msra.mxu0 %v3490
    %4156 = vmatprep.subr.bf16.mxu0 %v3493
    %4157 = vmatpush1.bf16.msra.mxu0 %v3492
    %4158 = vmatprep.subr.bf16.mxu0 %v3495
    %4159 = vmatpush1.bf16.msra.mxu0 %v3494
    %4160 = vmatprep.subr.bf16.mxu0 0
    %4161 = vmatpush1.bf16.msra.mxu0 0
    %4162 = vmatprep.subr.bf16.mxu0 0
    %4163 = vmatpush1.bf16.msra.mxu0 0
    %4164 = vmatprep.subr.bf16.mxu0 0
    %4165 = vmatpush1.bf16.msra.mxu0 0
    %4166 = vmatprep.subr.bf16.mxu0 0
    %4167 = vmatpush1.bf16.msra.mxu0 0
    %4168 = vmatprep.subr.bf16.mxu0 0
    %4169 = vmatpush1.bf16.msra.mxu0 0
    %4170 = vmatprep.subr.bf16.mxu0 0
    %4171 = vmatpush1.bf16.msra.mxu0 0
    %4172 = vmatprep.subr.bf16.mxu0 0
    %4173 = vmatpush1.bf16.msra.mxu0 0
    %4174 = vmatprep.subr.bf16.mxu0 0
    %4175 = vmatpush1.bf16.msra.mxu0 0
    %4176 = vmatprep.subr.bf16.mxu0 0
    %4177 = vmatpush1.bf16.msra.mxu0 0
    %4178 = vmatprep.subr.bf16.mxu0 0
    %4179 = vmatpush1.bf16.msra.mxu0 0
    %4180 = vmatprep.subr.bf16.mxu0 0
    %4181 = vmatpush1.bf16.msra.mxu0 0
    %4182 = vmatprep.subr.bf16.mxu0 0
    %4183 = vmatpush1.bf16.msra.mxu0 0
    %4184 = vmatprep.mubr.bf16.mxu0 0
    %4185 = vmatmul.mubr.bf16.gmra.mrb[0].mxu0 %v4150
    %v4186 = vpop.f32.mrb[0].mxu0
    %v4187 = vadd.f32 0.0, %v4186
    %v4188 = vpop.f32.mrb[0].mxu0
    %v4189 = vadd.f32 0.0, %v4188
    %v4190 = vpop.f32.mrb[0].mxu0
    %v4191 = vpop.f32.mrb[0].mxu0
    %4192 = vdwg.mxu0
    %v4193 = vadd.f32 %v2663, %v4187
    %v4194 = vadd.f32 %v2665, %v4189
    %v4195 = vxor.u32 %v4193, 2147483648
    %v4196 = vmul.f32 %v4195, 1.442695
    %v4197 = vpow.pop %v4196
    %v4198 = vadd.f32 %v4197, 1.0
    %v4199 = vrcp.pop %v4198
    %v4200 = vmul.f32 1.0, %v4199
    %v4201 = vtanh.pop %v4194
    %v4202 = vxor.u32 %v4194, 2147483648
    %v4203 = vmul.f32 %v4202, 1.442695
    %v4204 = vpow.pop %v4203
    %v4205 = vadd.f32 %v4204, 1.0
    %v4206 = vrcp.pop %v4205
    %v4207 = vmul.f32 1.0, %v4206
    %v4208 = vmul.f32 %v4200, %v4142
    %v4209 = vmul.f32 %v4200, %v4201
    %4211 = vrot.lane.b32.xlu0 %v4209, 64
    %v4212 = vpop.permute.xlu0 %4211
    %v4214 = vadd.f32 %v4208, %v4212
    %v4215 = vtanh.pop %v4214
    %v4216 = vmul.f32 %v4207, %v4215
    %v4217 = vadd.f32 %v2815, %v4216
    %v4218 = vmax.f32 %v4217, 0.0
    %v4219 = vadd.f32 %v2887, %v4144
    %v4220 = vmax.f32 %v4219, 0.0
    %v4221 = vadd.f32 %v2959, %v4072
    %v4222 = vmax.f32 %v4221, 0.0
    %v4223 = vadd.f32 %v3031, %v4000
    %v4224 = vmax.f32 %v4223, 0.0
    %v4225 = vadd.f32 %v3103, %v3928
    %v4226 = vmax.f32 %v4225, 0.0
    %v4227 = vadd.f32 %v3175, %v3856
    %v4228 = vmax.f32 %v4227, 0.0
    %v4229 = vadd.f32 %v3247, %v3784
    %v4230 = vmax.f32 %v4229, 0.0
    %v4231 = vadd.f32 %v3319, %v3712
    %v4232 = vmax.f32 %v4231, 0.0
    %v4233 = vadd.f32 %v3391, %v3640
    %v4234 = vmax.f32 %v4233, 0.0
    %v4235 = vadd.f32 %v3463, %v3568
    %v4236 = vmax.f32 %v4235, 0.0
    %4238 = vrot.lane.b32.xlu0 %v4218, 64
    %v4239 = vpop.permute.xlu0 %4238
    %4242 = vrot.lane.b32.xlu0 %v4222, 64
    %v4243 = vpop.permute.xlu0 %4242
    %4246 = vrot.lane.b32.xlu0 %v4226, 64
    %v4247 = vpop.permute.xlu0 %4246
    %4250 = vrot.lane.b32.xlu0 %v4230, 64
    %v4251 = vpop.permute.xlu0 %4250
    %4254 = vrot.lane.b32.xlu0 %v4234, 64
    %v4255 = vpop.permute.xlu0 %4254
    %v4257 = vsel %vm545, %v4239, %v4220
    %v4258 = vsel %vm545, %v4243, %v4224
    %v4259 = vsel %vm545, %v4247, %v4228
    %v4260 = vsel %vm545, %v4251, %v4232
    %v4261 = vsel %vm545, %v4255, %v4236
    %v4262 = vpack.c.bf16 %v4257, %v4257
    %v4263 = vpack.c.bf16 %v4258, %v4258
    %v4264 = vpack.c.bf16 %v4259, %v4259
    %v4265 = vpack.c.bf16 %v4260, %v4260
    %v4266 = vpack.c.bf16 %v4261, %v4261
    %v4269 = vlaneseq
    %v4270 = vshrl.u32 %v4269, 7
    %v4271 = vsub.s32 0, %v4270
    %v4272 = vrot.slane %v451, %v4271
    %v4273 = vlaneseq
    %v4274 = vshrl.u32 %v4273, 7
    %v4275 = vsub.s32 4, %v4274
    %v4276 = vrot.slane %v451, %v4275
    %v4277 = vlaneseq
    %v4278 = vshrl.u32 %v4277, 7
    %v4279 = vsub.s32 0, %v4278
    %v4280 = vrot.slane %v452, %v4279
    %v4284 = vlaneseq
    %v4285 = vshrl.u32 %v4284, 7
    %v4286 = vsub.s32 0, %v4285
    %v4287 = vrot.slane %v4272, %v4286
    %v4288 = vlaneseq
    %v4289 = vshrl.u32 %v4288, 7
    %v4290 = vsub.s32 0, %v4289
    %v4291 = vrot.slane %v4276, %v4290
    %v4292 = vlaneseq
    %v4293 = vshrl.u32 %v4292, 7
    %v4294 = vsub.s32 0, %v4293
    %v4295 = vrot.slane %v4280, %v4294
    %v4456 = vunpack.c.l.b16 %v211
    %v4457 = vunpack.c.h.b16 %v211
    %v4458 = vunpack.c.l.b16 %v212
    %v4459 = vunpack.c.l.b16 %v213
    %v4460 = vunpack.c.h.b16 %v213
    %v4461 = vunpack.c.l.b16 %v214
    %v4462 = vunpack.c.l.b16 %v215
    %v4463 = vunpack.c.h.b16 %v215
    %v4464 = vunpack.c.l.b16 %v216
    %v4465 = vunpack.c.l.b16 %v217
    %v4466 = vunpack.c.h.b16 %v217
    %v4467 = vunpack.c.l.b16 %v218
    %v4468 = vunpack.c.l.b16 %v219
    %v4469 = vunpack.c.h.b16 %v219
    %v4470 = vunpack.c.l.b16 %v220
    %v4471 = vunpack.c.l.b16 %v221
    %v4472 = vunpack.c.h.b16 %v221
    %v4473 = vunpack.c.l.b16 %v222
    %v4474 = vunpack.c.l.b16 %v223
    %v4475 = vunpack.c.h.b16 %v223
    %v4476 = vunpack.c.l.b16 %v224
    %v4477 = vunpack.c.l.b16 %v225
    %v4478 = vunpack.c.h.b16 %v225
    %v4479 = vunpack.c.l.b16 %v226
    %v4480 = vunpack.c.l.b16 %v227
    %v4481 = vunpack.c.h.b16 %v227
    %v4482 = vunpack.c.l.b16 %v228
    %v4483 = vunpack.c.l.b16 %v229
    %v4484 = vunpack.c.h.b16 %v229
    %v4485 = vunpack.c.l.b16 %v230
    %v4486 = vunpack.c.l.b16 %v231
    %v4487 = vunpack.c.h.b16 %v231
    %v4488 = vunpack.c.l.b16 %v232
    %v4489 = vunpack.c.l.b16 %v233
    %v4490 = vunpack.c.h.b16 %v233
    %v4491 = vunpack.c.l.b16 %v234
    %v4492 = vunpack.c.l.b16 %v235
    %v4493 = vunpack.c.h.b16 %v235
    %v4494 = vunpack.c.l.b16 %v236
    %v4495 = vunpack.c.l.b16 %v237
    %v4496 = vunpack.c.h.b16 %v237
    %v4497 = vunpack.c.l.b16 %v238
    %v4498 = vunpack.c.l.b16 %v239
    %v4499 = vunpack.c.h.b16 %v239
    %v4500 = vunpack.c.l.b16 %v240
    %v4501 = vunpack.c.l.b16 %v241
    %v4502 = vunpack.c.h.b16 %v241
    %v4503 = vunpack.c.l.b16 %v242
    %v4504 = vunpack.c.l.b16 %v243
    %v4505 = vunpack.c.h.b16 %v243
    %v4506 = vunpack.c.l.b16 %v244
    %v4507 = vunpack.c.l.b16 %v245
    %v4508 = vunpack.c.h.b16 %v245
    %v4509 = vunpack.c.l.b16 %v246
    %v4510 = vunpack.c.l.b16 %v247
    %v4511 = vunpack.c.h.b16 %v247
    %v4512 = vunpack.c.l.b16 %v248
    %v4513 = vunpack.c.l.b16 %v249
    %v4514 = vunpack.c.h.b16 %v249
    %v4515 = vunpack.c.l.b16 %v250
    %v4516 = vunpack.c.l.b16 %v251
    %v4517 = vunpack.c.h.b16 %v251
    %v4518 = vunpack.c.l.b16 %v252
    %v4519 = vunpack.c.l.b16 %v253
    %v4520 = vunpack.c.h.b16 %v253
    %v4521 = vunpack.c.l.b16 %v254
    %v4522 = vunpack.c.l.b16 %v255
    %v4523 = vunpack.c.h.b16 %v255
    %v4524 = vunpack.c.l.b16 %v256
    %v4525 = vunpack.c.l.b16 %v257
    %v4526 = vunpack.c.h.b16 %v257
    %v4527 = vunpack.c.l.b16 %v258
    %v4528 = vunpack.c.l.b16 %v259
    %v4529 = vunpack.c.h.b16 %v259
    %v4530 = vunpack.c.l.b16 %v260
    %v4531 = vunpack.c.l.b16 %v261
    %v4532 = vunpack.c.h.b16 %v261
    %v4533 = vunpack.c.l.b16 %v262
    %v4534 = vunpack.c.l.b16 %v263
    %v4535 = vunpack.c.h.b16 %v263
    %v4536 = vunpack.c.l.b16 %v264
    %v4537 = vunpack.c.l.b16 %v265
    %v4538 = vunpack.c.h.b16 %v265
    %v4539 = vunpack.c.l.b16 %v266
    %v4540 = vunpack.c.l.b16 %v267
    %v4541 = vunpack.c.h.b16 %v267
    %v4542 = vunpack.c.l.b16 %v268
    %v4543 = vunpack.c.l.b16 %v269
    %v4544 = vunpack.c.h.b16 %v269
    %v4545 = vunpack.c.l.b16 %v270
    %v4546 = vunpack.c.l.b16 %v271
    %v4547 = vunpack.c.h.b16 %v271
    %v4548 = vunpack.c.l.b16 %v272
    %v4549 = vunpack.c.l.b16 %v273
    %v4550 = vunpack.c.h.b16 %v273
    %v4551 = vunpack.c.l.b16 %v274
    %v4552 = vunpack.c.l.b16 %v275
    %v4553 = vunpack.c.h.b16 %v275
    %v4554 = vunpack.c.l.b16 %v276
    %v4555 = vunpack.c.l.b16 %v277
    %v4556 = vunpack.c.h.b16 %v277
    %v4557 = vunpack.c.l.b16 %v278
    %v4558 = vunpack.c.l.b16 %v279
    %v4559 = vunpack.c.h.b16 %v279
    %v4560 = vunpack.c.l.b16 %v280
    %v4561 = vunpack.c.l.b16 %v281
    %v4562 = vunpack.c.h.b16 %v281
    %v4563 = vunpack.c.l.b16 %v282
    %v4564 = vunpack.c.l.b16 %v283
    %v4565 = vunpack.c.h.b16 %v283
    %v4566 = vunpack.c.l.b16 %v284
    %v4567 = vunpack.c.l.b16 %v285
    %v4568 = vunpack.c.h.b16 %v285
    %v4569 = vunpack.c.l.b16 %v286
    %v4570 = vunpack.c.l.b16 %v287
    %v4571 = vunpack.c.h.b16 %v287
    %v4572 = vunpack.c.l.b16 %v288
    %v4573 = vunpack.c.l.b16 %v289
    %v4574 = vunpack.c.h.b16 %v289
    %v4575 = vunpack.c.l.b16 %v290
    %v4576 = vunpack.c.l.b16 %v291
    %v4577 = vunpack.c.h.b16 %v291
    %v4578 = vunpack.c.l.b16 %v292
    %v4579 = vunpack.c.l.b16 %v293
    %v4580 = vunpack.c.h.b16 %v293
    %v4581 = vunpack.c.l.b16 %v294
    %v4582 = vunpack.c.l.b16 %v295
    %v4583 = vunpack.c.h.b16 %v295
    %v4584 = vunpack.c.l.b16 %v296
    %v4585 = vunpack.c.l.b16 %v297
    %v4586 = vunpack.c.h.b16 %v297
    %v4587 = vunpack.c.l.b16 %v298
    %v4588 = vunpack.c.l.b16 %v299
    %v4589 = vunpack.c.h.b16 %v299
    %v4590 = vunpack.c.l.b16 %v300
    %v4591 = vunpack.c.l.b16 %v301
    %v4592 = vunpack.c.h.b16 %v301
    %v4593 = vunpack.c.l.b16 %v302
    %v4594 = vunpack.c.l.b16 %v303
    %v4595 = vunpack.c.h.b16 %v303
    %v4596 = vunpack.c.l.b16 %v304
    %v4597 = vunpack.c.l.b16 %v305
    %v4598 = vunpack.c.h.b16 %v305
    %v4599 = vunpack.c.l.b16 %v306
    %v4600 = vunpack.c.l.b16 %v307
    %v4601 = vunpack.c.h.b16 %v307
    %v4602 = vunpack.c.l.b16 %v308
    %v4603 = vunpack.c.l.b16 %v309
    %v4604 = vunpack.c.h.b16 %v309
    %v4605 = vunpack.c.l.b16 %v310
    %v4606 = vunpack.c.l.b16 %v311
    %v4607 = vunpack.c.h.b16 %v311
    %v4608 = vunpack.c.l.b16 %v312
    %v4609 = vunpack.c.l.b16 %v313
    %v4610 = vunpack.c.h.b16 %v313
    %v4611 = vunpack.c.l.b16 %v314
    %v4612 = vunpack.c.l.b16 %v315
    %v4613 = vunpack.c.h.b16 %v315
    %v4614 = vunpack.c.l.b16 %v316
    %v4615 = vunpack.c.l.b16 %v317
    %v4616 = vunpack.c.h.b16 %v317
    %v4617 = vunpack.c.l.b16 %v318
    %v4618 = vunpack.c.l.b16 %v319
    %v4619 = vunpack.c.h.b16 %v319
    %v4620 = vunpack.c.l.b16 %v320
    %v4621 = vunpack.c.l.b16 %v321
    %v4622 = vunpack.c.h.b16 %v321
    %v4623 = vunpack.c.l.b16 %v322
    %v4624 = vunpack.c.l.b16 %v323
    %v4625 = vunpack.c.h.b16 %v323
    %v4626 = vunpack.c.l.b16 %v324
    %v4627 = vunpack.c.l.b16 %v325
    %v4628 = vunpack.c.h.b16 %v325
    %v4629 = vunpack.c.l.b16 %v326
    %v4630 = vunpack.c.l.b16 %v327
    %v4631 = vunpack.c.h.b16 %v327
    %v4632 = vunpack.c.l.b16 %v328
    %v4633 = vunpack.c.l.b16 %v329
    %v4634 = vunpack.c.h.b16 %v329
    %v4635 = vunpack.c.l.b16 %v330
    %v4636 = vunpack.c.l.b16 %v331
    %v4637 = vunpack.c.h.b16 %v331
    %v4638 = vunpack.c.l.b16 %v332
    %v4639 = vunpack.c.l.b16 %v333
    %v4640 = vunpack.c.h.b16 %v333
    %v4641 = vunpack.c.l.b16 %v334
    %v4642 = vunpack.c.l.b16 %v335
    %v4643 = vunpack.c.h.b16 %v335
    %v4644 = vunpack.c.l.b16 %v336
    %v4645 = vunpack.c.l.b16 %v337
    %v4646 = vunpack.c.h.b16 %v337
    %v4647 = vunpack.c.l.b16 %v338
    %v4648 = vunpack.c.l.b16 %v339
    %v4649 = vunpack.c.h.b16 %v339
    %v4650 = vunpack.c.l.b16 %v340
    %v4651 = vunpack.c.l.b16 %v341
    %v4652 = vunpack.c.h.b16 %v341
    %v4653 = vunpack.c.l.b16 %v342
    %v4654 = vunpack.c.l.b16 %v343
    %v4655 = vunpack.c.h.b16 %v343
    %v4656 = vunpack.c.l.b16 %v344
    %v4657 = vunpack.c.l.b16 %v345
    %v4658 = vunpack.c.h.b16 %v345
    %v4659 = vunpack.c.l.b16 %v346
    %v4660 = vunpack.c.l.b16 %v347
    %v4661 = vunpack.c.h.b16 %v347
    %v4662 = vunpack.c.l.b16 %v348
    %v4663 = vunpack.c.l.b16 %v349
    %v4664 = vunpack.c.h.b16 %v349
    %v4665 = vunpack.c.l.b16 %v350
    %v4666 = vunpack.c.l.b16 %v351
    %v4667 = vunpack.c.h.b16 %v351
    %v4668 = vunpack.c.l.b16 %v352
    %v4669 = vunpack.c.l.b16 %v353
    %v4670 = vunpack.c.h.b16 %v353
    %v4671 = vunpack.c.l.b16 %v354
    %v4672 = vunpack.c.l.b16 %v355
    %v4673 = vunpack.c.h.b16 %v355
    %v4674 = vunpack.c.l.b16 %v356
    %v4675 = vunpack.c.l.b16 %v357
    %v4676 = vunpack.c.h.b16 %v357
    %v4677 = vunpack.c.l.b16 %v358
    %v4678 = vunpack.c.l.b16 %v359
    %v4679 = vunpack.c.h.b16 %v359
    %v4680 = vunpack.c.l.b16 %v360
    %v4681 = vunpack.c.l.b16 %v361
    %v4682 = vunpack.c.h.b16 %v361
    %v4683 = vunpack.c.l.b16 %v362
    %v4684 = vunpack.c.l.b16 %v363
    %v4685 = vunpack.c.h.b16 %v363
    %v4686 = vunpack.c.l.b16 %v364
    %v4687 = vunpack.c.l.b16 %v365
    %v4688 = vunpack.c.h.b16 %v365
    %v4689 = vunpack.c.l.b16 %v366
    %v4690 = vunpack.c.l.b16 %v367
    %v4691 = vunpack.c.h.b16 %v367
    %v4692 = vunpack.c.l.b16 %v368
    %v4693 = vunpack.c.l.b16 %v369
    %v4694 = vunpack.c.h.b16 %v369
    %v4695 = vunpack.c.l.b16 %v370
    %v4696 = vpack.c.b16 %v4459, %v4456
    %v4697 = vpack.c.b16 %v4460, %v4457
    %v4698 = vpack.c.b16 %v4461, %v4458
    %v4699 = vpack.c.b16 %v4465, %v4462
    %v4700 = vpack.c.b16 %v4466, %v4463
    %v4701 = vpack.c.b16 %v4467, %v4464
    %v4702 = vpack.c.b16 %v4471, %v4468
    %v4703 = vpack.c.b16 %v4472, %v4469
    %v4704 = vpack.c.b16 %v4473, %v4470
    %v4705 = vpack.c.b16 %v4477, %v4474
    %v4706 = vpack.c.b16 %v4478, %v4475
    %v4707 = vpack.c.b16 %v4479, %v4476
    %v4708 = vpack.c.b16 %v4483, %v4480
    %v4709 = vpack.c.b16 %v4484, %v4481
    %v4710 = vpack.c.b16 %v4485, %v4482
    %v4711 = vpack.c.b16 %v4489, %v4486
    %v4712 = vpack.c.b16 %v4490, %v4487
    %v4713 = vpack.c.b16 %v4491, %v4488
    %v4714 = vpack.c.b16 %v4495, %v4492
    %v4715 = vpack.c.b16 %v4496, %v4493
    %v4716 = vpack.c.b16 %v4497, %v4494
    %v4717 = vpack.c.b16 %v4501, %v4498
    %v4718 = vpack.c.b16 %v4502, %v4499
    %v4719 = vpack.c.b16 %v4503, %v4500
    %v4720 = vpack.c.b16 %v4507, %v4504
    %v4721 = vpack.c.b16 %v4508, %v4505
    %v4722 = vpack.c.b16 %v4509, %v4506
    %v4723 = vpack.c.b16 %v4513, %v4510
    %v4724 = vpack.c.b16 %v4514, %v4511
    %v4725 = vpack.c.b16 %v4515, %v4512
    %v4726 = vpack.c.b16 %v4519, %v4516
    %v4727 = vpack.c.b16 %v4520, %v4517
    %v4728 = vpack.c.b16 %v4521, %v4518
    %v4729 = vpack.c.b16 %v4525, %v4522
    %v4730 = vpack.c.b16 %v4526, %v4523
    %v4731 = vpack.c.b16 %v4527, %v4524
    %v4732 = vpack.c.b16 %v4531, %v4528
    %v4733 = vpack.c.b16 %v4532, %v4529
    %v4734 = vpack.c.b16 %v4533, %v4530
    %v4735 = vpack.c.b16 %v4537, %v4534
    %v4736 = vpack.c.b16 %v4538, %v4535
    %v4737 = vpack.c.b16 %v4539, %v4536
    %v4738 = vpack.c.b16 %v4543, %v4540
    %v4739 = vpack.c.b16 %v4544, %v4541
    %v4740 = vpack.c.b16 %v4545, %v4542
    %v4741 = vpack.c.b16 %v4549, %v4546
    %v4742 = vpack.c.b16 %v4550, %v4547
    %v4743 = vpack.c.b16 %v4551, %v4548
    %v4744 = vpack.c.b16 %v4555, %v4552
    %v4745 = vpack.c.b16 %v4556, %v4553
    %v4746 = vpack.c.b16 %v4557, %v4554
    %v4747 = vpack.c.b16 %v4561, %v4558
    %v4748 = vpack.c.b16 %v4562, %v4559
    %v4749 = vpack.c.b16 %v4563, %v4560
    %v4750 = vpack.c.b16 %v4567, %v4564
    %v4751 = vpack.c.b16 %v4568, %v4565
    %v4752 = vpack.c.b16 %v4569, %v4566
    %v4753 = vpack.c.b16 %v4573, %v4570
    %v4754 = vpack.c.b16 %v4574, %v4571
    %v4755 = vpack.c.b16 %v4575, %v4572
    %v4756 = vpack.c.b16 %v4579, %v4576
    %v4757 = vpack.c.b16 %v4580, %v4577
    %v4758 = vpack.c.b16 %v4581, %v4578
    %v4759 = vpack.c.b16 %v4585, %v4582
    %v4760 = vpack.c.b16 %v4586, %v4583
    %v4761 = vpack.c.b16 %v4587, %v4584
    %v4762 = vpack.c.b16 %v4591, %v4588
    %v4763 = vpack.c.b16 %v4592, %v4589
    %v4764 = vpack.c.b16 %v4593, %v4590
    %v4765 = vpack.c.b16 %v4597, %v4594
    %v4766 = vpack.c.b16 %v4598, %v4595
    %v4767 = vpack.c.b16 %v4599, %v4596
    %v4768 = vpack.c.b16 %v4603, %v4600
    %v4769 = vpack.c.b16 %v4604, %v4601
    %v4770 = vpack.c.b16 %v4605, %v4602
    %v4771 = vpack.c.b16 %v4609, %v4606
    %v4772 = vpack.c.b16 %v4610, %v4607
    %v4773 = vpack.c.b16 %v4611, %v4608
    %v4774 = vpack.c.b16 %v4615, %v4612
    %v4775 = vpack.c.b16 %v4616, %v4613
    %v4776 = vpack.c.b16 %v4617, %v4614
    %v4777 = vpack.c.b16 %v4621, %v4618
    %v4778 = vpack.c.b16 %v4622, %v4619
    %v4779 = vpack.c.b16 %v4623, %v4620
    %v4780 = vpack.c.b16 %v4627, %v4624
    %v4781 = vpack.c.b16 %v4628, %v4625
    %v4782 = vpack.c.b16 %v4629, %v4626
    %v4783 = vpack.c.b16 %v4633, %v4630
    %v4784 = vpack.c.b16 %v4634, %v4631
    %v4785 = vpack.c.b16 %v4635, %v4632
    %v4786 = vpack.c.b16 %v4639, %v4636
    %v4787 = vpack.c.b16 %v4640, %v4637
    %v4788 = vpack.c.b16 %v4641, %v4638
    %v4789 = vpack.c.b16 %v4645, %v4642
    %v4790 = vpack.c.b16 %v4646, %v4643
    %v4791 = vpack.c.b16 %v4647, %v4644
    %v4792 = vpack.c.b16 %v4651, %v4648
    %v4793 = vpack.c.b16 %v4652, %v4649
    %v4794 = vpack.c.b16 %v4653, %v4650
    %v4795 = vpack.c.b16 %v4657, %v4654
    %v4796 = vpack.c.b16 %v4658, %v4655
    %v4797 = vpack.c.b16 %v4659, %v4656
    %v4798 = vpack.c.b16 %v4663, %v4660
    %v4799 = vpack.c.b16 %v4664, %v4661
    %v4800 = vpack.c.b16 %v4665, %v4662
    %v4801 = vpack.c.b16 %v4669, %v4666
    %v4802 = vpack.c.b16 %v4670, %v4667
    %v4803 = vpack.c.b16 %v4671, %v4668
    %v4804 = vpack.c.b16 %v4675, %v4672
    %v4805 = vpack.c.b16 %v4676, %v4673
    %v4806 = vpack.c.b16 %v4677, %v4674
    %v4807 = vpack.c.b16 %v4681, %v4678
    %v4808 = vpack.c.b16 %v4682, %v4679
    %v4809 = vpack.c.b16 %v4683, %v4680
    %v4810 = vpack.c.b16 %v4687, %v4684
    %v4811 = vpack.c.b16 %v4688, %v4685
    %v4812 = vpack.c.b16 %v4689, %v4686
    %v4813 = vpack.c.b16 %v4693, %v4690
    %v4814 = vpack.c.b16 %v4694, %v4691
    %v4815 = vpack.c.b16 %v4695, %v4692
    %4936 = vmatprep.subr.bf16.mxu0 %v4697
    %4937 = vmatpush1.bf16.msra.mxu0 %v4696
    %4938 = vmatprep.subr.bf16.mxu0 %v4700
    %4939 = vmatpush1.bf16.msra.mxu0 %v4699
    %4940 = vmatprep.subr.bf16.mxu0 %v4703
    %4941 = vmatpush1.bf16.msra.mxu0 %v4702
    %4942 = vmatprep.subr.bf16.mxu0 %v4706
    %4943 = vmatpush1.bf16.msra.mxu0 %v4705
    %4944 = vmatprep.subr.bf16.mxu0 %v4709
    %4945 = vmatpush1.bf16.msra.mxu0 %v4708
    %4946 = vmatprep.subr.bf16.mxu0 %v4712
    %4947 = vmatpush1.bf16.msra.mxu0 %v4711
    %4948 = vmatprep.subr.bf16.mxu0 %v4715
    %4949 = vmatpush1.bf16.msra.mxu0 %v4714
    %4950 = vmatprep.subr.bf16.mxu0 %v4718
    %4951 = vmatpush1.bf16.msra.mxu0 %v4717
    %4952 = vmatprep.subr.bf16.mxu0 %v4721
    %4953 = vmatpush1.bf16.msra.mxu0 %v4720
    %4954 = vmatprep.subr.bf16.mxu0 %v4724
    %4955 = vmatpush1.bf16.msra.mxu0 %v4723
    %4956 = vmatprep.subr.bf16.mxu0 %v4727
    %4957 = vmatpush1.bf16.msra.mxu0 %v4726
    %4958 = vmatprep.subr.bf16.mxu0 %v4730
    %4959 = vmatpush1.bf16.msra.mxu0 %v4729
    %4960 = vmatprep.subr.bf16.mxu0 %v4733
    %4961 = vmatpush1.bf16.msra.mxu0 %v4732
    %4962 = vmatprep.subr.bf16.mxu0 %v4736
    %4963 = vmatpush1.bf16.msra.mxu0 %v4735
    %4964 = vmatprep.subr.bf16.mxu0 %v4739
    %4965 = vmatpush1.bf16.msra.mxu0 %v4738
    %4966 = vmatprep.subr.bf16.mxu0 %v4742
    %4967 = vmatpush1.bf16.msra.mxu0 %v4741
    %4968 = vmatprep.mubr.bf16.mxu0 %v4263
    %4969 = vmatmul.mubr.bf16.gmra.mrb[0].mxu0 %v4262
    %v4970 = vpop.f32.mrb[0].mxu0
    %v4971 = vadd.f32 %v4287, %v4970
    %v4972 = vpop.f32.mrb[0].mxu0
    %v4973 = vadd.f32 %v4291, %v4972
    %v4974 = vpop.f32.mrb[0].mxu0
    %v4975 = vpop.f32.mrb[0].mxu0
    %4976 = vdwg.mxu0
    %4977 = vmatprep.subr.bf16.mxu0 %v4745
    %4978 = vmatpush1.bf16.msra.mxu0 %v4744
    %4979 = vmatprep.subr.bf16.mxu0 %v4748
    %4980 = vmatpush1.bf16.msra.mxu0 %v4747
    %4981 = vmatprep.subr.bf16.mxu0 %v4751
    %4982 = vmatpush1.bf16.msra.mxu0 %v4750
    %4983 = vmatprep.subr.bf16.mxu0 %v4754
    %4984 = vmatpush1.bf16.msra.mxu0 %v4753
    %4985 = vmatprep.subr.bf16.mxu0 %v4757
    %4986 = vmatpush1.bf16.msra.mxu0 %v4756
    %4987 = vmatprep.subr.bf16.mxu0 %v4760
    %4988 = vmatpush1.bf16.msra.mxu0 %v4759
    %4989 = vmatprep.subr.bf16.mxu0 %v4763
    %4990 = vmatpush1.bf16.msra.mxu0 %v4762
    %4991 = vmatprep.subr.bf16.mxu0 %v4766
    %4992 = vmatpush1.bf16.msra.mxu0 %v4765
    %4993 = vmatprep.subr.bf16.mxu0 %v4769
    %4994 = vmatpush1.bf16.msra.mxu0 %v4768
    %4995 = vmatprep.subr.bf16.mxu0 %v4772
    %4996 = vmatpush1.bf16.msra.mxu0 %v4771
    %4997 = vmatprep.subr.bf16.mxu0 %v4775
    %4998 = vmatpush1.bf16.msra.mxu0 %v4774
    %4999 = vmatprep.subr.bf16.mxu0 %v4778
    %5000 = vmatpush1.bf16.msra.mxu0 %v4777
    %5001 = vmatprep.subr.bf16.mxu0 %v4781
    %5002 = vmatpush1.bf16.msra.mxu0 %v4780
    %5003 = vmatprep.subr.bf16.mxu0 %v4784
    %5004 = vmatpush1.bf16.msra.mxu0 %v4783
    %5005 = vmatprep.subr.bf16.mxu0 %v4787
    %5006 = vmatpush1.bf16.msra.mxu0 %v4786
    %5007 = vmatprep.subr.bf16.mxu0 %v4790
    %5008 = vmatpush1.bf16.msra.mxu0 %v4789
    %5009 = vmatprep.mubr.bf16.mxu0 %v4265
    %5010 = vmatmul.mubr.bf16.gmra.mrb[0].mxu0 %v4264
    %v5011 = vpop.f32.mrb[0].mxu0
    %v5012 = vadd.f32 %v4971, %v5011
    %v5013 = vpop.f32.mrb[0].mxu0
    %v5014 = vadd.f32 %v4973, %v5013
    %v5015 = vpop.f32.mrb[0].mxu0
    %v5016 = vpop.f32.mrb[0].mxu0
    %5017 = vdwg.mxu0
    %5018 = vmatprep.subr.bf16.mxu0 %v4793
    %5019 = vmatpush1.bf16.msra.mxu0 %v4792
    %5020 = vmatprep.subr.bf16.mxu0 %v4796
    %5021 = vmatpush1.bf16.msra.mxu0 %v4795
    %5022 = vmatprep.subr.bf16.mxu0 %v4799
    %5023 = vmatpush1.bf16.msra.mxu0 %v4798
    %5024 = vmatprep.subr.bf16.mxu0 %v4802
    %5025 = vmatpush1.bf16.msra.mxu0 %v4801
    %5026 = vmatprep.subr.bf16.mxu0 %v4805
    %5027 = vmatpush1.bf16.msra.mxu0 %v4804
    %5028 = vmatprep.subr.bf16.mxu0 %v4808
    %5029 = vmatpush1.bf16.msra.mxu0 %v4807
    %5030 = vmatprep.subr.bf16.mxu0 %v4811
    %5031 = vmatpush1.bf16.msra.mxu0 %v4810
    %5032 = vmatprep.subr.bf16.mxu0 %v4814
    %5033 = vmatpush1.bf16.msra.mxu0 %v4813
    %5034 = vmatprep.subr.bf16.mxu0 0
    %5035 = vmatpush1.bf16.msra.mxu0 0
    %5036 = vmatprep.subr.bf16.mxu0 0
    %5037 = vmatpush1.bf16.msra.mxu0 0
    %5038 = vmatprep.subr.bf16.mxu0 0
    %5039 = vmatpush1.bf16.msra.mxu0 0
    %5040 = vmatprep.subr.bf16.mxu0 0
    %5041 = vmatpush1.bf16.msra.mxu0 0
    %5042 = vmatprep.subr.bf16.mxu0 0
    %5043 = vmatpush1.bf16.msra.mxu0 0
    %5044 = vmatprep.subr.bf16.mxu0 0
    %5045 = vmatpush1.bf16.msra.mxu0 0
    %5046 = vmatprep.subr.bf16.mxu0 0
    %5047 = vmatpush1.bf16.msra.mxu0 0
    %5048 = vmatprep.subr.bf16.mxu0 0
    %5049 = vmatpush1.bf16.msra.mxu0 0
    %5050 = vmatprep.mubr.bf16.mxu0 0
    %5051 = vmatmul.mubr.bf16.gmra.mrb[0].mxu0 %v4266
    %v5052 = vpop.f32.mrb[0].mxu0
    %v5053 = vadd.f32 %v5012, %v5052
    %v5054 = vpop.f32.mrb[0].mxu0
    %v5055 = vadd.f32 %v5014, %v5054
    %v5056 = vpop.f32.mrb[0].mxu0
    %v5057 = vpop.f32.mrb[0].mxu0
    %5058 = vdwg.mxu0
    %5059 = vmatprep.subr.bf16.mxu0 0
    %5060 = vmatpush1.bf16.msra.mxu0 %v4698
    %5061 = vmatprep.subr.bf16.mxu0 0
    %5062 = vmatpush1.bf16.msra.mxu0 %v4701
    %5063 = vmatprep.subr.bf16.mxu0 0
    %5064 = vmatpush1.bf16.msra.mxu0 %v4704
    %5065 = vmatprep.subr.bf16.mxu0 0
    %5066 = vmatpush1.bf16.msra.mxu0 %v4707
    %5067 = vmatprep.subr.bf16.mxu0 0
    %5068 = vmatpush1.bf16.msra.mxu0 %v4710
    %5069 = vmatprep.subr.bf16.mxu0 0
    %5070 = vmatpush1.bf16.msra.mxu0 %v4713
    %5071 = vmatprep.subr.bf16.mxu0 0
    %5072 = vmatpush1.bf16.msra.mxu0 %v4716
    %5073 = vmatprep.subr.bf16.mxu0 0
    %5074 = vmatpush1.bf16.msra.mxu0 %v4719
    %5075 = vmatprep.subr.bf16.mxu0 0
    %5076 = vmatpush1.bf16.msra.mxu0 %v4722
    %5077 = vmatprep.subr.bf16.mxu0 0
    %5078 = vmatpush1.bf16.msra.mxu0 %v4725
    %5079 = vmatprep.subr.bf16.mxu0 0
    %5080 = vmatpush1.bf16.msra.mxu0 %v4728
    %5081 = vmatprep.subr.bf16.mxu0 0
    %5082 = vmatpush1.bf16.msra.mxu0 %v4731
    %5083 = vmatprep.subr.bf16.mxu0 0
    %5084 = vmatpush1.bf16.msra.mxu0 %v4734
    %5085 = vmatprep.subr.bf16.mxu0 0
    %5086 = vmatpush1.bf16.msra.mxu0 %v4737
    %5087 = vmatprep.subr.bf16.mxu0 0
    %5088 = vmatpush1.bf16.msra.mxu0 %v4740
    %5089 = vmatprep.subr.bf16.mxu0 0
    %5090 = vmatpush1.bf16.msra.mxu0 %v4743
    %5091 = vmatprep.mubr.bf16.mxu0 %v4263
    %5092 = vmatmul.mubr.bf16.gmra.mrb[0].mxu0 %v4262
    %v5093 = vpop.f32.mrb[0].mxu0
    %v5094 = vadd.f32 %v4295, %v5093
    %v5095 = vpop.f32.mrb[0].mxu0
    %v5096 = vpop.f32.mrb[0].mxu0
    %v5097 = vpop.f32.mrb[0].mxu0
    %5098 = vdwg.mxu0
    %5099 = vmatprep.subr.bf16.mxu0 0
    %5100 = vmatpush1.bf16.msra.mxu0 %v4746
    %5101 = vmatprep.subr.bf16.mxu0 0
    %5102 = vmatpush1.bf16.msra.mxu0 %v4749
    %5103 = vmatprep.subr.bf16.mxu0 0
    %5104 = vmatpush1.bf16.msra.mxu0 %v4752
    %5105 = vmatprep.subr.bf16.mxu0 0
    %5106 = vmatpush1.bf16.msra.mxu0 %v4755
    %5107 = vmatprep.subr.bf16.mxu0 0
    %5108 = vmatpush1.bf16.msra.mxu0 %v4758
    %5109 = vmatprep.subr.bf16.mxu0 0
    %5110 = vmatpush1.bf16.msra.mxu0 %v4761
    %5111 = vmatprep.subr.bf16.mxu0 0
    %5112 = vmatpush1.bf16.msra.mxu0 %v4764
    %5113 = vmatprep.subr.bf16.mxu0 0
    %5114 = vmatpush1.bf16.msra.mxu0 %v4767
    %5115 = vmatprep.subr.bf16.mxu0 0
    %5116 = vmatpush1.bf16.msra.mxu0 %v4770
    %5117 = vmatprep.subr.bf16.mxu0 0
    %5118 = vmatpush1.bf16.msra.mxu0 %v4773
    %5119 = vmatprep.subr.bf16.mxu0 0
    %5120 = vmatpush1.bf16.msra.mxu0 %v4776
    %5121 = vmatprep.subr.bf16.mxu0 0
    %5122 = vmatpush1.bf16.msra.mxu0 %v4779
    %5123 = vmatprep.subr.bf16.mxu0 0
    %5124 = vmatpush1.bf16.msra.mxu0 %v4782
    %5125 = vmatprep.subr.bf16.mxu0 0
    %5126 = vmatpush1.bf16.msra.mxu0 %v4785
    %5127 = vmatprep.subr.bf16.mxu0 0
    %5128 = vmatpush1.bf16.msra.mxu0 %v4788
    %5129 = vmatprep.subr.bf16.mxu0 0
    %5130 = vmatpush1.bf16.msra.mxu0 %v4791
    %5131 = vmatprep.mubr.bf16.mxu0 %v4265
    %5132 = vmatmul.mubr.bf16.gmra.mrb[0].mxu0 %v4264
    %v5133 = vpop.f32.mrb[0].mxu0
    %v5134 = vadd.f32 %v5094, %v5133
    %v5135 = vpop.f32.mrb[0].mxu0
    %v5136 = vpop.f32.mrb[0].mxu0
    %v5137 = vpop.f32.mrb[0].mxu0
    %5138 = vdwg.mxu0
    %5139 = vmatprep.subr.bf16.mxu0 0
    %5140 = vmatpush1.bf16.msra.mxu0 %v4794
    %5141 = vmatprep.subr.bf16.mxu0 0
    %5142 = vmatpush1.bf16.msra.mxu0 %v4797
    %5143 = vmatprep.subr.bf16.mxu0 0
    %5144 = vmatpush1.bf16.msra.mxu0 %v4800
    %5145 = vmatprep.subr.bf16.mxu0 0
    %5146 = vmatpush1.bf16.msra.mxu0 %v4803
    %5147 = vmatprep.subr.bf16.mxu0 0
    %5148 = vmatpush1.bf16.msra.mxu0 %v4806
    %5149 = vmatprep.subr.bf16.mxu0 0
    %5150 = vmatpush1.bf16.msra.mxu0 %v4809
    %5151 = vmatprep.subr.bf16.mxu0 0
    %5152 = vmatpush1.bf16.msra.mxu0 %v4812
    %5153 = vmatprep.subr.bf16.mxu0 0
    %5154 = vmatpush1.bf16.msra.mxu0 %v4815
    %5155 = vmatprep.subr.bf16.mxu0 0
    %5156 = vmatpush1.bf16.msra.mxu0 0
    %5157 = vmatprep.subr.bf16.mxu0 0
    %5158 = vmatpush1.bf16.msra.mxu0 0
    %5159 = vmatprep.subr.bf16.mxu0 0
    %5160 = vmatpush1.bf16.msra.mxu0 0
    %5161 = vmatprep.subr.bf16.mxu0 0
    %5162 = vmatpush1.bf16.msra.mxu0 0
    %5163 = vmatprep.subr.bf16.mxu0 0
    %5164 = vmatpush1.bf16.msra.mxu0 0
    %5165 = vmatprep.subr.bf16.mxu0 0
    %5166 = vmatpush1.bf16.msra.mxu0 0
    %5167 = vmatprep.subr.bf16.mxu0 0
    %5168 = vmatpush1.bf16.msra.mxu0 0
    %5169 = vmatprep.subr.bf16.mxu0 0
    %5170 = vmatpush1.bf16.msra.mxu0 0
    %5171 = vmatprep.mubr.bf16.mxu0 0
    %5172 = vmatmul.mubr.bf16.gmra.mrb[0].mxu0 %v4266
    %v5173 = vpop.f32.mrb[0].mxu0
    %v5174 = vadd.f32 %v5134, %v5173
    %v5175 = vpop.f32.mrb[0].mxu0
    %v5176 = vpop.f32.mrb[0].mxu0
    %v5177 = vpop.f32.mrb[0].mxu0
    %5178 = vdwg.mxu0
    %v5179 = vmax.f32 %v5053, 0.0
    %v5180 = vmax.f32 %v5055, 0.0
    %v5181 = vmax.f32 %v5174, 0.0
    %v5182 = vpack.c.bf16 %v5179, %v5179
    %v5183 = vpack.c.bf16 %v5180, %v5180
    %v5184 = vpack.c.bf16 %v5181, %v5181
    %v5185 = vlaneseq
    %v5186 = vshrl.u32 %v5185, 7
    %v5187 = vsub.s32 1, %v5186
    %v5188 = vrot.slane %v451, %v5187
    %v5189 = vlaneseq
    %v5190 = vshrl.u32 %v5189, 7
    %v5191 = vsub.s32 5, %v5190
    %v5192 = vrot.slane %v451, %v5191
    %v5195 = vlaneseq
    %v5196 = vshrl.u32 %v5195, 7
    %v5197 = vsub.s32 1, %v5196
    %v5198 = vrot.slane %v5188, %v5197
    %v5199 = vlaneseq
    %v5200 = vshrl.u32 %v5199, 7
    %v5201 = vsub.s32 1, %v5200
    %v5202 = vrot.slane %v5192, %v5201
    %v5251 = vunpack.c.l.b16 %v371
    %v5252 = vunpack.c.h.b16 %v371
    %v5253 = vunpack.c.l.b16 %v372
    %v5254 = vunpack.c.h.b16 %v372
    %v5255 = vunpack.c.l.b16 %v373
    %v5256 = vunpack.c.h.b16 %v373
    %v5257 = vunpack.c.l.b16 %v374
    %v5258 = vunpack.c.h.b16 %v374
    %v5259 = vunpack.c.l.b16 %v375
    %v5260 = vunpack.c.h.b16 %v375
    %v5261 = vunpack.c.l.b16 %v376
    %v5262 = vunpack.c.h.b16 %v376
    %v5263 = vunpack.c.l.b16 %v377
    %v5264 = vunpack.c.h.b16 %v377
    %v5265 = vunpack.c.l.b16 %v378
    %v5266 = vunpack.c.h.b16 %v378
    %v5267 = vunpack.c.l.b16 %v379
    %v5268 = vunpack.c.h.b16 %v379
    %v5269 = vunpack.c.l.b16 %v380
    %v5270 = vunpack.c.h.b16 %v380
    %v5271 = vunpack.c.l.b16 %v381
    %v5272 = vunpack.c.h.b16 %v381
    %v5273 = vunpack.c.l.b16 %v382
    %v5274 = vunpack.c.h.b16 %v382
    %v5275 = vunpack.c.l.b16 %v383
    %v5276 = vunpack.c.h.b16 %v383
    %v5277 = vunpack.c.l.b16 %v384
    %v5278 = vunpack.c.h.b16 %v384
    %v5279 = vunpack.c.l.b16 %v385
    %v5280 = vunpack.c.h.b16 %v385
    %v5281 = vunpack.c.l.b16 %v386
    %v5282 = vunpack.c.h.b16 %v386
    %v5283 = vunpack.c.l.b16 %v387
    %v5284 = vunpack.c.h.b16 %v387
    %v5285 = vunpack.c.l.b16 %v388
    %v5286 = vunpack.c.h.b16 %v388
    %v5287 = vunpack.c.l.b16 %v389
    %v5288 = vunpack.c.h.b16 %v389
    %v5289 = vunpack.c.l.b16 %v390
    %v5290 = vunpack.c.h.b16 %v390
    %v5291 = vunpack.c.l.b16 %v391
    %v5292 = vunpack.c.h.b16 %v391
    %v5293 = vunpack.c.l.b16 %v392
    %v5294 = vunpack.c.h.b16 %v392
    %v5295 = vunpack.c.l.b16 %v393
    %v5296 = vunpack.c.h.b16 %v393
    %v5297 = vunpack.c.l.b16 %v394
    %v5298 = vunpack.c.h.b16 %v394
    %v5299 = vunpack.c.l.b16 %v395
    %v5300 = vunpack.c.h.b16 %v395
    %v5301 = vunpack.c.l.b16 %v396
    %v5302 = vunpack.c.h.b16 %v396
    %v5303 = vunpack.c.l.b16 %v397
    %v5304 = vunpack.c.h.b16 %v397
    %v5305 = vunpack.c.l.b16 %v398
    %v5306 = vunpack.c.h.b16 %v398
    %v5307 = vunpack.c.l.b16 %v399
    %v5308 = vunpack.c.h.b16 %v399
    %v5309 = vunpack.c.l.b16 %v400
    %v5310 = vunpack.c.h.b16 %v400
    %v5311 = vunpack.c.l.b16 %v401
    %v5312 = vunpack.c.h.b16 %v401
    %v5313 = vunpack.c.l.b16 %v402
    %v5314 = vunpack.c.h.b16 %v402
    %v5315 = vunpack.c.l.b16 %v403
    %v5316 = vunpack.c.h.b16 %v403
    %v5317 = vunpack.c.l.b16 %v404
    %v5318 = vunpack.c.h.b16 %v404
    %v5319 = vunpack.c.l.b16 %v405
    %v5320 = vunpack.c.h.b16 %v405
    %v5321 = vunpack.c.l.b16 %v406
    %v5322 = vunpack.c.h.b16 %v406
    %v5323 = vunpack.c.l.b16 %v407
    %v5324 = vunpack.c.h.b16 %v407
    %v5325 = vunpack.c.l.b16 %v408
    %v5326 = vunpack.c.h.b16 %v408
    %v5327 = vunpack.c.l.b16 %v409
    %v5328 = vunpack.c.h.b16 %v409
    %v5329 = vunpack.c.l.b16 %v410
    %v5330 = vunpack.c.h.b16 %v410
    %v5331 = vunpack.c.l.b16 %v411
    %v5332 = vunpack.c.h.b16 %v411
    %v5333 = vunpack.c.l.b16 %v412
    %v5334 = vunpack.c.h.b16 %v412
    %v5335 = vunpack.c.l.b16 %v413
    %v5336 = vunpack.c.h.b16 %v413
    %v5337 = vunpack.c.l.b16 %v414
    %v5338 = vunpack.c.h.b16 %v414
    %v5339 = vunpack.c.l.b16 %v415
    %v5340 = vunpack.c.h.b16 %v415
    %v5341 = vunpack.c.l.b16 %v416
    %v5342 = vunpack.c.h.b16 %v416
    %v5343 = vunpack.c.l.b16 %v417
    %v5344 = vunpack.c.h.b16 %v417
    %v5345 = vunpack.c.l.b16 %v418
    %v5346 = vunpack.c.h.b16 %v418
    %v5347 = vpack.c.b16 %v5253, %v5251
    %v5348 = vpack.c.b16 %v5254, %v5252
    %v5349 = vpack.c.b16 %v5257, %v5255
    %v5350 = vpack.c.b16 %v5258, %v5256
    %v5351 = vpack.c.b16 %v5261, %v5259
    %v5352 = vpack.c.b16 %v5262, %v5260
    %v5353 = vpack.c.b16 %v5265, %v5263
    %v5354 = vpack.c.b16 %v5266, %v5264
    %v5355 = vpack.c.b16 %v5269, %v5267
    %v5356 = vpack.c.b16 %v5270, %v5268
    %v5357 = vpack.c.b16 %v5273, %v5271
    %v5358 = vpack.c.b16 %v5274, %v5272
    %v5359 = vpack.c.b16 %v5277, %v5275
    %v5360 = vpack.c.b16 %v5278, %v5276
    %v5361 = vpack.c.b16 %v5281, %v5279
    %v5362 = vpack.c.b16 %v5282, %v5280
    %v5363 = vpack.c.b16 %v5285, %v5283
    %v5364 = vpack.c.b16 %v5286, %v5284
    %v5365 = vpack.c.b16 %v5289, %v5287
    %v5366 = vpack.c.b16 %v5290, %v5288
    %v5367 = vpack.c.b16 %v5293, %v5291
    %v5368 = vpack.c.b16 %v5294, %v5292
    %v5369 = vpack.c.b16 %v5297, %v5295
    %v5370 = vpack.c.b16 %v5298, %v5296
    %v5371 = vpack.c.b16 %v5301, %v5299
    %v5372 = vpack.c.b16 %v5302, %v5300
    %v5373 = vpack.c.b16 %v5305, %v5303
    %v5374 = vpack.c.b16 %v5306, %v5304
    %v5375 = vpack.c.b16 %v5309, %v5307
    %v5376 = vpack.c.b16 %v5310, %v5308
    %v5377 = vpack.c.b16 %v5313, %v5311
    %v5378 = vpack.c.b16 %v5314, %v5312
    %v5379 = vpack.c.b16 %v5317, %v5315
    %v5380 = vpack.c.b16 %v5318, %v5316
    %v5381 = vpack.c.b16 %v5321, %v5319
    %v5382 = vpack.c.b16 %v5322, %v5320
    %v5383 = vpack.c.b16 %v5325, %v5323
    %v5384 = vpack.c.b16 %v5326, %v5324
    %v5385 = vpack.c.b16 %v5329, %v5327
    %v5386 = vpack.c.b16 %v5330, %v5328
    %v5387 = vpack.c.b16 %v5333, %v5331
    %v5388 = vpack.c.b16 %v5334, %v5332
    %v5389 = vpack.c.b16 %v5337, %v5335
    %v5390 = vpack.c.b16 %v5338, %v5336
    %v5391 = vpack.c.b16 %v5341, %v5339
    %v5392 = vpack.c.b16 %v5342, %v5340
    %v5393 = vpack.c.b16 %v5345, %v5343
    %v5394 = vpack.c.b16 %v5346, %v5344
    %5443 = vmatprep.subr.bf16.mxu0 %v5348
    %5444 = vmatpush1.bf16.msra.mxu0 %v5347
    %5445 = vmatprep.subr.bf16.mxu0 %v5350
    %5446 = vmatpush1.bf16.msra.mxu0 %v5349
    %5447 = vmatprep.subr.bf16.mxu0 %v5352
    %5448 = vmatpush1.bf16.msra.mxu0 %v5351
    %5449 = vmatprep.subr.bf16.mxu0 %v5354
    %5450 = vmatpush1.bf16.msra.mxu0 %v5353
    %5451 = vmatprep.subr.bf16.mxu0 %v5356
    %5452 = vmatpush1.bf16.msra.mxu0 %v5355
    %5453 = vmatprep.subr.bf16.mxu0 %v5358
    %5454 = vmatpush1.bf16.msra.mxu0 %v5357
    %5455 = vmatprep.subr.bf16.mxu0 %v5360
    %5456 = vmatpush1.bf16.msra.mxu0 %v5359
    %5457 = vmatprep.subr.bf16.mxu0 %v5362
    %5458 = vmatpush1.bf16.msra.mxu0 %v5361
    %5459 = vmatprep.subr.bf16.mxu0 %v5364
    %5460 = vmatpush1.bf16.msra.mxu0 %v5363
    %5461 = vmatprep.subr.bf16.mxu0 %v5366
    %5462 = vmatpush1.bf16.msra.mxu0 %v5365
    %5463 = vmatprep.subr.bf16.mxu0 %v5368
    %5464 = vmatpush1.bf16.msra.mxu0 %v5367
    %5465 = vmatprep.subr.bf16.mxu0 %v5370
    %5466 = vmatpush1.bf16.msra.mxu0 %v5369
    %5467 = vmatprep.subr.bf16.mxu0 %v5372
    %5468 = vmatpush1.bf16.msra.mxu0 %v5371
    %5469 = vmatprep.subr.bf16.mxu0 %v5374
    %5470 = vmatpush1.bf16.msra.mxu0 %v5373
    %5471 = vmatprep.subr.bf16.mxu0 %v5376
    %5472 = vmatpush1.bf16.msra.mxu0 %v5375
    %5473 = vmatprep.subr.bf16.mxu0 %v5378
    %5474 = vmatpush1.bf16.msra.mxu0 %v5377
    %5475 = vmatprep.mubr.bf16.mxu0 %v5183
    %5476 = vmatmul.mubr.bf16.gmra.mrb[0].mxu0 %v5182
    %v5477 = vpop.f32.mrb[0].mxu0
    %v5478 = vadd.f32 %v5198, %v5477
    %v5479 = vpop.f32.mrb[0].mxu0
    %v5480 = vadd.f32 %v5202, %v5479
    %v5481 = vpop.f32.mrb[0].mxu0
    %v5482 = vpop.f32.mrb[0].mxu0
    %5483 = vdwg.mxu0
    %5484 = vmatprep.subr.bf16.mxu0 %v5380
    %5485 = vmatpush1.bf16.msra.mxu0 %v5379
    %5486 = vmatprep.subr.bf16.mxu0 %v5382
    %5487 = vmatpush1.bf16.msra.mxu0 %v5381
    %5488 = vmatprep.subr.bf16.mxu0 %v5384
    %5489 = vmatpush1.bf16.msra.mxu0 %v5383
    %5490 = vmatprep.subr.bf16.mxu0 %v5386
    %5491 = vmatpush1.bf16.msra.mxu0 %v5385
    %5492 = vmatprep.subr.bf16.mxu0 %v5388
    %5493 = vmatpush1.bf16.msra.mxu0 %v5387
    %5494 = vmatprep.subr.bf16.mxu0 %v5390
    %5495 = vmatpush1.bf16.msra.mxu0 %v5389
    %5496 = vmatprep.subr.bf16.mxu0 %v5392
    %5497 = vmatpush1.bf16.msra.mxu0 %v5391
    %5498 = vmatprep.subr.bf16.mxu0 %v5394
    %5499 = vmatpush1.bf16.msra.mxu0 %v5393
    %5500 = vmatprep.subr.bf16.mxu0 0
    %5501 = vmatpush1.bf16.msra.mxu0 0
    %5502 = vmatprep.subr.bf16.mxu0 0
    %5503 = vmatpush1.bf16.msra.mxu0 0
    %5504 = vmatprep.subr.bf16.mxu0 0
    %5505 = vmatpush1.bf16.msra.mxu0 0
    %5506 = vmatprep.subr.bf16.mxu0 0
    %5507 = vmatpush1.bf16.msra.mxu0 0
    %5508 = vmatprep.subr.bf16.mxu0 0
    %5509 = vmatpush1.bf16.msra.mxu0 0
    %5510 = vmatprep.subr.bf16.mxu0 0
    %5511 = vmatpush1.bf16.msra.mxu0 0
    %5512 = vmatprep.subr.bf16.mxu0 0
    %5513 = vmatpush1.bf16.msra.mxu0 0
    %5514 = vmatprep.subr.bf16.mxu0 0
    %5515 = vmatpush1.bf16.msra.mxu0 0
    %5516 = vmatprep.mubr.bf16.mxu0 0
    %5517 = vmatmul.mubr.bf16.gmra.mrb[0].mxu0 %v5184
    %v5518 = vpop.f32.mrb[0].mxu0
    %v5519 = vadd.f32 %v5478, %v5518
    %v5520 = vpop.f32.mrb[0].mxu0
    %v5521 = vadd.f32 %v5480, %v5520
    %v5522 = vpop.f32.mrb[0].mxu0
    %v5523 = vpop.f32.mrb[0].mxu0
    %5524 = vdwg.mxu0
    %v5525 = vmax.f32 %v5519, 0.0
    %v5526 = vmax.f32 %v5521, 0.0
    %v5527 = vpack.c.bf16 %v5525, %v5525
    %v5528 = vpack.c.bf16 %v5526, %v5526
    %v5529 = vlaneseq
    %v5530 = vshrl.u32 %v5529, 7
    %v5531 = vsub.s32 2, %v5530
    %v5532 = vrot.slane %v451, %v5531
    %v5565 = vunpack.c.l.b16 %v419
    %v5566 = vunpack.c.l.b16 %v420
    %v5567 = vunpack.c.l.b16 %v421
    %v5568 = vunpack.c.l.b16 %v422
    %v5569 = vunpack.c.l.b16 %v423
    %v5570 = vunpack.c.l.b16 %v424
    %v5571 = vunpack.c.l.b16 %v425
    %v5572 = vunpack.c.l.b16 %v426
    %v5573 = vunpack.c.l.b16 %v427
    %v5574 = vunpack.c.l.b16 %v428
    %v5575 = vunpack.c.l.b16 %v429
    %v5576 = vunpack.c.l.b16 %v430
    %v5577 = vunpack.c.l.b16 %v431
    %v5578 = vunpack.c.l.b16 %v432
    %v5579 = vunpack.c.l.b16 %v433
    %v5580 = vunpack.c.l.b16 %v434
    %v5581 = vunpack.c.l.b16 %v435
    %v5582 = vunpack.c.l.b16 %v436
    %v5583 = vunpack.c.l.b16 %v437
    %v5584 = vunpack.c.l.b16 %v438
    %v5585 = vunpack.c.l.b16 %v439
    %v5586 = vunpack.c.l.b16 %v440
    %v5587 = vunpack.c.l.b16 %v441
    %v5588 = vunpack.c.l.b16 %v442
    %v5589 = vunpack.c.l.b16 %v443
    %v5590 = vunpack.c.l.b16 %v444
    %v5591 = vunpack.c.l.b16 %v445
    %v5592 = vunpack.c.l.b16 %v446
    %v5593 = vunpack.c.l.b16 %v447
    %v5594 = vunpack.c.l.b16 %v448
    %v5595 = vunpack.c.l.b16 %v449
    %v5596 = vunpack.c.l.b16 %v450
    %v5597 = vpack.c.b16 %v5566, %v5565
    %v5598 = vpack.c.b16 %v5568, %v5567
    %v5599 = vpack.c.b16 %v5570, %v5569
    %v5600 = vpack.c.b16 %v5572, %v5571
    %v5601 = vpack.c.b16 %v5574, %v5573
    %v5602 = vpack.c.b16 %v5576, %v5575
    %v5603 = vpack.c.b16 %v5578, %v5577
    %v5604 = vpack.c.b16 %v5580, %v5579
    %v5605 = vpack.c.b16 %v5582, %v5581
    %v5606 = vpack.c.b16 %v5584, %v5583
    %v5607 = vpack.c.b16 %v5586, %v5585
    %v5608 = vpack.c.b16 %v5588, %v5587
    %v5609 = vpack.c.b16 %v5590, %v5589
    %v5610 = vpack.c.b16 %v5592, %v5591
    %v5611 = vpack.c.b16 %v5594, %v5593
    %v5612 = vpack.c.b16 %v5596, %v5595
    %5629 = vmatprep.subr.bf16.mxu0 0
    %5630 = vmatpush1.bf16.msra.mxu0 %v5597
    %5631 = vmatprep.subr.bf16.mxu0 0
    %5632 = vmatpush1.bf16.msra.mxu0 %v5598
    %5633 = vmatprep.subr.bf16.mxu0 0
    %5634 = vmatpush1.bf16.msra.mxu0 %v5599
    %5635 = vmatprep.subr.bf16.mxu0 0
    %5636 = vmatpush1.bf16.msra.mxu0 %v5600
    %5637 = vmatprep.subr.bf16.mxu0 0
    %5638 = vmatpush1.bf16.msra.mxu0 %v5601
    %5639 = vmatprep.subr.bf16.mxu0 0
    %5640 = vmatpush1.bf16.msra.mxu0 %v5602
    %5641 = vmatprep.subr.bf16.mxu0 0
    %5642 = vmatpush1.bf16.msra.mxu0 %v5603
    %5643 = vmatprep.subr.bf16.mxu0 0
    %5644 = vmatpush1.bf16.msra.mxu0 %v5604
    %5645 = vmatprep.subr.bf16.mxu0 0
    %5646 = vmatpush1.bf16.msra.mxu0 %v5605
    %5647 = vmatprep.subr.bf16.mxu0 0
    %5648 = vmatpush1.bf16.msra.mxu0 %v5606
    %5649 = vmatprep.subr.bf16.mxu0 0
    %5650 = vmatpush1.bf16.msra.mxu0 %v5607
    %5651 = vmatprep.subr.bf16.mxu0 0
    %5652 = vmatpush1.bf16.msra.mxu0 %v5608
    %5653 = vmatprep.subr.bf16.mxu0 0
    %5654 = vmatpush1.bf16.msra.mxu0 %v5609
    %5655 = vmatprep.subr.bf16.mxu0 0
    %5656 = vmatpush1.bf16.msra.mxu0 %v5610
    %5657 = vmatprep.subr.bf16.mxu0 0
    %5658 = vmatpush1.bf16.msra.mxu0 %v5611
    %5659 = vmatprep.subr.bf16.mxu0 0
    %5660 = vmatpush1.bf16.msra.mxu0 %v5612
    %5661 = vmatprep.mubr.bf16.mxu0 %v5528
    %5662 = vmatmul.mubr.bf16.gmra.mrb[0].mxu0 %v5527
    %v5663 = vpop.f32.mrb[0].mxu0
    %v5664 = vadd.f32 %v5532, %v5663
    %v5665 = vpop.f32.mrb[0].mxu0
    %v5666 = vpop.f32.mrb[0].mxu0
    %v5667 = vpop.f32.mrb[0].mxu0
    %5668 = vdwg.mxu0
    %v5669 = vmax.f32 %v5664, 0.0
    %v5670 = vpack.c.bf16 %v5669, %v5669
    %v5672 = vlaneseq
    %v5673 = vshrl.u32 %v5672, 7
    %v5674 = vsub.s32 0, %v5673
    %v5675 = vrot.slane %v461, %v5674
    %v5685 = vunpack.c.l.b16 %v453
    %v5686 = vunpack.c.l.b16 %v454
    %v5687 = vunpack.c.l.b16 %v455
    %v5688 = vunpack.c.l.b16 %v456
    %v5689 = vunpack.c.l.b16 %v457
    %v5690 = vunpack.c.l.b16 %v458
    %v5691 = vunpack.c.l.b16 %v459
    %v5692 = vunpack.c.l.b16 %v460
    %v5693 = vpack.c.b16 %v5686, %v5685
    %v5694 = vpack.c.b16 %v5688, %v5687
    %v5695 = vpack.c.b16 %v5690, %v5689
    %v5696 = vpack.c.b16 %v5692, %v5691
    %v5702 = vsel %vm545, %v5670, 0
    %5704 = vmatprep.subr.bf16.mxu0 0
    %5705 = vmatpush1.bf16.msra.mxu0 %v5693
    %5706 = vmatprep.subr.bf16.mxu0 0
    %5707 = vmatpush1.bf16.msra.mxu0 %v5694
    %5708 = vmatprep.subr.bf16.mxu0 0
    %5709 = vmatpush1.bf16.msra.mxu0 %v5695
    %5710 = vmatprep.subr.bf16.mxu0 0
    %5711 = vmatpush1.bf16.msra.mxu0 %v5696
    %5712 = vmatprep.subr.bf16.mxu0 0
    %5713 = vmatpush1.bf16.msra.mxu0 0
    %5714 = vmatprep.subr.bf16.mxu0 0
    %5715 = vmatpush1.bf16.msra.mxu0 0
    %5716 = vmatprep.subr.bf16.mxu0 0
    %5717 = vmatpush1.bf16.msra.mxu0 0
    %5718 = vmatprep.subr.bf16.mxu0 0
    %5719 = vmatpush1.bf16.msra.mxu0 0
    %5720 = vmatprep.subr.bf16.mxu0 0
    %5721 = vmatpush1.bf16.msra.mxu0 0
    %5722 = vmatprep.subr.bf16.mxu0 0
    %5723 = vmatpush1.bf16.msra.mxu0 0
    %5724 = vmatprep.subr.bf16.mxu0 0
    %5725 = vmatpush1.bf16.msra.mxu0 0
    %5726 = vmatprep.subr.bf16.mxu0 0
    %5727 = vmatpush1.bf16.msra.mxu0 0
    %5728 = vmatprep.subr.bf16.mxu0 0
    %5729 = vmatpush1.bf16.msra.mxu0 0
    %5730 = vmatprep.subr.bf16.mxu0 0
    %5731 = vmatpush1.bf16.msra.mxu0 0
    %5732 = vmatprep.subr.bf16.mxu0 0
    %5733 = vmatpush1.bf16.msra.mxu0 0
    %5734 = vmatprep.subr.bf16.mxu0 0
    %5735 = vmatpush1.bf16.msra.mxu0 0
    %5736 = vmatprep.mubr.bf16.mxu0 0
    %5737 = vmatmul.mubr.bf16.gmra.mrb[0].mxu0 %v5702
    %v5738 = vpop.f32.mrb[0].mxu0
    %v5739 = vadd.f32 %v5675, %v5738
    %v5740 = vpop.f32.mrb[0].mxu0
    %v5741 = vpop.f32.mrb[0].mxu0
    %v5742 = vpop.f32.mrb[0].mxu0
    %5743 = vdwg.mxu0
    %v5744 = vtanh.pop %v5739
    %v5745 = vxor.u32 %v5739, 2147483648
    %v5746 = vmul.f32 %v5745, 1.442695
    %v5747 = vpow.pop %v5746
    %v5748 = vadd.f32 %v5747, 1.0
    %v5749 = vrcp.pop %v5748
    %v5750 = vmul.f32 1.0, %v5749
    %5752 = vrot.lane.b32.xlu0 %v5750, 64
    %v5753 = vpop.permute.xlu0 %5752
    %v5755 = vmul.f32 %v5744, %v5753
    %v5756 = vpack.c.bf16 %v5755, %v5755
    %v5758 = vlaneseq
    %v5759 = vshrl.u32 %v5758, 7
    %v5760 = vsub.s32 0, %v5759
    %v5761 = vrot.slane %v470, %v5760
    %v5771 = vunpack.c.l.b16 %v462
    %v5772 = vunpack.c.l.b16 %v463
    %v5773 = vunpack.c.l.b16 %v464
    %v5774 = vunpack.c.l.b16 %v465
    %v5775 = vunpack.c.l.b16 %v466
    %v5776 = vunpack.c.l.b16 %v467
    %v5777 = vunpack.c.l.b16 %v468
    %v5778 = vunpack.c.l.b16 %v469
    %v5779 = vpack.c.b16 %v5772, %v5771
    %v5780 = vpack.c.b16 %v5774, %v5773
    %v5781 = vpack.c.b16 %v5776, %v5775
    %v5782 = vpack.c.b16 %v5778, %v5777
    %v5788 = vsel %vm545, %v5756, 0
    %5790 = vmatprep.subr.bf16.mxu0 0
    %5791 = vmatpush1.bf16.msra.mxu0 %v5779
    %5792 = vmatprep.subr.bf16.mxu0 0
    %5793 = vmatpush1.bf16.msra.mxu0 %v5780
    %5794 = vmatprep.subr.bf16.mxu0 0
    %5795 = vmatpush1.bf16.msra.mxu0 %v5781
    %5796 = vmatprep.subr.bf16.mxu0 0
    %5797 = vmatpush1.bf16.msra.mxu0 %v5782
    %5798 = vmatprep.subr.bf16.mxu0 0
    %5799 = vmatpush1.bf16.msra.mxu0 0
    %5800 = vmatprep.subr.bf16.mxu0 0
    %5801 = vmatpush1.bf16.msra.mxu0 0
    %5802 = vmatprep.subr.bf16.mxu0 0
    %5803 = vmatpush1.bf16.msra.mxu0 0
    %5804 = vmatprep.subr.bf16.mxu0 0
    %5805 = vmatpush1.bf16.msra.mxu0 0
    %5806 = vmatprep.subr.bf16.mxu0 0
    %5807 = vmatpush1.bf16.msra.mxu0 0
    %5808 = vmatprep.subr.bf16.mxu0 0
    %5809 = vmatpush1.bf16.msra.mxu0 0
    %5810 = vmatprep.subr.bf16.mxu0 0
    %5811 = vmatpush1.bf16.msra.mxu0 0
    %5812 = vmatprep.subr.bf16.mxu0 0
    %5813 = vmatpush1.bf16.msra.mxu0 0
    %5814 = vmatprep.subr.bf16.mxu0 0
    %5815 = vmatpush1.bf16.msra.mxu0 0
    %5816 = vmatprep.subr.bf16.mxu0 0
    %5817 = vmatpush1.bf16.msra.mxu0 0
    %5818 = vmatprep.subr.bf16.mxu0 0
    %5819 = vmatpush1.bf16.msra.mxu0 0
    %5820 = vmatprep.subr.bf16.mxu0 0
    %5821 = vmatpush1.bf16.msra.mxu0 0
    %5822 = vmatprep.mubr.bf16.mxu0 0
    %5823 = vmatmul.mubr.bf16.gmra.mrb[0].mxu0 %v5788
    %v5824 = vpop.f32.mrb[0].mxu0
    %v5825 = vadd.f32 %v5761, %v5824
    %v5826 = vpop.f32.mrb[0].mxu0
    %v5827 = vpop.f32.mrb[0].mxu0
    %v5828 = vpop.f32.mrb[0].mxu0
    %5829 = vdwg.mxu0
    %vm5830 = vcmask 7168
    %v5831 = vsel %vm5830, %v5825, -inf
    %v5832 = vrot.slane %v5831, 4
    %v5833 = vmax.f32 %v5831, %v5832
    %v5834 = vrot.slane %v5833, 2
    %v5835 = vmax.f32 %v5833, %v5834
    %v5836 = vrot.slane %v5835, 1
    %v5837 = vmax.f32 %v5835, %v5836
    %v5838 = vsub.f32 %v5825, %v5837
    %v5839 = vmul.f32 %v5838, 1.442695
    %v5840 = vpow.pop %v5839
    %v5841 = vsel %vm5830, %v5840, 0.0
    %v5842 = vrot.slane %v5841, 4
    %v5843 = vadd.f32 %v5841, %v5842
    %v5844 = vrot.slane %v5843, 2
    %v5845 = vadd.f32 %v5843, %v5844
    %v5846 = vrot.slane %v5845, 1
    %v5847 = vadd.f32 %v5845, %v5846
    %v5848 = vrcp.pop %v5847
    %v5849 = vmul.f32 %v5840, %v5848
    %5851 = vset.pattern.permute.xlu0 0
    %5852 = vperm.xlu0 %5851, %v5849
    %v5853 = vpop.permute.xlu0 %5852
    %v5855 = vmul.f32 %v5853, %v5669
    %v5856 = vsel %vm545, %v5855, 0.0
    %v5857 = vrot.slane %v5856, 4
    %v5858 = vadd.f32 %v5856, %v5857
    %v5859 = vrot.slane %v5858, 2
    %v5860 = vadd.f32 %v5858, %v5859
    %v5861 = vrot.slane %v5860, 1
    %v5862 = vadd.f32 %v5860, %v5861
    %v5863 = vpack.c.bf16 %v5862, %v5862
    %5864 = vrot.lane.b32.xlu0 %v5779, 127
    %v5865 = vpop.permute.xlu0 %5864
    %5866 = vrot.lane.b32.xlu0 %v5780, 127
    %v5867 = vpop.permute.xlu0 %5866
    %5868 = vrot.lane.b32.xlu0 %v5781, 127
    %v5869 = vpop.permute.xlu0 %5868
    %5870 = vrot.lane.b32.xlu0 %v5782, 127
    %v5871 = vpop.permute.xlu0 %5870
    %5876 = vrot.lane.b32.xlu0 %v5761, 127
    %v5877 = vpop.permute.xlu0 %5876
    %v5880 = vsel %vm545, %v5863, 0
    %5882 = vmatprep.subr.bf16.mxu0 0
    %5883 = vmatpush1.bf16.msra.mxu0 %v5865
    %5884 = vmatprep.subr.bf16.mxu0 0
    %5885 = vmatpush1.bf16.msra.mxu0 %v5867
    %5886 = vmatprep.subr.bf16.mxu0 0
    %5887 = vmatpush1.bf16.msra.mxu0 %v5869
    %5888 = vmatprep.subr.bf16.mxu0 0
    %5889 = vmatpush1.bf16.msra.mxu0 %v5871
    %5890 = vmatprep.subr.bf16.mxu0 0
    %5891 = vmatpush1.bf16.msra.mxu0 0
    %5892 = vmatprep.subr.bf16.mxu0 0
    %5893 = vmatpush1.bf16.msra.mxu0 0
    %5894 = vmatprep.subr.bf16.mxu0 0
    %5895 = vmatpush1.bf16.msra.mxu0 0
    %5896 = vmatprep.subr.bf16.mxu0 0
    %5897 = vmatpush1.bf16.msra.mxu0 0
    %5898 = vmatprep.subr.bf16.mxu0 0
    %5899 = vmatpush1.bf16.msra.mxu0 0
    %5900 = vmatprep.subr.bf16.mxu0 0
    %5901 = vmatpush1.bf16.msra.mxu0 0
    %5902 = vmatprep.subr.bf16.mxu0 0
    %5903 = vmatpush1.bf16.msra.mxu0 0
    %5904 = vmatprep.subr.bf16.mxu0 0
    %5905 = vmatpush1.bf16.msra.mxu0 0
    %5906 = vmatprep.subr.bf16.mxu0 0
    %5907 = vmatpush1.bf16.msra.mxu0 0
    %5908 = vmatprep.subr.bf16.mxu0 0
    %5909 = vmatpush1.bf16.msra.mxu0 0
    %5910 = vmatprep.subr.bf16.mxu0 0
    %5911 = vmatpush1.bf16.msra.mxu0 0
    %5912 = vmatprep.subr.bf16.mxu0 0
    %5913 = vmatpush1.bf16.msra.mxu0 0
    %5914 = vmatprep.mubr.bf16.mxu0 0
    %5915 = vmatmul.mubr.bf16.gmra.mrb[0].mxu0 %v5880
    %v5916 = vpop.f32.mrb[0].mxu0
    %v5917 = vadd.f32 %v5877, %v5916
    %v5918 = vpop.f32.mrb[0].mxu0
    %v5919 = vpop.f32.mrb[0].mxu0
    %v5920 = vpop.f32.mrb[0].mxu0
    %5921 = vdwg.mxu0
    %v5922 = vxor.u32 %v5917, 2147483648
    %v5923 = vmul.f32 %v5922, 1.442695
    %v5924 = vpow.pop %v5923
    %v5925 = vadd.f32 %v5924, 1.0
    %v5926 = vrcp.pop %v5925
    %v5927 = vmul.f32 1.0, %v5926
    %vm5928 = vcmp.ge.f32.partialorder %v5927, 0.5
    %v5929 = vsel %vm5928, 1, 0
    %v5930 = vcvt.s32.f32 %v5929
    %vm5931 = vcmask 0
    %5932 = vst.msk [vmem:[#allocation13] sm:$0x1] %vm5931, %v5927
    %5933 = vst.msk [vmem:[#allocation14] sm:$0x1] %vm5931, %v5930
    %5934 = vst.msk [vmem:[%s15] sm:$0xff] %vm5830, %v5849
    // Predicated region
    $region78: #{tpu_custom_call.1} parent=1 // pred_check
      _
    $region79: #{tpu_custom_call.1} parent=1 // pred_check_branch
      %5936 = sbr.rel (0) target = $region81
    $region80: #{tpu_custom_call.1} parent=1 // pred_region
      %s5938 = ssub.s32 16, 16
      %5939 = vsyncadd [#allocation4], %s5938
      %s5941 = sshll.u32 [#allocation13], 4
      %s5942 = int_to_ptr.vmem [resolvable:$true] %s5941
      %5944 = dma.vmem_to_hbm [thread:$0]  %s5942, 16, %s13, [#allocation4]
    $region81: #{tpu_custom_call.1} parent=1 // pred_fallthru
      _
    // Predicated region
    $region82: #{tpu_custom_call.1} parent=1 // pred_check
      _
    $region83: #{tpu_custom_call.1} parent=1 // pred_check_branch
      %5946 = sbr.rel (0) target = $region85
    $region84: #{tpu_custom_call.1} parent=1 // pred_region
      %s5948 = ssub.s32 16, 16
      %5949 = vsyncadd [#allocation15], %s5948
      %s5951 = sshll.u32 [#allocation14], 4
      %s5952 = int_to_ptr.vmem [resolvable:$true] %s5951
      %5954 = dma.vmem_to_hbm [thread:$0]  %s5952, 16, %s14, [#allocation15]
    $region85: #{tpu_custom_call.1} parent=1 // pred_fallthru
      _
    // Predicated region
    $region86: #{tpu_custom_call.1} parent=1 // pred_check
      _
    $region87: #{tpu_custom_call.1} parent=1 // pred_check_branch
      %5956 = sbr.rel (0) target = $region89
    $region88: #{tpu_custom_call.1} parent=1 // pred_region
      _
    $region89: #{tpu_custom_call.1} parent=1 // pred_fallthru
      _
    // Predicated region
    $region90: #{tpu_custom_call.1} parent=1 // pred_check
      _
    $region91: #{tpu_custom_call.1} parent=1 // pred_check_branch
      %5958 = sbr.rel (0) target = $region93
    $region92: #{tpu_custom_call.1} parent=1 // pred_region
      %5959 = dma.done [#allocation4], 16
    $region93: #{tpu_custom_call.1} parent=1 // pred_fallthru
      _
    // Predicated region
    $region94: #{tpu_custom_call.1} parent=1 // pred_check
      _
    $region95: #{tpu_custom_call.1} parent=1 // pred_check_branch
      %5961 = sbr.rel (0) target = $region97
    $region96: #{tpu_custom_call.1} parent=1 // pred_region
      %5962 = dma.done [#allocation15], 16
    $region97: #{tpu_custom_call.1} parent=1 // pred_fallthru
      _
    // Predicated region
    $region98: #{tpu_custom_call.1} parent=1 // pred_check
      _
    $region99: #{tpu_custom_call.1} parent=1 // pred_check_branch
      %5964 = sbr.rel (0) target = $region101
    $region100: #{tpu_custom_call.1} parent=1 // pred_region
      _
    $region101: #{tpu_custom_call.1} parent=1 // pred_fallthru
      _
    %5965 = vsyncpa [#allocation3], 1
    %5966 = vsyncpa [#allocation6], 1
    %5967 = vsyncpa [#allocation9], 1
    %5968 = vsyncpa [#allocation12], 1
    %5969 = vsyncpa [#allocation4], 1
    %5970 = vsyncpa [#allocation15], 1

</llo_original>
